<compile_context>
chip_gen: v7x
topology: tpu7x:2x2x1
jax: 0.10.0
libtpu: 0.0.40
codegen_flags: <defaults>
</compile_context>

<pallas_src>
import jax
import jax.numpy as jnp
from jax import lax
from jax.experimental import pallas as pl
from jax.experimental.pallas import tpu as pltpu

# ---------------------------------------------------------------- config
B = 2           # batch
C_IN = 4        # input channels
H = W = 16      # spatial
C_FEAT = 32     # backbone / RPN feature channels
HIDDEN = 32     # box-head hidden width
NUM_ANCHORS = 3
NUM_CLASSES = 5

HP, WP = H + 2, W + 2                      # spatial halo (zero ring) dims
N_HALO = B * HP * WP                       # 648 halo-layout rows
M = B * H * W                              # 512 real pixels
GUARD = 32                                 # scratch guard rows (>= WP+1, mult of 16)
N_SCR = N_HALO + 2 * GUARD                 # 712 scratch rows
LANES = 128                                # lane-dense head width
K_BB = 9 * C_IN + 1                        # conv1 im2col K (+1 bias/halo column) = 37
K_RPN = 9 * C_FEAT                         # conv2 im2col K = 288
N_RPN = NUM_ANCHORS + 4 * NUM_ANCHORS      # 15 real RPN head columns
N_BOX = NUM_CLASSES + 4 * NUM_CLASSES      # 25 real box head columns

# tap shifts in halo-flattened row units; tap order t = (di+1)*3 + (dj+1)
TAP_SHIFTS = tuple(di * WP + dj for di in (-1, 0, 1) for dj in (-1, 0, 1))


# ---------------------------------------------------------------- fused Pallas kernels
def _forward_core(fwd, halo_ref, ic_ref):
    (xic_ref, wbb_ref, wrpn_ref, brpn_ref, wrh_ref, brh_ref,
     pool_ref, wfc_ref, bfc_ref, wbh_ref, bbh_ref) = fwd
    f32, bf16 = jnp.float32, jnp.bfloat16

    # backbone conv3x3 + ReLU: single im2col matmul, K=37.  Bias and the halo-row
    # zeroing are folded into the im2col's last (ones / zeros) column, so feat is
    # exactly 0 on the halo ring -> zero padding for conv2 and the pooling.
    feat = jnp.maximum(jnp.dot(xic_ref[...], wbb_ref[...],
                               preferred_element_type=f32), 0.0)        # (N_HALO, C)

    # stage feat (bf16) into the guard-padded halo scratch; zero ONLY the guards
    # (the interior is fully overwritten every call).
    halo_ref[pl.ds(0, GUARD), :] = jnp.zeros((GUARD, C_FEAT), bf16)
    halo_ref[pl.ds(GUARD + N_HALO, GUARD), :] = jnp.zeros((GUARD, C_FEAT), bf16)
    halo_ref[pl.ds(GUARD, N_HALO), :] = feat.astype(bf16)

    # RPN conv3x3 + ReLU: write the 9 shifted views contiguously into the
    # (N_HALO, 288) bf16 im2col scratch (no masks - the halo supplies the zeros),
    # then one K=288 MXU matmul.  The +/-1-row shifts are sublane-misaligned
    # static slices; Mosaic's shifted loads handle them (XLU has slack here).
    for t, s in enumerate(TAP_SHIFTS):
        ic_ref[:, t * C_FEAT:(t + 1) * C_FEAT] = halo_ref[pl.ds(GUARD + s, N_HALO), :]
    rpnf = jnp.maximum(jnp.dot(ic_ref[...], wrpn_ref[...],
                               preferred_element_type=f32) + brpn_ref[...], 0.0)

    # 1x1 RPN heads (cls + bbox) packed into one lane-dense (C_FEAT, 128) weight.
    rpn_heads = jnp.dot(rpnf.astype(bf16), wrh_ref[...],
                        preferred_element_type=f32) + brh_ref[...]       # (N_HALO, 128)

    # global-average pool per image (RoIAlign stand-in): tiny bf16 matmul against
    # the already-staged bf16 feat scratch; pool matrix is a host constant whose
    # entries (0 or 1/256) are bf16-exact, and halo rows of feat are exact zeros.
    pooled = jnp.dot(pool_ref[...], halo_ref[pl.ds(GUARD, N_HALO), :],
                     preferred_element_type=f32)                         # (B, C)
    hidden = jnp.maximum(jnp.dot(pooled.astype(bf16), wfc_ref[...],
                                 preferred_element_type=f32) + bfc_ref[...], 0.0)
    box_heads = jnp.dot(hidden.astype(bf16), wbh_ref[...],
                        preferred_element_type=f32) + bbh_ref[...]       # (B, 128)
    return rpn_heads, box_heads


def _fused_infer_kernel(*refs):
    *fwd, rpn_out_ref, box_out_ref, halo_ref, ic_ref = refs
    rpn_heads, box_heads = _forward_core(tuple(fwd), halo_ref, ic_ref)
    rpn_out_ref[...] = rpn_heads
    box_out_ref[...] = box_heads


def _fused_train_kernel(*refs):
    *fwd, rpn_tgt_ref, box_tgt_ref, lmask_ref, loss_ref, halo_ref, ic_ref = refs
    f32 = jnp.float32
    rpn_heads, box_heads = _forward_core(tuple(fwd), halo_ref, ic_ref)

    # --- RPN losses on the halo-layout (N_HALO, 128) tiles --------------------
    # lmask is 1.0 at (interior row, lane < 15) and 0 elsewhere; per-lane column
    # sums then split objectness vs box-delta lanes, so no (648,128) iota masks.
    x = rpn_heads
    t = rpn_tgt_ref[...]
    msk = lmask_ref[...]
    # BCE-with-logits; transcendentals kept f32 (v5e-safe).  bf16 EUP variant for
    # v6e/v7x is a generation-specific follow-up.
    bce = jnp.maximum(x, 0.0) - x * t + jnp.log(1.0 + jnp.exp(-jnp.abs(x)))
    bce_cols = jnp.sum(bce * msk, axis=0, keepdims=True)                 # (1, 128)
    l1_cols = jnp.sum(jnp.abs(x - t) * msk, axis=0, keepdims=True)       # (1, 128)
    loss_obj = jnp.sum(bce_cols[:, :NUM_ANCHORS]) / (M * NUM_ANCHORS)
    loss_rpn_box = jnp.sum(l1_cols[:, NUM_ANCHORS:N_RPN]) / (M * 4 * NUM_ANCHORS)

    # --- box-head losses on the (B, 128) lane-padded tiles ---------------------
    z, bt = box_heads, box_tgt_ref[...]
    col_b = lax.broadcasted_iota(jnp.int32, (B, LANES), 1)
    is_cls = col_b < NUM_CLASSES
    z_m = jnp.where(is_cls, z, -1e30)
    mx = jnp.max(z_m, axis=-1, keepdims=True)
    lse = mx + jnp.log(jnp.sum(jnp.exp(z_m - mx), axis=-1, keepdims=True))
    tgt = jnp.sum(jnp.where(is_cls, bt * z, 0.0), axis=-1, keepdims=True)
    loss_cls = jnp.sum(lse - tgt) / B
    in_box = (col_b >= NUM_CLASSES) & (col_b < N_BOX)
    loss_box = jnp.sum(jnp.where(in_box, jnp.abs(z - bt), 0.0)) / (B * 4 * NUM_CLASSES)

    # one packed, lane-dense loss row
    lane = lax.broadcasted_iota(jnp.int32, (1, LANES), 1)
    loss_ref[...] = (jnp.where(lane == 0, loss_obj, 0.0)
                     + jnp.where(lane == 1, loss_rpn_box, 0.0)
                     + jnp.where(lane == 2, loss_cls, 0.0)
                     + jnp.where(lane == 3, loss_box, 0.0)).astype(f32)


# ---------------------------------------------------------------- pallas_call wrappers
_VMEM = pl.BlockSpec(memory_space=pltpu.MemorySpace.VMEM)
_SCRATCH = [pltpu.VMEM((N_SCR, C_FEAT), jnp.bfloat16),     # guard-padded feat halo
            pltpu.VMEM((N_HALO, K_RPN), jnp.bfloat16)]     # conv2 im2col


def _fwd_args(packed, x_ic):
    return (x_ic, packed["wbb"], packed["wrpn"], packed["brpn"],
            packed["wrh"], packed["brh"], packed["pool"],
            packed["wfc"], packed["bfc"], packed["wbh"], packed["bbh"])


def fused_inference(packed, x_ic):
    args = _fwd_args(packed, x_ic)
    return pl.pallas_call(
        _fused_infer_kernel,
        out_shape=(jax.ShapeDtypeStruct((N_HALO, LANES), jnp.float32),
                   jax.ShapeDtypeStruct((B, LANES), jnp.float32)),
        in_specs=[_VMEM] * len(args),
        out_specs=(_VMEM, _VMEM),
        scratch_shapes=_SCRATCH,
    )(*args)


def fused_training(packed, x_ic, rpn_tgt, box_tgt, lmask):
    args = _fwd_args(packed, x_ic) + (rpn_tgt, box_tgt, lmask)
    return pl.pallas_call(
        _fused_train_kernel,
        out_shape=jax.ShapeDtypeStruct((1, LANES), jnp.float32),
        in_specs=[_VMEM] * len(args),
        out_specs=_VMEM,
        scratch_shapes=_SCRATCH,
    )(*args)


# ---------------------------------------------------------------- host packing helpers
def conv3x3_wmat(w_oihw):                                # (Cout,Cin,3,3) -> (9*Cin,Cout)
    cout, cin, _, _ = w_oihw.shape
    return jnp.transpose(w_oihw, (2, 3, 1, 0)).reshape(9 * cin, cout)


def conv1x1_wmat(w_oihw):                                # (Cout,Cin,1,1) -> (Cin,Cout)
    return jnp.transpose(w_oihw[:, :, 0, 0], (1, 0))


def _embed_interior(x_bhwc, lanes):
    """(B,H,W,lanes) -> (N_HALO, lanes) halo-layout array, zeros on the halo ring."""
    full = jnp.zeros((B, HP, WP, lanes), x_bhwc.dtype)
    full = full.at[:, 1:H + 1, 1:W + 1, :].set(x_bhwc)
    return full.reshape(N_HALO, lanes)


def pack_params(p):
    """Pack raw params into kernel-ready tiles: im2col conv weights (bias row
    appended for conv1), heads concatenated + zero-padded to 128 lanes (bf16 for
    every MXU operand), plus the constant bf16 pooling matrix."""
    bf16, f32 = jnp.bfloat16, jnp.float32

    wbb = jnp.concatenate([conv3x3_wmat(p["backbone_w"]),
                           p["backbone_b"].reshape(1, C_FEAT)], axis=0)   # (37, C)
    wrpn = conv3x3_wmat(p["rpn_conv_w"])                                  # (288, C)

    wrh = jnp.zeros((C_FEAT, LANES), f32)
    wrh = wrh.at[:, :NUM_ANCHORS].set(conv1x1_wmat(p["rpn_cls_w"]))
    wrh = wrh.at[:, NUM_ANCHORS:N_RPN].set(conv1x1_wmat(p["rpn_bbox_w"]))
    brh = jnp.zeros((1, LANES), f32)
    brh = brh.at[0, :NUM_ANCHORS].set(p["rpn_cls_b"])
    brh = brh.at[0, NUM_ANCHORS:N_RPN].set(p["rpn_bbox_b"])

    wbh = jnp.zeros((HIDDEN, LANES), f32)
    wbh = wbh.at[:, :NUM_CLASSES].set(p["cls_w"])
    wbh = wbh.at[:, NUM_CLASSES:N_BOX].set(p["box_w"])
    bbh = jnp.zeros((1, LANES), f32)
    bbh = bbh.at[0, :NUM_CLASSES].set(p["cls_b"])
    bbh = bbh.at[0, NUM_CLASSES:N_BOX].set(p["box_b"])

    # pooling matrix: (B, N_HALO), 1/(H*W) on image-b interior rows (bf16-exact).
    pool_cols = _embed_interior(
        jnp.broadcast_to(jnp.eye(B, dtype=f32)[:, None, None, :], (B, H, W, B))
        * (1.0 / (H * W)), B)                                             # (N_HALO, B)
    pool = jnp.transpose(pool_cols, (1, 0)).astype(bf16)                  # (B, N_HALO)

    return {
        "wbb": wbb.astype(bf16),
        "wrpn": wrpn.astype(bf16),
        "brpn": p["rpn_conv_b"].reshape(1, C_FEAT).astype(f32),
        "wrh": wrh.astype(bf16),
        "brh": brh,
        "pool": pool,
        "wfc": p["fc_w"].astype(bf16),
        "bfc": p["fc_b"].reshape(1, HIDDEN).astype(f32),
        "wbh": wbh.astype(bf16),
        "bbh": bbh,
    }


def pack_images(images_nchw):
    """Host im2col of the input in halo row order + bias/halo-indicator column.
    Pure layout plumbing (pad / slice / concat), no FLOPs hoisted out of the kernel."""
    f32 = jnp.float32
    x = jnp.transpose(images_nchw, (0, 2, 3, 1)).astype(f32)              # (B,H,W,C_IN)
    xp = jnp.pad(x, ((0, 0), (1, 1), (1, 1), (0, 0)))
    patches = [xp[:, i:i + H, j:j + W, :] for i in range(3) for j in range(3)]
    ic = jnp.concatenate(patches + [jnp.ones((B, H, W, 1), f32)], axis=-1)  # (B,H,W,37)
    return _embed_interior(ic, K_BB).astype(jnp.bfloat16)                   # (N_HALO,37)


def pack_targets(targets):
    f32 = jnp.float32
    obj = targets["objectness"].reshape(B, H, W, NUM_ANCHORS).astype(f32)
    rbx = targets["rpn_box_targets"].reshape(B, H, W, 4 * NUM_ANCHORS).astype(f32)
    t = jnp.concatenate([obj, rbx], axis=-1)
    t = jnp.pad(t, ((0, 0), (0, 0), (0, 0), (0, LANES - N_RPN)))
    rpn_tgt = _embed_interior(t, LANES)                                    # (N_HALO,128)

    lane_ok = (jnp.arange(LANES) < N_RPN).astype(f32)
    lmask = _embed_interior(jnp.broadcast_to(lane_ok, (B, H, W, LANES)), LANES)

    onehot = jax.nn.one_hot(targets["labels"], NUM_CLASSES, dtype=f32)
    box_tgt = jnp.pad(
        jnp.concatenate([onehot, targets["box_targets"].astype(f32)], axis=-1),
        ((0, 0), (0, LANES - N_BOX)))
    return rpn_tgt, box_tgt, lmask


# ---------------------------------------------------------------- jitted entry points
@jax.jit
def _infer_jit(packed, images_nchw):
    rpn_out, box_out = fused_inference(packed, pack_images(images_nchw))
    rpn = rpn_out.reshape(B, HP, WP, LANES)[:, 1:H + 1, 1:W + 1, :]   # drop halo ring
    return {
        "objectness": rpn[..., :NUM_ANCHORS],
        "rpn_box_deltas": rpn[..., NUM_ANCHORS:N_RPN],
        "class_logits": box_out[:, :NUM_CLASSES],
        "box_regression": box_out[:, NUM_CLASSES:N_BOX],
    }


@jax.jit
def _train_jit(packed, images_nchw, targets):
    rpn_tgt, box_tgt, lmask = pack_targets(targets)
    lv = fused_training(packed, pack_images(images_nchw), rpn_tgt, box_tgt, lmask)
    return {
        "loss_objectness": lv[0, 0],
        "loss_rpn_box_reg": lv[0, 1],
        "loss_classifier": lv[0, 2],
        "loss_box_reg": lv[0, 3],
    }


# ---------------------------------------------------------------- synthetic base model
def init_params(key):
    ks = jax.random.split(key, 8)

    def w(k, shape, scale=0.05):
        return scale * jax.random.normal(k, shape, dtype=jnp.float32)

    return {
        "backbone_w": w(ks[0], (C_FEAT, C_IN, 3, 3)),
        "backbone_b": jnp.zeros((C_FEAT,), jnp.float32),
        "rpn_conv_w": w(ks[1], (C_FEAT, C_FEAT, 3, 3)),
        "rpn_conv_b": jnp.zeros((C_FEAT,), jnp.float32),
        "rpn_cls_w": w(ks[2], (NUM_ANCHORS, C_FEAT, 1, 1)),
        "rpn_cls_b": jnp.zeros((NUM_ANCHORS,), jnp.float32),
        "rpn_bbox_w": w(ks[3], (4 * NUM_ANCHORS, C_FEAT, 1, 1)),
        "rpn_bbox_b": jnp.zeros((4 * NUM_ANCHORS,), jnp.float32),
        "fc_w": w(ks[4], (C_FEAT, HIDDEN)),
        "fc_b": jnp.zeros((HIDDEN,), jnp.float32),
        "cls_w": w(ks[5], (HIDDEN, NUM_CLASSES)),
        "cls_b": jnp.zeros((NUM_CLASSES,), jnp.float32),
        "box_w": w(ks[6], (HIDDEN, 4 * NUM_CLASSES)),
        "box_b": jnp.zeros((4 * NUM_CLASSES,), jnp.float32),
    }


class SyntheticFasterRCNN:
    """Minimal Faster-R-CNN-shaped base model; each call runs ONE fused Pallas kernel."""
    # TODO(synk): anchor generation, proposal matching, NMS and RoIAlign from the
    # real torchvision FasterRCNN have no clean Pallas equivalent and are replaced
    # by a global-average-pooled box head + dense per-pixel RPN targets.

    def __init__(self, params):
        self.params = params
        self.packed = pack_params(params)
        self.training = False

    def train(self):
        self.training = True
        return self

    def eval(self):
        self.training = False
        return self

    def __call__(self, images_nchw, targets=None):
        if targets is None:
            return _infer_jit(self.packed, images_nchw)
        return _train_jit(self.packed, images_nchw, targets)


# ---------------------------------------------------------------- the wrapper (reference semantics)
class ModelWithCustomForward:
    def __init__(self, base_model, w_box, w_rpn):
        self.base_model = base_model
        self.w_box = w_box      # stored, unused in forward (matches reference module)
        self.w_rpn = w_rpn

    def forward(self, images, targets=None):
        if targets is not None:
            training = self.base_model.training
            if not training:
                self.base_model.train()
            loss_dict = self.base_model(images, targets)
            if not training:
                self.base_model.eval()
            return loss_dict
        else:
            return self.base_model(images)

    __call__ = forward


# ---------------------------------------------------------------- pure-JAX reference (validation)
def im2col_3x3(x_nhwc):
    b, h, w, c = x_nhwc.shape
    xp = jnp.pad(x_nhwc, ((0, 0), (1, 1), (1, 1), (0, 0)))
    patches = [xp[:, i:i + h, j:j + w, :] for i in range(3) for j in range(3)]
    return jnp.concatenate(patches, axis=-1).reshape(b * h * w, 9 * c)


def reference_forward(params, images_nchw):
    bf16, f32 = jnp.bfloat16, jnp.float32

    def conv(x_nhwc, w, b):
        y = jnp.dot(im2col_3x3(x_nhwc).astype(bf16), conv3x3_wmat(w).astype(bf16),
                    preferred_element_type=f32) + b
        return jnp.maximum(y, 0.0)

    def head(x, w, b):
        return jnp.dot(x.astype(bf16), w.astype(bf16), preferred_element_type=f32) + b

    x = jnp.transpose(images_nchw, (0, 2, 3, 1)).astype(f32)
    feat = conv(x, params["backbone_w"], params["backbone_b"])                 # (M, C)
    rpnf = conv(feat.reshape(B, H, W, C_FEAT),
                params["rpn_conv_w"], params["rpn_conv_b"])                    # (M, C)
    obj = head(rpnf, conv1x1_wmat(params["rpn_cls_w"]), params["rpn_cls_b"])
    dlt = head(rpnf, conv1x1_wmat(params["rpn_bbox_w"]), params["rpn_bbox_b"])
    pooled = jnp.mean(feat.reshape(B, H * W, C_FEAT), axis=1)
    hidden = jnp.maximum(head(pooled, params["fc_w"], params["fc_b"]), 0.0)
    return {
        "objectness": obj.reshape(B, H, W, NUM_ANCHORS),
        "rpn_box_deltas": dlt.reshape(B, H, W, 4 * NUM_ANCHORS),
        "class_logits": head(hidden, params["cls_w"], params["cls_b"]),
        "box_regression": head(hidden, params["box_w"], params["box_b"]),
    }


def reference_losses(params, images_nchw, targets):
    out = reference_forward(params, images_nchw)
    obj = out["objectness"].reshape(M, NUM_ANCHORS)
    t_obj = targets["objectness"].reshape(M, NUM_ANCHORS).astype(jnp.float32)
    bce = jnp.maximum(obj, 0.0) - obj * t_obj + jnp.log(1.0 + jnp.exp(-jnp.abs(obj)))
    dlt = out["rpn_box_deltas"].reshape(M, 4 * NUM_ANCHORS)
    t_dlt = targets["rpn_box_targets"].reshape(M, 4 * NUM_ANCHORS)
    z = out["class_logits"]
    onehot = jax.nn.one_hot(targets["labels"], NUM_CLASSES, dtype=jnp.float32)
    lse = jax.nn.logsumexp(z, axis=-1)
    return {
        "loss_objectness": jnp.mean(bce),
        "loss_rpn_box_reg": jnp.mean(jnp.abs(dlt - t_dlt)),
        "loss_classifier": jnp.mean(lse - jnp.sum(onehot * z, axis=-1)),
        "loss_box_reg": jnp.mean(jnp.abs(out["box_regression"]
                                         - targets["box_targets"])),
    }


# ---------------------------------------------------------------- main
if __name__ == "__main__":
    key = jax.random.PRNGKey(0)
    k_params, k_img, k_obj, k_rpn, k_lbl, k_box = jax.random.split(key, 6)

    params = init_params(k_params)
    base_model = SyntheticFasterRCNN(params).eval()
    model = ModelWithCustomForward(base_model, w_box=1.0, w_rpn=1.0)

    images = jax.random.normal(k_img, (B, C_IN, H, W), dtype=jnp.float32)  # NCHW
    targets = {
        "objectness": (jax.random.uniform(k_obj, (B, H, W, NUM_ANCHORS)) > 0.5
                       ).astype(jnp.float32),
        "rpn_box_targets": jax.random.normal(k_rpn, (B, H, W, 4 * NUM_ANCHORS),
                                             dtype=jnp.float32),
        "labels": jax.random.randint(k_lbl, (B,), 0, NUM_CLASSES),
        "box_targets": jax.random.normal(k_box, (B, 4 * NUM_CLASSES),
                                         dtype=jnp.float32),
    }

    # inference path (targets=None) -> detections-like dict (1 fused pallas_call)
    detections = model(images)
    jax.block_until_ready(detections)

    # training path (targets given) -> loss dict (1 fused pallas_call); eval mode restored
    loss_dict = model(images, targets)
    jax.block_until_ready(loss_dict)
    assert base_model.training is False

    # validate the fused kernels against a pure-JAX reference of the same model
    ref_det = reference_forward(params, images)
    for k in ("objectness", "rpn_box_deltas", "class_logits", "box_regression"):
        assert detections[k].shape == ref_det[k].shape, k
        assert jnp.allclose(detections[k], ref_det[k], rtol=1e-2, atol=1e-3), k

    ref_loss = reference_losses(params, images, targets)
    for k, v in loss_dict.items():
        assert jnp.isfinite(v), k
        assert jnp.allclose(v, ref_loss[k], rtol=1e-2, atol=1e-3), k

    print("KERNEL_OK")
</pallas_src>

<mosaic_0001>
module attributes {stable_mosaic.version = 11 : i64} {
  func.func @_fused_infer_kernel(%arg0: memref<648x37xbf16, #tpu.memory_space<vmem>>, %arg1: memref<37x32xbf16, #tpu.memory_space<vmem>>, %arg2: memref<288x32xbf16, #tpu.memory_space<vmem>>, %arg3: memref<1x32xf32, #tpu.memory_space<vmem>>, %arg4: memref<32x128xbf16, #tpu.memory_space<vmem>>, %arg5: memref<1x128xf32, #tpu.memory_space<vmem>>, %arg6: memref<2x648xbf16, #tpu.memory_space<vmem>>, %arg7: memref<32x32xbf16, #tpu.memory_space<vmem>>, %arg8: memref<1x32xf32, #tpu.memory_space<vmem>>, %arg9: memref<32x128xbf16, #tpu.memory_space<vmem>>, %arg10: memref<1x128xf32, #tpu.memory_space<vmem>>, %arg11: memref<648x128xf32, #tpu.memory_space<vmem>>, %arg12: memref<2x128xf32, #tpu.memory_space<vmem>>, %arg13: memref<712x32xbf16, #tpu.memory_space<vmem>>, %arg14: memref<648x288xbf16, #tpu.memory_space<vmem>>) attributes {dimension_semantics = [], scalar_prefetch = 0 : i64, scratch_operands = 2 : i64, tpu.core_type = #tpu.core_type<tc>} {
    %c0 = arith.constant 0 : index
    %c0_0 = arith.constant 0 : index
    %0 = vector.load %arg0[%c0, %c0_0] : memref<648x37xbf16, #tpu.memory_space<vmem>>, vector<648x37xbf16>
    %c0_1 = arith.constant 0 : index
    %c0_2 = arith.constant 0 : index
    %1 = vector.load %arg1[%c0_1, %c0_2] : memref<37x32xbf16, #tpu.memory_space<vmem>>, vector<37x32xbf16>
    %cst = arith.constant dense<0.000000e+00> : vector<648x32xf32>
    %2 = tpu.matmul %0, %1, %cst {dimension_numbers = #tpu.dot_dimension_numbers<[1], [0], [0], [1], [0, 0, 1, 1], [], []>} : vector<648x37xbf16>, vector<37x32xbf16>, vector<648x32xf32> -> vector<648x32xf32>
    %cst_3 = arith.constant 0.000000e+00 : f32
    %3 = vector.broadcast %cst_3 : f32 to vector<648x32xf32>
    %4 = arith.maximumf %2, %3 : vector<648x32xf32>
    %cst_4 = arith.constant 0.000000e+00 : bf16
    %5 = vector.broadcast %cst_4 : bf16 to vector<32x32xbf16>
    %c0_5 = arith.constant 0 : index
    %c0_6 = arith.constant 0 : index
    %6 = vector.load %arg13[%c0_5, %c0_6] : memref<712x32xbf16, #tpu.memory_space<vmem>>, vector<32x32xbf16>
    tpu.vector_store %arg13[%c0_5, %c0_6], %5 {strides = array<i32>} : memref<712x32xbf16, #tpu.memory_space<vmem>>, vector<32x32xbf16>,
    %cst_7 = arith.constant 0.000000e+00 : bf16
    %7 = vector.broadcast %cst_7 : bf16 to vector<32x32xbf16>
    %c680 = arith.constant 680 : index
    %c0_8 = arith.constant 0 : index
    %8 = vector.load %arg13[%c680, %c0_8] : memref<712x32xbf16, #tpu.memory_space<vmem>>, vector<32x32xbf16>
    tpu.vector_store %arg13[%c680, %c0_8], %7 {strides = array<i32>} : memref<712x32xbf16, #tpu.memory_space<vmem>>, vector<32x32xbf16>,
    %9 = arith.truncf %4 : vector<648x32xf32> to vector<648x32xbf16>
    %c32 = arith.constant 32 : index
    %c0_9 = arith.constant 0 : index
    %10 = vector.load %arg13[%c32, %c0_9] : memref<712x32xbf16, #tpu.memory_space<vmem>>, vector<648x32xbf16>
    tpu.vector_store %arg13[%c32, %c0_9], %9 {strides = array<i32>} : memref<712x32xbf16, #tpu.memory_space<vmem>>, vector<648x32xbf16>,
    %c13 = arith.constant 13 : index
    %c0_10 = arith.constant 0 : index
    %11 = vector.load %arg13[%c13, %c0_10] : memref<712x32xbf16, #tpu.memory_space<vmem>>, vector<648x32xbf16>
    %c0_11 = arith.constant 0 : index
    %c0_12 = arith.constant 0 : index
    %12 = vector.load %arg14[%c0_11, %c0_12] : memref<648x288xbf16, #tpu.memory_space<vmem>>, vector<648x32xbf16>
    tpu.vector_store %arg14[%c0_11, %c0_12], %11 {strides = array<i32>} : memref<648x288xbf16, #tpu.memory_space<vmem>>, vector<648x32xbf16>,
    %c14 = arith.constant 14 : index
    %c0_13 = arith.constant 0 : index
    %13 = vector.load %arg13[%c14, %c0_13] : memref<712x32xbf16, #tpu.memory_space<vmem>>, vector<648x32xbf16>
    %c0_14 = arith.constant 0 : index
    %c32_15 = arith.constant 32 : index
    %14 = vector.load %arg14[%c0_14, %c32_15] : memref<648x288xbf16, #tpu.memory_space<vmem>>, vector<648x32xbf16>
    tpu.vector_store %arg14[%c0_14, %c32_15], %13 {strides = array<i32>} : memref<648x288xbf16, #tpu.memory_space<vmem>>, vector<648x32xbf16>,
    %c15 = arith.constant 15 : index
    %c0_16 = arith.constant 0 : index
    %15 = vector.load %arg13[%c15, %c0_16] : memref<712x32xbf16, #tpu.memory_space<vmem>>, vector<648x32xbf16>
    %c0_17 = arith.constant 0 : index
    %c64 = arith.constant 64 : index
    %16 = vector.load %arg14[%c0_17, %c64] : memref<648x288xbf16, #tpu.memory_space<vmem>>, vector<648x32xbf16>
    tpu.vector_store %arg14[%c0_17, %c64], %15 {strides = array<i32>} : memref<648x288xbf16, #tpu.memory_space<vmem>>, vector<648x32xbf16>,
    %c31 = arith.constant 31 : index
    %c0_18 = arith.constant 0 : index
    %17 = vector.load %arg13[%c31, %c0_18] : memref<712x32xbf16, #tpu.memory_space<vmem>>, vector<648x32xbf16>
    %c0_19 = arith.constant 0 : index
    %c96 = arith.constant 96 : index
    %18 = vector.load %arg14[%c0_19, %c96] : memref<648x288xbf16, #tpu.memory_space<vmem>>, vector<648x32xbf16>
    tpu.vector_store %arg14[%c0_19, %c96], %17 {strides = array<i32>} : memref<648x288xbf16, #tpu.memory_space<vmem>>, vector<648x32xbf16>,
    %c32_20 = arith.constant 32 : index
    %c0_21 = arith.constant 0 : index
    %19 = vector.load %arg13[%c32_20, %c0_21] : memref<712x32xbf16, #tpu.memory_space<vmem>>, vector<648x32xbf16>
    %c0_22 = arith.constant 0 : index
    %c128 = arith.constant 128 : index
    %20 = vector.load %arg14[%c0_22, %c128] : memref<648x288xbf16, #tpu.memory_space<vmem>>, vector<648x32xbf16>
    tpu.vector_store %arg14[%c0_22, %c128], %19 {strides = array<i32>} : memref<648x288xbf16, #tpu.memory_space<vmem>>, vector<648x32xbf16>,
    %c33 = arith.constant 33 : index
    %c0_23 = arith.constant 0 : index
    %21 = vector.load %arg13[%c33, %c0_23] : memref<712x32xbf16, #tpu.memory_space<vmem>>, vector<648x32xbf16>
    %c0_24 = arith.constant 0 : index
    %c160 = arith.constant 160 : index
    %22 = vector.load %arg14[%c0_24, %c160] : memref<648x288xbf16, #tpu.memory_space<vmem>>, vector<648x32xbf16>
    tpu.vector_store %arg14[%c0_24, %c160], %21 {strides = array<i32>} : memref<648x288xbf16, #tpu.memory_space<vmem>>, vector<648x32xbf16>,
    %c49 = arith.constant 49 : index
    %c0_25 = arith.constant 0 : index
    %23 = vector.load %arg13[%c49, %c0_25] : memref<712x32xbf16, #tpu.memory_space<vmem>>, vector<648x32xbf16>
    %c0_26 = arith.constant 0 : index
    %c192 = arith.constant 192 : index
    %24 = vector.load %arg14[%c0_26, %c192] : memref<648x288xbf16, #tpu.memory_space<vmem>>, vector<648x32xbf16>
    tpu.vector_store %arg14[%c0_26, %c192], %23 {strides = array<i32>} : memref<648x288xbf16, #tpu.memory_space<vmem>>, vector<648x32xbf16>,
    %c50 = arith.constant 50 : index
    %c0_27 = arith.constant 0 : index
    %25 = vector.load %arg13[%c50, %c0_27] : memref<712x32xbf16, #tpu.memory_space<vmem>>, vector<648x32xbf16>
    %c0_28 = arith.constant 0 : index
    %c224 = arith.constant 224 : index
    %26 = vector.load %arg14[%c0_28, %c224] : memref<648x288xbf16, #tpu.memory_space<vmem>>, vector<648x32xbf16>
    tpu.vector_store %arg14[%c0_28, %c224], %25 {strides = array<i32>} : memref<648x288xbf16, #tpu.memory_space<vmem>>, vector<648x32xbf16>,
    %c51 = arith.constant 51 : index
    %c0_29 = arith.constant 0 : index
    %27 = vector.load %arg13[%c51, %c0_29] : memref<712x32xbf16, #tpu.memory_space<vmem>>, vector<648x32xbf16>
    %c0_30 = arith.constant 0 : index
    %c256 = arith.constant 256 : index
    %28 = vector.load %arg14[%c0_30, %c256] : memref<648x288xbf16, #tpu.memory_space<vmem>>, vector<648x32xbf16>
    tpu.vector_store %arg14[%c0_30, %c256], %27 {strides = array<i32>} : memref<648x288xbf16, #tpu.memory_space<vmem>>, vector<648x32xbf16>,
    %c0_31 = arith.constant 0 : index
    %c0_32 = arith.constant 0 : index
    %29 = vector.load %arg14[%c0_31, %c0_32] : memref<648x288xbf16, #tpu.memory_space<vmem>>, vector<648x288xbf16>
    %c0_33 = arith.constant 0 : index
    %c0_34 = arith.constant 0 : index
    %30 = vector.load %arg2[%c0_33, %c0_34] : memref<288x32xbf16, #tpu.memory_space<vmem>>, vector<288x32xbf16>
    %cst_35 = arith.constant dense<0.000000e+00> : vector<648x32xf32>
    %31 = tpu.matmul %29, %30, %cst_35 {dimension_numbers = #tpu.dot_dimension_numbers<[1], [0], [0], [1], [0, 0, 1, 1], [], []>} : vector<648x288xbf16>, vector<288x32xbf16>, vector<648x32xf32> -> vector<648x32xf32>
    %c0_36 = arith.constant 0 : index
    %c0_37 = arith.constant 0 : index
    %32 = vector.load %arg3[%c0_36, %c0_37] : memref<1x32xf32, #tpu.memory_space<vmem>>, vector<1x32xf32>
    %33 = vector.broadcast %32 : vector<1x32xf32> to vector<648x32xf32>
    %34 = arith.addf %31, %33 : vector<648x32xf32>
    %cst_38 = arith.constant 0.000000e+00 : f32
    %35 = vector.broadcast %cst_38 : f32 to vector<648x32xf32>
    %36 = arith.maximumf %34, %35 : vector<648x32xf32>
    %37 = arith.truncf %36 : vector<648x32xf32> to vector<648x32xbf16>
    %c0_39 = arith.constant 0 : index
    %c0_40 = arith.constant 0 : index
    %38 = vector.load %arg4[%c0_39, %c0_40] : memref<32x128xbf16, #tpu.memory_space<vmem>>, vector<32x128xbf16>
    %cst_41 = arith.constant dense<0.000000e+00> : vector<648x128xf32>
    %39 = tpu.matmul %37, %38, %cst_41 {dimension_numbers = #tpu.dot_dimension_numbers<[1], [0], [0], [1], [0, 0, 1, 1], [], []>} : vector<648x32xbf16>, vector<32x128xbf16>, vector<648x128xf32> -> vector<648x128xf32>
    %c0_42 = arith.constant 0 : index
    %c0_43 = arith.constant 0 : index
    %40 = vector.load %arg5[%c0_42, %c0_43] : memref<1x128xf32, #tpu.memory_space<vmem>>, vector<1x128xf32>
    %41 = vector.broadcast %40 : vector<1x128xf32> to vector<648x128xf32>
    %42 = arith.addf %39, %41 : vector<648x128xf32>
    %c0_44 = arith.constant 0 : index
    %c0_45 = arith.constant 0 : index
    %43 = vector.load %arg6[%c0_44, %c0_45] : memref<2x648xbf16, #tpu.memory_space<vmem>>, vector<2x648xbf16>
    %c32_46 = arith.constant 32 : index
    %c0_47 = arith.constant 0 : index
    %44 = vector.load %arg13[%c32_46, %c0_47] : memref<712x32xbf16, #tpu.memory_space<vmem>>, vector<648x32xbf16>
    %cst_48 = arith.constant dense<0.000000e+00> : vector<2x32xf32>
    %45 = tpu.matmul %43, %44, %cst_48 {dimension_numbers = #tpu.dot_dimension_numbers<[1], [0], [0], [1], [0, 0, 1, 1], [], []>} : vector<2x648xbf16>, vector<648x32xbf16>, vector<2x32xf32> -> vector<2x32xf32>
    %46 = arith.truncf %45 : vector<2x32xf32> to vector<2x32xbf16>
    %c0_49 = arith.constant 0 : index
    %c0_50 = arith.constant 0 : index
    %47 = vector.load %arg7[%c0_49, %c0_50] : memref<32x32xbf16, #tpu.memory_space<vmem>>, vector<32x32xbf16>
    %cst_51 = arith.constant dense<0.000000e+00> : vector<2x32xf32>
    %48 = tpu.matmul %46, %47, %cst_51 {dimension_numbers = #tpu.dot_dimension_numbers<[1], [0], [0], [1], [0, 0, 1, 1], [], []>} : vector<2x32xbf16>, vector<32x32xbf16>, vector<2x32xf32> -> vector<2x32xf32>
    %c0_52 = arith.constant 0 : index
    %c0_53 = arith.constant 0 : index
    %49 = vector.load %arg8[%c0_52, %c0_53] : memref<1x32xf32, #tpu.memory_space<vmem>>, vector<1x32xf32>
    %50 = vector.broadcast %49 : vector<1x32xf32> to vector<2x32xf32>
    %51 = arith.addf %48, %50 : vector<2x32xf32>
    %cst_54 = arith.constant 0.000000e+00 : f32
    %52 = vector.broadcast %cst_54 : f32 to vector<2x32xf32>
    %53 = arith.maximumf %51, %52 : vector<2x32xf32>
    %54 = arith.truncf %53 : vector<2x32xf32> to vector<2x32xbf16>
    %c0_55 = arith.constant 0 : index
    %c0_56 = arith.constant 0 : index
    %55 = vector.load %arg9[%c0_55, %c0_56] : memref<32x128xbf16, #tpu.memory_space<vmem>>, vector<32x128xbf16>
    %cst_57 = arith.constant dense<0.000000e+00> : vector<2x128xf32>
    %56 = tpu.matmul %54, %55, %cst_57 {dimension_numbers = #tpu.dot_dimension_numbers<[1], [0], [0], [1], [0, 0, 1, 1], [], []>} : vector<2x32xbf16>, vector<32x128xbf16>, vector<2x128xf32> -> vector<2x128xf32>
    %c0_58 = arith.constant 0 : index
    %c0_59 = arith.constant 0 : index
    %57 = vector.load %arg10[%c0_58, %c0_59] : memref<1x128xf32, #tpu.memory_space<vmem>>, vector<1x128xf32>
    %58 = vector.broadcast %57 : vector<1x128xf32> to vector<2x128xf32>
    %59 = arith.addf %56, %58 : vector<2x128xf32>
    %c0_60 = arith.constant 0 : index
    %c0_61 = arith.constant 0 : index
    %60 = vector.load %arg11[%c0_60, %c0_61] : memref<648x128xf32, #tpu.memory_space<vmem>>, vector<648x128xf32>
    tpu.vector_store %arg11[%c0_60, %c0_61], %42 {strides = array<i32>} : memref<648x128xf32, #tpu.memory_space<vmem>>, vector<648x128xf32>,
    %c0_62 = arith.constant 0 : index
    %c0_63 = arith.constant 0 : index
    %61 = vector.load %arg12[%c0_62, %c0_63] : memref<2x128xf32, #tpu.memory_space<vmem>>, vector<2x128xf32>
    tpu.vector_store %arg12[%c0_62, %c0_63], %59 {strides = array<i32>} : memref<2x128xf32, #tpu.memory_space<vmem>>, vector<2x128xf32>,
    return
  }
}

</mosaic_0001>

<llo_original>
// kernel: _infer_jit.1
$region0: #{_infer_jit.1}
  #allocation0 [shape = 'u32[]', space=smem, size = 0x4, offset = 0x4, fixed_abs, tag = 'smem constant byte address 0x4 - core index']
  #allocation1 [shape = 'u32[144,128]{1,0:T(1,128)}', space=vmem, size = 0x12000, scoped, tag = 'internal scratch']
  #allocation2 [shape = 'bf16[712,32]{1,0:T(8,128)(2,1)}', space=vmem, size = 0x2c800, scoped, tag = 'scratch operand']
  #allocation3 [shape = 'bf16[648,288]{1,0:T(8,128)(2,1)}', space=vmem, size = 0x79800, scoped, tag = 'scratch operand']
  %s0 = inlined_call_operand.vmem [shape: bf16[648,37], index: 0, kind: input, shape index: {}]
  %s1 = inlined_call_operand.vmem [shape: bf16[37,32], index: 1, kind: input, shape index: {}]
  %s2 = inlined_call_operand.vmem [shape: bf16[288,32], index: 2, kind: input, shape index: {}]
  %s3 = inlined_call_operand.vmem [shape: f32[1,32], index: 3, kind: input, shape index: {}]
  %s4 = inlined_call_operand.vmem [shape: bf16[32,128], index: 4, kind: input, shape index: {}]
  %s5 = inlined_call_operand.vmem [shape: f32[1,128], index: 5, kind: input, shape index: {}]
  %s6 = inlined_call_operand.vmem [shape: bf16[2,648], index: 6, kind: input, shape index: {}]
  %s7 = inlined_call_operand.vmem [shape: bf16[32,32], index: 7, kind: input, shape index: {}]
  %s8 = inlined_call_operand.vmem [shape: f32[1,32], index: 8, kind: input, shape index: {}]
  %s9 = inlined_call_operand.vmem [shape: bf16[32,128], index: 9, kind: input, shape index: {}]
  %s10 = inlined_call_operand.vmem [shape: f32[1,128], index: 10, kind: input, shape index: {}]
  %s11 = inlined_call_operand.vmem [shape: f32[648,128], index: 11, kind: output, shape index: {0}]
  %s12 = inlined_call_operand.vmem [shape: f32[2,128], index: 12, kind: output, shape index: {1}]
  %13 = xla_tuple %s11, %s12
  %s14 = sld [smem:[#allocation0]]
  $region62: #{_infer_jit.1} parent=0
    _
  %s16 = ssub.s32 1, %s14
  %s17 = scalar_select 0, %s16, %s14
  // Predicated region
  $region2: #{_infer_jit.1} parent=0 // pred_check
    _
  $region3: #{_infer_jit.1} parent=0 // pred_check_branch
    %19 = sbr.rel (0) target = $region5
  $region4: #{_infer_jit.1} parent=0 // pred_region
    _
  $region5: #{_infer_jit.1} parent=0 // pred_fallthru
    _
  // Predicated region
  $region6: #{_infer_jit.1} parent=0 // pred_check
    _
  $region7: #{_infer_jit.1} parent=0 // pred_check_branch
    %21 = sbr.rel (0) target = $region9
  $region8: #{_infer_jit.1} parent=0 // pred_region
    _
  $region9: #{_infer_jit.1} parent=0 // pred_fallthru
    _
  // Predicated region
  $region10: #{_infer_jit.1} parent=0 // pred_check
    _
  $region11: #{_infer_jit.1} parent=0 // pred_check_branch
    %23 = sbr.rel (0) target = $region13
  $region12: #{_infer_jit.1} parent=0 // pred_region
    _
  $region13: #{_infer_jit.1} parent=0 // pred_fallthru
    _
  // Predicated region
  $region14: #{_infer_jit.1} parent=0 // pred_check
    _
  $region15: #{_infer_jit.1} parent=0 // pred_check_branch
    %25 = sbr.rel (0) target = $region17
  $region16: #{_infer_jit.1} parent=0 // pred_region
    _
  $region17: #{_infer_jit.1} parent=0 // pred_fallthru
    _
  // Predicated region
  $region18: #{_infer_jit.1} parent=0 // pred_check
    _
  $region19: #{_infer_jit.1} parent=0 // pred_check_branch
    %27 = sbr.rel (0) target = $region21
  $region20: #{_infer_jit.1} parent=0 // pred_region
    _
  $region21: #{_infer_jit.1} parent=0 // pred_fallthru
    _
  // Predicated region
  $region22: #{_infer_jit.1} parent=0 // pred_check
    _
  $region23: #{_infer_jit.1} parent=0 // pred_check_branch
    %29 = sbr.rel (0) target = $region25
  $region24: #{_infer_jit.1} parent=0 // pred_region
    _
  $region25: #{_infer_jit.1} parent=0 // pred_fallthru
    _
  // Predicated region
  $region26: #{_infer_jit.1} parent=0 // pred_check
    _
  $region27: #{_infer_jit.1} parent=0 // pred_check_branch
    %31 = sbr.rel (0) target = $region29
  $region28: #{_infer_jit.1} parent=0 // pred_region
    _
  $region29: #{_infer_jit.1} parent=0 // pred_fallthru
    _
  // Predicated region
  $region30: #{_infer_jit.1} parent=0 // pred_check
    _
  $region31: #{_infer_jit.1} parent=0 // pred_check_branch
    %33 = sbr.rel (0) target = $region33
  $region32: #{_infer_jit.1} parent=0 // pred_region
    _
  $region33: #{_infer_jit.1} parent=0 // pred_fallthru
    _
  // Predicated region
  $region34: #{_infer_jit.1} parent=0 // pred_check
    _
  $region35: #{_infer_jit.1} parent=0 // pred_check_branch
    %35 = sbr.rel (0) target = $region37
  $region36: #{_infer_jit.1} parent=0 // pred_region
    _
  $region37: #{_infer_jit.1} parent=0 // pred_fallthru
    _
  // Predicated region
  $region38: #{_infer_jit.1} parent=0 // pred_check
    _
  $region39: #{_infer_jit.1} parent=0 // pred_check_branch
    %37 = sbr.rel (0) target = $region41
  $region40: #{_infer_jit.1} parent=0 // pred_region
    _
  $region41: #{_infer_jit.1} parent=0 // pred_fallthru
    _
  // Predicated region
  $region42: #{_infer_jit.1} parent=0 // pred_check
    _
  $region43: #{_infer_jit.1} parent=0 // pred_check_branch
    %39 = sbr.rel (0) target = $region45
  $region44: #{_infer_jit.1} parent=0 // pred_region
    _
  $region45: #{_infer_jit.1} parent=0 // pred_fallthru
    _
  %v41 = vld [vmem:[%s0] sm:$0xf]
  %v42 = vld [vmem:[%s0 + $0x4] sm:$0xf]
  %v43 = vld [vmem:[%s0 + $0x8] sm:$0xf]
  %v44 = vld [vmem:[%s0 + $0xc] sm:$0xf]
  %v45 = vld [vmem:[%s0 + $0x10] sm:$0xf]
  %v46 = vld [vmem:[%s0 + $0x14] sm:$0xf]
  %v47 = vld [vmem:[%s0 + $0x18] sm:$0xf]
  %v48 = vld [vmem:[%s0 + $0x1c] sm:$0xf]
  %v49 = vld [vmem:[%s0 + $0x20] sm:$0xf]
  %v50 = vld [vmem:[%s0 + $0x24] sm:$0xf]
  %v51 = vld [vmem:[%s0 + $0x28] sm:$0xf]
  %v52 = vld [vmem:[%s0 + $0x2c] sm:$0xf]
  %v53 = vld [vmem:[%s0 + $0x30] sm:$0xf]
  %v54 = vld [vmem:[%s0 + $0x34] sm:$0xf]
  %v55 = vld [vmem:[%s0 + $0x38] sm:$0xf]
  %v56 = vld [vmem:[%s0 + $0x3c] sm:$0xf]
  %v57 = vld [vmem:[%s0 + $0x40] sm:$0xf]
  %v58 = vld [vmem:[%s0 + $0x44] sm:$0xf]
  %v59 = vld [vmem:[%s0 + $0x48] sm:$0xf]
  %v60 = vld [vmem:[%s0 + $0x4c] sm:$0xf]
  %v61 = vld [vmem:[%s0 + $0x50] sm:$0xf]
  %v62 = vld [vmem:[%s0 + $0x54] sm:$0xf]
  %v63 = vld [vmem:[%s0 + $0x58] sm:$0xf]
  %v64 = vld [vmem:[%s0 + $0x5c] sm:$0xf]
  %v65 = vld [vmem:[%s0 + $0x60] sm:$0xf]
  %v66 = vld [vmem:[%s0 + $0x64] sm:$0xf]
  %v67 = vld [vmem:[%s0 + $0x68] sm:$0xf]
  %v68 = vld [vmem:[%s0 + $0x6c] sm:$0xf]
  %v69 = vld [vmem:[%s0 + $0x70] sm:$0xf]
  %v70 = vld [vmem:[%s0 + $0x74] sm:$0xf]
  %v71 = vld [vmem:[%s0 + $0x78] sm:$0xf]
  %v72 = vld [vmem:[%s0 + $0x7c] sm:$0xf]
  %v73 = vld [vmem:[%s0 + $0x80] sm:$0xf]
  %v74 = vld [vmem:[%s0 + $0x84] sm:$0xf]
  %v75 = vld [vmem:[%s0 + $0x88] sm:$0xf]
  %v76 = vld [vmem:[%s0 + $0x8c] sm:$0xf]
  %v77 = vld [vmem:[%s0 + $0x90] sm:$0xf]
  %v78 = vld [vmem:[%s0 + $0x94] sm:$0xf]
  %v79 = vld [vmem:[%s0 + $0x98] sm:$0xf]
  %v80 = vld [vmem:[%s0 + $0x9c] sm:$0xf]
  %v81 = vld [vmem:[%s0 + $0xa0] sm:$0xf]
  %v82 = vld [vmem:[%s0 + $0xa4] sm:$0xf]
  %v83 = vld [vmem:[%s0 + $0xa8] sm:$0xf]
  %v84 = vld [vmem:[%s0 + $0xac] sm:$0xf]
  %v85 = vld [vmem:[%s0 + $0xb0] sm:$0xf]
  %v86 = vld [vmem:[%s0 + $0xb4] sm:$0xf]
  %v87 = vld [vmem:[%s0 + $0xb8] sm:$0xf]
  %v88 = vld [vmem:[%s0 + $0xbc] sm:$0xf]
  %v89 = vld [vmem:[%s0 + $0xc0] sm:$0xf]
  %v90 = vld [vmem:[%s0 + $0xc4] sm:$0xf]
  %v91 = vld [vmem:[%s0 + $0xc8] sm:$0xf]
  %v92 = vld [vmem:[%s0 + $0xcc] sm:$0xf]
  %v93 = vld [vmem:[%s0 + $0xd0] sm:$0xf]
  %v94 = vld [vmem:[%s0 + $0xd4] sm:$0xf]
  %v95 = vld [vmem:[%s0 + $0xd8] sm:$0xf]
  %v96 = vld [vmem:[%s0 + $0xdc] sm:$0xf]
  %v97 = vld [vmem:[%s0 + $0xe0] sm:$0xf]
  %v98 = vld [vmem:[%s0 + $0xe4] sm:$0xf]
  %v99 = vld [vmem:[%s0 + $0xe8] sm:$0xf]
  %v100 = vld [vmem:[%s0 + $0xec] sm:$0xf]
  %v101 = vld [vmem:[%s0 + $0xf0] sm:$0xf]
  %v102 = vld [vmem:[%s0 + $0xf4] sm:$0xf]
  %v103 = vld [vmem:[%s0 + $0xf8] sm:$0xf]
  %v104 = vld [vmem:[%s0 + $0xfc] sm:$0xf]
  %v105 = vld [vmem:[%s0 + $0x100] sm:$0xf]
  %v106 = vld [vmem:[%s0 + $0x104] sm:$0xf]
  %v107 = vld [vmem:[%s0 + $0x108] sm:$0xf]
  %v108 = vld [vmem:[%s0 + $0x10c] sm:$0xf]
  %v109 = vld [vmem:[%s0 + $0x110] sm:$0xf]
  %v110 = vld [vmem:[%s0 + $0x114] sm:$0xf]
  %v111 = vld [vmem:[%s0 + $0x118] sm:$0xf]
  %v112 = vld [vmem:[%s0 + $0x11c] sm:$0xf]
  %v113 = vld [vmem:[%s0 + $0x120] sm:$0xf]
  %v114 = vld [vmem:[%s0 + $0x124] sm:$0xf]
  %v115 = vld [vmem:[%s0 + $0x128] sm:$0xf]
  %v116 = vld [vmem:[%s0 + $0x12c] sm:$0xf]
  %v117 = vld [vmem:[%s0 + $0x130] sm:$0xf]
  %v118 = vld [vmem:[%s0 + $0x134] sm:$0xf]
  %v119 = vld [vmem:[%s0 + $0x138] sm:$0xf]
  %v120 = vld [vmem:[%s0 + $0x13c] sm:$0xf]
  %v121 = vld [vmem:[%s0 + $0x140] sm:$0xf]
  %v122 = vld [vmem:[%s1] sm:$0xf]
  %v123 = vld [vmem:[%s1 + $0x4] sm:$0xf]
  %v124 = vld [vmem:[%s1 + $0x8] sm:$0xf]
  %v125 = vld [vmem:[%s1 + $0xc] sm:$0xf]
  %v126 = vld [vmem:[%s1 + $0x10] sm:$0x7]
  %v208 = vunpack.c.l.b16 %v41
  %v209 = vunpack.c.l.b16 %v42
  %v210 = vunpack.c.l.b16 %v43
  %v211 = vunpack.c.l.b16 %v44
  %v212 = vunpack.c.l.b16 %v45
  %v213 = vunpack.c.l.b16 %v46
  %v214 = vunpack.c.l.b16 %v47
  %v215 = vunpack.c.l.b16 %v48
  %v216 = vunpack.c.l.b16 %v49
  %v217 = vunpack.c.l.b16 %v50
  %v218 = vunpack.c.l.b16 %v51
  %v219 = vunpack.c.l.b16 %v52
  %v220 = vunpack.c.l.b16 %v53
  %v221 = vunpack.c.l.b16 %v54
  %v222 = vunpack.c.l.b16 %v55
  %v223 = vunpack.c.l.b16 %v56
  %v224 = vunpack.c.l.b16 %v57
  %v225 = vunpack.c.l.b16 %v58
  %v226 = vunpack.c.l.b16 %v59
  %v227 = vunpack.c.l.b16 %v60
  %v228 = vunpack.c.l.b16 %v61
  %v229 = vunpack.c.l.b16 %v62
  %v230 = vunpack.c.l.b16 %v63
  %v231 = vunpack.c.l.b16 %v64
  %v232 = vunpack.c.l.b16 %v65
  %v233 = vunpack.c.l.b16 %v66
  %v234 = vunpack.c.l.b16 %v67
  %v235 = vunpack.c.l.b16 %v68
  %v236 = vunpack.c.l.b16 %v69
  %v237 = vunpack.c.l.b16 %v70
  %v238 = vunpack.c.l.b16 %v71
  %v239 = vunpack.c.l.b16 %v72
  %v240 = vunpack.c.l.b16 %v73
  %v241 = vunpack.c.l.b16 %v74
  %v242 = vunpack.c.l.b16 %v75
  %v243 = vunpack.c.l.b16 %v76
  %v244 = vunpack.c.l.b16 %v77
  %v245 = vunpack.c.l.b16 %v78
  %v246 = vunpack.c.l.b16 %v79
  %v247 = vunpack.c.l.b16 %v80
  %v248 = vunpack.c.l.b16 %v81
  %v249 = vunpack.c.l.b16 %v82
  %v250 = vunpack.c.l.b16 %v83
  %v251 = vunpack.c.l.b16 %v84
  %v252 = vunpack.c.l.b16 %v85
  %v253 = vunpack.c.l.b16 %v86
  %v254 = vunpack.c.l.b16 %v87
  %v255 = vunpack.c.l.b16 %v88
  %v256 = vunpack.c.l.b16 %v89
  %v257 = vunpack.c.l.b16 %v90
  %v258 = vunpack.c.l.b16 %v91
  %v259 = vunpack.c.l.b16 %v92
  %v260 = vunpack.c.l.b16 %v93
  %v261 = vunpack.c.l.b16 %v94
  %v262 = vunpack.c.l.b16 %v95
  %v263 = vunpack.c.l.b16 %v96
  %v264 = vunpack.c.l.b16 %v97
  %v265 = vunpack.c.l.b16 %v98
  %v266 = vunpack.c.l.b16 %v99
  %v267 = vunpack.c.l.b16 %v100
  %v268 = vunpack.c.l.b16 %v101
  %v269 = vunpack.c.l.b16 %v102
  %v270 = vunpack.c.l.b16 %v103
  %v271 = vunpack.c.l.b16 %v104
  %v272 = vunpack.c.l.b16 %v105
  %v273 = vunpack.c.l.b16 %v106
  %v274 = vunpack.c.l.b16 %v107
  %v275 = vunpack.c.l.b16 %v108
  %v276 = vunpack.c.l.b16 %v109
  %v277 = vunpack.c.l.b16 %v110
  %v278 = vunpack.c.l.b16 %v111
  %v279 = vunpack.c.l.b16 %v112
  %v280 = vunpack.c.l.b16 %v113
  %v281 = vunpack.c.l.b16 %v114
  %v282 = vunpack.c.l.b16 %v115
  %v283 = vunpack.c.l.b16 %v116
  %v284 = vunpack.c.l.b16 %v117
  %v285 = vunpack.c.l.b16 %v118
  %v286 = vunpack.c.l.b16 %v119
  %v287 = vunpack.c.l.b16 %v120
  %v288 = vunpack.c.l.b16 %v121
  %v289 = vpack.c.b16 %v209, %v208
  %v290 = vpack.c.b16 %v211, %v210
  %v291 = vpack.c.b16 %v213, %v212
  %v292 = vpack.c.b16 %v215, %v214
  %v293 = vpack.c.b16 %v217, %v216
  %v294 = vpack.c.b16 %v219, %v218
  %v295 = vpack.c.b16 %v221, %v220
  %v296 = vpack.c.b16 %v223, %v222
  %v297 = vpack.c.b16 %v225, %v224
  %v298 = vpack.c.b16 %v227, %v226
  %v299 = vpack.c.b16 %v229, %v228
  %v300 = vpack.c.b16 %v231, %v230
  %v301 = vpack.c.b16 %v233, %v232
  %v302 = vpack.c.b16 %v235, %v234
  %v303 = vpack.c.b16 %v237, %v236
  %v304 = vpack.c.b16 %v239, %v238
  %v305 = vpack.c.b16 %v241, %v240
  %v306 = vpack.c.b16 %v243, %v242
  %v307 = vpack.c.b16 %v245, %v244
  %v308 = vpack.c.b16 %v247, %v246
  %v309 = vpack.c.b16 %v249, %v248
  %v310 = vpack.c.b16 %v251, %v250
  %v311 = vpack.c.b16 %v253, %v252
  %v312 = vpack.c.b16 %v255, %v254
  %v313 = vpack.c.b16 %v257, %v256
  %v314 = vpack.c.b16 %v259, %v258
  %v315 = vpack.c.b16 %v261, %v260
  %v316 = vpack.c.b16 %v263, %v262
  %v317 = vpack.c.b16 %v265, %v264
  %v318 = vpack.c.b16 %v267, %v266
  %v319 = vpack.c.b16 %v269, %v268
  %v320 = vpack.c.b16 %v271, %v270
  %v321 = vpack.c.b16 %v273, %v272
  %v322 = vpack.c.b16 %v275, %v274
  %v323 = vpack.c.b16 %v277, %v276
  %v324 = vpack.c.b16 %v279, %v278
  %v325 = vpack.c.b16 %v281, %v280
  %v326 = vpack.c.b16 %v283, %v282
  %v327 = vpack.c.b16 %v285, %v284
  %v328 = vpack.c.b16 %v287, %v286
  %v329 = vpack.c.b16 %v288, %v288
  %v335 = vunpack.c.l.b16 %v122
  %v336 = vunpack.c.l.b16 %v123
  %v337 = vunpack.c.l.b16 %v124
  %v338 = vunpack.c.l.b16 %v125
  %v339 = vunpack.c.l.b16 %v126
  %v340 = vpack.c.b16 %v336, %v335
  %v341 = vpack.c.b16 %v338, %v337
  %v342 = vpack.c.b16 %v339, %v339
  %vm345 = vcmask 302080
  %v347 = vsel %vm345, %v289, 0
  %v350 = vsel %vm345, %v290, 0
  %v353 = vsel %vm345, %v291, 0
  %v356 = vsel %vm345, %v292, 0
  %v359 = vsel %vm345, %v293, 0
  %v362 = vsel %vm345, %v294, 0
  %v365 = vsel %vm345, %v295, 0
  %v368 = vsel %vm345, %v296, 0
  %v371 = vsel %vm345, %v297, 0
  %v374 = vsel %vm345, %v298, 0
  %v377 = vsel %vm345, %v299, 0
  %v380 = vsel %vm345, %v300, 0
  %v383 = vsel %vm345, %v301, 0
  %v386 = vsel %vm345, %v302, 0
  %v389 = vsel %vm345, %v303, 0
  %v392 = vsel %vm345, %v304, 0
  %v395 = vsel %vm345, %v305, 0
  %v398 = vsel %vm345, %v306, 0
  %v401 = vsel %vm345, %v307, 0
  %v404 = vsel %vm345, %v308, 0
  %v407 = vsel %vm345, %v309, 0
  %v410 = vsel %vm345, %v310, 0
  %v413 = vsel %vm345, %v311, 0
  %v416 = vsel %vm345, %v312, 0
  %v419 = vsel %vm345, %v313, 0
  %v422 = vsel %vm345, %v314, 0
  %v425 = vsel %vm345, %v315, 0
  %v428 = vsel %vm345, %v316, 0
  %v431 = vsel %vm345, %v317, 0
  %v434 = vsel %vm345, %v318, 0
  %v437 = vsel %vm345, %v319, 0
  %v440 = vsel %vm345, %v320, 0
  %v443 = vsel %vm345, %v321, 0
  %v446 = vsel %vm345, %v322, 0
  %v449 = vsel %vm345, %v323, 0
  %v452 = vsel %vm345, %v324, 0
  %v455 = vsel %vm345, %v325, 0
  %v458 = vsel %vm345, %v326, 0
  %v461 = vsel %vm345, %v327, 0
  %v464 = vsel %vm345, %v328, 0
  %v467 = vsel %vm345, %v329, 0
  %vm469 = vcmask 1041408
  %vm470 = vcmask 1042432
  %v471 = vsel %vm469, 4294967295, 65535
  %v472 = vsel %vm470, %v471, 0
  %v474 = vand.u32 %v342, %v472
  %476 = vmatprep.subr.bf16.mxu0 0
  %477 = vmatpush1.bf16.msra.mxu0 %v340
  %478 = vmatprep.subr.bf16.mxu0 0
  %479 = vmatpush1.bf16.msra.mxu0 %v341
  %480 = vmatprep.subr.bf16.mxu0 0
  %481 = vmatpush1.bf16.msra.mxu0 %v474
  %482 = vmatprep.subr.bf16.mxu0 0
  %483 = vmatpush1.bf16.msra.mxu0 0
  %484 = vmatprep.subr.bf16.mxu0 0
  %485 = vmatpush1.bf16.msra.mxu0 0
  %486 = vmatprep.subr.bf16.mxu0 0
  %487 = vmatpush1.bf16.msra.mxu0 0
  %488 = vmatprep.subr.bf16.mxu0 0
  %489 = vmatpush1.bf16.msra.mxu0 0
  %490 = vmatprep.subr.bf16.mxu0 0
  %491 = vmatpush1.bf16.msra.mxu0 0
  %492 = vmatprep.subr.bf16.mxu0 0
  %493 = vmatpush1.bf16.msra.mxu0 0
  %494 = vmatprep.subr.bf16.mxu0 0
  %495 = vmatpush1.bf16.msra.mxu0 0
  %496 = vmatprep.subr.bf16.mxu0 0
  %497 = vmatpush1.bf16.msra.mxu0 0
  %498 = vmatprep.subr.bf16.mxu0 0
  %499 = vmatpush1.bf16.msra.mxu0 0
  %500 = vmatprep.subr.bf16.mxu0 0
  %501 = vmatpush1.bf16.msra.mxu0 0
  %502 = vmatprep.subr.bf16.mxu0 0
  %503 = vmatpush1.bf16.msra.mxu0 0
  %504 = vmatprep.subr.bf16.mxu0 0
  %505 = vmatpush1.bf16.msra.mxu0 0
  %506 = vmatprep.subr.bf16.mxu0 0
  %507 = vmatpush1.bf16.msra.mxu0 0
  %508 = vmatprep.mubr.bf16.mxu0 0
  %509 = vmatmul.mubr.bf16.gmra.mrb[0].mxu0 %v347
  %v510 = vpop.f32.mrb[0].mxu0
  %v511 = vadd.f32 0.0, %v510
  %v512 = vpop.f32.mrb[0].mxu0
  %v513 = vpop.f32.mrb[0].mxu0
  %v514 = vadd.f32 0.0, %v513
  %v515 = vpop.f32.mrb[0].mxu0
  %516 = vmatprep.mubr.bf16.mxu0 0
  %517 = vmatmul.mubr.bf16.gmra.mrb[0].mxu0 %v350
  %v518 = vpop.f32.mrb[0].mxu0
  %v519 = vadd.f32 0.0, %v518
  %v520 = vpop.f32.mrb[0].mxu0
  %v521 = vpop.f32.mrb[0].mxu0
  %v522 = vadd.f32 0.0, %v521
  %v523 = vpop.f32.mrb[0].mxu0
  %524 = vmatprep.mubr.bf16.mxu0 0
  %525 = vmatmul.mubr.bf16.gmra.mrb[0].mxu0 %v353
  %v526 = vpop.f32.mrb[0].mxu0
  %v527 = vadd.f32 0.0, %v526
  %v528 = vpop.f32.mrb[0].mxu0
  %v529 = vpop.f32.mrb[0].mxu0
  %v530 = vadd.f32 0.0, %v529
  %v531 = vpop.f32.mrb[0].mxu0
  %532 = vmatprep.mubr.bf16.mxu0 0
  %533 = vmatmul.mubr.bf16.gmra.mrb[0].mxu0 %v356
  %v534 = vpop.f32.mrb[0].mxu0
  %v535 = vadd.f32 0.0, %v534
  %v536 = vpop.f32.mrb[0].mxu0
  %v537 = vpop.f32.mrb[0].mxu0
  %v538 = vadd.f32 0.0, %v537
  %v539 = vpop.f32.mrb[0].mxu0
  %540 = vmatprep.mubr.bf16.mxu0 0
  %541 = vmatmul.mubr.bf16.gmra.mrb[0].mxu0 %v359
  %v542 = vpop.f32.mrb[0].mxu0
  %v543 = vadd.f32 0.0, %v542
  %v544 = vpop.f32.mrb[0].mxu0
  %v545 = vpop.f32.mrb[0].mxu0
  %v546 = vadd.f32 0.0, %v545
  %v547 = vpop.f32.mrb[0].mxu0
  %548 = vmatprep.mubr.bf16.mxu0 0
  %549 = vmatmul.mubr.bf16.gmra.mrb[0].mxu0 %v362
  %v550 = vpop.f32.mrb[0].mxu0
  %v551 = vadd.f32 0.0, %v550
  %v552 = vpop.f32.mrb[0].mxu0
  %v553 = vpop.f32.mrb[0].mxu0
  %v554 = vadd.f32 0.0, %v553
  %v555 = vpop.f32.mrb[0].mxu0
  %556 = vmatprep.mubr.bf16.mxu0 0
  %557 = vmatmul.mubr.bf16.gmra.mrb[0].mxu0 %v365
  %v558 = vpop.f32.mrb[0].mxu0
  %v559 = vadd.f32 0.0, %v558
  %v560 = vpop.f32.mrb[0].mxu0
  %v561 = vpop.f32.mrb[0].mxu0
  %v562 = vadd.f32 0.0, %v561
  %v563 = vpop.f32.mrb[0].mxu0
  %564 = vmatprep.mubr.bf16.mxu0 0
  %565 = vmatmul.mubr.bf16.gmra.mrb[0].mxu0 %v368
  %v566 = vpop.f32.mrb[0].mxu0
  %v567 = vadd.f32 0.0, %v566
  %v568 = vpop.f32.mrb[0].mxu0
  %v569 = vpop.f32.mrb[0].mxu0
  %v570 = vadd.f32 0.0, %v569
  %v571 = vpop.f32.mrb[0].mxu0
  %572 = vmatprep.mubr.bf16.mxu0 0
  %573 = vmatmul.mubr.bf16.gmra.mrb[0].mxu0 %v371
  %v574 = vpop.f32.mrb[0].mxu0
  %v575 = vadd.f32 0.0, %v574
  %v576 = vpop.f32.mrb[0].mxu0
  %v577 = vpop.f32.mrb[0].mxu0
  %v578 = vadd.f32 0.0, %v577
  %v579 = vpop.f32.mrb[0].mxu0
  %580 = vmatprep.mubr.bf16.mxu0 0
  %581 = vmatmul.mubr.bf16.gmra.mrb[0].mxu0 %v374
  %v582 = vpop.f32.mrb[0].mxu0
  %v583 = vadd.f32 0.0, %v582
  %v584 = vpop.f32.mrb[0].mxu0
  %v585 = vpop.f32.mrb[0].mxu0
  %v586 = vadd.f32 0.0, %v585
  %v587 = vpop.f32.mrb[0].mxu0
  %588 = vmatprep.mubr.bf16.mxu0 0
  %589 = vmatmul.mubr.bf16.gmra.mrb[0].mxu0 %v377
  %v590 = vpop.f32.mrb[0].mxu0
  %v591 = vadd.f32 0.0, %v590
  %v592 = vpop.f32.mrb[0].mxu0
  %v593 = vpop.f32.mrb[0].mxu0
  %v594 = vadd.f32 0.0, %v593
  %v595 = vpop.f32.mrb[0].mxu0
  %596 = vmatprep.mubr.bf16.mxu0 0
  %597 = vmatmul.mubr.bf16.gmra.mrb[0].mxu0 %v380
  %v598 = vpop.f32.mrb[0].mxu0
  %v599 = vadd.f32 0.0, %v598
  %v600 = vpop.f32.mrb[0].mxu0
  %v601 = vpop.f32.mrb[0].mxu0
  %v602 = vadd.f32 0.0, %v601
  %v603 = vpop.f32.mrb[0].mxu0
  %604 = vmatprep.mubr.bf16.mxu0 0
  %605 = vmatmul.mubr.bf16.gmra.mrb[0].mxu0 %v383
  %v606 = vpop.f32.mrb[0].mxu0
  %v607 = vadd.f32 0.0, %v606
  %v608 = vpop.f32.mrb[0].mxu0
  %v609 = vpop.f32.mrb[0].mxu0
  %v610 = vadd.f32 0.0, %v609
  %v611 = vpop.f32.mrb[0].mxu0
  %612 = vmatprep.mubr.bf16.mxu0 0
  %613 = vmatmul.mubr.bf16.gmra.mrb[0].mxu0 %v386
  %v614 = vpop.f32.mrb[0].mxu0
  %v615 = vadd.f32 0.0, %v614
  %v616 = vpop.f32.mrb[0].mxu0
  %v617 = vpop.f32.mrb[0].mxu0
  %v618 = vadd.f32 0.0, %v617
  %v619 = vpop.f32.mrb[0].mxu0
  %620 = vmatprep.mubr.bf16.mxu0 0
  %621 = vmatmul.mubr.bf16.gmra.mrb[0].mxu0 %v389
  %v622 = vpop.f32.mrb[0].mxu0
  %v623 = vadd.f32 0.0, %v622
  %v624 = vpop.f32.mrb[0].mxu0
  %v625 = vpop.f32.mrb[0].mxu0
  %v626 = vadd.f32 0.0, %v625
  %v627 = vpop.f32.mrb[0].mxu0
  %628 = vmatprep.mubr.bf16.mxu0 0
  %629 = vmatmul.mubr.bf16.gmra.mrb[0].mxu0 %v392
  %v630 = vpop.f32.mrb[0].mxu0
  %v631 = vadd.f32 0.0, %v630
  %v632 = vpop.f32.mrb[0].mxu0
  %v633 = vpop.f32.mrb[0].mxu0
  %v634 = vadd.f32 0.0, %v633
  %v635 = vpop.f32.mrb[0].mxu0
  %636 = vmatprep.mubr.bf16.mxu0 0
  %637 = vmatmul.mubr.bf16.gmra.mrb[0].mxu0 %v395
  %v638 = vpop.f32.mrb[0].mxu0
  %v639 = vadd.f32 0.0, %v638
  %v640 = vpop.f32.mrb[0].mxu0
  %v641 = vpop.f32.mrb[0].mxu0
  %v642 = vadd.f32 0.0, %v641
  %v643 = vpop.f32.mrb[0].mxu0
  %644 = vmatprep.mubr.bf16.mxu0 0
  %645 = vmatmul.mubr.bf16.gmra.mrb[0].mxu0 %v398
  %v646 = vpop.f32.mrb[0].mxu0
  %v647 = vadd.f32 0.0, %v646
  %v648 = vpop.f32.mrb[0].mxu0
  %v649 = vpop.f32.mrb[0].mxu0
  %v650 = vadd.f32 0.0, %v649
  %v651 = vpop.f32.mrb[0].mxu0
  %652 = vmatprep.mubr.bf16.mxu0 0
  %653 = vmatmul.mubr.bf16.gmra.mrb[0].mxu0 %v401
  %v654 = vpop.f32.mrb[0].mxu0
  %v655 = vadd.f32 0.0, %v654
  %v656 = vpop.f32.mrb[0].mxu0
  %v657 = vpop.f32.mrb[0].mxu0
  %v658 = vadd.f32 0.0, %v657
  %v659 = vpop.f32.mrb[0].mxu0
  %660 = vmatprep.mubr.bf16.mxu0 0
  %661 = vmatmul.mubr.bf16.gmra.mrb[0].mxu0 %v404
  %v662 = vpop.f32.mrb[0].mxu0
  %v663 = vadd.f32 0.0, %v662
  %v664 = vpop.f32.mrb[0].mxu0
  %v665 = vpop.f32.mrb[0].mxu0
  %v666 = vadd.f32 0.0, %v665
  %v667 = vpop.f32.mrb[0].mxu0
  %668 = vmatprep.mubr.bf16.mxu0 0
  %669 = vmatmul.mubr.bf16.gmra.mrb[0].mxu0 %v407
  %v670 = vpop.f32.mrb[0].mxu0
  %v671 = vadd.f32 0.0, %v670
  %v672 = vpop.f32.mrb[0].mxu0
  %v673 = vpop.f32.mrb[0].mxu0
  %v674 = vadd.f32 0.0, %v673
  %v675 = vpop.f32.mrb[0].mxu0
  %676 = vmatprep.mubr.bf16.mxu0 0
  %677 = vmatmul.mubr.bf16.gmra.mrb[0].mxu0 %v410
  %v678 = vpop.f32.mrb[0].mxu0
  %v679 = vadd.f32 0.0, %v678
  %v680 = vpop.f32.mrb[0].mxu0
  %v681 = vpop.f32.mrb[0].mxu0
  %v682 = vadd.f32 0.0, %v681
  %v683 = vpop.f32.mrb[0].mxu0
  %684 = vmatprep.mubr.bf16.mxu0 0
  %685 = vmatmul.mubr.bf16.gmra.mrb[0].mxu0 %v413
  %v686 = vpop.f32.mrb[0].mxu0
  %v687 = vadd.f32 0.0, %v686
  %v688 = vpop.f32.mrb[0].mxu0
  %v689 = vpop.f32.mrb[0].mxu0
  %v690 = vadd.f32 0.0, %v689
  %v691 = vpop.f32.mrb[0].mxu0
  %692 = vmatprep.mubr.bf16.mxu0 0
  %693 = vmatmul.mubr.bf16.gmra.mrb[0].mxu0 %v416
  %v694 = vpop.f32.mrb[0].mxu0
  %v695 = vadd.f32 0.0, %v694
  %v696 = vpop.f32.mrb[0].mxu0
  %v697 = vpop.f32.mrb[0].mxu0
  %v698 = vadd.f32 0.0, %v697
  %v699 = vpop.f32.mrb[0].mxu0
  %700 = vmatprep.mubr.bf16.mxu0 0
  %701 = vmatmul.mubr.bf16.gmra.mrb[0].mxu0 %v419
  %v702 = vpop.f32.mrb[0].mxu0
  %v703 = vadd.f32 0.0, %v702
  %v704 = vpop.f32.mrb[0].mxu0
  %v705 = vpop.f32.mrb[0].mxu0
  %v706 = vadd.f32 0.0, %v705
  %v707 = vpop.f32.mrb[0].mxu0
  %708 = vmatprep.mubr.bf16.mxu0 0
  %709 = vmatmul.mubr.bf16.gmra.mrb[0].mxu0 %v422
  %v710 = vpop.f32.mrb[0].mxu0
  %v711 = vadd.f32 0.0, %v710
  %v712 = vpop.f32.mrb[0].mxu0
  %v713 = vpop.f32.mrb[0].mxu0
  %v714 = vadd.f32 0.0, %v713
  %v715 = vpop.f32.mrb[0].mxu0
  %716 = vmatprep.mubr.bf16.mxu0 0
  %717 = vmatmul.mubr.bf16.gmra.mrb[0].mxu0 %v425
  %v718 = vpop.f32.mrb[0].mxu0
  %v719 = vadd.f32 0.0, %v718
  %v720 = vpop.f32.mrb[0].mxu0
  %v721 = vpop.f32.mrb[0].mxu0
  %v722 = vadd.f32 0.0, %v721
  %v723 = vpop.f32.mrb[0].mxu0
  %724 = vmatprep.mubr.bf16.mxu0 0
  %725 = vmatmul.mubr.bf16.gmra.mrb[0].mxu0 %v428
  %v726 = vpop.f32.mrb[0].mxu0
  %v727 = vadd.f32 0.0, %v726
  %v728 = vpop.f32.mrb[0].mxu0
  %v729 = vpop.f32.mrb[0].mxu0
  %v730 = vadd.f32 0.0, %v729
  %v731 = vpop.f32.mrb[0].mxu0
  %732 = vmatprep.mubr.bf16.mxu0 0
  %733 = vmatmul.mubr.bf16.gmra.mrb[0].mxu0 %v431
  %v734 = vpop.f32.mrb[0].mxu0
  %v735 = vadd.f32 0.0, %v734
  %v736 = vpop.f32.mrb[0].mxu0
  %v737 = vpop.f32.mrb[0].mxu0
  %v738 = vadd.f32 0.0, %v737
  %v739 = vpop.f32.mrb[0].mxu0
  %740 = vmatprep.mubr.bf16.mxu0 0
  %741 = vmatmul.mubr.bf16.gmra.mrb[0].mxu0 %v434
  %v742 = vpop.f32.mrb[0].mxu0
  %v743 = vadd.f32 0.0, %v742
  %v744 = vpop.f32.mrb[0].mxu0
  %v745 = vpop.f32.mrb[0].mxu0
  %v746 = vadd.f32 0.0, %v745
  %v747 = vpop.f32.mrb[0].mxu0
  %748 = vmatprep.mubr.bf16.mxu0 0
  %749 = vmatmul.mubr.bf16.gmra.mrb[0].mxu0 %v437
  %v750 = vpop.f32.mrb[0].mxu0
  %v751 = vadd.f32 0.0, %v750
  %v752 = vpop.f32.mrb[0].mxu0
  %v753 = vpop.f32.mrb[0].mxu0
  %v754 = vadd.f32 0.0, %v753
  %v755 = vpop.f32.mrb[0].mxu0
  %756 = vmatprep.mubr.bf16.mxu0 0
  %757 = vmatmul.mubr.bf16.gmra.mrb[0].mxu0 %v440
  %v758 = vpop.f32.mrb[0].mxu0
  %v759 = vadd.f32 0.0, %v758
  %v760 = vpop.f32.mrb[0].mxu0
  %v761 = vpop.f32.mrb[0].mxu0
  %v762 = vadd.f32 0.0, %v761
  %v763 = vpop.f32.mrb[0].mxu0
  %764 = vmatprep.mubr.bf16.mxu0 0
  %765 = vmatmul.mubr.bf16.gmra.mrb[0].mxu0 %v443
  %v766 = vpop.f32.mrb[0].mxu0
  %v767 = vadd.f32 0.0, %v766
  %v768 = vpop.f32.mrb[0].mxu0
  %v769 = vpop.f32.mrb[0].mxu0
  %v770 = vadd.f32 0.0, %v769
  %v771 = vpop.f32.mrb[0].mxu0
  %772 = vmatprep.mubr.bf16.mxu0 0
  %773 = vmatmul.mubr.bf16.gmra.mrb[0].mxu0 %v446
  %v774 = vpop.f32.mrb[0].mxu0
  %v775 = vadd.f32 0.0, %v774
  %v776 = vpop.f32.mrb[0].mxu0
  %v777 = vpop.f32.mrb[0].mxu0
  %v778 = vadd.f32 0.0, %v777
  %v779 = vpop.f32.mrb[0].mxu0
  %780 = vmatprep.mubr.bf16.mxu0 0
  %781 = vmatmul.mubr.bf16.gmra.mrb[0].mxu0 %v449
  %v782 = vpop.f32.mrb[0].mxu0
  %v783 = vadd.f32 0.0, %v782
  %v784 = vpop.f32.mrb[0].mxu0
  %v785 = vpop.f32.mrb[0].mxu0
  %v786 = vadd.f32 0.0, %v785
  %v787 = vpop.f32.mrb[0].mxu0
  %788 = vmatprep.mubr.bf16.mxu0 0
  %789 = vmatmul.mubr.bf16.gmra.mrb[0].mxu0 %v452
  %v790 = vpop.f32.mrb[0].mxu0
  %v791 = vadd.f32 0.0, %v790
  %v792 = vpop.f32.mrb[0].mxu0
  %v793 = vpop.f32.mrb[0].mxu0
  %v794 = vadd.f32 0.0, %v793
  %v795 = vpop.f32.mrb[0].mxu0
  %796 = vmatprep.mubr.bf16.mxu0 0
  %797 = vmatmul.mubr.bf16.gmra.mrb[0].mxu0 %v455
  %v798 = vpop.f32.mrb[0].mxu0
  %v799 = vadd.f32 0.0, %v798
  %v800 = vpop.f32.mrb[0].mxu0
  %v801 = vpop.f32.mrb[0].mxu0
  %v802 = vadd.f32 0.0, %v801
  %v803 = vpop.f32.mrb[0].mxu0
  %804 = vmatprep.mubr.bf16.mxu0 0
  %805 = vmatmul.mubr.bf16.gmra.mrb[0].mxu0 %v458
  %v806 = vpop.f32.mrb[0].mxu0
  %v807 = vadd.f32 0.0, %v806
  %v808 = vpop.f32.mrb[0].mxu0
  %v809 = vpop.f32.mrb[0].mxu0
  %v810 = vadd.f32 0.0, %v809
  %v811 = vpop.f32.mrb[0].mxu0
  %812 = vmatprep.mubr.bf16.mxu0 0
  %813 = vmatmul.mubr.bf16.gmra.mrb[0].mxu0 %v461
  %v814 = vpop.f32.mrb[0].mxu0
  %v815 = vadd.f32 0.0, %v814
  %v816 = vpop.f32.mrb[0].mxu0
  %v817 = vpop.f32.mrb[0].mxu0
  %v818 = vadd.f32 0.0, %v817
  %v819 = vpop.f32.mrb[0].mxu0
  %820 = vmatprep.mubr.bf16.mxu0 0
  %821 = vmatmul.mubr.bf16.gmra.mrb[0].mxu0 %v464
  %v822 = vpop.f32.mrb[0].mxu0
  %v823 = vadd.f32 0.0, %v822
  %v824 = vpop.f32.mrb[0].mxu0
  %v825 = vpop.f32.mrb[0].mxu0
  %v826 = vadd.f32 0.0, %v825
  %v827 = vpop.f32.mrb[0].mxu0
  %828 = vmatprep.mubr.bf16.mxu0 0
  %829 = vmatmul.mubr.bf16.gmra.mrb[0].mxu0 %v467
  %v830 = vpop.f32.mrb[0].mxu0
  %v831 = vadd.f32 0.0, %v830
  %v832 = vpop.f32.mrb[0].mxu0
  %v833 = vpop.f32.mrb[0].mxu0
  %v834 = vpop.f32.mrb[0].mxu0
  %835 = vdwg.mxu0
  %v836 = vmax.f32 %v511, 0.0
  %v837 = vmax.f32 %v514, 0.0
  %v838 = vmax.f32 %v519, 0.0
  %v839 = vmax.f32 %v522, 0.0
  %v840 = vmax.f32 %v527, 0.0
  %v841 = vmax.f32 %v530, 0.0
  %v842 = vmax.f32 %v535, 0.0
  %v843 = vmax.f32 %v538, 0.0
  %v844 = vmax.f32 %v543, 0.0
  %v845 = vmax.f32 %v546, 0.0
  %v846 = vmax.f32 %v551, 0.0
  %v847 = vmax.f32 %v554, 0.0
  %v848 = vmax.f32 %v559, 0.0
  %v849 = vmax.f32 %v562, 0.0
  %v850 = vmax.f32 %v567, 0.0
  %v851 = vmax.f32 %v570, 0.0
  %v852 = vmax.f32 %v575, 0.0
  %v853 = vmax.f32 %v578, 0.0
  %v854 = vmax.f32 %v583, 0.0
  %v855 = vmax.f32 %v586, 0.0
  %v856 = vmax.f32 %v591, 0.0
  %v857 = vmax.f32 %v594, 0.0
  %v858 = vmax.f32 %v599, 0.0
  %v859 = vmax.f32 %v602, 0.0
  %v860 = vmax.f32 %v607, 0.0
  %v861 = vmax.f32 %v610, 0.0
  %v862 = vmax.f32 %v615, 0.0
  %v863 = vmax.f32 %v618, 0.0
  %v864 = vmax.f32 %v623, 0.0
  %v865 = vmax.f32 %v626, 0.0
  %v866 = vmax.f32 %v631, 0.0
  %v867 = vmax.f32 %v634, 0.0
  %v868 = vmax.f32 %v639, 0.0
  %v869 = vmax.f32 %v642, 0.0
  %v870 = vmax.f32 %v647, 0.0
  %v871 = vmax.f32 %v650, 0.0
  %v872 = vmax.f32 %v655, 0.0
  %v873 = vmax.f32 %v658, 0.0
  %v874 = vmax.f32 %v663, 0.0
  %v875 = vmax.f32 %v666, 0.0
  %v876 = vmax.f32 %v671, 0.0
  %v877 = vmax.f32 %v674, 0.0
  %v878 = vmax.f32 %v679, 0.0
  %v879 = vmax.f32 %v682, 0.0
  %v880 = vmax.f32 %v687, 0.0
  %v881 = vmax.f32 %v690, 0.0
  %v882 = vmax.f32 %v695, 0.0
  %v883 = vmax.f32 %v698, 0.0
  %v884 = vmax.f32 %v703, 0.0
  %v885 = vmax.f32 %v706, 0.0
  %v886 = vmax.f32 %v711, 0.0
  %v887 = vmax.f32 %v714, 0.0
  %v888 = vmax.f32 %v719, 0.0
  %v889 = vmax.f32 %v722, 0.0
  %v890 = vmax.f32 %v727, 0.0
  %v891 = vmax.f32 %v730, 0.0
  %v892 = vmax.f32 %v735, 0.0
  %v893 = vmax.f32 %v738, 0.0
  %v894 = vmax.f32 %v743, 0.0
  %v895 = vmax.f32 %v746, 0.0
  %v896 = vmax.f32 %v751, 0.0
  %v897 = vmax.f32 %v754, 0.0
  %v898 = vmax.f32 %v759, 0.0
  %v899 = vmax.f32 %v762, 0.0
  %v900 = vmax.f32 %v767, 0.0
  %v901 = vmax.f32 %v770, 0.0
  %v902 = vmax.f32 %v775, 0.0
  %v903 = vmax.f32 %v778, 0.0
  %v904 = vmax.f32 %v783, 0.0
  %v905 = vmax.f32 %v786, 0.0
  %v906 = vmax.f32 %v791, 0.0
  %v907 = vmax.f32 %v794, 0.0
  %v908 = vmax.f32 %v799, 0.0
  %v909 = vmax.f32 %v802, 0.0
  %v910 = vmax.f32 %v807, 0.0
  %v911 = vmax.f32 %v810, 0.0
  %v912 = vmax.f32 %v815, 0.0
  %v913 = vmax.f32 %v818, 0.0
  %v914 = vmax.f32 %v823, 0.0
  %v915 = vmax.f32 %v826, 0.0
  %v916 = vmax.f32 %v831, 0.0
  %vm917 = vcmask 257024
  %918 = vst.msk [vmem:[#allocation2] sm:$0xf] %vm917, 0
  %919 = vst.msk [vmem:[#allocation2 + $0x4] sm:$0xf] %vm917, 0
  %920 = vst.msk [vmem:[#allocation2 + $0x8] sm:$0xf] %vm917, 0
  %921 = vst.msk [vmem:[#allocation2 + $0xc] sm:$0xf] %vm917, 0
  %922 = vst.msk [vmem:[#allocation2 + $0x154] sm:$0xf] %vm917, 0
  %923 = vst.msk [vmem:[#allocation2 + $0x158] sm:$0xf] %vm917, 0
  %924 = vst.msk [vmem:[#allocation2 + $0x15c] sm:$0xf] %vm917, 0
  %925 = vst.msk [vmem:[#allocation2 + $0x160] sm:$0xf] %vm917, 0
  %v926 = vpack.c.bf16 %v837, %v836
  %v927 = vpack.c.bf16 %v839, %v838
  %v928 = vpack.c.bf16 %v841, %v840
  %v929 = vpack.c.bf16 %v843, %v842
  %v930 = vpack.c.bf16 %v845, %v844
  %v931 = vpack.c.bf16 %v847, %v846
  %v932 = vpack.c.bf16 %v849, %v848
  %v933 = vpack.c.bf16 %v851, %v850
  %v934 = vpack.c.bf16 %v853, %v852
  %v935 = vpack.c.bf16 %v855, %v854
  %v936 = vpack.c.bf16 %v857, %v856
  %v937 = vpack.c.bf16 %v859, %v858
  %v938 = vpack.c.bf16 %v861, %v860
  %v939 = vpack.c.bf16 %v863, %v862
  %v940 = vpack.c.bf16 %v865, %v864
  %v941 = vpack.c.bf16 %v867, %v866
  %v942 = vpack.c.bf16 %v869, %v868
  %v943 = vpack.c.bf16 %v871, %v870
  %v944 = vpack.c.bf16 %v873, %v872
  %v945 = vpack.c.bf16 %v875, %v874
  %v946 = vpack.c.bf16 %v877, %v876
  %v947 = vpack.c.bf16 %v879, %v878
  %v948 = vpack.c.bf16 %v881, %v880
  %v949 = vpack.c.bf16 %v883, %v882
  %v950 = vpack.c.bf16 %v885, %v884
  %v951 = vpack.c.bf16 %v887, %v886
  %v952 = vpack.c.bf16 %v889, %v888
  %v953 = vpack.c.bf16 %v891, %v890
  %v954 = vpack.c.bf16 %v893, %v892
  %v955 = vpack.c.bf16 %v895, %v894
  %v956 = vpack.c.bf16 %v897, %v896
  %v957 = vpack.c.bf16 %v899, %v898
  %v958 = vpack.c.bf16 %v901, %v900
  %v959 = vpack.c.bf16 %v903, %v902
  %v960 = vpack.c.bf16 %v905, %v904
  %v961 = vpack.c.bf16 %v907, %v906
  %v962 = vpack.c.bf16 %v909, %v908
  %v963 = vpack.c.bf16 %v911, %v910
  %v964 = vpack.c.bf16 %v913, %v912
  %v965 = vpack.c.bf16 %v915, %v914
  %v966 = vpack.c.bf16 %v916, %v916
  %v1008 = vunpack.c.l.b16 %v926
  %v1009 = vunpack.c.h.b16 %v926
  %v1010 = vunpack.c.l.b16 %v927
  %v1011 = vunpack.c.h.b16 %v927
  %v1012 = vunpack.c.l.b16 %v928
  %v1013 = vunpack.c.h.b16 %v928
  %v1014 = vunpack.c.l.b16 %v929
  %v1015 = vunpack.c.h.b16 %v929
  %v1016 = vunpack.c.l.b16 %v930
  %v1017 = vunpack.c.h.b16 %v930
  %v1018 = vunpack.c.l.b16 %v931
  %v1019 = vunpack.c.h.b16 %v931
  %v1020 = vunpack.c.l.b16 %v932
  %v1021 = vunpack.c.h.b16 %v932
  %v1022 = vunpack.c.l.b16 %v933
  %v1023 = vunpack.c.h.b16 %v933
  %v1024 = vunpack.c.l.b16 %v934
  %v1025 = vunpack.c.h.b16 %v934
  %v1026 = vunpack.c.l.b16 %v935
  %v1027 = vunpack.c.h.b16 %v935
  %v1028 = vunpack.c.l.b16 %v936
  %v1029 = vunpack.c.h.b16 %v936
  %v1030 = vunpack.c.l.b16 %v937
  %v1031 = vunpack.c.h.b16 %v937
  %v1032 = vunpack.c.l.b16 %v938
  %v1033 = vunpack.c.h.b16 %v938
  %v1034 = vunpack.c.l.b16 %v939
  %v1035 = vunpack.c.h.b16 %v939
  %v1036 = vunpack.c.l.b16 %v940
  %v1037 = vunpack.c.h.b16 %v940
  %v1038 = vunpack.c.l.b16 %v941
  %v1039 = vunpack.c.h.b16 %v941
  %v1040 = vunpack.c.l.b16 %v942
  %v1041 = vunpack.c.h.b16 %v942
  %v1042 = vunpack.c.l.b16 %v943
  %v1043 = vunpack.c.h.b16 %v943
  %v1044 = vunpack.c.l.b16 %v944
  %v1045 = vunpack.c.h.b16 %v944
  %v1046 = vunpack.c.l.b16 %v945
  %v1047 = vunpack.c.h.b16 %v945
  %v1048 = vunpack.c.l.b16 %v946
  %v1049 = vunpack.c.h.b16 %v946
  %v1050 = vunpack.c.l.b16 %v947
  %v1051 = vunpack.c.h.b16 %v947
  %v1052 = vunpack.c.l.b16 %v948
  %v1053 = vunpack.c.h.b16 %v948
  %v1054 = vunpack.c.l.b16 %v949
  %v1055 = vunpack.c.h.b16 %v949
  %v1056 = vunpack.c.l.b16 %v950
  %v1057 = vunpack.c.h.b16 %v950
  %v1058 = vunpack.c.l.b16 %v951
  %v1059 = vunpack.c.h.b16 %v951
  %v1060 = vunpack.c.l.b16 %v952
  %v1061 = vunpack.c.h.b16 %v952
  %v1062 = vunpack.c.l.b16 %v953
  %v1063 = vunpack.c.h.b16 %v953
  %v1064 = vunpack.c.l.b16 %v954
  %v1065 = vunpack.c.h.b16 %v954
  %v1066 = vunpack.c.l.b16 %v955
  %v1067 = vunpack.c.h.b16 %v955
  %v1068 = vunpack.c.l.b16 %v956
  %v1069 = vunpack.c.h.b16 %v956
  %v1070 = vunpack.c.l.b16 %v957
  %v1071 = vunpack.c.h.b16 %v957
  %v1072 = vunpack.c.l.b16 %v958
  %v1073 = vunpack.c.h.b16 %v958
  %v1074 = vunpack.c.l.b16 %v959
  %v1075 = vunpack.c.h.b16 %v959
  %v1076 = vunpack.c.l.b16 %v960
  %v1077 = vunpack.c.h.b16 %v960
  %v1078 = vunpack.c.l.b16 %v961
  %v1079 = vunpack.c.h.b16 %v961
  %v1080 = vunpack.c.l.b16 %v962
  %v1081 = vunpack.c.h.b16 %v962
  %v1082 = vunpack.c.l.b16 %v963
  %v1083 = vunpack.c.h.b16 %v963
  %v1084 = vunpack.c.l.b16 %v964
  %v1085 = vunpack.c.h.b16 %v964
  %v1086 = vunpack.c.l.b16 %v965
  %v1087 = vunpack.c.h.b16 %v965
  %v1088 = vunpack.c.l.b16 %v966
  %v1089 = vpack.c.b16 %v1008, %v1008
  %v1090 = vpack.c.b16 %v1009, %v1009
  %v1091 = vpack.c.b16 %v1010, %v1010
  %v1092 = vpack.c.b16 %v1011, %v1011
  %v1093 = vpack.c.b16 %v1012, %v1012
  %v1094 = vpack.c.b16 %v1013, %v1013
  %v1095 = vpack.c.b16 %v1014, %v1014
  %v1096 = vpack.c.b16 %v1015, %v1015
  %v1097 = vpack.c.b16 %v1016, %v1016
  %v1098 = vpack.c.b16 %v1017, %v1017
  %v1099 = vpack.c.b16 %v1018, %v1018
  %v1100 = vpack.c.b16 %v1019, %v1019
  %v1101 = vpack.c.b16 %v1020, %v1020
  %v1102 = vpack.c.b16 %v1021, %v1021
  %v1103 = vpack.c.b16 %v1022, %v1022
  %v1104 = vpack.c.b16 %v1023, %v1023
  %v1105 = vpack.c.b16 %v1024, %v1024
  %v1106 = vpack.c.b16 %v1025, %v1025
  %v1107 = vpack.c.b16 %v1026, %v1026
  %v1108 = vpack.c.b16 %v1027, %v1027
  %v1109 = vpack.c.b16 %v1028, %v1028
  %v1110 = vpack.c.b16 %v1029, %v1029
  %v1111 = vpack.c.b16 %v1030, %v1030
  %v1112 = vpack.c.b16 %v1031, %v1031
  %v1113 = vpack.c.b16 %v1032, %v1032
  %v1114 = vpack.c.b16 %v1033, %v1033
  %v1115 = vpack.c.b16 %v1034, %v1034
  %v1116 = vpack.c.b16 %v1035, %v1035
  %v1117 = vpack.c.b16 %v1036, %v1036
  %v1118 = vpack.c.b16 %v1037, %v1037
  %v1119 = vpack.c.b16 %v1038, %v1038
  %v1120 = vpack.c.b16 %v1039, %v1039
  %v1121 = vpack.c.b16 %v1040, %v1040
  %v1122 = vpack.c.b16 %v1041, %v1041
  %v1123 = vpack.c.b16 %v1042, %v1042
  %v1124 = vpack.c.b16 %v1043, %v1043
  %v1125 = vpack.c.b16 %v1044, %v1044
  %v1126 = vpack.c.b16 %v1045, %v1045
  %v1127 = vpack.c.b16 %v1046, %v1046
  %v1128 = vpack.c.b16 %v1047, %v1047
  %v1129 = vpack.c.b16 %v1048, %v1048
  %v1130 = vpack.c.b16 %v1049, %v1049
  %v1131 = vpack.c.b16 %v1050, %v1050
  %v1132 = vpack.c.b16 %v1051, %v1051
  %v1133 = vpack.c.b16 %v1052, %v1052
  %v1134 = vpack.c.b16 %v1053, %v1053
  %v1135 = vpack.c.b16 %v1054, %v1054
  %v1136 = vpack.c.b16 %v1055, %v1055
  %v1137 = vpack.c.b16 %v1056, %v1056
  %v1138 = vpack.c.b16 %v1057, %v1057
  %v1139 = vpack.c.b16 %v1058, %v1058
  %v1140 = vpack.c.b16 %v1059, %v1059
  %v1141 = vpack.c.b16 %v1060, %v1060
  %v1142 = vpack.c.b16 %v1061, %v1061
  %v1143 = vpack.c.b16 %v1062, %v1062
  %v1144 = vpack.c.b16 %v1063, %v1063
  %v1145 = vpack.c.b16 %v1064, %v1064
  %v1146 = vpack.c.b16 %v1065, %v1065
  %v1147 = vpack.c.b16 %v1066, %v1066
  %v1148 = vpack.c.b16 %v1067, %v1067
  %v1149 = vpack.c.b16 %v1068, %v1068
  %v1150 = vpack.c.b16 %v1069, %v1069
  %v1151 = vpack.c.b16 %v1070, %v1070
  %v1152 = vpack.c.b16 %v1071, %v1071
  %v1153 = vpack.c.b16 %v1072, %v1072
  %v1154 = vpack.c.b16 %v1073, %v1073
  %v1155 = vpack.c.b16 %v1074, %v1074
  %v1156 = vpack.c.b16 %v1075, %v1075
  %v1157 = vpack.c.b16 %v1076, %v1076
  %v1158 = vpack.c.b16 %v1077, %v1077
  %v1159 = vpack.c.b16 %v1078, %v1078
  %v1160 = vpack.c.b16 %v1079, %v1079
  %v1161 = vpack.c.b16 %v1080, %v1080
  %v1162 = vpack.c.b16 %v1081, %v1081
  %v1163 = vpack.c.b16 %v1082, %v1082
  %v1164 = vpack.c.b16 %v1083, %v1083
  %v1165 = vpack.c.b16 %v1084, %v1084
  %v1166 = vpack.c.b16 %v1085, %v1085
  %v1167 = vpack.c.b16 %v1086, %v1086
  %v1168 = vpack.c.b16 %v1087, %v1087
  %v1169 = vpack.c.b16 %v1088, %v1088
  %1251 = vst.msk [vmem:[#allocation2 + $0x10] sm:$0xf] %vm917, %v1089
  %1252 = vst.msk [vmem:[#allocation2 + $0x14] sm:$0xf] %vm917, %v1090
  %1253 = vst.msk [vmem:[#allocation2 + $0x18] sm:$0xf] %vm917, %v1091
  %1254 = vst.msk [vmem:[#allocation2 + $0x1c] sm:$0xf] %vm917, %v1092
  %1255 = vst.msk [vmem:[#allocation2 + $0x20] sm:$0xf] %vm917, %v1093
  %1256 = vst.msk [vmem:[#allocation2 + $0x24] sm:$0xf] %vm917, %v1094
  %1257 = vst.msk [vmem:[#allocation2 + $0x28] sm:$0xf] %vm917, %v1095
  %1258 = vst.msk [vmem:[#allocation2 + $0x2c] sm:$0xf] %vm917, %v1096
  %1259 = vst.msk [vmem:[#allocation2 + $0x30] sm:$0xf] %vm917, %v1097
  %1260 = vst.msk [vmem:[#allocation2 + $0x34] sm:$0xf] %vm917, %v1098
  %1261 = vst.msk [vmem:[#allocation2 + $0x38] sm:$0xf] %vm917, %v1099
  %1262 = vst.msk [vmem:[#allocation2 + $0x3c] sm:$0xf] %vm917, %v1100
  %1263 = vst.msk [vmem:[#allocation2 + $0x40] sm:$0xf] %vm917, %v1101
  %1264 = vst.msk [vmem:[#allocation2 + $0x44] sm:$0xf] %vm917, %v1102
  %1265 = vst.msk [vmem:[#allocation2 + $0x48] sm:$0xf] %vm917, %v1103
  %1266 = vst.msk [vmem:[#allocation2 + $0x4c] sm:$0xf] %vm917, %v1104
  %1267 = vst.msk [vmem:[#allocation2 + $0x50] sm:$0xf] %vm917, %v1105
  %1268 = vst.msk [vmem:[#allocation2 + $0x54] sm:$0xf] %vm917, %v1106
  %1269 = vst.msk [vmem:[#allocation2 + $0x58] sm:$0xf] %vm917, %v1107
  %1270 = vst.msk [vmem:[#allocation2 + $0x5c] sm:$0xf] %vm917, %v1108
  %1271 = vst.msk [vmem:[#allocation2 + $0x60] sm:$0xf] %vm917, %v1109
  %1272 = vst.msk [vmem:[#allocation2 + $0x64] sm:$0xf] %vm917, %v1110
  %1273 = vst.msk [vmem:[#allocation2 + $0x68] sm:$0xf] %vm917, %v1111
  %1274 = vst.msk [vmem:[#allocation2 + $0x6c] sm:$0xf] %vm917, %v1112
  %1275 = vst.msk [vmem:[#allocation2 + $0x70] sm:$0xf] %vm917, %v1113
  %1276 = vst.msk [vmem:[#allocation2 + $0x74] sm:$0xf] %vm917, %v1114
  %1277 = vst.msk [vmem:[#allocation2 + $0x78] sm:$0xf] %vm917, %v1115
  %1278 = vst.msk [vmem:[#allocation2 + $0x7c] sm:$0xf] %vm917, %v1116
  %1279 = vst.msk [vmem:[#allocation2 + $0x80] sm:$0xf] %vm917, %v1117
  %1280 = vst.msk [vmem:[#allocation2 + $0x84] sm:$0xf] %vm917, %v1118
  %1281 = vst.msk [vmem:[#allocation2 + $0x88] sm:$0xf] %vm917, %v1119
  %1282 = vst.msk [vmem:[#allocation2 + $0x8c] sm:$0xf] %vm917, %v1120
  %1283 = vst.msk [vmem:[#allocation2 + $0x90] sm:$0xf] %vm917, %v1121
  %1284 = vst.msk [vmem:[#allocation2 + $0x94] sm:$0xf] %vm917, %v1122
  %1285 = vst.msk [vmem:[#allocation2 + $0x98] sm:$0xf] %vm917, %v1123
  %1286 = vst.msk [vmem:[#allocation2 + $0x9c] sm:$0xf] %vm917, %v1124
  %1287 = vst.msk [vmem:[#allocation2 + $0xa0] sm:$0xf] %vm917, %v1125
  %1288 = vst.msk [vmem:[#allocation2 + $0xa4] sm:$0xf] %vm917, %v1126
  %1289 = vst.msk [vmem:[#allocation2 + $0xa8] sm:$0xf] %vm917, %v1127
  %1290 = vst.msk [vmem:[#allocation2 + $0xac] sm:$0xf] %vm917, %v1128
  %1291 = vst.msk [vmem:[#allocation2 + $0xb0] sm:$0xf] %vm917, %v1129
  %1292 = vst.msk [vmem:[#allocation2 + $0xb4] sm:$0xf] %vm917, %v1130
  %1293 = vst.msk [vmem:[#allocation2 + $0xb8] sm:$0xf] %vm917, %v1131
  %1294 = vst.msk [vmem:[#allocation2 + $0xbc] sm:$0xf] %vm917, %v1132
  %1295 = vst.msk [vmem:[#allocation2 + $0xc0] sm:$0xf] %vm917, %v1133
  %1296 = vst.msk [vmem:[#allocation2 + $0xc4] sm:$0xf] %vm917, %v1134
  %1297 = vst.msk [vmem:[#allocation2 + $0xc8] sm:$0xf] %vm917, %v1135
  %1298 = vst.msk [vmem:[#allocation2 + $0xcc] sm:$0xf] %vm917, %v1136
  %1299 = vst.msk [vmem:[#allocation2 + $0xd0] sm:$0xf] %vm917, %v1137
  %1300 = vst.msk [vmem:[#allocation2 + $0xd4] sm:$0xf] %vm917, %v1138
  %1301 = vst.msk [vmem:[#allocation2 + $0xd8] sm:$0xf] %vm917, %v1139
  %1302 = vst.msk [vmem:[#allocation2 + $0xdc] sm:$0xf] %vm917, %v1140
  %1303 = vst.msk [vmem:[#allocation2 + $0xe0] sm:$0xf] %vm917, %v1141
  %1304 = vst.msk [vmem:[#allocation2 + $0xe4] sm:$0xf] %vm917, %v1142
  %1305 = vst.msk [vmem:[#allocation2 + $0xe8] sm:$0xf] %vm917, %v1143
  %1306 = vst.msk [vmem:[#allocation2 + $0xec] sm:$0xf] %vm917, %v1144
  %1307 = vst.msk [vmem:[#allocation2 + $0xf0] sm:$0xf] %vm917, %v1145
  %1308 = vst.msk [vmem:[#allocation2 + $0xf4] sm:$0xf] %vm917, %v1146
  %1309 = vst.msk [vmem:[#allocation2 + $0xf8] sm:$0xf] %vm917, %v1147
  %1310 = vst.msk [vmem:[#allocation2 + $0xfc] sm:$0xf] %vm917, %v1148
  %1311 = vst.msk [vmem:[#allocation2 + $0x100] sm:$0xf] %vm917, %v1149
  %1312 = vst.msk [vmem:[#allocation2 + $0x104] sm:$0xf] %vm917, %v1150
  %1313 = vst.msk [vmem:[#allocation2 + $0x108] sm:$0xf] %vm917, %v1151
  %1314 = vst.msk [vmem:[#allocation2 + $0x10c] sm:$0xf] %vm917, %v1152
  %1315 = vst.msk [vmem:[#allocation2 + $0x110] sm:$0xf] %vm917, %v1153
  %1316 = vst.msk [vmem:[#allocation2 + $0x114] sm:$0xf] %vm917, %v1154
  %1317 = vst.msk [vmem:[#allocation2 + $0x118] sm:$0xf] %vm917, %v1155
  %1318 = vst.msk [vmem:[#allocation2 + $0x11c] sm:$0xf] %vm917, %v1156
  %1319 = vst.msk [vmem:[#allocation2 + $0x120] sm:$0xf] %vm917, %v1157
  %1320 = vst.msk [vmem:[#allocation2 + $0x124] sm:$0xf] %vm917, %v1158
  %1321 = vst.msk [vmem:[#allocation2 + $0x128] sm:$0xf] %vm917, %v1159
  %1322 = vst.msk [vmem:[#allocation2 + $0x12c] sm:$0xf] %vm917, %v1160
  %1323 = vst.msk [vmem:[#allocation2 + $0x130] sm:$0xf] %vm917, %v1161
  %1324 = vst.msk [vmem:[#allocation2 + $0x134] sm:$0xf] %vm917, %v1162
  %1325 = vst.msk [vmem:[#allocation2 + $0x138] sm:$0xf] %vm917, %v1163
  %1326 = vst.msk [vmem:[#allocation2 + $0x13c] sm:$0xf] %vm917, %v1164
  %1327 = vst.msk [vmem:[#allocation2 + $0x140] sm:$0xf] %vm917, %v1165
  %1328 = vst.msk [vmem:[#allocation2 + $0x144] sm:$0xf] %vm917, %v1166
  %1329 = vst.msk [vmem:[#allocation2 + $0x148] sm:$0xf] %vm917, %v1167
  %1330 = vst.msk [vmem:[#allocation2 + $0x14c] sm:$0xf] %vm917, %v1168
  %1331 = vst.msk [vmem:[#allocation2 + $0x150] sm:$0xf] %vm917, %v1169
  %v1332 = vld [vmem:[#allocation2 + $0x4] sm:$0xc]
  %v1333 = vld [vmem:[#allocation2 + $0x8] sm:$0xf]
  %v1334 = vld [vmem:[#allocation2 + $0xc] sm:$0xf]
  %v1335 = vld [vmem:[#allocation2 + $0x10] sm:$0xf]
  %v1336 = vld [vmem:[#allocation2 + $0x14] sm:$0xf]
  %v1337 = vld [vmem:[#allocation2 + $0x18] sm:$0xf]
  %v1338 = vld [vmem:[#allocation2 + $0x1c] sm:$0xf]
  %v1339 = vld [vmem:[#allocation2 + $0x20] sm:$0xf]
  %v1340 = vld [vmem:[#allocation2 + $0x24] sm:$0xf]
  %v1341 = vld [vmem:[#allocation2 + $0x28] sm:$0xf]
  %v1342 = vld [vmem:[#allocation2 + $0x2c] sm:$0xf]
  %v1343 = vld [vmem:[#allocation2 + $0x30] sm:$0xf]
  %v1344 = vld [vmem:[#allocation2 + $0x34] sm:$0xf]
  %v1345 = vld [vmem:[#allocation2 + $0x38] sm:$0xf]
  %v1346 = vld [vmem:[#allocation2 + $0x3c] sm:$0xf]
  %v1347 = vld [vmem:[#allocation2 + $0x40] sm:$0xf]
  %v1348 = vld [vmem:[#allocation2 + $0x44] sm:$0xf]
  %v1349 = vld [vmem:[#allocation2 + $0x48] sm:$0xf]
  %v1350 = vld [vmem:[#allocation2 + $0x4c] sm:$0xf]
  %v1351 = vld [vmem:[#allocation2 + $0x50] sm:$0xf]
  %v1352 = vld [vmem:[#allocation2 + $0x54] sm:$0xf]
  %v1353 = vld [vmem:[#allocation2 + $0x58] sm:$0xf]
  %v1354 = vld [vmem:[#allocation2 + $0x5c] sm:$0xf]
  %v1355 = vld [vmem:[#allocation2 + $0x60] sm:$0xf]
  %v1356 = vld [vmem:[#allocation2 + $0x64] sm:$0xf]
  %v1357 = vld [vmem:[#allocation2 + $0x68] sm:$0xf]
  %v1358 = vld [vmem:[#allocation2 + $0x6c] sm:$0xf]
  %v1359 = vld [vmem:[#allocation2 + $0x70] sm:$0xf]
  %v1360 = vld [vmem:[#allocation2 + $0x74] sm:$0xf]
  %v1361 = vld [vmem:[#allocation2 + $0x78] sm:$0xf]
  %v1362 = vld [vmem:[#allocation2 + $0x7c] sm:$0xf]
  %v1363 = vld [vmem:[#allocation2 + $0x80] sm:$0xf]
  %v1364 = vld [vmem:[#allocation2 + $0x84] sm:$0xf]
  %v1365 = vld [vmem:[#allocation2 + $0x88] sm:$0xf]
  %v1366 = vld [vmem:[#allocation2 + $0x8c] sm:$0xf]
  %v1367 = vld [vmem:[#allocation2 + $0x90] sm:$0xf]
  %v1368 = vld [vmem:[#allocation2 + $0x94] sm:$0xf]
  %v1369 = vld [vmem:[#allocation2 + $0x98] sm:$0xf]
  %v1370 = vld [vmem:[#allocation2 + $0x9c] sm:$0xf]
  %v1371 = vld [vmem:[#allocation2 + $0xa0] sm:$0xf]
  %v1372 = vld [vmem:[#allocation2 + $0xa4] sm:$0xf]
  %v1373 = vld [vmem:[#allocation2 + $0xa8] sm:$0xf]
  %v1374 = vld [vmem:[#allocation2 + $0xac] sm:$0xf]
  %v1375 = vld [vmem:[#allocation2 + $0xb0] sm:$0xf]
  %v1376 = vld [vmem:[#allocation2 + $0xb4] sm:$0xf]
  %v1377 = vld [vmem:[#allocation2 + $0xb8] sm:$0xf]
  %v1378 = vld [vmem:[#allocation2 + $0xbc] sm:$0xf]
  %v1379 = vld [vmem:[#allocation2 + $0xc0] sm:$0xf]
  %v1380 = vld [vmem:[#allocation2 + $0xc4] sm:$0xf]
  %v1381 = vld [vmem:[#allocation2 + $0xc8] sm:$0xf]
  %v1382 = vld [vmem:[#allocation2 + $0xcc] sm:$0xf]
  %v1383 = vld [vmem:[#allocation2 + $0xd0] sm:$0xf]
  %v1384 = vld [vmem:[#allocation2 + $0xd4] sm:$0xf]
  %v1385 = vld [vmem:[#allocation2 + $0xd8] sm:$0xf]
  %v1386 = vld [vmem:[#allocation2 + $0xdc] sm:$0xf]
  %v1387 = vld [vmem:[#allocation2 + $0xe0] sm:$0xf]
  %v1388 = vld [vmem:[#allocation2 + $0xe4] sm:$0xf]
  %v1389 = vld [vmem:[#allocation2 + $0xe8] sm:$0xf]
  %v1390 = vld [vmem:[#allocation2 + $0xec] sm:$0xf]
  %v1391 = vld [vmem:[#allocation2 + $0xf0] sm:$0xf]
  %v1392 = vld [vmem:[#allocation2 + $0xf4] sm:$0xf]
  %v1393 = vld [vmem:[#allocation2 + $0xf8] sm:$0xf]
  %v1394 = vld [vmem:[#allocation2 + $0xfc] sm:$0xf]
  %v1395 = vld [vmem:[#allocation2 + $0x100] sm:$0xf]
  %v1396 = vld [vmem:[#allocation2 + $0x104] sm:$0xf]
  %v1397 = vld [vmem:[#allocation2 + $0x108] sm:$0xf]
  %v1398 = vld [vmem:[#allocation2 + $0x10c] sm:$0xf]
  %v1399 = vld [vmem:[#allocation2 + $0x110] sm:$0xf]
  %v1400 = vld [vmem:[#allocation2 + $0x114] sm:$0xf]
  %v1401 = vld [vmem:[#allocation2 + $0x118] sm:$0xf]
  %v1402 = vld [vmem:[#allocation2 + $0x11c] sm:$0xf]
  %v1403 = vld [vmem:[#allocation2 + $0x120] sm:$0xf]
  %v1404 = vld [vmem:[#allocation2 + $0x124] sm:$0xf]
  %v1405 = vld [vmem:[#allocation2 + $0x128] sm:$0xf]
  %v1406 = vld [vmem:[#allocation2 + $0x12c] sm:$0xf]
  %v1407 = vld [vmem:[#allocation2 + $0x130] sm:$0xf]
  %v1408 = vld [vmem:[#allocation2 + $0x134] sm:$0xf]
  %v1409 = vld [vmem:[#allocation2 + $0x138] sm:$0xf]
  %v1410 = vld [vmem:[#allocation2 + $0x13c] sm:$0xf]
  %v1411 = vld [vmem:[#allocation2 + $0x140] sm:$0xf]
  %v1412 = vld [vmem:[#allocation2 + $0x144] sm:$0xf]
  %v1413 = vld [vmem:[#allocation2 + $0x148] sm:$0x7]
  %vm1414 = vsmask.f32 1280
  %vm1415 = vsmask.f32 5392
  %vm1416 = vmor %vm1414, %vm1415
  %v1418 = vshrl.u32 %v1332, 16
  %v1420 = vrot.slane %v1418, 6
  %v1421 = vshll.u32 %v1332, 16
  %v1423 = vrot.slane %v1421, 7
  %v1424 = vor.u32 %v1420, %v1423
  %v1425 = vrot.slane %v1424, 4
  %v1427 = vshrl.u32 %v1333, 16
  %v1429 = vrot.slane %v1427, 6
  %v1430 = vshll.u32 %v1333, 16
  %v1432 = vrot.slane %v1430, 7
  %v1433 = vor.u32 %v1429, %v1432
  %v1434 = vsel %vm1416, %v1425, %v1433
  %v1435 = vrot.slane %v1433, 4
  %v1437 = vshrl.u32 %v1334, 16
  %v1439 = vrot.slane %v1437, 6
  %v1440 = vshll.u32 %v1334, 16
  %v1442 = vrot.slane %v1440, 7
  %v1443 = vor.u32 %v1439, %v1442
  %v1444 = vsel %vm1416, %v1435, %v1443
  %v1445 = vrot.slane %v1443, 4
  %v1447 = vshrl.u32 %v1335, 16
  %v1449 = vrot.slane %v1447, 6
  %v1450 = vshll.u32 %v1335, 16
  %v1452 = vrot.slane %v1450, 7
  %v1453 = vor.u32 %v1449, %v1452
  %v1454 = vsel %vm1416, %v1445, %v1453
  %v1455 = vrot.slane %v1453, 4
  %v1457 = vshrl.u32 %v1336, 16
  %v1459 = vrot.slane %v1457, 6
  %v1460 = vshll.u32 %v1336, 16
  %v1462 = vrot.slane %v1460, 7
  %v1463 = vor.u32 %v1459, %v1462
  %v1464 = vsel %vm1416, %v1455, %v1463
  %v1465 = vrot.slane %v1463, 4
  %v1467 = vshrl.u32 %v1337, 16
  %v1469 = vrot.slane %v1467, 6
  %v1470 = vshll.u32 %v1337, 16
  %v1472 = vrot.slane %v1470, 7
  %v1473 = vor.u32 %v1469, %v1472
  %v1474 = vsel %vm1416, %v1465, %v1473
  %v1475 = vrot.slane %v1473, 4
  %v1477 = vshrl.u32 %v1338, 16
  %v1479 = vrot.slane %v1477, 6
  %v1480 = vshll.u32 %v1338, 16
  %v1482 = vrot.slane %v1480, 7
  %v1483 = vor.u32 %v1479, %v1482
  %v1484 = vsel %vm1416, %v1475, %v1483
  %v1485 = vrot.slane %v1483, 4
  %v1487 = vshrl.u32 %v1339, 16
  %v1489 = vrot.slane %v1487, 6
  %v1490 = vshll.u32 %v1339, 16
  %v1492 = vrot.slane %v1490, 7
  %v1493 = vor.u32 %v1489, %v1492
  %v1494 = vsel %vm1416, %v1485, %v1493
  %v1495 = vrot.slane %v1493, 4
  %v1497 = vshrl.u32 %v1340, 16
  %v1499 = vrot.slane %v1497, 6
  %v1500 = vshll.u32 %v1340, 16
  %v1502 = vrot.slane %v1500, 7
  %v1503 = vor.u32 %v1499, %v1502
  %v1504 = vsel %vm1416, %v1495, %v1503
  %v1505 = vrot.slane %v1503, 4
  %v1507 = vshrl.u32 %v1341, 16
  %v1509 = vrot.slane %v1507, 6
  %v1510 = vshll.u32 %v1341, 16
  %v1512 = vrot.slane %v1510, 7
  %v1513 = vor.u32 %v1509, %v1512
  %v1514 = vsel %vm1416, %v1505, %v1513
  %v1515 = vrot.slane %v1513, 4
  %v1517 = vshrl.u32 %v1342, 16
  %v1519 = vrot.slane %v1517, 6
  %v1520 = vshll.u32 %v1342, 16
  %v1522 = vrot.slane %v1520, 7
  %v1523 = vor.u32 %v1519, %v1522
  %v1524 = vsel %vm1416, %v1515, %v1523
  %v1525 = vrot.slane %v1523, 4
  %v1527 = vshrl.u32 %v1343, 16
  %v1529 = vrot.slane %v1527, 6
  %v1530 = vshll.u32 %v1343, 16
  %v1532 = vrot.slane %v1530, 7
  %v1533 = vor.u32 %v1529, %v1532
  %v1534 = vsel %vm1416, %v1525, %v1533
  %v1535 = vrot.slane %v1533, 4
  %v1537 = vshrl.u32 %v1344, 16
  %v1539 = vrot.slane %v1537, 6
  %v1540 = vshll.u32 %v1344, 16
  %v1542 = vrot.slane %v1540, 7
  %v1543 = vor.u32 %v1539, %v1542
  %v1544 = vsel %vm1416, %v1535, %v1543
  %v1545 = vrot.slane %v1543, 4
  %v1547 = vshrl.u32 %v1345, 16
  %v1549 = vrot.slane %v1547, 6
  %v1550 = vshll.u32 %v1345, 16
  %v1552 = vrot.slane %v1550, 7
  %v1553 = vor.u32 %v1549, %v1552
  %v1554 = vsel %vm1416, %v1545, %v1553
  %v1555 = vrot.slane %v1553, 4
  %v1557 = vshrl.u32 %v1346, 16
  %v1559 = vrot.slane %v1557, 6
  %v1560 = vshll.u32 %v1346, 16
  %v1562 = vrot.slane %v1560, 7
  %v1563 = vor.u32 %v1559, %v1562
  %v1564 = vsel %vm1416, %v1555, %v1563
  %v1565 = vrot.slane %v1563, 4
  %v1567 = vshrl.u32 %v1347, 16
  %v1569 = vrot.slane %v1567, 6
  %v1570 = vshll.u32 %v1347, 16
  %v1572 = vrot.slane %v1570, 7
  %v1573 = vor.u32 %v1569, %v1572
  %v1574 = vsel %vm1416, %v1565, %v1573
  %v1575 = vrot.slane %v1573, 4
  %v1577 = vshrl.u32 %v1348, 16
  %v1579 = vrot.slane %v1577, 6
  %v1580 = vshll.u32 %v1348, 16
  %v1582 = vrot.slane %v1580, 7
  %v1583 = vor.u32 %v1579, %v1582
  %v1584 = vsel %vm1416, %v1575, %v1583
  %v1585 = vrot.slane %v1583, 4
  %v1587 = vshrl.u32 %v1349, 16
  %v1589 = vrot.slane %v1587, 6
  %v1590 = vshll.u32 %v1349, 16
  %v1592 = vrot.slane %v1590, 7
  %v1593 = vor.u32 %v1589, %v1592
  %v1594 = vsel %vm1416, %v1585, %v1593
  %v1595 = vrot.slane %v1593, 4
  %v1597 = vshrl.u32 %v1350, 16
  %v1599 = vrot.slane %v1597, 6
  %v1600 = vshll.u32 %v1350, 16
  %v1602 = vrot.slane %v1600, 7
  %v1603 = vor.u32 %v1599, %v1602
  %v1604 = vsel %vm1416, %v1595, %v1603
  %v1605 = vrot.slane %v1603, 4
  %v1607 = vshrl.u32 %v1351, 16
  %v1609 = vrot.slane %v1607, 6
  %v1610 = vshll.u32 %v1351, 16
  %v1612 = vrot.slane %v1610, 7
  %v1613 = vor.u32 %v1609, %v1612
  %v1614 = vsel %vm1416, %v1605, %v1613
  %v1615 = vrot.slane %v1613, 4
  %v1617 = vshrl.u32 %v1352, 16
  %v1619 = vrot.slane %v1617, 6
  %v1620 = vshll.u32 %v1352, 16
  %v1622 = vrot.slane %v1620, 7
  %v1623 = vor.u32 %v1619, %v1622
  %v1624 = vsel %vm1416, %v1615, %v1623
  %v1625 = vrot.slane %v1623, 4
  %v1627 = vshrl.u32 %v1353, 16
  %v1629 = vrot.slane %v1627, 6
  %v1630 = vshll.u32 %v1353, 16
  %v1632 = vrot.slane %v1630, 7
  %v1633 = vor.u32 %v1629, %v1632
  %v1634 = vsel %vm1416, %v1625, %v1633
  %v1635 = vrot.slane %v1633, 4
  %v1637 = vshrl.u32 %v1354, 16
  %v1639 = vrot.slane %v1637, 6
  %v1640 = vshll.u32 %v1354, 16
  %v1642 = vrot.slane %v1640, 7
  %v1643 = vor.u32 %v1639, %v1642
  %v1644 = vsel %vm1416, %v1635, %v1643
  %v1645 = vrot.slane %v1643, 4
  %v1647 = vshrl.u32 %v1355, 16
  %v1649 = vrot.slane %v1647, 6
  %v1650 = vshll.u32 %v1355, 16
  %v1652 = vrot.slane %v1650, 7
  %v1653 = vor.u32 %v1649, %v1652
  %v1654 = vsel %vm1416, %v1645, %v1653
  %v1655 = vrot.slane %v1653, 4
  %v1657 = vshrl.u32 %v1356, 16
  %v1659 = vrot.slane %v1657, 6
  %v1660 = vshll.u32 %v1356, 16
  %v1662 = vrot.slane %v1660, 7
  %v1663 = vor.u32 %v1659, %v1662
  %v1664 = vsel %vm1416, %v1655, %v1663
  %v1665 = vrot.slane %v1663, 4
  %v1667 = vshrl.u32 %v1357, 16
  %v1669 = vrot.slane %v1667, 6
  %v1670 = vshll.u32 %v1357, 16
  %v1672 = vrot.slane %v1670, 7
  %v1673 = vor.u32 %v1669, %v1672
  %v1674 = vsel %vm1416, %v1665, %v1673
  %v1675 = vrot.slane %v1673, 4
  %v1677 = vshrl.u32 %v1358, 16
  %v1679 = vrot.slane %v1677, 6
  %v1680 = vshll.u32 %v1358, 16
  %v1682 = vrot.slane %v1680, 7
  %v1683 = vor.u32 %v1679, %v1682
  %v1684 = vsel %vm1416, %v1675, %v1683
  %v1685 = vrot.slane %v1683, 4
  %v1687 = vshrl.u32 %v1359, 16
  %v1689 = vrot.slane %v1687, 6
  %v1690 = vshll.u32 %v1359, 16
  %v1692 = vrot.slane %v1690, 7
  %v1693 = vor.u32 %v1689, %v1692
  %v1694 = vsel %vm1416, %v1685, %v1693
  %v1695 = vrot.slane %v1693, 4
  %v1697 = vshrl.u32 %v1360, 16
  %v1699 = vrot.slane %v1697, 6
  %v1700 = vshll.u32 %v1360, 16
  %v1702 = vrot.slane %v1700, 7
  %v1703 = vor.u32 %v1699, %v1702
  %v1704 = vsel %vm1416, %v1695, %v1703
  %v1705 = vrot.slane %v1703, 4
  %v1707 = vshrl.u32 %v1361, 16
  %v1709 = vrot.slane %v1707, 6
  %v1710 = vshll.u32 %v1361, 16
  %v1712 = vrot.slane %v1710, 7
  %v1713 = vor.u32 %v1709, %v1712
  %v1714 = vsel %vm1416, %v1705, %v1713
  %v1715 = vrot.slane %v1713, 4
  %v1717 = vshrl.u32 %v1362, 16
  %v1719 = vrot.slane %v1717, 6
  %v1720 = vshll.u32 %v1362, 16
  %v1722 = vrot.slane %v1720, 7
  %v1723 = vor.u32 %v1719, %v1722
  %v1724 = vsel %vm1416, %v1715, %v1723
  %v1725 = vrot.slane %v1723, 4
  %v1727 = vshrl.u32 %v1363, 16
  %v1729 = vrot.slane %v1727, 6
  %v1730 = vshll.u32 %v1363, 16
  %v1732 = vrot.slane %v1730, 7
  %v1733 = vor.u32 %v1729, %v1732
  %v1734 = vsel %vm1416, %v1725, %v1733
  %v1735 = vrot.slane %v1733, 4
  %v1737 = vshrl.u32 %v1364, 16
  %v1739 = vrot.slane %v1737, 6
  %v1740 = vshll.u32 %v1364, 16
  %v1742 = vrot.slane %v1740, 7
  %v1743 = vor.u32 %v1739, %v1742
  %v1744 = vsel %vm1416, %v1735, %v1743
  %v1745 = vrot.slane %v1743, 4
  %v1747 = vshrl.u32 %v1365, 16
  %v1749 = vrot.slane %v1747, 6
  %v1750 = vshll.u32 %v1365, 16
  %v1752 = vrot.slane %v1750, 7
  %v1753 = vor.u32 %v1749, %v1752
  %v1754 = vsel %vm1416, %v1745, %v1753
  %v1755 = vrot.slane %v1753, 4
  %v1757 = vshrl.u32 %v1366, 16
  %v1759 = vrot.slane %v1757, 6
  %v1760 = vshll.u32 %v1366, 16
  %v1762 = vrot.slane %v1760, 7
  %v1763 = vor.u32 %v1759, %v1762
  %v1764 = vsel %vm1416, %v1755, %v1763
  %v1765 = vrot.slane %v1763, 4
  %v1767 = vshrl.u32 %v1367, 16
  %v1769 = vrot.slane %v1767, 6
  %v1770 = vshll.u32 %v1367, 16
  %v1772 = vrot.slane %v1770, 7
  %v1773 = vor.u32 %v1769, %v1772
  %v1774 = vsel %vm1416, %v1765, %v1773
  %v1775 = vrot.slane %v1773, 4
  %v1777 = vshrl.u32 %v1368, 16
  %v1779 = vrot.slane %v1777, 6
  %v1780 = vshll.u32 %v1368, 16
  %v1782 = vrot.slane %v1780, 7
  %v1783 = vor.u32 %v1779, %v1782
  %v1784 = vsel %vm1416, %v1775, %v1783
  %v1785 = vrot.slane %v1783, 4
  %v1787 = vshrl.u32 %v1369, 16
  %v1789 = vrot.slane %v1787, 6
  %v1790 = vshll.u32 %v1369, 16
  %v1792 = vrot.slane %v1790, 7
  %v1793 = vor.u32 %v1789, %v1792
  %v1794 = vsel %vm1416, %v1785, %v1793
  %v1795 = vrot.slane %v1793, 4
  %v1797 = vshrl.u32 %v1370, 16
  %v1799 = vrot.slane %v1797, 6
  %v1800 = vshll.u32 %v1370, 16
  %v1802 = vrot.slane %v1800, 7
  %v1803 = vor.u32 %v1799, %v1802
  %v1804 = vsel %vm1416, %v1795, %v1803
  %v1805 = vrot.slane %v1803, 4
  %v1807 = vshrl.u32 %v1371, 16
  %v1809 = vrot.slane %v1807, 6
  %v1810 = vshll.u32 %v1371, 16
  %v1812 = vrot.slane %v1810, 7
  %v1813 = vor.u32 %v1809, %v1812
  %v1814 = vsel %vm1416, %v1805, %v1813
  %v1815 = vrot.slane %v1813, 4
  %v1817 = vshrl.u32 %v1372, 16
  %v1819 = vrot.slane %v1817, 6
  %v1820 = vshll.u32 %v1372, 16
  %v1822 = vrot.slane %v1820, 7
  %v1823 = vor.u32 %v1819, %v1822
  %v1824 = vsel %vm1416, %v1815, %v1823
  %v1825 = vrot.slane %v1823, 4
  %v1827 = vshrl.u32 %v1373, 16
  %v1829 = vrot.slane %v1827, 6
  %v1830 = vshll.u32 %v1373, 16
  %v1832 = vrot.slane %v1830, 7
  %v1833 = vor.u32 %v1829, %v1832
  %v1834 = vsel %vm1416, %v1825, %v1833
  %v1835 = vrot.slane %v1833, 4
  %v1837 = vshrl.u32 %v1374, 16
  %v1839 = vrot.slane %v1837, 6
  %v1840 = vshll.u32 %v1374, 16
  %v1842 = vrot.slane %v1840, 7
  %v1843 = vor.u32 %v1839, %v1842
  %v1844 = vsel %vm1416, %v1835, %v1843
  %v1845 = vrot.slane %v1843, 4
  %v1847 = vshrl.u32 %v1375, 16
  %v1849 = vrot.slane %v1847, 6
  %v1850 = vshll.u32 %v1375, 16
  %v1852 = vrot.slane %v1850, 7
  %v1853 = vor.u32 %v1849, %v1852
  %v1854 = vsel %vm1416, %v1845, %v1853
  %v1855 = vrot.slane %v1853, 4
  %v1857 = vshrl.u32 %v1376, 16
  %v1859 = vrot.slane %v1857, 6
  %v1860 = vshll.u32 %v1376, 16
  %v1862 = vrot.slane %v1860, 7
  %v1863 = vor.u32 %v1859, %v1862
  %v1864 = vsel %vm1416, %v1855, %v1863
  %v1865 = vrot.slane %v1863, 4
  %v1867 = vshrl.u32 %v1377, 16
  %v1869 = vrot.slane %v1867, 6
  %v1870 = vshll.u32 %v1377, 16
  %v1872 = vrot.slane %v1870, 7
  %v1873 = vor.u32 %v1869, %v1872
  %v1874 = vsel %vm1416, %v1865, %v1873
  %v1875 = vrot.slane %v1873, 4
  %v1877 = vshrl.u32 %v1378, 16
  %v1879 = vrot.slane %v1877, 6
  %v1880 = vshll.u32 %v1378, 16
  %v1882 = vrot.slane %v1880, 7
  %v1883 = vor.u32 %v1879, %v1882
  %v1884 = vsel %vm1416, %v1875, %v1883
  %v1885 = vrot.slane %v1883, 4
  %v1887 = vshrl.u32 %v1379, 16
  %v1889 = vrot.slane %v1887, 6
  %v1890 = vshll.u32 %v1379, 16
  %v1892 = vrot.slane %v1890, 7
  %v1893 = vor.u32 %v1889, %v1892
  %v1894 = vsel %vm1416, %v1885, %v1893
  %v1895 = vrot.slane %v1893, 4
  %v1897 = vshrl.u32 %v1380, 16
  %v1899 = vrot.slane %v1897, 6
  %v1900 = vshll.u32 %v1380, 16
  %v1902 = vrot.slane %v1900, 7
  %v1903 = vor.u32 %v1899, %v1902
  %v1904 = vsel %vm1416, %v1895, %v1903
  %v1905 = vrot.slane %v1903, 4
  %v1907 = vshrl.u32 %v1381, 16
  %v1909 = vrot.slane %v1907, 6
  %v1910 = vshll.u32 %v1381, 16
  %v1912 = vrot.slane %v1910, 7
  %v1913 = vor.u32 %v1909, %v1912
  %v1914 = vsel %vm1416, %v1905, %v1913
  %v1915 = vrot.slane %v1913, 4
  %v1917 = vshrl.u32 %v1382, 16
  %v1919 = vrot.slane %v1917, 6
  %v1920 = vshll.u32 %v1382, 16
  %v1922 = vrot.slane %v1920, 7
  %v1923 = vor.u32 %v1919, %v1922
  %v1924 = vsel %vm1416, %v1915, %v1923
  %v1925 = vrot.slane %v1923, 4
  %v1927 = vshrl.u32 %v1383, 16
  %v1929 = vrot.slane %v1927, 6
  %v1930 = vshll.u32 %v1383, 16
  %v1932 = vrot.slane %v1930, 7
  %v1933 = vor.u32 %v1929, %v1932
  %v1934 = vsel %vm1416, %v1925, %v1933
  %v1935 = vrot.slane %v1933, 4
  %v1937 = vshrl.u32 %v1384, 16
  %v1939 = vrot.slane %v1937, 6
  %v1940 = vshll.u32 %v1384, 16
  %v1942 = vrot.slane %v1940, 7
  %v1943 = vor.u32 %v1939, %v1942
  %v1944 = vsel %vm1416, %v1935, %v1943
  %v1945 = vrot.slane %v1943, 4
  %v1947 = vshrl.u32 %v1385, 16
  %v1949 = vrot.slane %v1947, 6
  %v1950 = vshll.u32 %v1385, 16
  %v1952 = vrot.slane %v1950, 7
  %v1953 = vor.u32 %v1949, %v1952
  %v1954 = vsel %vm1416, %v1945, %v1953
  %v1955 = vrot.slane %v1953, 4
  %v1957 = vshrl.u32 %v1386, 16
  %v1959 = vrot.slane %v1957, 6
  %v1960 = vshll.u32 %v1386, 16
  %v1962 = vrot.slane %v1960, 7
  %v1963 = vor.u32 %v1959, %v1962
  %v1964 = vsel %vm1416, %v1955, %v1963
  %v1965 = vrot.slane %v1963, 4
  %v1967 = vshrl.u32 %v1387, 16
  %v1969 = vrot.slane %v1967, 6
  %v1970 = vshll.u32 %v1387, 16
  %v1972 = vrot.slane %v1970, 7
  %v1973 = vor.u32 %v1969, %v1972
  %v1974 = vsel %vm1416, %v1965, %v1973
  %v1975 = vrot.slane %v1973, 4
  %v1977 = vshrl.u32 %v1388, 16
  %v1979 = vrot.slane %v1977, 6
  %v1980 = vshll.u32 %v1388, 16
  %v1982 = vrot.slane %v1980, 7
  %v1983 = vor.u32 %v1979, %v1982
  %v1984 = vsel %vm1416, %v1975, %v1983
  %v1985 = vrot.slane %v1983, 4
  %v1987 = vshrl.u32 %v1389, 16
  %v1989 = vrot.slane %v1987, 6
  %v1990 = vshll.u32 %v1389, 16
  %v1992 = vrot.slane %v1990, 7
  %v1993 = vor.u32 %v1989, %v1992
  %v1994 = vsel %vm1416, %v1985, %v1993
  %v1995 = vrot.slane %v1993, 4
  %v1997 = vshrl.u32 %v1390, 16
  %v1999 = vrot.slane %v1997, 6
  %v2000 = vshll.u32 %v1390, 16
  %v2002 = vrot.slane %v2000, 7
  %v2003 = vor.u32 %v1999, %v2002
  %v2004 = vsel %vm1416, %v1995, %v2003
  %v2005 = vrot.slane %v2003, 4
  %v2007 = vshrl.u32 %v1391, 16
  %v2009 = vrot.slane %v2007, 6
  %v2010 = vshll.u32 %v1391, 16
  %v2012 = vrot.slane %v2010, 7
  %v2013 = vor.u32 %v2009, %v2012
  %v2014 = vsel %vm1416, %v2005, %v2013
  %v2015 = vrot.slane %v2013, 4
  %v2017 = vshrl.u32 %v1392, 16
  %v2019 = vrot.slane %v2017, 6
  %v2020 = vshll.u32 %v1392, 16
  %v2022 = vrot.slane %v2020, 7
  %v2023 = vor.u32 %v2019, %v2022
  %v2024 = vsel %vm1416, %v2015, %v2023
  %v2025 = vrot.slane %v2023, 4
  %v2027 = vshrl.u32 %v1393, 16
  %v2029 = vrot.slane %v2027, 6
  %v2030 = vshll.u32 %v1393, 16
  %v2032 = vrot.slane %v2030, 7
  %v2033 = vor.u32 %v2029, %v2032
  %v2034 = vsel %vm1416, %v2025, %v2033
  %v2035 = vrot.slane %v2033, 4
  %v2037 = vshrl.u32 %v1394, 16
  %v2039 = vrot.slane %v2037, 6
  %v2040 = vshll.u32 %v1394, 16
  %v2042 = vrot.slane %v2040, 7
  %v2043 = vor.u32 %v2039, %v2042
  %v2044 = vsel %vm1416, %v2035, %v2043
  %v2045 = vrot.slane %v2043, 4
  %v2047 = vshrl.u32 %v1395, 16
  %v2049 = vrot.slane %v2047, 6
  %v2050 = vshll.u32 %v1395, 16
  %v2052 = vrot.slane %v2050, 7
  %v2053 = vor.u32 %v2049, %v2052
  %v2054 = vsel %vm1416, %v2045, %v2053
  %v2055 = vrot.slane %v2053, 4
  %v2057 = vshrl.u32 %v1396, 16
  %v2059 = vrot.slane %v2057, 6
  %v2060 = vshll.u32 %v1396, 16
  %v2062 = vrot.slane %v2060, 7
  %v2063 = vor.u32 %v2059, %v2062
  %v2064 = vsel %vm1416, %v2055, %v2063
  %v2065 = vrot.slane %v2063, 4
  %v2067 = vshrl.u32 %v1397, 16
  %v2069 = vrot.slane %v2067, 6
  %v2070 = vshll.u32 %v1397, 16
  %v2072 = vrot.slane %v2070, 7
  %v2073 = vor.u32 %v2069, %v2072
  %v2074 = vsel %vm1416, %v2065, %v2073
  %v2075 = vrot.slane %v2073, 4
  %v2077 = vshrl.u32 %v1398, 16
  %v2079 = vrot.slane %v2077, 6
  %v2080 = vshll.u32 %v1398, 16
  %v2082 = vrot.slane %v2080, 7
  %v2083 = vor.u32 %v2079, %v2082
  %v2084 = vsel %vm1416, %v2075, %v2083
  %v2085 = vrot.slane %v2083, 4
  %v2087 = vshrl.u32 %v1399, 16
  %v2089 = vrot.slane %v2087, 6
  %v2090 = vshll.u32 %v1399, 16
  %v2092 = vrot.slane %v2090, 7
  %v2093 = vor.u32 %v2089, %v2092
  %v2094 = vsel %vm1416, %v2085, %v2093
  %v2095 = vrot.slane %v2093, 4
  %v2097 = vshrl.u32 %v1400, 16
  %v2099 = vrot.slane %v2097, 6
  %v2100 = vshll.u32 %v1400, 16
  %v2102 = vrot.slane %v2100, 7
  %v2103 = vor.u32 %v2099, %v2102
  %v2104 = vsel %vm1416, %v2095, %v2103
  %v2105 = vrot.slane %v2103, 4
  %v2107 = vshrl.u32 %v1401, 16
  %v2109 = vrot.slane %v2107, 6
  %v2110 = vshll.u32 %v1401, 16
  %v2112 = vrot.slane %v2110, 7
  %v2113 = vor.u32 %v2109, %v2112
  %v2114 = vsel %vm1416, %v2105, %v2113
  %v2115 = vrot.slane %v2113, 4
  %v2117 = vshrl.u32 %v1402, 16
  %v2119 = vrot.slane %v2117, 6
  %v2120 = vshll.u32 %v1402, 16
  %v2122 = vrot.slane %v2120, 7
  %v2123 = vor.u32 %v2119, %v2122
  %v2124 = vsel %vm1416, %v2115, %v2123
  %v2125 = vrot.slane %v2123, 4
  %v2127 = vshrl.u32 %v1403, 16
  %v2129 = vrot.slane %v2127, 6
  %v2130 = vshll.u32 %v1403, 16
  %v2132 = vrot.slane %v2130, 7
  %v2133 = vor.u32 %v2129, %v2132
  %v2134 = vsel %vm1416, %v2125, %v2133
  %v2135 = vrot.slane %v2133, 4
  %v2137 = vshrl.u32 %v1404, 16
  %v2139 = vrot.slane %v2137, 6
  %v2140 = vshll.u32 %v1404, 16
  %v2142 = vrot.slane %v2140, 7
  %v2143 = vor.u32 %v2139, %v2142
  %v2144 = vsel %vm1416, %v2135, %v2143
  %v2145 = vrot.slane %v2143, 4
  %v2147 = vshrl.u32 %v1405, 16
  %v2149 = vrot.slane %v2147, 6
  %v2150 = vshll.u32 %v1405, 16
  %v2152 = vrot.slane %v2150, 7
  %v2153 = vor.u32 %v2149, %v2152
  %v2154 = vsel %vm1416, %v2145, %v2153
  %v2155 = vrot.slane %v2153, 4
  %v2157 = vshrl.u32 %v1406, 16
  %v2159 = vrot.slane %v2157, 6
  %v2160 = vshll.u32 %v1406, 16
  %v2162 = vrot.slane %v2160, 7
  %v2163 = vor.u32 %v2159, %v2162
  %v2164 = vsel %vm1416, %v2155, %v2163
  %v2165 = vrot.slane %v2163, 4
  %v2167 = vshrl.u32 %v1407, 16
  %v2169 = vrot.slane %v2167, 6
  %v2170 = vshll.u32 %v1407, 16
  %v2172 = vrot.slane %v2170, 7
  %v2173 = vor.u32 %v2169, %v2172
  %v2174 = vsel %vm1416, %v2165, %v2173
  %v2175 = vrot.slane %v2173, 4
  %v2177 = vshrl.u32 %v1408, 16
  %v2179 = vrot.slane %v2177, 6
  %v2180 = vshll.u32 %v1408, 16
  %v2182 = vrot.slane %v2180, 7
  %v2183 = vor.u32 %v2179, %v2182
  %v2184 = vsel %vm1416, %v2175, %v2183
  %v2185 = vrot.slane %v2183, 4
  %v2187 = vshrl.u32 %v1409, 16
  %v2189 = vrot.slane %v2187, 6
  %v2190 = vshll.u32 %v1409, 16
  %v2192 = vrot.slane %v2190, 7
  %v2193 = vor.u32 %v2189, %v2192
  %v2194 = vsel %vm1416, %v2185, %v2193
  %v2195 = vrot.slane %v2193, 4
  %v2197 = vshrl.u32 %v1410, 16
  %v2199 = vrot.slane %v2197, 6
  %v2200 = vshll.u32 %v1410, 16
  %v2202 = vrot.slane %v2200, 7
  %v2203 = vor.u32 %v2199, %v2202
  %v2204 = vsel %vm1416, %v2195, %v2203
  %v2205 = vrot.slane %v2203, 4
  %v2207 = vshrl.u32 %v1411, 16
  %v2209 = vrot.slane %v2207, 6
  %v2210 = vshll.u32 %v1411, 16
  %v2212 = vrot.slane %v2210, 7
  %v2213 = vor.u32 %v2209, %v2212
  %v2214 = vsel %vm1416, %v2205, %v2213
  %v2215 = vrot.slane %v2213, 4
  %v2217 = vshrl.u32 %v1412, 16
  %v2219 = vrot.slane %v2217, 6
  %v2220 = vshll.u32 %v1412, 16
  %v2222 = vrot.slane %v2220, 7
  %v2223 = vor.u32 %v2219, %v2222
  %v2224 = vsel %vm1416, %v2215, %v2223
  %v2225 = vrot.slane %v2223, 4
  %v2227 = vshrl.u32 %v1413, 16
  %v2229 = vrot.slane %v2227, 6
  %v2230 = vshll.u32 %v1413, 16
  %v2232 = vrot.slane %v2230, 7
  %v2233 = vor.u32 %v2229, %v2232
  %v2234 = vsel %vm1416, %v2225, %v2233
  %2316 = vst.msk [vmem:[#allocation3] sm:$0xf] %vm917, %v1434
  %2317 = vst.msk [vmem:[#allocation3 + $0xc] sm:$0xf] %vm917, %v1444
  %2318 = vst.msk [vmem:[#allocation3 + $0x18] sm:$0xf] %vm917, %v1454
  %2319 = vst.msk [vmem:[#allocation3 + $0x24] sm:$0xf] %vm917, %v1464
  %2320 = vst.msk [vmem:[#allocation3 + $0x30] sm:$0xf] %vm917, %v1474
  %2321 = vst.msk [vmem:[#allocation3 + $0x3c] sm:$0xf] %vm917, %v1484
  %2322 = vst.msk [vmem:[#allocation3 + $0x48] sm:$0xf] %vm917, %v1494
  %2323 = vst.msk [vmem:[#allocation3 + $0x54] sm:$0xf] %vm917, %v1504
  %2324 = vst.msk [vmem:[#allocation3 + $0x60] sm:$0xf] %vm917, %v1514
  %2325 = vst.msk [vmem:[#allocation3 + $0x6c] sm:$0xf] %vm917, %v1524
  %2326 = vst.msk [vmem:[#allocation3 + $0x78] sm:$0xf] %vm917, %v1534
  %2327 = vst.msk [vmem:[#allocation3 + $0x84] sm:$0xf] %vm917, %v1544
  %2328 = vst.msk [vmem:[#allocation3 + $0x90] sm:$0xf] %vm917, %v1554
  %2329 = vst.msk [vmem:[#allocation3 + $0x9c] sm:$0xf] %vm917, %v1564
  %2330 = vst.msk [vmem:[#allocation3 + $0xa8] sm:$0xf] %vm917, %v1574
  %2331 = vst.msk [vmem:[#allocation3 + $0xb4] sm:$0xf] %vm917, %v1584
  %2332 = vst.msk [vmem:[#allocation3 + $0xc0] sm:$0xf] %vm917, %v1594
  %2333 = vst.msk [vmem:[#allocation3 + $0xcc] sm:$0xf] %vm917, %v1604
  %2334 = vst.msk [vmem:[#allocation3 + $0xd8] sm:$0xf] %vm917, %v1614
  %2335 = vst.msk [vmem:[#allocation3 + $0xe4] sm:$0xf] %vm917, %v1624
  %2336 = vst.msk [vmem:[#allocation3 + $0xf0] sm:$0xf] %vm917, %v1634
  %2337 = vst.msk [vmem:[#allocation3 + $0xfc] sm:$0xf] %vm917, %v1644
  %2338 = vst.msk [vmem:[#allocation3 + $0x108] sm:$0xf] %vm917, %v1654
  %2339 = vst.msk [vmem:[#allocation3 + $0x114] sm:$0xf] %vm917, %v1664
  %2340 = vst.msk [vmem:[#allocation3 + $0x120] sm:$0xf] %vm917, %v1674
  %2341 = vst.msk [vmem:[#allocation3 + $0x12c] sm:$0xf] %vm917, %v1684
  %2342 = vst.msk [vmem:[#allocation3 + $0x138] sm:$0xf] %vm917, %v1694
  %2343 = vst.msk [vmem:[#allocation3 + $0x144] sm:$0xf] %vm917, %v1704
  %2344 = vst.msk [vmem:[#allocation3 + $0x150] sm:$0xf] %vm917, %v1714
  %2345 = vst.msk [vmem:[#allocation3 + $0x15c] sm:$0xf] %vm917, %v1724
  %2346 = vst.msk [vmem:[#allocation3 + $0x168] sm:$0xf] %vm917, %v1734
  %2347 = vst.msk [vmem:[#allocation3 + $0x174] sm:$0xf] %vm917, %v1744
  %2348 = vst.msk [vmem:[#allocation3 + $0x180] sm:$0xf] %vm917, %v1754
  %2349 = vst.msk [vmem:[#allocation3 + $0x18c] sm:$0xf] %vm917, %v1764
  %2350 = vst.msk [vmem:[#allocation3 + $0x198] sm:$0xf] %vm917, %v1774
  %2351 = vst.msk [vmem:[#allocation3 + $0x1a4] sm:$0xf] %vm917, %v1784
  %2352 = vst.msk [vmem:[#allocation3 + $0x1b0] sm:$0xf] %vm917, %v1794
  %2353 = vst.msk [vmem:[#allocation3 + $0x1bc] sm:$0xf] %vm917, %v1804
  %2354 = vst.msk [vmem:[#allocation3 + $0x1c8] sm:$0xf] %vm917, %v1814
  %2355 = vst.msk [vmem:[#allocation3 + $0x1d4] sm:$0xf] %vm917, %v1824
  %2356 = vst.msk [vmem:[#allocation3 + $0x1e0] sm:$0xf] %vm917, %v1834
  %2357 = vst.msk [vmem:[#allocation3 + $0x1ec] sm:$0xf] %vm917, %v1844
  %2358 = vst.msk [vmem:[#allocation3 + $0x1f8] sm:$0xf] %vm917, %v1854
  %2359 = vst.msk [vmem:[#allocation3 + $0x204] sm:$0xf] %vm917, %v1864
  %2360 = vst.msk [vmem:[#allocation3 + $0x210] sm:$0xf] %vm917, %v1874
  %2361 = vst.msk [vmem:[#allocation3 + $0x21c] sm:$0xf] %vm917, %v1884
  %2362 = vst.msk [vmem:[#allocation3 + $0x228] sm:$0xf] %vm917, %v1894
  %2363 = vst.msk [vmem:[#allocation3 + $0x234] sm:$0xf] %vm917, %v1904
  %2364 = vst.msk [vmem:[#allocation3 + $0x240] sm:$0xf] %vm917, %v1914
  %2365 = vst.msk [vmem:[#allocation3 + $0x24c] sm:$0xf] %vm917, %v1924
  %2366 = vst.msk [vmem:[#allocation3 + $0x258] sm:$0xf] %vm917, %v1934
  %2367 = vst.msk [vmem:[#allocation3 + $0x264] sm:$0xf] %vm917, %v1944
  %2368 = vst.msk [vmem:[#allocation3 + $0x270] sm:$0xf] %vm917, %v1954
  %2369 = vst.msk [vmem:[#allocation3 + $0x27c] sm:$0xf] %vm917, %v1964
  %2370 = vst.msk [vmem:[#allocation3 + $0x288] sm:$0xf] %vm917, %v1974
  %2371 = vst.msk [vmem:[#allocation3 + $0x294] sm:$0xf] %vm917, %v1984
  %2372 = vst.msk [vmem:[#allocation3 + $0x2a0] sm:$0xf] %vm917, %v1994
  %2373 = vst.msk [vmem:[#allocation3 + $0x2ac] sm:$0xf] %vm917, %v2004
  %2374 = vst.msk [vmem:[#allocation3 + $0x2b8] sm:$0xf] %vm917, %v2014
  %2375 = vst.msk [vmem:[#allocation3 + $0x2c4] sm:$0xf] %vm917, %v2024
  %2376 = vst.msk [vmem:[#allocation3 + $0x2d0] sm:$0xf] %vm917, %v2034
  %2377 = vst.msk [vmem:[#allocation3 + $0x2dc] sm:$0xf] %vm917, %v2044
  %2378 = vst.msk [vmem:[#allocation3 + $0x2e8] sm:$0xf] %vm917, %v2054
  %2379 = vst.msk [vmem:[#allocation3 + $0x2f4] sm:$0xf] %vm917, %v2064
  %2380 = vst.msk [vmem:[#allocation3 + $0x300] sm:$0xf] %vm917, %v2074
  %2381 = vst.msk [vmem:[#allocation3 + $0x30c] sm:$0xf] %vm917, %v2084
  %2382 = vst.msk [vmem:[#allocation3 + $0x318] sm:$0xf] %vm917, %v2094
  %2383 = vst.msk [vmem:[#allocation3 + $0x324] sm:$0xf] %vm917, %v2104
  %2384 = vst.msk [vmem:[#allocation3 + $0x330] sm:$0xf] %vm917, %v2114
  %2385 = vst.msk [vmem:[#allocation3 + $0x33c] sm:$0xf] %vm917, %v2124
  %2386 = vst.msk [vmem:[#allocation3 + $0x348] sm:$0xf] %vm917, %v2134
  %2387 = vst.msk [vmem:[#allocation3 + $0x354] sm:$0xf] %vm917, %v2144
  %2388 = vst.msk [vmem:[#allocation3 + $0x360] sm:$0xf] %vm917, %v2154
  %2389 = vst.msk [vmem:[#allocation3 + $0x36c] sm:$0xf] %vm917, %v2164
  %2390 = vst.msk [vmem:[#allocation3 + $0x378] sm:$0xf] %vm917, %v2174
  %2391 = vst.msk [vmem:[#allocation3 + $0x384] sm:$0xf] %vm917, %v2184
  %2392 = vst.msk [vmem:[#allocation3 + $0x390] sm:$0xf] %vm917, %v2194
  %2393 = vst.msk [vmem:[#allocation3 + $0x39c] sm:$0xf] %vm917, %v2204
  %2394 = vst.msk [vmem:[#allocation3 + $0x3a8] sm:$0xf] %vm917, %v2214
  %2395 = vst.msk [vmem:[#allocation3 + $0x3b4] sm:$0xf] %vm917, %v2224
  %2396 = vst.msk [vmem:[#allocation3 + $0x3c0] sm:$0xf] %vm917, %v2234
  %v2397 = vld [vmem:[#allocation2 + $0x4] sm:$0x8]
  %v2398 = vld [vmem:[#allocation2 + $0x8] sm:$0xf]
  %v2399 = vld [vmem:[#allocation2 + $0xc] sm:$0xf]
  %v2400 = vld [vmem:[#allocation2 + $0x10] sm:$0xf]
  %v2401 = vld [vmem:[#allocation2 + $0x14] sm:$0xf]
  %v2402 = vld [vmem:[#allocation2 + $0x18] sm:$0xf]
  %v2403 = vld [vmem:[#allocation2 + $0x1c] sm:$0xf]
  %v2404 = vld [vmem:[#allocation2 + $0x20] sm:$0xf]
  %v2405 = vld [vmem:[#allocation2 + $0x24] sm:$0xf]
  %v2406 = vld [vmem:[#allocation2 + $0x28] sm:$0xf]
  %v2407 = vld [vmem:[#allocation2 + $0x2c] sm:$0xf]
  %v2408 = vld [vmem:[#allocation2 + $0x30] sm:$0xf]
  %v2409 = vld [vmem:[#allocation2 + $0x34] sm:$0xf]
  %v2410 = vld [vmem:[#allocation2 + $0x38] sm:$0xf]
  %v2411 = vld [vmem:[#allocation2 + $0x3c] sm:$0xf]
  %v2412 = vld [vmem:[#allocation2 + $0x40] sm:$0xf]
  %v2413 = vld [vmem:[#allocation2 + $0x44] sm:$0xf]
  %v2414 = vld [vmem:[#allocation2 + $0x48] sm:$0xf]
  %v2415 = vld [vmem:[#allocation2 + $0x4c] sm:$0xf]
  %v2416 = vld [vmem:[#allocation2 + $0x50] sm:$0xf]
  %v2417 = vld [vmem:[#allocation2 + $0x54] sm:$0xf]
  %v2418 = vld [vmem:[#allocation2 + $0x58] sm:$0xf]
  %v2419 = vld [vmem:[#allocation2 + $0x5c] sm:$0xf]
  %v2420 = vld [vmem:[#allocation2 + $0x60] sm:$0xf]
  %v2421 = vld [vmem:[#allocation2 + $0x64] sm:$0xf]
  %v2422 = vld [vmem:[#allocation2 + $0x68] sm:$0xf]
  %v2423 = vld [vmem:[#allocation2 + $0x6c] sm:$0xf]
  %v2424 = vld [vmem:[#allocation2 + $0x70] sm:$0xf]
  %v2425 = vld [vmem:[#allocation2 + $0x74] sm:$0xf]
  %v2426 = vld [vmem:[#allocation2 + $0x78] sm:$0xf]
  %v2427 = vld [vmem:[#allocation2 + $0x7c] sm:$0xf]
  %v2428 = vld [vmem:[#allocation2 + $0x80] sm:$0xf]
  %v2429 = vld [vmem:[#allocation2 + $0x84] sm:$0xf]
  %v2430 = vld [vmem:[#allocation2 + $0x88] sm:$0xf]
  %v2431 = vld [vmem:[#allocation2 + $0x8c] sm:$0xf]
  %v2432 = vld [vmem:[#allocation2 + $0x90] sm:$0xf]
  %v2433 = vld [vmem:[#allocation2 + $0x94] sm:$0xf]
  %v2434 = vld [vmem:[#allocation2 + $0x98] sm:$0xf]
  %v2435 = vld [vmem:[#allocation2 + $0x9c] sm:$0xf]
  %v2436 = vld [vmem:[#allocation2 + $0xa0] sm:$0xf]
  %v2437 = vld [vmem:[#allocation2 + $0xa4] sm:$0xf]
  %v2438 = vld [vmem:[#allocation2 + $0xa8] sm:$0xf]
  %v2439 = vld [vmem:[#allocation2 + $0xac] sm:$0xf]
  %v2440 = vld [vmem:[#allocation2 + $0xb0] sm:$0xf]
  %v2441 = vld [vmem:[#allocation2 + $0xb4] sm:$0xf]
  %v2442 = vld [vmem:[#allocation2 + $0xb8] sm:$0xf]
  %v2443 = vld [vmem:[#allocation2 + $0xbc] sm:$0xf]
  %v2444 = vld [vmem:[#allocation2 + $0xc0] sm:$0xf]
  %v2445 = vld [vmem:[#allocation2 + $0xc4] sm:$0xf]
  %v2446 = vld [vmem:[#allocation2 + $0xc8] sm:$0xf]
  %v2447 = vld [vmem:[#allocation2 + $0xcc] sm:$0xf]
  %v2448 = vld [vmem:[#allocation2 + $0xd0] sm:$0xf]
  %v2449 = vld [vmem:[#allocation2 + $0xd4] sm:$0xf]
  %v2450 = vld [vmem:[#allocation2 + $0xd8] sm:$0xf]
  %v2451 = vld [vmem:[#allocation2 + $0xdc] sm:$0xf]
  %v2452 = vld [vmem:[#allocation2 + $0xe0] sm:$0xf]
  %v2453 = vld [vmem:[#allocation2 + $0xe4] sm:$0xf]
  %v2454 = vld [vmem:[#allocation2 + $0xe8] sm:$0xf]
  %v2455 = vld [vmem:[#allocation2 + $0xec] sm:$0xf]
  %v2456 = vld [vmem:[#allocation2 + $0xf0] sm:$0xf]
  %v2457 = vld [vmem:[#allocation2 + $0xf4] sm:$0xf]
  %v2458 = vld [vmem:[#allocation2 + $0xf8] sm:$0xf]
  %v2459 = vld [vmem:[#allocation2 + $0xfc] sm:$0xf]
  %v2460 = vld [vmem:[#allocation2 + $0x100] sm:$0xf]
  %v2461 = vld [vmem:[#allocation2 + $0x104] sm:$0xf]
  %v2462 = vld [vmem:[#allocation2 + $0x108] sm:$0xf]
  %v2463 = vld [vmem:[#allocation2 + $0x10c] sm:$0xf]
  %v2464 = vld [vmem:[#allocation2 + $0x110] sm:$0xf]
  %v2465 = vld [vmem:[#allocation2 + $0x114] sm:$0xf]
  %v2466 = vld [vmem:[#allocation2 + $0x118] sm:$0xf]
  %v2467 = vld [vmem:[#allocation2 + $0x11c] sm:$0xf]
  %v2468 = vld [vmem:[#allocation2 + $0x120] sm:$0xf]
  %v2469 = vld [vmem:[#allocation2 + $0x124] sm:$0xf]
  %v2470 = vld [vmem:[#allocation2 + $0x128] sm:$0xf]
  %v2471 = vld [vmem:[#allocation2 + $0x12c] sm:$0xf]
  %v2472 = vld [vmem:[#allocation2 + $0x130] sm:$0xf]
  %v2473 = vld [vmem:[#allocation2 + $0x134] sm:$0xf]
  %v2474 = vld [vmem:[#allocation2 + $0x138] sm:$0xf]
  %v2475 = vld [vmem:[#allocation2 + $0x13c] sm:$0xf]
  %v2476 = vld [vmem:[#allocation2 + $0x140] sm:$0xf]
  %v2477 = vld [vmem:[#allocation2 + $0x144] sm:$0xf]
  %v2478 = vld [vmem:[#allocation2 + $0x148] sm:$0x7]
  %vm2561 = vcmask 1040384
  %vm2562 = vcmask 1044484
  %vm2563 = vmor %vm2561, %vm2562
  %v2564 = vrot.slane %v2397, 7
  %v2565 = vrot.slane %v2564, 4
  %v2566 = vrot.slane %v2398, 7
  %v2567 = vsel %vm2563, %v2565, %v2566
  %v2568 = vrot.slane %v2566, 4
  %v2569 = vrot.slane %v2399, 7
  %v2570 = vsel %vm2563, %v2568, %v2569
  %v2571 = vrot.slane %v2569, 4
  %v2572 = vrot.slane %v2400, 7
  %v2573 = vsel %vm2563, %v2571, %v2572
  %v2574 = vrot.slane %v2572, 4
  %v2575 = vrot.slane %v2401, 7
  %v2576 = vsel %vm2563, %v2574, %v2575
  %v2577 = vrot.slane %v2575, 4
  %v2578 = vrot.slane %v2402, 7
  %v2579 = vsel %vm2563, %v2577, %v2578
  %v2580 = vrot.slane %v2578, 4
  %v2581 = vrot.slane %v2403, 7
  %v2582 = vsel %vm2563, %v2580, %v2581
  %v2583 = vrot.slane %v2581, 4
  %v2584 = vrot.slane %v2404, 7
  %v2585 = vsel %vm2563, %v2583, %v2584
  %v2586 = vrot.slane %v2584, 4
  %v2587 = vrot.slane %v2405, 7
  %v2588 = vsel %vm2563, %v2586, %v2587
  %v2589 = vrot.slane %v2587, 4
  %v2590 = vrot.slane %v2406, 7
  %v2591 = vsel %vm2563, %v2589, %v2590
  %v2592 = vrot.slane %v2590, 4
  %v2593 = vrot.slane %v2407, 7
  %v2594 = vsel %vm2563, %v2592, %v2593
  %v2595 = vrot.slane %v2593, 4
  %v2596 = vrot.slane %v2408, 7
  %v2597 = vsel %vm2563, %v2595, %v2596
  %v2598 = vrot.slane %v2596, 4
  %v2599 = vrot.slane %v2409, 7
  %v2600 = vsel %vm2563, %v2598, %v2599
  %v2601 = vrot.slane %v2599, 4
  %v2602 = vrot.slane %v2410, 7
  %v2603 = vsel %vm2563, %v2601, %v2602
  %v2604 = vrot.slane %v2602, 4
  %v2605 = vrot.slane %v2411, 7
  %v2606 = vsel %vm2563, %v2604, %v2605
  %v2607 = vrot.slane %v2605, 4
  %v2608 = vrot.slane %v2412, 7
  %v2609 = vsel %vm2563, %v2607, %v2608
  %v2610 = vrot.slane %v2608, 4
  %v2611 = vrot.slane %v2413, 7
  %v2612 = vsel %vm2563, %v2610, %v2611
  %v2613 = vrot.slane %v2611, 4
  %v2614 = vrot.slane %v2414, 7
  %v2615 = vsel %vm2563, %v2613, %v2614
  %v2616 = vrot.slane %v2614, 4
  %v2617 = vrot.slane %v2415, 7
  %v2618 = vsel %vm2563, %v2616, %v2617
  %v2619 = vrot.slane %v2617, 4
  %v2620 = vrot.slane %v2416, 7
  %v2621 = vsel %vm2563, %v2619, %v2620
  %v2622 = vrot.slane %v2620, 4
  %v2623 = vrot.slane %v2417, 7
  %v2624 = vsel %vm2563, %v2622, %v2623
  %v2625 = vrot.slane %v2623, 4
  %v2626 = vrot.slane %v2418, 7
  %v2627 = vsel %vm2563, %v2625, %v2626
  %v2628 = vrot.slane %v2626, 4
  %v2629 = vrot.slane %v2419, 7
  %v2630 = vsel %vm2563, %v2628, %v2629
  %v2631 = vrot.slane %v2629, 4
  %v2632 = vrot.slane %v2420, 7
  %v2633 = vsel %vm2563, %v2631, %v2632
  %v2634 = vrot.slane %v2632, 4
  %v2635 = vrot.slane %v2421, 7
  %v2636 = vsel %vm2563, %v2634, %v2635
  %v2637 = vrot.slane %v2635, 4
  %v2638 = vrot.slane %v2422, 7
  %v2639 = vsel %vm2563, %v2637, %v2638
  %v2640 = vrot.slane %v2638, 4
  %v2641 = vrot.slane %v2423, 7
  %v2642 = vsel %vm2563, %v2640, %v2641
  %v2643 = vrot.slane %v2641, 4
  %v2644 = vrot.slane %v2424, 7
  %v2645 = vsel %vm2563, %v2643, %v2644
  %v2646 = vrot.slane %v2644, 4
  %v2647 = vrot.slane %v2425, 7
  %v2648 = vsel %vm2563, %v2646, %v2647
  %v2649 = vrot.slane %v2647, 4
  %v2650 = vrot.slane %v2426, 7
  %v2651 = vsel %vm2563, %v2649, %v2650
  %v2652 = vrot.slane %v2650, 4
  %v2653 = vrot.slane %v2427, 7
  %v2654 = vsel %vm2563, %v2652, %v2653
  %v2655 = vrot.slane %v2653, 4
  %v2656 = vrot.slane %v2428, 7
  %v2657 = vsel %vm2563, %v2655, %v2656
  %v2658 = vrot.slane %v2656, 4
  %v2659 = vrot.slane %v2429, 7
  %v2660 = vsel %vm2563, %v2658, %v2659
  %v2661 = vrot.slane %v2659, 4
  %v2662 = vrot.slane %v2430, 7
  %v2663 = vsel %vm2563, %v2661, %v2662
  %v2664 = vrot.slane %v2662, 4
  %v2665 = vrot.slane %v2431, 7
  %v2666 = vsel %vm2563, %v2664, %v2665
  %v2667 = vrot.slane %v2665, 4
  %v2668 = vrot.slane %v2432, 7
  %v2669 = vsel %vm2563, %v2667, %v2668
  %v2670 = vrot.slane %v2668, 4
  %v2671 = vrot.slane %v2433, 7
  %v2672 = vsel %vm2563, %v2670, %v2671
  %v2673 = vrot.slane %v2671, 4
  %v2674 = vrot.slane %v2434, 7
  %v2675 = vsel %vm2563, %v2673, %v2674
  %v2676 = vrot.slane %v2674, 4
  %v2677 = vrot.slane %v2435, 7
  %v2678 = vsel %vm2563, %v2676, %v2677
  %v2679 = vrot.slane %v2677, 4
  %v2680 = vrot.slane %v2436, 7
  %v2681 = vsel %vm2563, %v2679, %v2680
  %v2682 = vrot.slane %v2680, 4
  %v2683 = vrot.slane %v2437, 7
  %v2684 = vsel %vm2563, %v2682, %v2683
  %v2685 = vrot.slane %v2683, 4
  %v2686 = vrot.slane %v2438, 7
  %v2687 = vsel %vm2563, %v2685, %v2686
  %v2688 = vrot.slane %v2686, 4
  %v2689 = vrot.slane %v2439, 7
  %v2690 = vsel %vm2563, %v2688, %v2689
  %v2691 = vrot.slane %v2689, 4
  %v2692 = vrot.slane %v2440, 7
  %v2693 = vsel %vm2563, %v2691, %v2692
  %v2694 = vrot.slane %v2692, 4
  %v2695 = vrot.slane %v2441, 7
  %v2696 = vsel %vm2563, %v2694, %v2695
  %v2697 = vrot.slane %v2695, 4
  %v2698 = vrot.slane %v2442, 7
  %v2699 = vsel %vm2563, %v2697, %v2698
  %v2700 = vrot.slane %v2698, 4
  %v2701 = vrot.slane %v2443, 7
  %v2702 = vsel %vm2563, %v2700, %v2701
  %v2703 = vrot.slane %v2701, 4
  %v2704 = vrot.slane %v2444, 7
  %v2705 = vsel %vm2563, %v2703, %v2704
  %v2706 = vrot.slane %v2704, 4
  %v2707 = vrot.slane %v2445, 7
  %v2708 = vsel %vm2563, %v2706, %v2707
  %v2709 = vrot.slane %v2707, 4
  %v2710 = vrot.slane %v2446, 7
  %v2711 = vsel %vm2563, %v2709, %v2710
  %v2712 = vrot.slane %v2710, 4
  %v2713 = vrot.slane %v2447, 7
  %v2714 = vsel %vm2563, %v2712, %v2713
  %v2715 = vrot.slane %v2713, 4
  %v2716 = vrot.slane %v2448, 7
  %v2717 = vsel %vm2563, %v2715, %v2716
  %v2718 = vrot.slane %v2716, 4
  %v2719 = vrot.slane %v2449, 7
  %v2720 = vsel %vm2563, %v2718, %v2719
  %v2721 = vrot.slane %v2719, 4
  %v2722 = vrot.slane %v2450, 7
  %v2723 = vsel %vm2563, %v2721, %v2722
  %v2724 = vrot.slane %v2722, 4
  %v2725 = vrot.slane %v2451, 7
  %v2726 = vsel %vm2563, %v2724, %v2725
  %v2727 = vrot.slane %v2725, 4
  %v2728 = vrot.slane %v2452, 7
  %v2729 = vsel %vm2563, %v2727, %v2728
  %v2730 = vrot.slane %v2728, 4
  %v2731 = vrot.slane %v2453, 7
  %v2732 = vsel %vm2563, %v2730, %v2731
  %v2733 = vrot.slane %v2731, 4
  %v2734 = vrot.slane %v2454, 7
  %v2735 = vsel %vm2563, %v2733, %v2734
  %v2736 = vrot.slane %v2734, 4
  %v2737 = vrot.slane %v2455, 7
  %v2738 = vsel %vm2563, %v2736, %v2737
  %v2739 = vrot.slane %v2737, 4
  %v2740 = vrot.slane %v2456, 7
  %v2741 = vsel %vm2563, %v2739, %v2740
  %v2742 = vrot.slane %v2740, 4
  %v2743 = vrot.slane %v2457, 7
  %v2744 = vsel %vm2563, %v2742, %v2743
  %v2745 = vrot.slane %v2743, 4
  %v2746 = vrot.slane %v2458, 7
  %v2747 = vsel %vm2563, %v2745, %v2746
  %v2748 = vrot.slane %v2746, 4
  %v2749 = vrot.slane %v2459, 7
  %v2750 = vsel %vm2563, %v2748, %v2749
  %v2751 = vrot.slane %v2749, 4
  %v2752 = vrot.slane %v2460, 7
  %v2753 = vsel %vm2563, %v2751, %v2752
  %v2754 = vrot.slane %v2752, 4
  %v2755 = vrot.slane %v2461, 7
  %v2756 = vsel %vm2563, %v2754, %v2755
  %v2757 = vrot.slane %v2755, 4
  %v2758 = vrot.slane %v2462, 7
  %v2759 = vsel %vm2563, %v2757, %v2758
  %v2760 = vrot.slane %v2758, 4
  %v2761 = vrot.slane %v2463, 7
  %v2762 = vsel %vm2563, %v2760, %v2761
  %v2763 = vrot.slane %v2761, 4
  %v2764 = vrot.slane %v2464, 7
  %v2765 = vsel %vm2563, %v2763, %v2764
  %v2766 = vrot.slane %v2764, 4
  %v2767 = vrot.slane %v2465, 7
  %v2768 = vsel %vm2563, %v2766, %v2767
  %v2769 = vrot.slane %v2767, 4
  %v2770 = vrot.slane %v2466, 7
  %v2771 = vsel %vm2563, %v2769, %v2770
  %v2772 = vrot.slane %v2770, 4
  %v2773 = vrot.slane %v2467, 7
  %v2774 = vsel %vm2563, %v2772, %v2773
  %v2775 = vrot.slane %v2773, 4
  %v2776 = vrot.slane %v2468, 7
  %v2777 = vsel %vm2563, %v2775, %v2776
  %v2778 = vrot.slane %v2776, 4
  %v2779 = vrot.slane %v2469, 7
  %v2780 = vsel %vm2563, %v2778, %v2779
  %v2781 = vrot.slane %v2779, 4
  %v2782 = vrot.slane %v2470, 7
  %v2783 = vsel %vm2563, %v2781, %v2782
  %v2784 = vrot.slane %v2782, 4
  %v2785 = vrot.slane %v2471, 7
  %v2786 = vsel %vm2563, %v2784, %v2785
  %v2787 = vrot.slane %v2785, 4
  %v2788 = vrot.slane %v2472, 7
  %v2789 = vsel %vm2563, %v2787, %v2788
  %v2790 = vrot.slane %v2788, 4
  %v2791 = vrot.slane %v2473, 7
  %v2792 = vsel %vm2563, %v2790, %v2791
  %v2793 = vrot.slane %v2791, 4
  %v2794 = vrot.slane %v2474, 7
  %v2795 = vsel %vm2563, %v2793, %v2794
  %v2796 = vrot.slane %v2794, 4
  %v2797 = vrot.slane %v2475, 7
  %v2798 = vsel %vm2563, %v2796, %v2797
  %v2799 = vrot.slane %v2797, 4
  %v2800 = vrot.slane %v2476, 7
  %v2801 = vsel %vm2563, %v2799, %v2800
  %v2802 = vrot.slane %v2800, 4
  %v2803 = vrot.slane %v2477, 7
  %v2804 = vsel %vm2563, %v2802, %v2803
  %v2805 = vrot.slane %v2803, 4
  %v2806 = vrot.slane %v2478, 7
  %v2807 = vsel %vm2563, %v2805, %v2806
  %2808 = vrot.lane.b32.xlu0 %v2567, 32
  %v2809 = vpop.permute.xlu0 %2808
  %2810 = vrot.lane.b32.xlu0 %v2570, 32
  %v2811 = vpop.permute.xlu0 %2810
  %2812 = vrot.lane.b32.xlu0 %v2573, 32
  %v2813 = vpop.permute.xlu0 %2812
  %2814 = vrot.lane.b32.xlu0 %v2576, 32
  %v2815 = vpop.permute.xlu0 %2814
  %2816 = vrot.lane.b32.xlu0 %v2579, 32
  %v2817 = vpop.permute.xlu0 %2816
  %2818 = vrot.lane.b32.xlu0 %v2582, 32
  %v2819 = vpop.permute.xlu0 %2818
  %2820 = vrot.lane.b32.xlu0 %v2585, 32
  %v2821 = vpop.permute.xlu0 %2820
  %2822 = vrot.lane.b32.xlu0 %v2588, 32
  %v2823 = vpop.permute.xlu0 %2822
  %2824 = vrot.lane.b32.xlu0 %v2591, 32
  %v2825 = vpop.permute.xlu0 %2824
  %2826 = vrot.lane.b32.xlu0 %v2594, 32
  %v2827 = vpop.permute.xlu0 %2826
  %2828 = vrot.lane.b32.xlu0 %v2597, 32
  %v2829 = vpop.permute.xlu0 %2828
  %2830 = vrot.lane.b32.xlu0 %v2600, 32
  %v2831 = vpop.permute.xlu0 %2830
  %2832 = vrot.lane.b32.xlu0 %v2603, 32
  %v2833 = vpop.permute.xlu0 %2832
  %2834 = vrot.lane.b32.xlu0 %v2606, 32
  %v2835 = vpop.permute.xlu0 %2834
  %2836 = vrot.lane.b32.xlu0 %v2609, 32
  %v2837 = vpop.permute.xlu0 %2836
  %2838 = vrot.lane.b32.xlu0 %v2612, 32
  %v2839 = vpop.permute.xlu0 %2838
  %2840 = vrot.lane.b32.xlu0 %v2615, 32
  %v2841 = vpop.permute.xlu0 %2840
  %2842 = vrot.lane.b32.xlu0 %v2618, 32
  %v2843 = vpop.permute.xlu0 %2842
  %2844 = vrot.lane.b32.xlu0 %v2621, 32
  %v2845 = vpop.permute.xlu0 %2844
  %2846 = vrot.lane.b32.xlu0 %v2624, 32
  %v2847 = vpop.permute.xlu0 %2846
  %2848 = vrot.lane.b32.xlu0 %v2627, 32
  %v2849 = vpop.permute.xlu0 %2848
  %2850 = vrot.lane.b32.xlu0 %v2630, 32
  %v2851 = vpop.permute.xlu0 %2850
  %2852 = vrot.lane.b32.xlu0 %v2633, 32
  %v2853 = vpop.permute.xlu0 %2852
  %2854 = vrot.lane.b32.xlu0 %v2636, 32
  %v2855 = vpop.permute.xlu0 %2854
  %2856 = vrot.lane.b32.xlu0 %v2639, 32
  %v2857 = vpop.permute.xlu0 %2856
  %2858 = vrot.lane.b32.xlu0 %v2642, 32
  %v2859 = vpop.permute.xlu0 %2858
  %2860 = vrot.lane.b32.xlu0 %v2645, 32
  %v2861 = vpop.permute.xlu0 %2860
  %2862 = vrot.lane.b32.xlu0 %v2648, 32
  %v2863 = vpop.permute.xlu0 %2862
  %2864 = vrot.lane.b32.xlu0 %v2651, 32
  %v2865 = vpop.permute.xlu0 %2864
  %2866 = vrot.lane.b32.xlu0 %v2654, 32
  %v2867 = vpop.permute.xlu0 %2866
  %2868 = vrot.lane.b32.xlu0 %v2657, 32
  %v2869 = vpop.permute.xlu0 %2868
  %2870 = vrot.lane.b32.xlu0 %v2660, 32
  %v2871 = vpop.permute.xlu0 %2870
  %2872 = vrot.lane.b32.xlu0 %v2663, 32
  %v2873 = vpop.permute.xlu0 %2872
  %2874 = vrot.lane.b32.xlu0 %v2666, 32
  %v2875 = vpop.permute.xlu0 %2874
  %2876 = vrot.lane.b32.xlu0 %v2669, 32
  %v2877 = vpop.permute.xlu0 %2876
  %2878 = vrot.lane.b32.xlu0 %v2672, 32
  %v2879 = vpop.permute.xlu0 %2878
  %2880 = vrot.lane.b32.xlu0 %v2675, 32
  %v2881 = vpop.permute.xlu0 %2880
  %2882 = vrot.lane.b32.xlu0 %v2678, 32
  %v2883 = vpop.permute.xlu0 %2882
  %2884 = vrot.lane.b32.xlu0 %v2681, 32
  %v2885 = vpop.permute.xlu0 %2884
  %2886 = vrot.lane.b32.xlu0 %v2684, 32
  %v2887 = vpop.permute.xlu0 %2886
  %2888 = vrot.lane.b32.xlu0 %v2687, 32
  %v2889 = vpop.permute.xlu0 %2888
  %2890 = vrot.lane.b32.xlu0 %v2690, 32
  %v2891 = vpop.permute.xlu0 %2890
  %2892 = vrot.lane.b32.xlu0 %v2693, 32
  %v2893 = vpop.permute.xlu0 %2892
  %2894 = vrot.lane.b32.xlu0 %v2696, 32
  %v2895 = vpop.permute.xlu0 %2894
  %2896 = vrot.lane.b32.xlu0 %v2699, 32
  %v2897 = vpop.permute.xlu0 %2896
  %2898 = vrot.lane.b32.xlu0 %v2702, 32
  %v2899 = vpop.permute.xlu0 %2898
  %2900 = vrot.lane.b32.xlu0 %v2705, 32
  %v2901 = vpop.permute.xlu0 %2900
  %2902 = vrot.lane.b32.xlu0 %v2708, 32
  %v2903 = vpop.permute.xlu0 %2902
  %2904 = vrot.lane.b32.xlu0 %v2711, 32
  %v2905 = vpop.permute.xlu0 %2904
  %2906 = vrot.lane.b32.xlu0 %v2714, 32
  %v2907 = vpop.permute.xlu0 %2906
  %2908 = vrot.lane.b32.xlu0 %v2717, 32
  %v2909 = vpop.permute.xlu0 %2908
  %2910 = vrot.lane.b32.xlu0 %v2720, 32
  %v2911 = vpop.permute.xlu0 %2910
  %2912 = vrot.lane.b32.xlu0 %v2723, 32
  %v2913 = vpop.permute.xlu0 %2912
  %2914 = vrot.lane.b32.xlu0 %v2726, 32
  %v2915 = vpop.permute.xlu0 %2914
  %2916 = vrot.lane.b32.xlu0 %v2729, 32
  %v2917 = vpop.permute.xlu0 %2916
  %2918 = vrot.lane.b32.xlu0 %v2732, 32
  %v2919 = vpop.permute.xlu0 %2918
  %2920 = vrot.lane.b32.xlu0 %v2735, 32
  %v2921 = vpop.permute.xlu0 %2920
  %2922 = vrot.lane.b32.xlu0 %v2738, 32
  %v2923 = vpop.permute.xlu0 %2922
  %2924 = vrot.lane.b32.xlu0 %v2741, 32
  %v2925 = vpop.permute.xlu0 %2924
  %2926 = vrot.lane.b32.xlu0 %v2744, 32
  %v2927 = vpop.permute.xlu0 %2926
  %2928 = vrot.lane.b32.xlu0 %v2747, 32
  %v2929 = vpop.permute.xlu0 %2928
  %2930 = vrot.lane.b32.xlu0 %v2750, 32
  %v2931 = vpop.permute.xlu0 %2930
  %2932 = vrot.lane.b32.xlu0 %v2753, 32
  %v2933 = vpop.permute.xlu0 %2932
  %2934 = vrot.lane.b32.xlu0 %v2756, 32
  %v2935 = vpop.permute.xlu0 %2934
  %2936 = vrot.lane.b32.xlu0 %v2759, 32
  %v2937 = vpop.permute.xlu0 %2936
  %2938 = vrot.lane.b32.xlu0 %v2762, 32
  %v2939 = vpop.permute.xlu0 %2938
  %2940 = vrot.lane.b32.xlu0 %v2765, 32
  %v2941 = vpop.permute.xlu0 %2940
  %2942 = vrot.lane.b32.xlu0 %v2768, 32
  %v2943 = vpop.permute.xlu0 %2942
  %2944 = vrot.lane.b32.xlu0 %v2771, 32
  %v2945 = vpop.permute.xlu0 %2944
  %2946 = vrot.lane.b32.xlu0 %v2774, 32
  %v2947 = vpop.permute.xlu0 %2946
  %2948 = vrot.lane.b32.xlu0 %v2777, 32
  %v2949 = vpop.permute.xlu0 %2948
  %2950 = vrot.lane.b32.xlu0 %v2780, 32
  %v2951 = vpop.permute.xlu0 %2950
  %2952 = vrot.lane.b32.xlu0 %v2783, 32
  %v2953 = vpop.permute.xlu0 %2952
  %2954 = vrot.lane.b32.xlu0 %v2786, 32
  %v2955 = vpop.permute.xlu0 %2954
  %2956 = vrot.lane.b32.xlu0 %v2789, 32
  %v2957 = vpop.permute.xlu0 %2956
  %2958 = vrot.lane.b32.xlu0 %v2792, 32
  %v2959 = vpop.permute.xlu0 %2958
  %2960 = vrot.lane.b32.xlu0 %v2795, 32
  %v2961 = vpop.permute.xlu0 %2960
  %2962 = vrot.lane.b32.xlu0 %v2798, 32
  %v2963 = vpop.permute.xlu0 %2962
  %2964 = vrot.lane.b32.xlu0 %v2801, 32
  %v2965 = vpop.permute.xlu0 %2964
  %2966 = vrot.lane.b32.xlu0 %v2804, 32
  %v2967 = vpop.permute.xlu0 %2966
  %2968 = vrot.lane.b32.xlu0 %v2807, 32
  %v2969 = vpop.permute.xlu0 %2968
  %vm3051 = vcmask 519424
  %3052 = vst.msk [vmem:[#allocation3] sm:$0xf] %vm3051, %v2809
  %3053 = vst.msk [vmem:[#allocation3 + $0xc] sm:$0xf] %vm3051, %v2811
  %3054 = vst.msk [vmem:[#allocation3 + $0x18] sm:$0xf] %vm3051, %v2813
  %3055 = vst.msk [vmem:[#allocation3 + $0x24] sm:$0xf] %vm3051, %v2815
  %3056 = vst.msk [vmem:[#allocation3 + $0x30] sm:$0xf] %vm3051, %v2817
  %3057 = vst.msk [vmem:[#allocation3 + $0x3c] sm:$0xf] %vm3051, %v2819
  %3058 = vst.msk [vmem:[#allocation3 + $0x48] sm:$0xf] %vm3051, %v2821
  %3059 = vst.msk [vmem:[#allocation3 + $0x54] sm:$0xf] %vm3051, %v2823
  %3060 = vst.msk [vmem:[#allocation3 + $0x60] sm:$0xf] %vm3051, %v2825
  %3061 = vst.msk [vmem:[#allocation3 + $0x6c] sm:$0xf] %vm3051, %v2827
  %3062 = vst.msk [vmem:[#allocation3 + $0x78] sm:$0xf] %vm3051, %v2829
  %3063 = vst.msk [vmem:[#allocation3 + $0x84] sm:$0xf] %vm3051, %v2831
  %3064 = vst.msk [vmem:[#allocation3 + $0x90] sm:$0xf] %vm3051, %v2833
  %3065 = vst.msk [vmem:[#allocation3 + $0x9c] sm:$0xf] %vm3051, %v2835
  %3066 = vst.msk [vmem:[#allocation3 + $0xa8] sm:$0xf] %vm3051, %v2837
  %3067 = vst.msk [vmem:[#allocation3 + $0xb4] sm:$0xf] %vm3051, %v2839
  %3068 = vst.msk [vmem:[#allocation3 + $0xc0] sm:$0xf] %vm3051, %v2841
  %3069 = vst.msk [vmem:[#allocation3 + $0xcc] sm:$0xf] %vm3051, %v2843
  %3070 = vst.msk [vmem:[#allocation3 + $0xd8] sm:$0xf] %vm3051, %v2845
  %3071 = vst.msk [vmem:[#allocation3 + $0xe4] sm:$0xf] %vm3051, %v2847
  %3072 = vst.msk [vmem:[#allocation3 + $0xf0] sm:$0xf] %vm3051, %v2849
  %3073 = vst.msk [vmem:[#allocation3 + $0xfc] sm:$0xf] %vm3051, %v2851
  %3074 = vst.msk [vmem:[#allocation3 + $0x108] sm:$0xf] %vm3051, %v2853
  %3075 = vst.msk [vmem:[#allocation3 + $0x114] sm:$0xf] %vm3051, %v2855
  %3076 = vst.msk [vmem:[#allocation3 + $0x120] sm:$0xf] %vm3051, %v2857
  %3077 = vst.msk [vmem:[#allocation3 + $0x12c] sm:$0xf] %vm3051, %v2859
  %3078 = vst.msk [vmem:[#allocation3 + $0x138] sm:$0xf] %vm3051, %v2861
  %3079 = vst.msk [vmem:[#allocation3 + $0x144] sm:$0xf] %vm3051, %v2863
  %3080 = vst.msk [vmem:[#allocation3 + $0x150] sm:$0xf] %vm3051, %v2865
  %3081 = vst.msk [vmem:[#allocation3 + $0x15c] sm:$0xf] %vm3051, %v2867
  %3082 = vst.msk [vmem:[#allocation3 + $0x168] sm:$0xf] %vm3051, %v2869
  %3083 = vst.msk [vmem:[#allocation3 + $0x174] sm:$0xf] %vm3051, %v2871
  %3084 = vst.msk [vmem:[#allocation3 + $0x180] sm:$0xf] %vm3051, %v2873
  %3085 = vst.msk [vmem:[#allocation3 + $0x18c] sm:$0xf] %vm3051, %v2875
  %3086 = vst.msk [vmem:[#allocation3 + $0x198] sm:$0xf] %vm3051, %v2877
  %3087 = vst.msk [vmem:[#allocation3 + $0x1a4] sm:$0xf] %vm3051, %v2879
  %3088 = vst.msk [vmem:[#allocation3 + $0x1b0] sm:$0xf] %vm3051, %v2881
  %3089 = vst.msk [vmem:[#allocation3 + $0x1bc] sm:$0xf] %vm3051, %v2883
  %3090 = vst.msk [vmem:[#allocation3 + $0x1c8] sm:$0xf] %vm3051, %v2885
  %3091 = vst.msk [vmem:[#allocation3 + $0x1d4] sm:$0xf] %vm3051, %v2887
  %3092 = vst.msk [vmem:[#allocation3 + $0x1e0] sm:$0xf] %vm3051, %v2889
  %3093 = vst.msk [vmem:[#allocation3 + $0x1ec] sm:$0xf] %vm3051, %v2891
  %3094 = vst.msk [vmem:[#allocation3 + $0x1f8] sm:$0xf] %vm3051, %v2893
  %3095 = vst.msk [vmem:[#allocation3 + $0x204] sm:$0xf] %vm3051, %v2895
  %3096 = vst.msk [vmem:[#allocation3 + $0x210] sm:$0xf] %vm3051, %v2897
  %3097 = vst.msk [vmem:[#allocation3 + $0x21c] sm:$0xf] %vm3051, %v2899
  %3098 = vst.msk [vmem:[#allocation3 + $0x228] sm:$0xf] %vm3051, %v2901
  %3099 = vst.msk [vmem:[#allocation3 + $0x234] sm:$0xf] %vm3051, %v2903
  %3100 = vst.msk [vmem:[#allocation3 + $0x240] sm:$0xf] %vm3051, %v2905
  %3101 = vst.msk [vmem:[#allocation3 + $0x24c] sm:$0xf] %vm3051, %v2907
  %3102 = vst.msk [vmem:[#allocation3 + $0x258] sm:$0xf] %vm3051, %v2909
  %3103 = vst.msk [vmem:[#allocation3 + $0x264] sm:$0xf] %vm3051, %v2911
  %3104 = vst.msk [vmem:[#allocation3 + $0x270] sm:$0xf] %vm3051, %v2913
  %3105 = vst.msk [vmem:[#allocation3 + $0x27c] sm:$0xf] %vm3051, %v2915
  %3106 = vst.msk [vmem:[#allocation3 + $0x288] sm:$0xf] %vm3051, %v2917
  %3107 = vst.msk [vmem:[#allocation3 + $0x294] sm:$0xf] %vm3051, %v2919
  %3108 = vst.msk [vmem:[#allocation3 + $0x2a0] sm:$0xf] %vm3051, %v2921
  %3109 = vst.msk [vmem:[#allocation3 + $0x2ac] sm:$0xf] %vm3051, %v2923
  %3110 = vst.msk [vmem:[#allocation3 + $0x2b8] sm:$0xf] %vm3051, %v2925
  %3111 = vst.msk [vmem:[#allocation3 + $0x2c4] sm:$0xf] %vm3051, %v2927
  %3112 = vst.msk [vmem:[#allocation3 + $0x2d0] sm:$0xf] %vm3051, %v2929
  %3113 = vst.msk [vmem:[#allocation3 + $0x2dc] sm:$0xf] %vm3051, %v2931
  %3114 = vst.msk [vmem:[#allocation3 + $0x2e8] sm:$0xf] %vm3051, %v2933
  %3115 = vst.msk [vmem:[#allocation3 + $0x2f4] sm:$0xf] %vm3051, %v2935
  %3116 = vst.msk [vmem:[#allocation3 + $0x300] sm:$0xf] %vm3051, %v2937
  %3117 = vst.msk [vmem:[#allocation3 + $0x30c] sm:$0xf] %vm3051, %v2939
  %3118 = vst.msk [vmem:[#allocation3 + $0x318] sm:$0xf] %vm3051, %v2941
  %3119 = vst.msk [vmem:[#allocation3 + $0x324] sm:$0xf] %vm3051, %v2943
  %3120 = vst.msk [vmem:[#allocation3 + $0x330] sm:$0xf] %vm3051, %v2945
  %3121 = vst.msk [vmem:[#allocation3 + $0x33c] sm:$0xf] %vm3051, %v2947
  %3122 = vst.msk [vmem:[#allocation3 + $0x348] sm:$0xf] %vm3051, %v2949
  %3123 = vst.msk [vmem:[#allocation3 + $0x354] sm:$0xf] %vm3051, %v2951
  %3124 = vst.msk [vmem:[#allocation3 + $0x360] sm:$0xf] %vm3051, %v2953
  %3125 = vst.msk [vmem:[#allocation3 + $0x36c] sm:$0xf] %vm3051, %v2955
  %3126 = vst.msk [vmem:[#allocation3 + $0x378] sm:$0xf] %vm3051, %v2957
  %3127 = vst.msk [vmem:[#allocation3 + $0x384] sm:$0xf] %vm3051, %v2959
  %3128 = vst.msk [vmem:[#allocation3 + $0x390] sm:$0xf] %vm3051, %v2961
  %3129 = vst.msk [vmem:[#allocation3 + $0x39c] sm:$0xf] %vm3051, %v2963
  %3130 = vst.msk [vmem:[#allocation3 + $0x3a8] sm:$0xf] %vm3051, %v2965
  %3131 = vst.msk [vmem:[#allocation3 + $0x3b4] sm:$0xf] %vm3051, %v2967
  %3132 = vst.msk [vmem:[#allocation3 + $0x3c0] sm:$0xf] %vm3051, %v2969
  %v3133 = vld [vmem:[#allocation2 + $0x4] sm:$0x8]
  %v3134 = vld [vmem:[#allocation2 + $0x8] sm:$0xf]
  %v3135 = vld [vmem:[#allocation2 + $0xc] sm:$0xf]
  %v3136 = vld [vmem:[#allocation2 + $0x10] sm:$0xf]
  %v3137 = vld [vmem:[#allocation2 + $0x14] sm:$0xf]
  %v3138 = vld [vmem:[#allocation2 + $0x18] sm:$0xf]
  %v3139 = vld [vmem:[#allocation2 + $0x1c] sm:$0xf]
  %v3140 = vld [vmem:[#allocation2 + $0x20] sm:$0xf]
  %v3141 = vld [vmem:[#allocation2 + $0x24] sm:$0xf]
  %v3142 = vld [vmem:[#allocation2 + $0x28] sm:$0xf]
  %v3143 = vld [vmem:[#allocation2 + $0x2c] sm:$0xf]
  %v3144 = vld [vmem:[#allocation2 + $0x30] sm:$0xf]
  %v3145 = vld [vmem:[#allocation2 + $0x34] sm:$0xf]
  %v3146 = vld [vmem:[#allocation2 + $0x38] sm:$0xf]
  %v3147 = vld [vmem:[#allocation2 + $0x3c] sm:$0xf]
  %v3148 = vld [vmem:[#allocation2 + $0x40] sm:$0xf]
  %v3149 = vld [vmem:[#allocation2 + $0x44] sm:$0xf]
  %v3150 = vld [vmem:[#allocation2 + $0x48] sm:$0xf]
  %v3151 = vld [vmem:[#allocation2 + $0x4c] sm:$0xf]
  %v3152 = vld [vmem:[#allocation2 + $0x50] sm:$0xf]
  %v3153 = vld [vmem:[#allocation2 + $0x54] sm:$0xf]
  %v3154 = vld [vmem:[#allocation2 + $0x58] sm:$0xf]
  %v3155 = vld [vmem:[#allocation2 + $0x5c] sm:$0xf]
  %v3156 = vld [vmem:[#allocation2 + $0x60] sm:$0xf]
  %v3157 = vld [vmem:[#allocation2 + $0x64] sm:$0xf]
  %v3158 = vld [vmem:[#allocation2 + $0x68] sm:$0xf]
  %v3159 = vld [vmem:[#allocation2 + $0x6c] sm:$0xf]
  %v3160 = vld [vmem:[#allocation2 + $0x70] sm:$0xf]
  %v3161 = vld [vmem:[#allocation2 + $0x74] sm:$0xf]
  %v3162 = vld [vmem:[#allocation2 + $0x78] sm:$0xf]
  %v3163 = vld [vmem:[#allocation2 + $0x7c] sm:$0xf]
  %v3164 = vld [vmem:[#allocation2 + $0x80] sm:$0xf]
  %v3165 = vld [vmem:[#allocation2 + $0x84] sm:$0xf]
  %v3166 = vld [vmem:[#allocation2 + $0x88] sm:$0xf]
  %v3167 = vld [vmem:[#allocation2 + $0x8c] sm:$0xf]
  %v3168 = vld [vmem:[#allocation2 + $0x90] sm:$0xf]
  %v3169 = vld [vmem:[#allocation2 + $0x94] sm:$0xf]
  %v3170 = vld [vmem:[#allocation2 + $0x98] sm:$0xf]
  %v3171 = vld [vmem:[#allocation2 + $0x9c] sm:$0xf]
  %v3172 = vld [vmem:[#allocation2 + $0xa0] sm:$0xf]
  %v3173 = vld [vmem:[#allocation2 + $0xa4] sm:$0xf]
  %v3174 = vld [vmem:[#allocation2 + $0xa8] sm:$0xf]
  %v3175 = vld [vmem:[#allocation2 + $0xac] sm:$0xf]
  %v3176 = vld [vmem:[#allocation2 + $0xb0] sm:$0xf]
  %v3177 = vld [vmem:[#allocation2 + $0xb4] sm:$0xf]
  %v3178 = vld [vmem:[#allocation2 + $0xb8] sm:$0xf]
  %v3179 = vld [vmem:[#allocation2 + $0xbc] sm:$0xf]
  %v3180 = vld [vmem:[#allocation2 + $0xc0] sm:$0xf]
  %v3181 = vld [vmem:[#allocation2 + $0xc4] sm:$0xf]
  %v3182 = vld [vmem:[#allocation2 + $0xc8] sm:$0xf]
  %v3183 = vld [vmem:[#allocation2 + $0xcc] sm:$0xf]
  %v3184 = vld [vmem:[#allocation2 + $0xd0] sm:$0xf]
  %v3185 = vld [vmem:[#allocation2 + $0xd4] sm:$0xf]
  %v3186 = vld [vmem:[#allocation2 + $0xd8] sm:$0xf]
  %v3187 = vld [vmem:[#allocation2 + $0xdc] sm:$0xf]
  %v3188 = vld [vmem:[#allocation2 + $0xe0] sm:$0xf]
  %v3189 = vld [vmem:[#allocation2 + $0xe4] sm:$0xf]
  %v3190 = vld [vmem:[#allocation2 + $0xe8] sm:$0xf]
  %v3191 = vld [vmem:[#allocation2 + $0xec] sm:$0xf]
  %v3192 = vld [vmem:[#allocation2 + $0xf0] sm:$0xf]
  %v3193 = vld [vmem:[#allocation2 + $0xf4] sm:$0xf]
  %v3194 = vld [vmem:[#allocation2 + $0xf8] sm:$0xf]
  %v3195 = vld [vmem:[#allocation2 + $0xfc] sm:$0xf]
  %v3196 = vld [vmem:[#allocation2 + $0x100] sm:$0xf]
  %v3197 = vld [vmem:[#allocation2 + $0x104] sm:$0xf]
  %v3198 = vld [vmem:[#allocation2 + $0x108] sm:$0xf]
  %v3199 = vld [vmem:[#allocation2 + $0x10c] sm:$0xf]
  %v3200 = vld [vmem:[#allocation2 + $0x110] sm:$0xf]
  %v3201 = vld [vmem:[#allocation2 + $0x114] sm:$0xf]
  %v3202 = vld [vmem:[#allocation2 + $0x118] sm:$0xf]
  %v3203 = vld [vmem:[#allocation2 + $0x11c] sm:$0xf]
  %v3204 = vld [vmem:[#allocation2 + $0x120] sm:$0xf]
  %v3205 = vld [vmem:[#allocation2 + $0x124] sm:$0xf]
  %v3206 = vld [vmem:[#allocation2 + $0x128] sm:$0xf]
  %v3207 = vld [vmem:[#allocation2 + $0x12c] sm:$0xf]
  %v3208 = vld [vmem:[#allocation2 + $0x130] sm:$0xf]
  %v3209 = vld [vmem:[#allocation2 + $0x134] sm:$0xf]
  %v3210 = vld [vmem:[#allocation2 + $0x138] sm:$0xf]
  %v3211 = vld [vmem:[#allocation2 + $0x13c] sm:$0xf]
  %v3212 = vld [vmem:[#allocation2 + $0x140] sm:$0xf]
  %v3213 = vld [vmem:[#allocation2 + $0x144] sm:$0xf]
  %v3214 = vld [vmem:[#allocation2 + $0x148] sm:$0xf]
  %vm3215 = vsmask.f32 256
  %vm3216 = vsmask.f32 4368
  %vm3217 = vmor %vm3215, %vm3216
  %v3219 = vshrl.u32 %v3133, 16
  %v3221 = vrot.slane %v3219, 7
  %v3222 = vrot.slane %v3221, 4
  %v3224 = vshrl.u32 %v3134, 16
  %v3226 = vrot.slane %v3224, 7
  %v3227 = vshll.u32 %v3134, 16
  %v3229 = vor.u32 %v3226, %v3227
  %v3230 = vsel %vm3217, %v3222, %v3229
  %v3231 = vrot.slane %v3226, 4
  %v3233 = vshrl.u32 %v3135, 16
  %v3235 = vrot.slane %v3233, 7
  %v3236 = vshll.u32 %v3135, 16
  %v3238 = vor.u32 %v3235, %v3236
  %v3239 = vsel %vm3217, %v3231, %v3238
  %v3240 = vrot.slane %v3235, 4
  %v3242 = vshrl.u32 %v3136, 16
  %v3244 = vrot.slane %v3242, 7
  %v3245 = vshll.u32 %v3136, 16
  %v3247 = vor.u32 %v3244, %v3245
  %v3248 = vsel %vm3217, %v3240, %v3247
  %v3249 = vrot.slane %v3244, 4
  %v3251 = vshrl.u32 %v3137, 16
  %v3253 = vrot.slane %v3251, 7
  %v3254 = vshll.u32 %v3137, 16
  %v3256 = vor.u32 %v3253, %v3254
  %v3257 = vsel %vm3217, %v3249, %v3256
  %v3258 = vrot.slane %v3253, 4
  %v3260 = vshrl.u32 %v3138, 16
  %v3262 = vrot.slane %v3260, 7
  %v3263 = vshll.u32 %v3138, 16
  %v3265 = vor.u32 %v3262, %v3263
  %v3266 = vsel %vm3217, %v3258, %v3265
  %v3267 = vrot.slane %v3262, 4
  %v3269 = vshrl.u32 %v3139, 16
  %v3271 = vrot.slane %v3269, 7
  %v3272 = vshll.u32 %v3139, 16
  %v3274 = vor.u32 %v3271, %v3272
  %v3275 = vsel %vm3217, %v3267, %v3274
  %v3276 = vrot.slane %v3271, 4
  %v3278 = vshrl.u32 %v3140, 16
  %v3280 = vrot.slane %v3278, 7
  %v3281 = vshll.u32 %v3140, 16
  %v3283 = vor.u32 %v3280, %v3281
  %v3284 = vsel %vm3217, %v3276, %v3283
  %v3285 = vrot.slane %v3280, 4
  %v3287 = vshrl.u32 %v3141, 16
  %v3289 = vrot.slane %v3287, 7
  %v3290 = vshll.u32 %v3141, 16
  %v3292 = vor.u32 %v3289, %v3290
  %v3293 = vsel %vm3217, %v3285, %v3292
  %v3294 = vrot.slane %v3289, 4
  %v3296 = vshrl.u32 %v3142, 16
  %v3298 = vrot.slane %v3296, 7
  %v3299 = vshll.u32 %v3142, 16
  %v3301 = vor.u32 %v3298, %v3299
  %v3302 = vsel %vm3217, %v3294, %v3301
  %v3303 = vrot.slane %v3298, 4
  %v3305 = vshrl.u32 %v3143, 16
  %v3307 = vrot.slane %v3305, 7
  %v3308 = vshll.u32 %v3143, 16
  %v3310 = vor.u32 %v3307, %v3308
  %v3311 = vsel %vm3217, %v3303, %v3310
  %v3312 = vrot.slane %v3307, 4
  %v3314 = vshrl.u32 %v3144, 16
  %v3316 = vrot.slane %v3314, 7
  %v3317 = vshll.u32 %v3144, 16
  %v3319 = vor.u32 %v3316, %v3317
  %v3320 = vsel %vm3217, %v3312, %v3319
  %v3321 = vrot.slane %v3316, 4
  %v3323 = vshrl.u32 %v3145, 16
  %v3325 = vrot.slane %v3323, 7
  %v3326 = vshll.u32 %v3145, 16
  %v3328 = vor.u32 %v3325, %v3326
  %v3329 = vsel %vm3217, %v3321, %v3328
  %v3330 = vrot.slane %v3325, 4
  %v3332 = vshrl.u32 %v3146, 16
  %v3334 = vrot.slane %v3332, 7
  %v3335 = vshll.u32 %v3146, 16
  %v3337 = vor.u32 %v3334, %v3335
  %v3338 = vsel %vm3217, %v3330, %v3337
  %v3339 = vrot.slane %v3334, 4
  %v3341 = vshrl.u32 %v3147, 16
  %v3343 = vrot.slane %v3341, 7
  %v3344 = vshll.u32 %v3147, 16
  %v3346 = vor.u32 %v3343, %v3344
  %v3347 = vsel %vm3217, %v3339, %v3346
  %v3348 = vrot.slane %v3343, 4
  %v3350 = vshrl.u32 %v3148, 16
  %v3352 = vrot.slane %v3350, 7
  %v3353 = vshll.u32 %v3148, 16
  %v3355 = vor.u32 %v3352, %v3353
  %v3356 = vsel %vm3217, %v3348, %v3355
  %v3357 = vrot.slane %v3352, 4
  %v3359 = vshrl.u32 %v3149, 16
  %v3361 = vrot.slane %v3359, 7
  %v3362 = vshll.u32 %v3149, 16
  %v3364 = vor.u32 %v3361, %v3362
  %v3365 = vsel %vm3217, %v3357, %v3364
  %v3366 = vrot.slane %v3361, 4
  %v3368 = vshrl.u32 %v3150, 16
  %v3370 = vrot.slane %v3368, 7
  %v3371 = vshll.u32 %v3150, 16
  %v3373 = vor.u32 %v3370, %v3371
  %v3374 = vsel %vm3217, %v3366, %v3373
  %v3375 = vrot.slane %v3370, 4
  %v3377 = vshrl.u32 %v3151, 16
  %v3379 = vrot.slane %v3377, 7
  %v3380 = vshll.u32 %v3151, 16
  %v3382 = vor.u32 %v3379, %v3380
  %v3383 = vsel %vm3217, %v3375, %v3382
  %v3384 = vrot.slane %v3379, 4
  %v3386 = vshrl.u32 %v3152, 16
  %v3388 = vrot.slane %v3386, 7
  %v3389 = vshll.u32 %v3152, 16
  %v3391 = vor.u32 %v3388, %v3389
  %v3392 = vsel %vm3217, %v3384, %v3391
  %v3393 = vrot.slane %v3388, 4
  %v3395 = vshrl.u32 %v3153, 16
  %v3397 = vrot.slane %v3395, 7
  %v3398 = vshll.u32 %v3153, 16
  %v3400 = vor.u32 %v3397, %v3398
  %v3401 = vsel %vm3217, %v3393, %v3400
  %v3402 = vrot.slane %v3397, 4
  %v3404 = vshrl.u32 %v3154, 16
  %v3406 = vrot.slane %v3404, 7
  %v3407 = vshll.u32 %v3154, 16
  %v3409 = vor.u32 %v3406, %v3407
  %v3410 = vsel %vm3217, %v3402, %v3409
  %v3411 = vrot.slane %v3406, 4
  %v3413 = vshrl.u32 %v3155, 16
  %v3415 = vrot.slane %v3413, 7
  %v3416 = vshll.u32 %v3155, 16
  %v3418 = vor.u32 %v3415, %v3416
  %v3419 = vsel %vm3217, %v3411, %v3418
  %v3420 = vrot.slane %v3415, 4
  %v3422 = vshrl.u32 %v3156, 16
  %v3424 = vrot.slane %v3422, 7
  %v3425 = vshll.u32 %v3156, 16
  %v3427 = vor.u32 %v3424, %v3425
  %v3428 = vsel %vm3217, %v3420, %v3427
  %v3429 = vrot.slane %v3424, 4
  %v3431 = vshrl.u32 %v3157, 16
  %v3433 = vrot.slane %v3431, 7
  %v3434 = vshll.u32 %v3157, 16
  %v3436 = vor.u32 %v3433, %v3434
  %v3437 = vsel %vm3217, %v3429, %v3436
  %v3438 = vrot.slane %v3433, 4
  %v3440 = vshrl.u32 %v3158, 16
  %v3442 = vrot.slane %v3440, 7
  %v3443 = vshll.u32 %v3158, 16
  %v3445 = vor.u32 %v3442, %v3443
  %v3446 = vsel %vm3217, %v3438, %v3445
  %v3447 = vrot.slane %v3442, 4
  %v3449 = vshrl.u32 %v3159, 16
  %v3451 = vrot.slane %v3449, 7
  %v3452 = vshll.u32 %v3159, 16
  %v3454 = vor.u32 %v3451, %v3452
  %v3455 = vsel %vm3217, %v3447, %v3454
  %v3456 = vrot.slane %v3451, 4
  %v3458 = vshrl.u32 %v3160, 16
  %v3460 = vrot.slane %v3458, 7
  %v3461 = vshll.u32 %v3160, 16
  %v3463 = vor.u32 %v3460, %v3461
  %v3464 = vsel %vm3217, %v3456, %v3463
  %v3465 = vrot.slane %v3460, 4
  %v3467 = vshrl.u32 %v3161, 16
  %v3469 = vrot.slane %v3467, 7
  %v3470 = vshll.u32 %v3161, 16
  %v3472 = vor.u32 %v3469, %v3470
  %v3473 = vsel %vm3217, %v3465, %v3472
  %v3474 = vrot.slane %v3469, 4
  %v3476 = vshrl.u32 %v3162, 16
  %v3478 = vrot.slane %v3476, 7
  %v3479 = vshll.u32 %v3162, 16
  %v3481 = vor.u32 %v3478, %v3479
  %v3482 = vsel %vm3217, %v3474, %v3481
  %v3483 = vrot.slane %v3478, 4
  %v3485 = vshrl.u32 %v3163, 16
  %v3487 = vrot.slane %v3485, 7
  %v3488 = vshll.u32 %v3163, 16
  %v3490 = vor.u32 %v3487, %v3488
  %v3491 = vsel %vm3217, %v3483, %v3490
  %v3492 = vrot.slane %v3487, 4
  %v3494 = vshrl.u32 %v3164, 16
  %v3496 = vrot.slane %v3494, 7
  %v3497 = vshll.u32 %v3164, 16
  %v3499 = vor.u32 %v3496, %v3497
  %v3500 = vsel %vm3217, %v3492, %v3499
  %v3501 = vrot.slane %v3496, 4
  %v3503 = vshrl.u32 %v3165, 16
  %v3505 = vrot.slane %v3503, 7
  %v3506 = vshll.u32 %v3165, 16
  %v3508 = vor.u32 %v3505, %v3506
  %v3509 = vsel %vm3217, %v3501, %v3508
  %v3510 = vrot.slane %v3505, 4
  %v3512 = vshrl.u32 %v3166, 16
  %v3514 = vrot.slane %v3512, 7
  %v3515 = vshll.u32 %v3166, 16
  %v3517 = vor.u32 %v3514, %v3515
  %v3518 = vsel %vm3217, %v3510, %v3517
  %v3519 = vrot.slane %v3514, 4
  %v3521 = vshrl.u32 %v3167, 16
  %v3523 = vrot.slane %v3521, 7
  %v3524 = vshll.u32 %v3167, 16
  %v3526 = vor.u32 %v3523, %v3524
  %v3527 = vsel %vm3217, %v3519, %v3526
  %v3528 = vrot.slane %v3523, 4
  %v3530 = vshrl.u32 %v3168, 16
  %v3532 = vrot.slane %v3530, 7
  %v3533 = vshll.u32 %v3168, 16
  %v3535 = vor.u32 %v3532, %v3533
  %v3536 = vsel %vm3217, %v3528, %v3535
  %v3537 = vrot.slane %v3532, 4
  %v3539 = vshrl.u32 %v3169, 16
  %v3541 = vrot.slane %v3539, 7
  %v3542 = vshll.u32 %v3169, 16
  %v3544 = vor.u32 %v3541, %v3542
  %v3545 = vsel %vm3217, %v3537, %v3544
  %v3546 = vrot.slane %v3541, 4
  %v3548 = vshrl.u32 %v3170, 16
  %v3550 = vrot.slane %v3548, 7
  %v3551 = vshll.u32 %v3170, 16
  %v3553 = vor.u32 %v3550, %v3551
  %v3554 = vsel %vm3217, %v3546, %v3553
  %v3555 = vrot.slane %v3550, 4
  %v3557 = vshrl.u32 %v3171, 16
  %v3559 = vrot.slane %v3557, 7
  %v3560 = vshll.u32 %v3171, 16
  %v3562 = vor.u32 %v3559, %v3560
  %v3563 = vsel %vm3217, %v3555, %v3562
  %v3564 = vrot.slane %v3559, 4
  %v3566 = vshrl.u32 %v3172, 16
  %v3568 = vrot.slane %v3566, 7
  %v3569 = vshll.u32 %v3172, 16
  %v3571 = vor.u32 %v3568, %v3569
  %v3572 = vsel %vm3217, %v3564, %v3571
  %v3573 = vrot.slane %v3568, 4
  %v3575 = vshrl.u32 %v3173, 16
  %v3577 = vrot.slane %v3575, 7
  %v3578 = vshll.u32 %v3173, 16
  %v3580 = vor.u32 %v3577, %v3578
  %v3581 = vsel %vm3217, %v3573, %v3580
  %v3582 = vrot.slane %v3577, 4
  %v3584 = vshrl.u32 %v3174, 16
  %v3586 = vrot.slane %v3584, 7
  %v3587 = vshll.u32 %v3174, 16
  %v3589 = vor.u32 %v3586, %v3587
  %v3590 = vsel %vm3217, %v3582, %v3589
  %v3591 = vrot.slane %v3586, 4
  %v3593 = vshrl.u32 %v3175, 16
  %v3595 = vrot.slane %v3593, 7
  %v3596 = vshll.u32 %v3175, 16
  %v3598 = vor.u32 %v3595, %v3596
  %v3599 = vsel %vm3217, %v3591, %v3598
  %v3600 = vrot.slane %v3595, 4
  %v3602 = vshrl.u32 %v3176, 16
  %v3604 = vrot.slane %v3602, 7
  %v3605 = vshll.u32 %v3176, 16
  %v3607 = vor.u32 %v3604, %v3605
  %v3608 = vsel %vm3217, %v3600, %v3607
  %v3609 = vrot.slane %v3604, 4
  %v3611 = vshrl.u32 %v3177, 16
  %v3613 = vrot.slane %v3611, 7
  %v3614 = vshll.u32 %v3177, 16
  %v3616 = vor.u32 %v3613, %v3614
  %v3617 = vsel %vm3217, %v3609, %v3616
  %v3618 = vrot.slane %v3613, 4
  %v3620 = vshrl.u32 %v3178, 16
  %v3622 = vrot.slane %v3620, 7
  %v3623 = vshll.u32 %v3178, 16
  %v3625 = vor.u32 %v3622, %v3623
  %v3626 = vsel %vm3217, %v3618, %v3625
  %v3627 = vrot.slane %v3622, 4
  %v3629 = vshrl.u32 %v3179, 16
  %v3631 = vrot.slane %v3629, 7
  %v3632 = vshll.u32 %v3179, 16
  %v3634 = vor.u32 %v3631, %v3632
  %v3635 = vsel %vm3217, %v3627, %v3634
  %v3636 = vrot.slane %v3631, 4
  %v3638 = vshrl.u32 %v3180, 16
  %v3640 = vrot.slane %v3638, 7
  %v3641 = vshll.u32 %v3180, 16
  %v3643 = vor.u32 %v3640, %v3641
  %v3644 = vsel %vm3217, %v3636, %v3643
  %v3645 = vrot.slane %v3640, 4
  %v3647 = vshrl.u32 %v3181, 16
  %v3649 = vrot.slane %v3647, 7
  %v3650 = vshll.u32 %v3181, 16
  %v3652 = vor.u32 %v3649, %v3650
  %v3653 = vsel %vm3217, %v3645, %v3652
  %v3654 = vrot.slane %v3649, 4
  %v3656 = vshrl.u32 %v3182, 16
  %v3658 = vrot.slane %v3656, 7
  %v3659 = vshll.u32 %v3182, 16
  %v3661 = vor.u32 %v3658, %v3659
  %v3662 = vsel %vm3217, %v3654, %v3661
  %v3663 = vrot.slane %v3658, 4
  %v3665 = vshrl.u32 %v3183, 16
  %v3667 = vrot.slane %v3665, 7
  %v3668 = vshll.u32 %v3183, 16
  %v3670 = vor.u32 %v3667, %v3668
  %v3671 = vsel %vm3217, %v3663, %v3670
  %v3672 = vrot.slane %v3667, 4
  %v3674 = vshrl.u32 %v3184, 16
  %v3676 = vrot.slane %v3674, 7
  %v3677 = vshll.u32 %v3184, 16
  %v3679 = vor.u32 %v3676, %v3677
  %v3680 = vsel %vm3217, %v3672, %v3679
  %v3681 = vrot.slane %v3676, 4
  %v3683 = vshrl.u32 %v3185, 16
  %v3685 = vrot.slane %v3683, 7
  %v3686 = vshll.u32 %v3185, 16
  %v3688 = vor.u32 %v3685, %v3686
  %v3689 = vsel %vm3217, %v3681, %v3688
  %v3690 = vrot.slane %v3685, 4
  %v3692 = vshrl.u32 %v3186, 16
  %v3694 = vrot.slane %v3692, 7
  %v3695 = vshll.u32 %v3186, 16
  %v3697 = vor.u32 %v3694, %v3695
  %v3698 = vsel %vm3217, %v3690, %v3697
  %v3699 = vrot.slane %v3694, 4
  %v3701 = vshrl.u32 %v3187, 16
  %v3703 = vrot.slane %v3701, 7
  %v3704 = vshll.u32 %v3187, 16
  %v3706 = vor.u32 %v3703, %v3704
  %v3707 = vsel %vm3217, %v3699, %v3706
  %v3708 = vrot.slane %v3703, 4
  %v3710 = vshrl.u32 %v3188, 16
  %v3712 = vrot.slane %v3710, 7
  %v3713 = vshll.u32 %v3188, 16
  %v3715 = vor.u32 %v3712, %v3713
  %v3716 = vsel %vm3217, %v3708, %v3715
  %v3717 = vrot.slane %v3712, 4
  %v3719 = vshrl.u32 %v3189, 16
  %v3721 = vrot.slane %v3719, 7
  %v3722 = vshll.u32 %v3189, 16
  %v3724 = vor.u32 %v3721, %v3722
  %v3725 = vsel %vm3217, %v3717, %v3724
  %v3726 = vrot.slane %v3721, 4
  %v3728 = vshrl.u32 %v3190, 16
  %v3730 = vrot.slane %v3728, 7
  %v3731 = vshll.u32 %v3190, 16
  %v3733 = vor.u32 %v3730, %v3731
  %v3734 = vsel %vm3217, %v3726, %v3733
  %v3735 = vrot.slane %v3730, 4
  %v3737 = vshrl.u32 %v3191, 16
  %v3739 = vrot.slane %v3737, 7
  %v3740 = vshll.u32 %v3191, 16
  %v3742 = vor.u32 %v3739, %v3740
  %v3743 = vsel %vm3217, %v3735, %v3742
  %v3744 = vrot.slane %v3739, 4
  %v3746 = vshrl.u32 %v3192, 16
  %v3748 = vrot.slane %v3746, 7
  %v3749 = vshll.u32 %v3192, 16
  %v3751 = vor.u32 %v3748, %v3749
  %v3752 = vsel %vm3217, %v3744, %v3751
  %v3753 = vrot.slane %v3748, 4
  %v3755 = vshrl.u32 %v3193, 16
  %v3757 = vrot.slane %v3755, 7
  %v3758 = vshll.u32 %v3193, 16
  %v3760 = vor.u32 %v3757, %v3758
  %v3761 = vsel %vm3217, %v3753, %v3760
  %v3762 = vrot.slane %v3757, 4
  %v3764 = vshrl.u32 %v3194, 16
  %v3766 = vrot.slane %v3764, 7
  %v3767 = vshll.u32 %v3194, 16
  %v3769 = vor.u32 %v3766, %v3767
  %v3770 = vsel %vm3217, %v3762, %v3769
  %v3771 = vrot.slane %v3766, 4
  %v3773 = vshrl.u32 %v3195, 16
  %v3775 = vrot.slane %v3773, 7
  %v3776 = vshll.u32 %v3195, 16
  %v3778 = vor.u32 %v3775, %v3776
  %v3779 = vsel %vm3217, %v3771, %v3778
  %v3780 = vrot.slane %v3775, 4
  %v3782 = vshrl.u32 %v3196, 16
  %v3784 = vrot.slane %v3782, 7
  %v3785 = vshll.u32 %v3196, 16
  %v3787 = vor.u32 %v3784, %v3785
  %v3788 = vsel %vm3217, %v3780, %v3787
  %v3789 = vrot.slane %v3784, 4
  %v3791 = vshrl.u32 %v3197, 16
  %v3793 = vrot.slane %v3791, 7
  %v3794 = vshll.u32 %v3197, 16
  %v3796 = vor.u32 %v3793, %v3794
  %v3797 = vsel %vm3217, %v3789, %v3796
  %v3798 = vrot.slane %v3793, 4
  %v3800 = vshrl.u32 %v3198, 16
  %v3802 = vrot.slane %v3800, 7
  %v3803 = vshll.u32 %v3198, 16
  %v3805 = vor.u32 %v3802, %v3803
  %v3806 = vsel %vm3217, %v3798, %v3805
  %v3807 = vrot.slane %v3802, 4
  %v3809 = vshrl.u32 %v3199, 16
  %v3811 = vrot.slane %v3809, 7
  %v3812 = vshll.u32 %v3199, 16
  %v3814 = vor.u32 %v3811, %v3812
  %v3815 = vsel %vm3217, %v3807, %v3814
  %v3816 = vrot.slane %v3811, 4
  %v3818 = vshrl.u32 %v3200, 16
  %v3820 = vrot.slane %v3818, 7
  %v3821 = vshll.u32 %v3200, 16
  %v3823 = vor.u32 %v3820, %v3821
  %v3824 = vsel %vm3217, %v3816, %v3823
  %v3825 = vrot.slane %v3820, 4
  %v3827 = vshrl.u32 %v3201, 16
  %v3829 = vrot.slane %v3827, 7
  %v3830 = vshll.u32 %v3201, 16
  %v3832 = vor.u32 %v3829, %v3830
  %v3833 = vsel %vm3217, %v3825, %v3832
  %v3834 = vrot.slane %v3829, 4
  %v3836 = vshrl.u32 %v3202, 16
  %v3838 = vrot.slane %v3836, 7
  %v3839 = vshll.u32 %v3202, 16
  %v3841 = vor.u32 %v3838, %v3839
  %v3842 = vsel %vm3217, %v3834, %v3841
  %v3843 = vrot.slane %v3838, 4
  %v3845 = vshrl.u32 %v3203, 16
  %v3847 = vrot.slane %v3845, 7
  %v3848 = vshll.u32 %v3203, 16
  %v3850 = vor.u32 %v3847, %v3848
  %v3851 = vsel %vm3217, %v3843, %v3850
  %v3852 = vrot.slane %v3847, 4
  %v3854 = vshrl.u32 %v3204, 16
  %v3856 = vrot.slane %v3854, 7
  %v3857 = vshll.u32 %v3204, 16
  %v3859 = vor.u32 %v3856, %v3857
  %v3860 = vsel %vm3217, %v3852, %v3859
  %v3861 = vrot.slane %v3856, 4
  %v3863 = vshrl.u32 %v3205, 16
  %v3865 = vrot.slane %v3863, 7
  %v3866 = vshll.u32 %v3205, 16
  %v3868 = vor.u32 %v3865, %v3866
  %v3869 = vsel %vm3217, %v3861, %v3868
  %v3870 = vrot.slane %v3865, 4
  %v3872 = vshrl.u32 %v3206, 16
  %v3874 = vrot.slane %v3872, 7
  %v3875 = vshll.u32 %v3206, 16
  %v3877 = vor.u32 %v3874, %v3875
  %v3878 = vsel %vm3217, %v3870, %v3877
  %v3879 = vrot.slane %v3874, 4
  %v3881 = vshrl.u32 %v3207, 16
  %v3883 = vrot.slane %v3881, 7
  %v3884 = vshll.u32 %v3207, 16
  %v3886 = vor.u32 %v3883, %v3884
  %v3887 = vsel %vm3217, %v3879, %v3886
  %v3888 = vrot.slane %v3883, 4
  %v3890 = vshrl.u32 %v3208, 16
  %v3892 = vrot.slane %v3890, 7
  %v3893 = vshll.u32 %v3208, 16
  %v3895 = vor.u32 %v3892, %v3893
  %v3896 = vsel %vm3217, %v3888, %v3895
  %v3897 = vrot.slane %v3892, 4
  %v3899 = vshrl.u32 %v3209, 16
  %v3901 = vrot.slane %v3899, 7
  %v3902 = vshll.u32 %v3209, 16
  %v3904 = vor.u32 %v3901, %v3902
  %v3905 = vsel %vm3217, %v3897, %v3904
  %v3906 = vrot.slane %v3901, 4
  %v3908 = vshrl.u32 %v3210, 16
  %v3910 = vrot.slane %v3908, 7
  %v3911 = vshll.u32 %v3210, 16
  %v3913 = vor.u32 %v3910, %v3911
  %v3914 = vsel %vm3217, %v3906, %v3913
  %v3915 = vrot.slane %v3910, 4
  %v3917 = vshrl.u32 %v3211, 16
  %v3919 = vrot.slane %v3917, 7
  %v3920 = vshll.u32 %v3211, 16
  %v3922 = vor.u32 %v3919, %v3920
  %v3923 = vsel %vm3217, %v3915, %v3922
  %v3924 = vrot.slane %v3919, 4
  %v3926 = vshrl.u32 %v3212, 16
  %v3928 = vrot.slane %v3926, 7
  %v3929 = vshll.u32 %v3212, 16
  %v3931 = vor.u32 %v3928, %v3929
  %v3932 = vsel %vm3217, %v3924, %v3931
  %v3933 = vrot.slane %v3928, 4
  %v3935 = vshrl.u32 %v3213, 16
  %v3937 = vrot.slane %v3935, 7
  %v3938 = vshll.u32 %v3213, 16
  %v3940 = vor.u32 %v3937, %v3938
  %v3941 = vsel %vm3217, %v3933, %v3940
  %v3942 = vrot.slane %v3937, 4
  %v3944 = vshrl.u32 %v3214, 16
  %v3946 = vrot.slane %v3944, 7
  %v3947 = vshll.u32 %v3214, 16
  %v3949 = vor.u32 %v3946, %v3947
  %v3950 = vsel %vm3217, %v3942, %v3949
  %3951 = vrot.lane.b32.xlu0 %v3230, 64
  %v3952 = vpop.permute.xlu0 %3951
  %3953 = vrot.lane.b32.xlu0 %v3239, 64
  %v3954 = vpop.permute.xlu0 %3953
  %3955 = vrot.lane.b32.xlu0 %v3248, 64
  %v3956 = vpop.permute.xlu0 %3955
  %3957 = vrot.lane.b32.xlu0 %v3257, 64
  %v3958 = vpop.permute.xlu0 %3957
  %3959 = vrot.lane.b32.xlu0 %v3266, 64
  %v3960 = vpop.permute.xlu0 %3959
  %3961 = vrot.lane.b32.xlu0 %v3275, 64
  %v3962 = vpop.permute.xlu0 %3961
  %3963 = vrot.lane.b32.xlu0 %v3284, 64
  %v3964 = vpop.permute.xlu0 %3963
  %3965 = vrot.lane.b32.xlu0 %v3293, 64
  %v3966 = vpop.permute.xlu0 %3965
  %3967 = vrot.lane.b32.xlu0 %v3302, 64
  %v3968 = vpop.permute.xlu0 %3967
  %3969 = vrot.lane.b32.xlu0 %v3311, 64
  %v3970 = vpop.permute.xlu0 %3969
  %3971 = vrot.lane.b32.xlu0 %v3320, 64
  %v3972 = vpop.permute.xlu0 %3971
  %3973 = vrot.lane.b32.xlu0 %v3329, 64
  %v3974 = vpop.permute.xlu0 %3973
  %3975 = vrot.lane.b32.xlu0 %v3338, 64
  %v3976 = vpop.permute.xlu0 %3975
  %3977 = vrot.lane.b32.xlu0 %v3347, 64
  %v3978 = vpop.permute.xlu0 %3977
  %3979 = vrot.lane.b32.xlu0 %v3356, 64
  %v3980 = vpop.permute.xlu0 %3979
  %3981 = vrot.lane.b32.xlu0 %v3365, 64
  %v3982 = vpop.permute.xlu0 %3981
  %3983 = vrot.lane.b32.xlu0 %v3374, 64
  %v3984 = vpop.permute.xlu0 %3983
  %3985 = vrot.lane.b32.xlu0 %v3383, 64
  %v3986 = vpop.permute.xlu0 %3985
  %3987 = vrot.lane.b32.xlu0 %v3392, 64
  %v3988 = vpop.permute.xlu0 %3987
  %3989 = vrot.lane.b32.xlu0 %v3401, 64
  %v3990 = vpop.permute.xlu0 %3989
  %3991 = vrot.lane.b32.xlu0 %v3410, 64
  %v3992 = vpop.permute.xlu0 %3991
  %3993 = vrot.lane.b32.xlu0 %v3419, 64
  %v3994 = vpop.permute.xlu0 %3993
  %3995 = vrot.lane.b32.xlu0 %v3428, 64
  %v3996 = vpop.permute.xlu0 %3995
  %3997 = vrot.lane.b32.xlu0 %v3437, 64
  %v3998 = vpop.permute.xlu0 %3997
  %3999 = vrot.lane.b32.xlu0 %v3446, 64
  %v4000 = vpop.permute.xlu0 %3999
  %4001 = vrot.lane.b32.xlu0 %v3455, 64
  %v4002 = vpop.permute.xlu0 %4001
  %4003 = vrot.lane.b32.xlu0 %v3464, 64
  %v4004 = vpop.permute.xlu0 %4003
  %4005 = vrot.lane.b32.xlu0 %v3473, 64
  %v4006 = vpop.permute.xlu0 %4005
  %4007 = vrot.lane.b32.xlu0 %v3482, 64
  %v4008 = vpop.permute.xlu0 %4007
  %4009 = vrot.lane.b32.xlu0 %v3491, 64
  %v4010 = vpop.permute.xlu0 %4009
  %4011 = vrot.lane.b32.xlu0 %v3500, 64
  %v4012 = vpop.permute.xlu0 %4011
  %4013 = vrot.lane.b32.xlu0 %v3509, 64
  %v4014 = vpop.permute.xlu0 %4013
  %4015 = vrot.lane.b32.xlu0 %v3518, 64
  %v4016 = vpop.permute.xlu0 %4015
  %4017 = vrot.lane.b32.xlu0 %v3527, 64
  %v4018 = vpop.permute.xlu0 %4017
  %4019 = vrot.lane.b32.xlu0 %v3536, 64
  %v4020 = vpop.permute.xlu0 %4019
  %4021 = vrot.lane.b32.xlu0 %v3545, 64
  %v4022 = vpop.permute.xlu0 %4021
  %4023 = vrot.lane.b32.xlu0 %v3554, 64
  %v4024 = vpop.permute.xlu0 %4023
  %4025 = vrot.lane.b32.xlu0 %v3563, 64
  %v4026 = vpop.permute.xlu0 %4025
  %4027 = vrot.lane.b32.xlu0 %v3572, 64
  %v4028 = vpop.permute.xlu0 %4027
  %4029 = vrot.lane.b32.xlu0 %v3581, 64
  %v4030 = vpop.permute.xlu0 %4029
  %4031 = vrot.lane.b32.xlu0 %v3590, 64
  %v4032 = vpop.permute.xlu0 %4031
  %4033 = vrot.lane.b32.xlu0 %v3599, 64
  %v4034 = vpop.permute.xlu0 %4033
  %4035 = vrot.lane.b32.xlu0 %v3608, 64
  %v4036 = vpop.permute.xlu0 %4035
  %4037 = vrot.lane.b32.xlu0 %v3617, 64
  %v4038 = vpop.permute.xlu0 %4037
  %4039 = vrot.lane.b32.xlu0 %v3626, 64
  %v4040 = vpop.permute.xlu0 %4039
  %4041 = vrot.lane.b32.xlu0 %v3635, 64
  %v4042 = vpop.permute.xlu0 %4041
  %4043 = vrot.lane.b32.xlu0 %v3644, 64
  %v4044 = vpop.permute.xlu0 %4043
  %4045 = vrot.lane.b32.xlu0 %v3653, 64
  %v4046 = vpop.permute.xlu0 %4045
  %4047 = vrot.lane.b32.xlu0 %v3662, 64
  %v4048 = vpop.permute.xlu0 %4047
  %4049 = vrot.lane.b32.xlu0 %v3671, 64
  %v4050 = vpop.permute.xlu0 %4049
  %4051 = vrot.lane.b32.xlu0 %v3680, 64
  %v4052 = vpop.permute.xlu0 %4051
  %4053 = vrot.lane.b32.xlu0 %v3689, 64
  %v4054 = vpop.permute.xlu0 %4053
  %4055 = vrot.lane.b32.xlu0 %v3698, 64
  %v4056 = vpop.permute.xlu0 %4055
  %4057 = vrot.lane.b32.xlu0 %v3707, 64
  %v4058 = vpop.permute.xlu0 %4057
  %4059 = vrot.lane.b32.xlu0 %v3716, 64
  %v4060 = vpop.permute.xlu0 %4059
  %4061 = vrot.lane.b32.xlu0 %v3725, 64
  %v4062 = vpop.permute.xlu0 %4061
  %4063 = vrot.lane.b32.xlu0 %v3734, 64
  %v4064 = vpop.permute.xlu0 %4063
  %4065 = vrot.lane.b32.xlu0 %v3743, 64
  %v4066 = vpop.permute.xlu0 %4065
  %4067 = vrot.lane.b32.xlu0 %v3752, 64
  %v4068 = vpop.permute.xlu0 %4067
  %4069 = vrot.lane.b32.xlu0 %v3761, 64
  %v4070 = vpop.permute.xlu0 %4069
  %4071 = vrot.lane.b32.xlu0 %v3770, 64
  %v4072 = vpop.permute.xlu0 %4071
  %4073 = vrot.lane.b32.xlu0 %v3779, 64
  %v4074 = vpop.permute.xlu0 %4073
  %4075 = vrot.lane.b32.xlu0 %v3788, 64
  %v4076 = vpop.permute.xlu0 %4075
  %4077 = vrot.lane.b32.xlu0 %v3797, 64
  %v4078 = vpop.permute.xlu0 %4077
  %4079 = vrot.lane.b32.xlu0 %v3806, 64
  %v4080 = vpop.permute.xlu0 %4079
  %4081 = vrot.lane.b32.xlu0 %v3815, 64
  %v4082 = vpop.permute.xlu0 %4081
  %4083 = vrot.lane.b32.xlu0 %v3824, 64
  %v4084 = vpop.permute.xlu0 %4083
  %4085 = vrot.lane.b32.xlu0 %v3833, 64
  %v4086 = vpop.permute.xlu0 %4085
  %4087 = vrot.lane.b32.xlu0 %v3842, 64
  %v4088 = vpop.permute.xlu0 %4087
  %4089 = vrot.lane.b32.xlu0 %v3851, 64
  %v4090 = vpop.permute.xlu0 %4089
  %4091 = vrot.lane.b32.xlu0 %v3860, 64
  %v4092 = vpop.permute.xlu0 %4091
  %4093 = vrot.lane.b32.xlu0 %v3869, 64
  %v4094 = vpop.permute.xlu0 %4093
  %4095 = vrot.lane.b32.xlu0 %v3878, 64
  %v4096 = vpop.permute.xlu0 %4095
  %4097 = vrot.lane.b32.xlu0 %v3887, 64
  %v4098 = vpop.permute.xlu0 %4097
  %4099 = vrot.lane.b32.xlu0 %v3896, 64
  %v4100 = vpop.permute.xlu0 %4099
  %4101 = vrot.lane.b32.xlu0 %v3905, 64
  %v4102 = vpop.permute.xlu0 %4101
  %4103 = vrot.lane.b32.xlu0 %v3914, 64
  %v4104 = vpop.permute.xlu0 %4103
  %4105 = vrot.lane.b32.xlu0 %v3923, 64
  %v4106 = vpop.permute.xlu0 %4105
  %4107 = vrot.lane.b32.xlu0 %v3932, 64
  %v4108 = vpop.permute.xlu0 %4107
  %4109 = vrot.lane.b32.xlu0 %v3941, 64
  %v4110 = vpop.permute.xlu0 %4109
  %4111 = vrot.lane.b32.xlu0 %v3950, 64
  %v4112 = vpop.permute.xlu0 %4111
  %vm4194 = vcmask 781824
  %4195 = vst.msk [vmem:[#allocation3] sm:$0xf] %vm4194, %v3952
  %4196 = vst.msk [vmem:[#allocation3 + $0xc] sm:$0xf] %vm4194, %v3954
  %4197 = vst.msk [vmem:[#allocation3 + $0x18] sm:$0xf] %vm4194, %v3956
  %4198 = vst.msk [vmem:[#allocation3 + $0x24] sm:$0xf] %vm4194, %v3958
  %4199 = vst.msk [vmem:[#allocation3 + $0x30] sm:$0xf] %vm4194, %v3960
  %4200 = vst.msk [vmem:[#allocation3 + $0x3c] sm:$0xf] %vm4194, %v3962
  %4201 = vst.msk [vmem:[#allocation3 + $0x48] sm:$0xf] %vm4194, %v3964
  %4202 = vst.msk [vmem:[#allocation3 + $0x54] sm:$0xf] %vm4194, %v3966
  %4203 = vst.msk [vmem:[#allocation3 + $0x60] sm:$0xf] %vm4194, %v3968
  %4204 = vst.msk [vmem:[#allocation3 + $0x6c] sm:$0xf] %vm4194, %v3970
  %4205 = vst.msk [vmem:[#allocation3 + $0x78] sm:$0xf] %vm4194, %v3972
  %4206 = vst.msk [vmem:[#allocation3 + $0x84] sm:$0xf] %vm4194, %v3974
  %4207 = vst.msk [vmem:[#allocation3 + $0x90] sm:$0xf] %vm4194, %v3976
  %4208 = vst.msk [vmem:[#allocation3 + $0x9c] sm:$0xf] %vm4194, %v3978
  %4209 = vst.msk [vmem:[#allocation3 + $0xa8] sm:$0xf] %vm4194, %v3980
  %4210 = vst.msk [vmem:[#allocation3 + $0xb4] sm:$0xf] %vm4194, %v3982
  %4211 = vst.msk [vmem:[#allocation3 + $0xc0] sm:$0xf] %vm4194, %v3984
  %4212 = vst.msk [vmem:[#allocation3 + $0xcc] sm:$0xf] %vm4194, %v3986
  %4213 = vst.msk [vmem:[#allocation3 + $0xd8] sm:$0xf] %vm4194, %v3988
  %4214 = vst.msk [vmem:[#allocation3 + $0xe4] sm:$0xf] %vm4194, %v3990
  %4215 = vst.msk [vmem:[#allocation3 + $0xf0] sm:$0xf] %vm4194, %v3992
  %4216 = vst.msk [vmem:[#allocation3 + $0xfc] sm:$0xf] %vm4194, %v3994
  %4217 = vst.msk [vmem:[#allocation3 + $0x108] sm:$0xf] %vm4194, %v3996
  %4218 = vst.msk [vmem:[#allocation3 + $0x114] sm:$0xf] %vm4194, %v3998
  %4219 = vst.msk [vmem:[#allocation3 + $0x120] sm:$0xf] %vm4194, %v4000
  %4220 = vst.msk [vmem:[#allocation3 + $0x12c] sm:$0xf] %vm4194, %v4002
  %4221 = vst.msk [vmem:[#allocation3 + $0x138] sm:$0xf] %vm4194, %v4004
  %4222 = vst.msk [vmem:[#allocation3 + $0x144] sm:$0xf] %vm4194, %v4006
  %4223 = vst.msk [vmem:[#allocation3 + $0x150] sm:$0xf] %vm4194, %v4008
  %4224 = vst.msk [vmem:[#allocation3 + $0x15c] sm:$0xf] %vm4194, %v4010
  %4225 = vst.msk [vmem:[#allocation3 + $0x168] sm:$0xf] %vm4194, %v4012
  %4226 = vst.msk [vmem:[#allocation3 + $0x174] sm:$0xf] %vm4194, %v4014
  %4227 = vst.msk [vmem:[#allocation3 + $0x180] sm:$0xf] %vm4194, %v4016
  %4228 = vst.msk [vmem:[#allocation3 + $0x18c] sm:$0xf] %vm4194, %v4018
  %4229 = vst.msk [vmem:[#allocation3 + $0x198] sm:$0xf] %vm4194, %v4020
  %4230 = vst.msk [vmem:[#allocation3 + $0x1a4] sm:$0xf] %vm4194, %v4022
  %4231 = vst.msk [vmem:[#allocation3 + $0x1b0] sm:$0xf] %vm4194, %v4024
  %4232 = vst.msk [vmem:[#allocation3 + $0x1bc] sm:$0xf] %vm4194, %v4026
  %4233 = vst.msk [vmem:[#allocation3 + $0x1c8] sm:$0xf] %vm4194, %v4028
  %4234 = vst.msk [vmem:[#allocation3 + $0x1d4] sm:$0xf] %vm4194, %v4030
  %4235 = vst.msk [vmem:[#allocation3 + $0x1e0] sm:$0xf] %vm4194, %v4032
  %4236 = vst.msk [vmem:[#allocation3 + $0x1ec] sm:$0xf] %vm4194, %v4034
  %4237 = vst.msk [vmem:[#allocation3 + $0x1f8] sm:$0xf] %vm4194, %v4036
  %4238 = vst.msk [vmem:[#allocation3 + $0x204] sm:$0xf] %vm4194, %v4038
  %4239 = vst.msk [vmem:[#allocation3 + $0x210] sm:$0xf] %vm4194, %v4040
  %4240 = vst.msk [vmem:[#allocation3 + $0x21c] sm:$0xf] %vm4194, %v4042
  %4241 = vst.msk [vmem:[#allocation3 + $0x228] sm:$0xf] %vm4194, %v4044
  %4242 = vst.msk [vmem:[#allocation3 + $0x234] sm:$0xf] %vm4194, %v4046
  %4243 = vst.msk [vmem:[#allocation3 + $0x240] sm:$0xf] %vm4194, %v4048
  %4244 = vst.msk [vmem:[#allocation3 + $0x24c] sm:$0xf] %vm4194, %v4050
  %4245 = vst.msk [vmem:[#allocation3 + $0x258] sm:$0xf] %vm4194, %v4052
  %4246 = vst.msk [vmem:[#allocation3 + $0x264] sm:$0xf] %vm4194, %v4054
  %4247 = vst.msk [vmem:[#allocation3 + $0x270] sm:$0xf] %vm4194, %v4056
  %4248 = vst.msk [vmem:[#allocation3 + $0x27c] sm:$0xf] %vm4194, %v4058
  %4249 = vst.msk [vmem:[#allocation3 + $0x288] sm:$0xf] %vm4194, %v4060
  %4250 = vst.msk [vmem:[#allocation3 + $0x294] sm:$0xf] %vm4194, %v4062
  %4251 = vst.msk [vmem:[#allocation3 + $0x2a0] sm:$0xf] %vm4194, %v4064
  %4252 = vst.msk [vmem:[#allocation3 + $0x2ac] sm:$0xf] %vm4194, %v4066
  %4253 = vst.msk [vmem:[#allocation3 + $0x2b8] sm:$0xf] %vm4194, %v4068
  %4254 = vst.msk [vmem:[#allocation3 + $0x2c4] sm:$0xf] %vm4194, %v4070
  %4255 = vst.msk [vmem:[#allocation3 + $0x2d0] sm:$0xf] %vm4194, %v4072
  %4256 = vst.msk [vmem:[#allocation3 + $0x2dc] sm:$0xf] %vm4194, %v4074
  %4257 = vst.msk [vmem:[#allocation3 + $0x2e8] sm:$0xf] %vm4194, %v4076
  %4258 = vst.msk [vmem:[#allocation3 + $0x2f4] sm:$0xf] %vm4194, %v4078
  %4259 = vst.msk [vmem:[#allocation3 + $0x300] sm:$0xf] %vm4194, %v4080
  %4260 = vst.msk [vmem:[#allocation3 + $0x30c] sm:$0xf] %vm4194, %v4082
  %4261 = vst.msk [vmem:[#allocation3 + $0x318] sm:$0xf] %vm4194, %v4084
  %4262 = vst.msk [vmem:[#allocation3 + $0x324] sm:$0xf] %vm4194, %v4086
  %4263 = vst.msk [vmem:[#allocation3 + $0x330] sm:$0xf] %vm4194, %v4088
  %4264 = vst.msk [vmem:[#allocation3 + $0x33c] sm:$0xf] %vm4194, %v4090
  %4265 = vst.msk [vmem:[#allocation3 + $0x348] sm:$0xf] %vm4194, %v4092
  %4266 = vst.msk [vmem:[#allocation3 + $0x354] sm:$0xf] %vm4194, %v4094
  %4267 = vst.msk [vmem:[#allocation3 + $0x360] sm:$0xf] %vm4194, %v4096
  %4268 = vst.msk [vmem:[#allocation3 + $0x36c] sm:$0xf] %vm4194, %v4098
  %4269 = vst.msk [vmem:[#allocation3 + $0x378] sm:$0xf] %vm4194, %v4100
  %4270 = vst.msk [vmem:[#allocation3 + $0x384] sm:$0xf] %vm4194, %v4102
  %4271 = vst.msk [vmem:[#allocation3 + $0x390] sm:$0xf] %vm4194, %v4104
  %4272 = vst.msk [vmem:[#allocation3 + $0x39c] sm:$0xf] %vm4194, %v4106
  %4273 = vst.msk [vmem:[#allocation3 + $0x3a8] sm:$0xf] %vm4194, %v4108
  %4274 = vst.msk [vmem:[#allocation3 + $0x3b4] sm:$0xf] %vm4194, %v4110
  %4275 = vst.msk [vmem:[#allocation3 + $0x3c0] sm:$0xf] %vm4194, %v4112
  %v4276 = vld [vmem:[#allocation2 + $0xc] sm:$0x8]
  %v4277 = vld [vmem:[#allocation2 + $0x10] sm:$0xf]
  %v4278 = vld [vmem:[#allocation2 + $0x14] sm:$0xf]
  %v4279 = vld [vmem:[#allocation2 + $0x18] sm:$0xf]
  %v4280 = vld [vmem:[#allocation2 + $0x1c] sm:$0xf]
  %v4281 = vld [vmem:[#allocation2 + $0x20] sm:$0xf]
  %v4282 = vld [vmem:[#allocation2 + $0x24] sm:$0xf]
  %v4283 = vld [vmem:[#allocation2 + $0x28] sm:$0xf]
  %v4284 = vld [vmem:[#allocation2 + $0x2c] sm:$0xf]
  %v4285 = vld [vmem:[#allocation2 + $0x30] sm:$0xf]
  %v4286 = vld [vmem:[#allocation2 + $0x34] sm:$0xf]
  %v4287 = vld [vmem:[#allocation2 + $0x38] sm:$0xf]
  %v4288 = vld [vmem:[#allocation2 + $0x3c] sm:$0xf]
  %v4289 = vld [vmem:[#allocation2 + $0x40] sm:$0xf]
  %v4290 = vld [vmem:[#allocation2 + $0x44] sm:$0xf]
  %v4291 = vld [vmem:[#allocation2 + $0x48] sm:$0xf]
  %v4292 = vld [vmem:[#allocation2 + $0x4c] sm:$0xf]
  %v4293 = vld [vmem:[#allocation2 + $0x50] sm:$0xf]
  %v4294 = vld [vmem:[#allocation2 + $0x54] sm:$0xf]
  %v4295 = vld [vmem:[#allocation2 + $0x58] sm:$0xf]
  %v4296 = vld [vmem:[#allocation2 + $0x5c] sm:$0xf]
  %v4297 = vld [vmem:[#allocation2 + $0x60] sm:$0xf]
  %v4298 = vld [vmem:[#allocation2 + $0x64] sm:$0xf]
  %v4299 = vld [vmem:[#allocation2 + $0x68] sm:$0xf]
  %v4300 = vld [vmem:[#allocation2 + $0x6c] sm:$0xf]
  %v4301 = vld [vmem:[#allocation2 + $0x70] sm:$0xf]
  %v4302 = vld [vmem:[#allocation2 + $0x74] sm:$0xf]
  %v4303 = vld [vmem:[#allocation2 + $0x78] sm:$0xf]
  %v4304 = vld [vmem:[#allocation2 + $0x7c] sm:$0xf]
  %v4305 = vld [vmem:[#allocation2 + $0x80] sm:$0xf]
  %v4306 = vld [vmem:[#allocation2 + $0x84] sm:$0xf]
  %v4307 = vld [vmem:[#allocation2 + $0x88] sm:$0xf]
  %v4308 = vld [vmem:[#allocation2 + $0x8c] sm:$0xf]
  %v4309 = vld [vmem:[#allocation2 + $0x90] sm:$0xf]
  %v4310 = vld [vmem:[#allocation2 + $0x94] sm:$0xf]
  %v4311 = vld [vmem:[#allocation2 + $0x98] sm:$0xf]
  %v4312 = vld [vmem:[#allocation2 + $0x9c] sm:$0xf]
  %v4313 = vld [vmem:[#allocation2 + $0xa0] sm:$0xf]
  %v4314 = vld [vmem:[#allocation2 + $0xa4] sm:$0xf]
  %v4315 = vld [vmem:[#allocation2 + $0xa8] sm:$0xf]
  %v4316 = vld [vmem:[#allocation2 + $0xac] sm:$0xf]
  %v4317 = vld [vmem:[#allocation2 + $0xb0] sm:$0xf]
  %v4318 = vld [vmem:[#allocation2 + $0xb4] sm:$0xf]
  %v4319 = vld [vmem:[#allocation2 + $0xb8] sm:$0xf]
  %v4320 = vld [vmem:[#allocation2 + $0xbc] sm:$0xf]
  %v4321 = vld [vmem:[#allocation2 + $0xc0] sm:$0xf]
  %v4322 = vld [vmem:[#allocation2 + $0xc4] sm:$0xf]
  %v4323 = vld [vmem:[#allocation2 + $0xc8] sm:$0xf]
  %v4324 = vld [vmem:[#allocation2 + $0xcc] sm:$0xf]
  %v4325 = vld [vmem:[#allocation2 + $0xd0] sm:$0xf]
  %v4326 = vld [vmem:[#allocation2 + $0xd4] sm:$0xf]
  %v4327 = vld [vmem:[#allocation2 + $0xd8] sm:$0xf]
  %v4328 = vld [vmem:[#allocation2 + $0xdc] sm:$0xf]
  %v4329 = vld [vmem:[#allocation2 + $0xe0] sm:$0xf]
  %v4330 = vld [vmem:[#allocation2 + $0xe4] sm:$0xf]
  %v4331 = vld [vmem:[#allocation2 + $0xe8] sm:$0xf]
  %v4332 = vld [vmem:[#allocation2 + $0xec] sm:$0xf]
  %v4333 = vld [vmem:[#allocation2 + $0xf0] sm:$0xf]
  %v4334 = vld [vmem:[#allocation2 + $0xf4] sm:$0xf]
  %v4335 = vld [vmem:[#allocation2 + $0xf8] sm:$0xf]
  %v4336 = vld [vmem:[#allocation2 + $0xfc] sm:$0xf]
  %v4337 = vld [vmem:[#allocation2 + $0x100] sm:$0xf]
  %v4338 = vld [vmem:[#allocation2 + $0x104] sm:$0xf]
  %v4339 = vld [vmem:[#allocation2 + $0x108] sm:$0xf]
  %v4340 = vld [vmem:[#allocation2 + $0x10c] sm:$0xf]
  %v4341 = vld [vmem:[#allocation2 + $0x110] sm:$0xf]
  %v4342 = vld [vmem:[#allocation2 + $0x114] sm:$0xf]
  %v4343 = vld [vmem:[#allocation2 + $0x118] sm:$0xf]
  %v4344 = vld [vmem:[#allocation2 + $0x11c] sm:$0xf]
  %v4345 = vld [vmem:[#allocation2 + $0x120] sm:$0xf]
  %v4346 = vld [vmem:[#allocation2 + $0x124] sm:$0xf]
  %v4347 = vld [vmem:[#allocation2 + $0x128] sm:$0xf]
  %v4348 = vld [vmem:[#allocation2 + $0x12c] sm:$0xf]
  %v4349 = vld [vmem:[#allocation2 + $0x130] sm:$0xf]
  %v4350 = vld [vmem:[#allocation2 + $0x134] sm:$0xf]
  %v4351 = vld [vmem:[#allocation2 + $0x138] sm:$0xf]
  %v4352 = vld [vmem:[#allocation2 + $0x13c] sm:$0xf]
  %v4353 = vld [vmem:[#allocation2 + $0x140] sm:$0xf]
  %v4354 = vld [vmem:[#allocation2 + $0x144] sm:$0xf]
  %v4355 = vld [vmem:[#allocation2 + $0x148] sm:$0xf]
  %v4356 = vld [vmem:[#allocation2 + $0x14c] sm:$0xf]
  %v4357 = vld [vmem:[#allocation2 + $0x150] sm:$0xf]
  %v4359 = vshrl.u32 %v4276, 16
  %v4361 = vrot.slane %v4359, 7
  %v4362 = vrot.slane %v4361, 4
  %v4364 = vshrl.u32 %v4277, 16
  %v4366 = vrot.slane %v4364, 7
  %v4367 = vshll.u32 %v4277, 16
  %v4369 = vor.u32 %v4366, %v4367
  %v4370 = vsel %vm3217, %v4362, %v4369
  %v4371 = vrot.slane %v4366, 4
  %v4373 = vshrl.u32 %v4278, 16
  %v4375 = vrot.slane %v4373, 7
  %v4376 = vshll.u32 %v4278, 16
  %v4378 = vor.u32 %v4375, %v4376
  %v4379 = vsel %vm3217, %v4371, %v4378
  %v4380 = vrot.slane %v4375, 4
  %v4382 = vshrl.u32 %v4279, 16
  %v4384 = vrot.slane %v4382, 7
  %v4385 = vshll.u32 %v4279, 16
  %v4387 = vor.u32 %v4384, %v4385
  %v4388 = vsel %vm3217, %v4380, %v4387
  %v4389 = vrot.slane %v4384, 4
  %v4391 = vshrl.u32 %v4280, 16
  %v4393 = vrot.slane %v4391, 7
  %v4394 = vshll.u32 %v4280, 16
  %v4396 = vor.u32 %v4393, %v4394
  %v4397 = vsel %vm3217, %v4389, %v4396
  %v4398 = vrot.slane %v4393, 4
  %v4400 = vshrl.u32 %v4281, 16
  %v4402 = vrot.slane %v4400, 7
  %v4403 = vshll.u32 %v4281, 16
  %v4405 = vor.u32 %v4402, %v4403
  %v4406 = vsel %vm3217, %v4398, %v4405
  %v4407 = vrot.slane %v4402, 4
  %v4409 = vshrl.u32 %v4282, 16
  %v4411 = vrot.slane %v4409, 7
  %v4412 = vshll.u32 %v4282, 16
  %v4414 = vor.u32 %v4411, %v4412
  %v4415 = vsel %vm3217, %v4407, %v4414
  %v4416 = vrot.slane %v4411, 4
  %v4418 = vshrl.u32 %v4283, 16
  %v4420 = vrot.slane %v4418, 7
  %v4421 = vshll.u32 %v4283, 16
  %v4423 = vor.u32 %v4420, %v4421
  %v4424 = vsel %vm3217, %v4416, %v4423
  %v4425 = vrot.slane %v4420, 4
  %v4427 = vshrl.u32 %v4284, 16
  %v4429 = vrot.slane %v4427, 7
  %v4430 = vshll.u32 %v4284, 16
  %v4432 = vor.u32 %v4429, %v4430
  %v4433 = vsel %vm3217, %v4425, %v4432
  %v4434 = vrot.slane %v4429, 4
  %v4436 = vshrl.u32 %v4285, 16
  %v4438 = vrot.slane %v4436, 7
  %v4439 = vshll.u32 %v4285, 16
  %v4441 = vor.u32 %v4438, %v4439
  %v4442 = vsel %vm3217, %v4434, %v4441
  %v4443 = vrot.slane %v4438, 4
  %v4445 = vshrl.u32 %v4286, 16
  %v4447 = vrot.slane %v4445, 7
  %v4448 = vshll.u32 %v4286, 16
  %v4450 = vor.u32 %v4447, %v4448
  %v4451 = vsel %vm3217, %v4443, %v4450
  %v4452 = vrot.slane %v4447, 4
  %v4454 = vshrl.u32 %v4287, 16
  %v4456 = vrot.slane %v4454, 7
  %v4457 = vshll.u32 %v4287, 16
  %v4459 = vor.u32 %v4456, %v4457
  %v4460 = vsel %vm3217, %v4452, %v4459
  %v4461 = vrot.slane %v4456, 4
  %v4463 = vshrl.u32 %v4288, 16
  %v4465 = vrot.slane %v4463, 7
  %v4466 = vshll.u32 %v4288, 16
  %v4468 = vor.u32 %v4465, %v4466
  %v4469 = vsel %vm3217, %v4461, %v4468
  %v4470 = vrot.slane %v4465, 4
  %v4472 = vshrl.u32 %v4289, 16
  %v4474 = vrot.slane %v4472, 7
  %v4475 = vshll.u32 %v4289, 16
  %v4477 = vor.u32 %v4474, %v4475
  %v4478 = vsel %vm3217, %v4470, %v4477
  %v4479 = vrot.slane %v4474, 4
  %v4481 = vshrl.u32 %v4290, 16
  %v4483 = vrot.slane %v4481, 7
  %v4484 = vshll.u32 %v4290, 16
  %v4486 = vor.u32 %v4483, %v4484
  %v4487 = vsel %vm3217, %v4479, %v4486
  %v4488 = vrot.slane %v4483, 4
  %v4490 = vshrl.u32 %v4291, 16
  %v4492 = vrot.slane %v4490, 7
  %v4493 = vshll.u32 %v4291, 16
  %v4495 = vor.u32 %v4492, %v4493
  %v4496 = vsel %vm3217, %v4488, %v4495
  %v4497 = vrot.slane %v4492, 4
  %v4499 = vshrl.u32 %v4292, 16
  %v4501 = vrot.slane %v4499, 7
  %v4502 = vshll.u32 %v4292, 16
  %v4504 = vor.u32 %v4501, %v4502
  %v4505 = vsel %vm3217, %v4497, %v4504
  %v4506 = vrot.slane %v4501, 4
  %v4508 = vshrl.u32 %v4293, 16
  %v4510 = vrot.slane %v4508, 7
  %v4511 = vshll.u32 %v4293, 16
  %v4513 = vor.u32 %v4510, %v4511
  %v4514 = vsel %vm3217, %v4506, %v4513
  %v4515 = vrot.slane %v4510, 4
  %v4517 = vshrl.u32 %v4294, 16
  %v4519 = vrot.slane %v4517, 7
  %v4520 = vshll.u32 %v4294, 16
  %v4522 = vor.u32 %v4519, %v4520
  %v4523 = vsel %vm3217, %v4515, %v4522
  %v4524 = vrot.slane %v4519, 4
  %v4526 = vshrl.u32 %v4295, 16
  %v4528 = vrot.slane %v4526, 7
  %v4529 = vshll.u32 %v4295, 16
  %v4531 = vor.u32 %v4528, %v4529
  %v4532 = vsel %vm3217, %v4524, %v4531
  %v4533 = vrot.slane %v4528, 4
  %v4535 = vshrl.u32 %v4296, 16
  %v4537 = vrot.slane %v4535, 7
  %v4538 = vshll.u32 %v4296, 16
  %v4540 = vor.u32 %v4537, %v4538
  %v4541 = vsel %vm3217, %v4533, %v4540
  %v4542 = vrot.slane %v4537, 4
  %v4544 = vshrl.u32 %v4297, 16
  %v4546 = vrot.slane %v4544, 7
  %v4547 = vshll.u32 %v4297, 16
  %v4549 = vor.u32 %v4546, %v4547
  %v4550 = vsel %vm3217, %v4542, %v4549
  %v4551 = vrot.slane %v4546, 4
  %v4553 = vshrl.u32 %v4298, 16
  %v4555 = vrot.slane %v4553, 7
  %v4556 = vshll.u32 %v4298, 16
  %v4558 = vor.u32 %v4555, %v4556
  %v4559 = vsel %vm3217, %v4551, %v4558
  %v4560 = vrot.slane %v4555, 4
  %v4562 = vshrl.u32 %v4299, 16
  %v4564 = vrot.slane %v4562, 7
  %v4565 = vshll.u32 %v4299, 16
  %v4567 = vor.u32 %v4564, %v4565
  %v4568 = vsel %vm3217, %v4560, %v4567
  %v4569 = vrot.slane %v4564, 4
  %v4571 = vshrl.u32 %v4300, 16
  %v4573 = vrot.slane %v4571, 7
  %v4574 = vshll.u32 %v4300, 16
  %v4576 = vor.u32 %v4573, %v4574
  %v4577 = vsel %vm3217, %v4569, %v4576
  %v4578 = vrot.slane %v4573, 4
  %v4580 = vshrl.u32 %v4301, 16
  %v4582 = vrot.slane %v4580, 7
  %v4583 = vshll.u32 %v4301, 16
  %v4585 = vor.u32 %v4582, %v4583
  %v4586 = vsel %vm3217, %v4578, %v4585
  %v4587 = vrot.slane %v4582, 4
  %v4589 = vshrl.u32 %v4302, 16
  %v4591 = vrot.slane %v4589, 7
  %v4592 = vshll.u32 %v4302, 16
  %v4594 = vor.u32 %v4591, %v4592
  %v4595 = vsel %vm3217, %v4587, %v4594
  %v4596 = vrot.slane %v4591, 4
  %v4598 = vshrl.u32 %v4303, 16
  %v4600 = vrot.slane %v4598, 7
  %v4601 = vshll.u32 %v4303, 16
  %v4603 = vor.u32 %v4600, %v4601
  %v4604 = vsel %vm3217, %v4596, %v4603
  %v4605 = vrot.slane %v4600, 4
  %v4607 = vshrl.u32 %v4304, 16
  %v4609 = vrot.slane %v4607, 7
  %v4610 = vshll.u32 %v4304, 16
  %v4612 = vor.u32 %v4609, %v4610
  %v4613 = vsel %vm3217, %v4605, %v4612
  %v4614 = vrot.slane %v4609, 4
  %v4616 = vshrl.u32 %v4305, 16
  %v4618 = vrot.slane %v4616, 7
  %v4619 = vshll.u32 %v4305, 16
  %v4621 = vor.u32 %v4618, %v4619
  %v4622 = vsel %vm3217, %v4614, %v4621
  %v4623 = vrot.slane %v4618, 4
  %v4625 = vshrl.u32 %v4306, 16
  %v4627 = vrot.slane %v4625, 7
  %v4628 = vshll.u32 %v4306, 16
  %v4630 = vor.u32 %v4627, %v4628
  %v4631 = vsel %vm3217, %v4623, %v4630
  %v4632 = vrot.slane %v4627, 4
  %v4634 = vshrl.u32 %v4307, 16
  %v4636 = vrot.slane %v4634, 7
  %v4637 = vshll.u32 %v4307, 16
  %v4639 = vor.u32 %v4636, %v4637
  %v4640 = vsel %vm3217, %v4632, %v4639
  %v4641 = vrot.slane %v4636, 4
  %v4643 = vshrl.u32 %v4308, 16
  %v4645 = vrot.slane %v4643, 7
  %v4646 = vshll.u32 %v4308, 16
  %v4648 = vor.u32 %v4645, %v4646
  %v4649 = vsel %vm3217, %v4641, %v4648
  %v4650 = vrot.slane %v4645, 4
  %v4652 = vshrl.u32 %v4309, 16
  %v4654 = vrot.slane %v4652, 7
  %v4655 = vshll.u32 %v4309, 16
  %v4657 = vor.u32 %v4654, %v4655
  %v4658 = vsel %vm3217, %v4650, %v4657
  %v4659 = vrot.slane %v4654, 4
  %v4661 = vshrl.u32 %v4310, 16
  %v4663 = vrot.slane %v4661, 7
  %v4664 = vshll.u32 %v4310, 16
  %v4666 = vor.u32 %v4663, %v4664
  %v4667 = vsel %vm3217, %v4659, %v4666
  %v4668 = vrot.slane %v4663, 4
  %v4670 = vshrl.u32 %v4311, 16
  %v4672 = vrot.slane %v4670, 7
  %v4673 = vshll.u32 %v4311, 16
  %v4675 = vor.u32 %v4672, %v4673
  %v4676 = vsel %vm3217, %v4668, %v4675
  %v4677 = vrot.slane %v4672, 4
  %v4679 = vshrl.u32 %v4312, 16
  %v4681 = vrot.slane %v4679, 7
  %v4682 = vshll.u32 %v4312, 16
  %v4684 = vor.u32 %v4681, %v4682
  %v4685 = vsel %vm3217, %v4677, %v4684
  %v4686 = vrot.slane %v4681, 4
  %v4688 = vshrl.u32 %v4313, 16
  %v4690 = vrot.slane %v4688, 7
  %v4691 = vshll.u32 %v4313, 16
  %v4693 = vor.u32 %v4690, %v4691
  %v4694 = vsel %vm3217, %v4686, %v4693
  %v4695 = vrot.slane %v4690, 4
  %v4697 = vshrl.u32 %v4314, 16
  %v4699 = vrot.slane %v4697, 7
  %v4700 = vshll.u32 %v4314, 16
  %v4702 = vor.u32 %v4699, %v4700
  %v4703 = vsel %vm3217, %v4695, %v4702
  %v4704 = vrot.slane %v4699, 4
  %v4706 = vshrl.u32 %v4315, 16
  %v4708 = vrot.slane %v4706, 7
  %v4709 = vshll.u32 %v4315, 16
  %v4711 = vor.u32 %v4708, %v4709
  %v4712 = vsel %vm3217, %v4704, %v4711
  %v4713 = vrot.slane %v4708, 4
  %v4715 = vshrl.u32 %v4316, 16
  %v4717 = vrot.slane %v4715, 7
  %v4718 = vshll.u32 %v4316, 16
  %v4720 = vor.u32 %v4717, %v4718
  %v4721 = vsel %vm3217, %v4713, %v4720
  %v4722 = vrot.slane %v4717, 4
  %v4724 = vshrl.u32 %v4317, 16
  %v4726 = vrot.slane %v4724, 7
  %v4727 = vshll.u32 %v4317, 16
  %v4729 = vor.u32 %v4726, %v4727
  %v4730 = vsel %vm3217, %v4722, %v4729
  %v4731 = vrot.slane %v4726, 4
  %v4733 = vshrl.u32 %v4318, 16
  %v4735 = vrot.slane %v4733, 7
  %v4736 = vshll.u32 %v4318, 16
  %v4738 = vor.u32 %v4735, %v4736
  %v4739 = vsel %vm3217, %v4731, %v4738
  %v4740 = vrot.slane %v4735, 4
  %v4742 = vshrl.u32 %v4319, 16
  %v4744 = vrot.slane %v4742, 7
  %v4745 = vshll.u32 %v4319, 16
  %v4747 = vor.u32 %v4744, %v4745
  %v4748 = vsel %vm3217, %v4740, %v4747
  %v4749 = vrot.slane %v4744, 4
  %v4751 = vshrl.u32 %v4320, 16
  %v4753 = vrot.slane %v4751, 7
  %v4754 = vshll.u32 %v4320, 16
  %v4756 = vor.u32 %v4753, %v4754
  %v4757 = vsel %vm3217, %v4749, %v4756
  %v4758 = vrot.slane %v4753, 4
  %v4760 = vshrl.u32 %v4321, 16
  %v4762 = vrot.slane %v4760, 7
  %v4763 = vshll.u32 %v4321, 16
  %v4765 = vor.u32 %v4762, %v4763
  %v4766 = vsel %vm3217, %v4758, %v4765
  %v4767 = vrot.slane %v4762, 4
  %v4769 = vshrl.u32 %v4322, 16
  %v4771 = vrot.slane %v4769, 7
  %v4772 = vshll.u32 %v4322, 16
  %v4774 = vor.u32 %v4771, %v4772
  %v4775 = vsel %vm3217, %v4767, %v4774
  %v4776 = vrot.slane %v4771, 4
  %v4778 = vshrl.u32 %v4323, 16
  %v4780 = vrot.slane %v4778, 7
  %v4781 = vshll.u32 %v4323, 16
  %v4783 = vor.u32 %v4780, %v4781
  %v4784 = vsel %vm3217, %v4776, %v4783
  %v4785 = vrot.slane %v4780, 4
  %v4787 = vshrl.u32 %v4324, 16
  %v4789 = vrot.slane %v4787, 7
  %v4790 = vshll.u32 %v4324, 16
  %v4792 = vor.u32 %v4789, %v4790
  %v4793 = vsel %vm3217, %v4785, %v4792
  %v4794 = vrot.slane %v4789, 4
  %v4796 = vshrl.u32 %v4325, 16
  %v4798 = vrot.slane %v4796, 7
  %v4799 = vshll.u32 %v4325, 16
  %v4801 = vor.u32 %v4798, %v4799
  %v4802 = vsel %vm3217, %v4794, %v4801
  %v4803 = vrot.slane %v4798, 4
  %v4805 = vshrl.u32 %v4326, 16
  %v4807 = vrot.slane %v4805, 7
  %v4808 = vshll.u32 %v4326, 16
  %v4810 = vor.u32 %v4807, %v4808
  %v4811 = vsel %vm3217, %v4803, %v4810
  %v4812 = vrot.slane %v4807, 4
  %v4814 = vshrl.u32 %v4327, 16
  %v4816 = vrot.slane %v4814, 7
  %v4817 = vshll.u32 %v4327, 16
  %v4819 = vor.u32 %v4816, %v4817
  %v4820 = vsel %vm3217, %v4812, %v4819
  %v4821 = vrot.slane %v4816, 4
  %v4823 = vshrl.u32 %v4328, 16
  %v4825 = vrot.slane %v4823, 7
  %v4826 = vshll.u32 %v4328, 16
  %v4828 = vor.u32 %v4825, %v4826
  %v4829 = vsel %vm3217, %v4821, %v4828
  %v4830 = vrot.slane %v4825, 4
  %v4832 = vshrl.u32 %v4329, 16
  %v4834 = vrot.slane %v4832, 7
  %v4835 = vshll.u32 %v4329, 16
  %v4837 = vor.u32 %v4834, %v4835
  %v4838 = vsel %vm3217, %v4830, %v4837
  %v4839 = vrot.slane %v4834, 4
  %v4841 = vshrl.u32 %v4330, 16
  %v4843 = vrot.slane %v4841, 7
  %v4844 = vshll.u32 %v4330, 16
  %v4846 = vor.u32 %v4843, %v4844
  %v4847 = vsel %vm3217, %v4839, %v4846
  %v4848 = vrot.slane %v4843, 4
  %v4850 = vshrl.u32 %v4331, 16
  %v4852 = vrot.slane %v4850, 7
  %v4853 = vshll.u32 %v4331, 16
  %v4855 = vor.u32 %v4852, %v4853
  %v4856 = vsel %vm3217, %v4848, %v4855
  %v4857 = vrot.slane %v4852, 4
  %v4859 = vshrl.u32 %v4332, 16
  %v4861 = vrot.slane %v4859, 7
  %v4862 = vshll.u32 %v4332, 16
  %v4864 = vor.u32 %v4861, %v4862
  %v4865 = vsel %vm3217, %v4857, %v4864
  %v4866 = vrot.slane %v4861, 4
  %v4868 = vshrl.u32 %v4333, 16
  %v4870 = vrot.slane %v4868, 7
  %v4871 = vshll.u32 %v4333, 16
  %v4873 = vor.u32 %v4870, %v4871
  %v4874 = vsel %vm3217, %v4866, %v4873
  %v4875 = vrot.slane %v4870, 4
  %v4877 = vshrl.u32 %v4334, 16
  %v4879 = vrot.slane %v4877, 7
  %v4880 = vshll.u32 %v4334, 16
  %v4882 = vor.u32 %v4879, %v4880
  %v4883 = vsel %vm3217, %v4875, %v4882
  %v4884 = vrot.slane %v4879, 4
  %v4886 = vshrl.u32 %v4335, 16
  %v4888 = vrot.slane %v4886, 7
  %v4889 = vshll.u32 %v4335, 16
  %v4891 = vor.u32 %v4888, %v4889
  %v4892 = vsel %vm3217, %v4884, %v4891
  %v4893 = vrot.slane %v4888, 4
  %v4895 = vshrl.u32 %v4336, 16
  %v4897 = vrot.slane %v4895, 7
  %v4898 = vshll.u32 %v4336, 16
  %v4900 = vor.u32 %v4897, %v4898
  %v4901 = vsel %vm3217, %v4893, %v4900
  %v4902 = vrot.slane %v4897, 4
  %v4904 = vshrl.u32 %v4337, 16
  %v4906 = vrot.slane %v4904, 7
  %v4907 = vshll.u32 %v4337, 16
  %v4909 = vor.u32 %v4906, %v4907
  %v4910 = vsel %vm3217, %v4902, %v4909
  %v4911 = vrot.slane %v4906, 4
  %v4913 = vshrl.u32 %v4338, 16
  %v4915 = vrot.slane %v4913, 7
  %v4916 = vshll.u32 %v4338, 16
  %v4918 = vor.u32 %v4915, %v4916
  %v4919 = vsel %vm3217, %v4911, %v4918
  %v4920 = vrot.slane %v4915, 4
  %v4922 = vshrl.u32 %v4339, 16
  %v4924 = vrot.slane %v4922, 7
  %v4925 = vshll.u32 %v4339, 16
  %v4927 = vor.u32 %v4924, %v4925
  %v4928 = vsel %vm3217, %v4920, %v4927
  %v4929 = vrot.slane %v4924, 4
  %v4931 = vshrl.u32 %v4340, 16
  %v4933 = vrot.slane %v4931, 7
  %v4934 = vshll.u32 %v4340, 16
  %v4936 = vor.u32 %v4933, %v4934
  %v4937 = vsel %vm3217, %v4929, %v4936
  %v4938 = vrot.slane %v4933, 4
  %v4940 = vshrl.u32 %v4341, 16
  %v4942 = vrot.slane %v4940, 7
  %v4943 = vshll.u32 %v4341, 16
  %v4945 = vor.u32 %v4942, %v4943
  %v4946 = vsel %vm3217, %v4938, %v4945
  %v4947 = vrot.slane %v4942, 4
  %v4949 = vshrl.u32 %v4342, 16
  %v4951 = vrot.slane %v4949, 7
  %v4952 = vshll.u32 %v4342, 16
  %v4954 = vor.u32 %v4951, %v4952
  %v4955 = vsel %vm3217, %v4947, %v4954
  %v4956 = vrot.slane %v4951, 4
  %v4958 = vshrl.u32 %v4343, 16
  %v4960 = vrot.slane %v4958, 7
  %v4961 = vshll.u32 %v4343, 16
  %v4963 = vor.u32 %v4960, %v4961
  %v4964 = vsel %vm3217, %v4956, %v4963
  %v4965 = vrot.slane %v4960, 4
  %v4967 = vshrl.u32 %v4344, 16
  %v4969 = vrot.slane %v4967, 7
  %v4970 = vshll.u32 %v4344, 16
  %v4972 = vor.u32 %v4969, %v4970
  %v4973 = vsel %vm3217, %v4965, %v4972
  %v4974 = vrot.slane %v4969, 4
  %v4976 = vshrl.u32 %v4345, 16
  %v4978 = vrot.slane %v4976, 7
  %v4979 = vshll.u32 %v4345, 16
  %v4981 = vor.u32 %v4978, %v4979
  %v4982 = vsel %vm3217, %v4974, %v4981
  %v4983 = vrot.slane %v4978, 4
  %v4985 = vshrl.u32 %v4346, 16
  %v4987 = vrot.slane %v4985, 7
  %v4988 = vshll.u32 %v4346, 16
  %v4990 = vor.u32 %v4987, %v4988
  %v4991 = vsel %vm3217, %v4983, %v4990
  %v4992 = vrot.slane %v4987, 4
  %v4994 = vshrl.u32 %v4347, 16
  %v4996 = vrot.slane %v4994, 7
  %v4997 = vshll.u32 %v4347, 16
  %v4999 = vor.u32 %v4996, %v4997
  %v5000 = vsel %vm3217, %v4992, %v4999
  %v5001 = vrot.slane %v4996, 4
  %v5003 = vshrl.u32 %v4348, 16
  %v5005 = vrot.slane %v5003, 7
  %v5006 = vshll.u32 %v4348, 16
  %v5008 = vor.u32 %v5005, %v5006
  %v5009 = vsel %vm3217, %v5001, %v5008
  %v5010 = vrot.slane %v5005, 4
  %v5012 = vshrl.u32 %v4349, 16
  %v5014 = vrot.slane %v5012, 7
  %v5015 = vshll.u32 %v4349, 16
  %v5017 = vor.u32 %v5014, %v5015
  %v5018 = vsel %vm3217, %v5010, %v5017
  %v5019 = vrot.slane %v5014, 4
  %v5021 = vshrl.u32 %v4350, 16
  %v5023 = vrot.slane %v5021, 7
  %v5024 = vshll.u32 %v4350, 16
  %v5026 = vor.u32 %v5023, %v5024
  %v5027 = vsel %vm3217, %v5019, %v5026
  %v5028 = vrot.slane %v5023, 4
  %v5030 = vshrl.u32 %v4351, 16
  %v5032 = vrot.slane %v5030, 7
  %v5033 = vshll.u32 %v4351, 16
  %v5035 = vor.u32 %v5032, %v5033
  %v5036 = vsel %vm3217, %v5028, %v5035
  %v5037 = vrot.slane %v5032, 4
  %v5039 = vshrl.u32 %v4352, 16
  %v5041 = vrot.slane %v5039, 7
  %v5042 = vshll.u32 %v4352, 16
  %v5044 = vor.u32 %v5041, %v5042
  %v5045 = vsel %vm3217, %v5037, %v5044
  %v5046 = vrot.slane %v5041, 4
  %v5048 = vshrl.u32 %v4353, 16
  %v5050 = vrot.slane %v5048, 7
  %v5051 = vshll.u32 %v4353, 16
  %v5053 = vor.u32 %v5050, %v5051
  %v5054 = vsel %vm3217, %v5046, %v5053
  %v5055 = vrot.slane %v5050, 4
  %v5057 = vshrl.u32 %v4354, 16
  %v5059 = vrot.slane %v5057, 7
  %v5060 = vshll.u32 %v4354, 16
  %v5062 = vor.u32 %v5059, %v5060
  %v5063 = vsel %vm3217, %v5055, %v5062
  %v5064 = vrot.slane %v5059, 4
  %v5066 = vshrl.u32 %v4355, 16
  %v5068 = vrot.slane %v5066, 7
  %v5069 = vshll.u32 %v4355, 16
  %v5071 = vor.u32 %v5068, %v5069
  %v5072 = vsel %vm3217, %v5064, %v5071
  %v5073 = vrot.slane %v5068, 4
  %v5075 = vshrl.u32 %v4356, 16
  %v5077 = vrot.slane %v5075, 7
  %v5078 = vshll.u32 %v4356, 16
  %v5080 = vor.u32 %v5077, %v5078
  %v5081 = vsel %vm3217, %v5073, %v5080
  %v5082 = vrot.slane %v5077, 4
  %v5084 = vshrl.u32 %v4357, 16
  %v5086 = vrot.slane %v5084, 7
  %v5087 = vshll.u32 %v4357, 16
  %v5089 = vor.u32 %v5086, %v5087
  %v5090 = vsel %vm3217, %v5082, %v5089
  %5091 = vrot.lane.b32.xlu0 %v4370, 96
  %v5092 = vpop.permute.xlu0 %5091
  %5093 = vrot.lane.b32.xlu0 %v4379, 96
  %v5094 = vpop.permute.xlu0 %5093
  %5095 = vrot.lane.b32.xlu0 %v4388, 96
  %v5096 = vpop.permute.xlu0 %5095
  %5097 = vrot.lane.b32.xlu0 %v4397, 96
  %v5098 = vpop.permute.xlu0 %5097
  %5099 = vrot.lane.b32.xlu0 %v4406, 96
  %v5100 = vpop.permute.xlu0 %5099
  %5101 = vrot.lane.b32.xlu0 %v4415, 96
  %v5102 = vpop.permute.xlu0 %5101
  %5103 = vrot.lane.b32.xlu0 %v4424, 96
  %v5104 = vpop.permute.xlu0 %5103
  %5105 = vrot.lane.b32.xlu0 %v4433, 96
  %v5106 = vpop.permute.xlu0 %5105
  %5107 = vrot.lane.b32.xlu0 %v4442, 96
  %v5108 = vpop.permute.xlu0 %5107
  %5109 = vrot.lane.b32.xlu0 %v4451, 96
  %v5110 = vpop.permute.xlu0 %5109
  %5111 = vrot.lane.b32.xlu0 %v4460, 96
  %v5112 = vpop.permute.xlu0 %5111
  %5113 = vrot.lane.b32.xlu0 %v4469, 96
  %v5114 = vpop.permute.xlu0 %5113
  %5115 = vrot.lane.b32.xlu0 %v4478, 96
  %v5116 = vpop.permute.xlu0 %5115
  %5117 = vrot.lane.b32.xlu0 %v4487, 96
  %v5118 = vpop.permute.xlu0 %5117
  %5119 = vrot.lane.b32.xlu0 %v4496, 96
  %v5120 = vpop.permute.xlu0 %5119
  %5121 = vrot.lane.b32.xlu0 %v4505, 96
  %v5122 = vpop.permute.xlu0 %5121
  %5123 = vrot.lane.b32.xlu0 %v4514, 96
  %v5124 = vpop.permute.xlu0 %5123
  %5125 = vrot.lane.b32.xlu0 %v4523, 96
  %v5126 = vpop.permute.xlu0 %5125
  %5127 = vrot.lane.b32.xlu0 %v4532, 96
  %v5128 = vpop.permute.xlu0 %5127
  %5129 = vrot.lane.b32.xlu0 %v4541, 96
  %v5130 = vpop.permute.xlu0 %5129
  %5131 = vrot.lane.b32.xlu0 %v4550, 96
  %v5132 = vpop.permute.xlu0 %5131
  %5133 = vrot.lane.b32.xlu0 %v4559, 96
  %v5134 = vpop.permute.xlu0 %5133
  %5135 = vrot.lane.b32.xlu0 %v4568, 96
  %v5136 = vpop.permute.xlu0 %5135
  %5137 = vrot.lane.b32.xlu0 %v4577, 96
  %v5138 = vpop.permute.xlu0 %5137
  %5139 = vrot.lane.b32.xlu0 %v4586, 96
  %v5140 = vpop.permute.xlu0 %5139
  %5141 = vrot.lane.b32.xlu0 %v4595, 96
  %v5142 = vpop.permute.xlu0 %5141
  %5143 = vrot.lane.b32.xlu0 %v4604, 96
  %v5144 = vpop.permute.xlu0 %5143
  %5145 = vrot.lane.b32.xlu0 %v4613, 96
  %v5146 = vpop.permute.xlu0 %5145
  %5147 = vrot.lane.b32.xlu0 %v4622, 96
  %v5148 = vpop.permute.xlu0 %5147
  %5149 = vrot.lane.b32.xlu0 %v4631, 96
  %v5150 = vpop.permute.xlu0 %5149
  %5151 = vrot.lane.b32.xlu0 %v4640, 96
  %v5152 = vpop.permute.xlu0 %5151
  %5153 = vrot.lane.b32.xlu0 %v4649, 96
  %v5154 = vpop.permute.xlu0 %5153
  %5155 = vrot.lane.b32.xlu0 %v4658, 96
  %v5156 = vpop.permute.xlu0 %5155
  %5157 = vrot.lane.b32.xlu0 %v4667, 96
  %v5158 = vpop.permute.xlu0 %5157
  %5159 = vrot.lane.b32.xlu0 %v4676, 96
  %v5160 = vpop.permute.xlu0 %5159
  %5161 = vrot.lane.b32.xlu0 %v4685, 96
  %v5162 = vpop.permute.xlu0 %5161
  %5163 = vrot.lane.b32.xlu0 %v4694, 96
  %v5164 = vpop.permute.xlu0 %5163
  %5165 = vrot.lane.b32.xlu0 %v4703, 96
  %v5166 = vpop.permute.xlu0 %5165
  %5167 = vrot.lane.b32.xlu0 %v4712, 96
  %v5168 = vpop.permute.xlu0 %5167
  %5169 = vrot.lane.b32.xlu0 %v4721, 96
  %v5170 = vpop.permute.xlu0 %5169
  %5171 = vrot.lane.b32.xlu0 %v4730, 96
  %v5172 = vpop.permute.xlu0 %5171
  %5173 = vrot.lane.b32.xlu0 %v4739, 96
  %v5174 = vpop.permute.xlu0 %5173
  %5175 = vrot.lane.b32.xlu0 %v4748, 96
  %v5176 = vpop.permute.xlu0 %5175
  %5177 = vrot.lane.b32.xlu0 %v4757, 96
  %v5178 = vpop.permute.xlu0 %5177
  %5179 = vrot.lane.b32.xlu0 %v4766, 96
  %v5180 = vpop.permute.xlu0 %5179
  %5181 = vrot.lane.b32.xlu0 %v4775, 96
  %v5182 = vpop.permute.xlu0 %5181
  %5183 = vrot.lane.b32.xlu0 %v4784, 96
  %v5184 = vpop.permute.xlu0 %5183
  %5185 = vrot.lane.b32.xlu0 %v4793, 96
  %v5186 = vpop.permute.xlu0 %5185
  %5187 = vrot.lane.b32.xlu0 %v4802, 96
  %v5188 = vpop.permute.xlu0 %5187
  %5189 = vrot.lane.b32.xlu0 %v4811, 96
  %v5190 = vpop.permute.xlu0 %5189
  %5191 = vrot.lane.b32.xlu0 %v4820, 96
  %v5192 = vpop.permute.xlu0 %5191
  %5193 = vrot.lane.b32.xlu0 %v4829, 96
  %v5194 = vpop.permute.xlu0 %5193
  %5195 = vrot.lane.b32.xlu0 %v4838, 96
  %v5196 = vpop.permute.xlu0 %5195
  %5197 = vrot.lane.b32.xlu0 %v4847, 96
  %v5198 = vpop.permute.xlu0 %5197
  %5199 = vrot.lane.b32.xlu0 %v4856, 96
  %v5200 = vpop.permute.xlu0 %5199
  %5201 = vrot.lane.b32.xlu0 %v4865, 96
  %v5202 = vpop.permute.xlu0 %5201
  %5203 = vrot.lane.b32.xlu0 %v4874, 96
  %v5204 = vpop.permute.xlu0 %5203
  %5205 = vrot.lane.b32.xlu0 %v4883, 96
  %v5206 = vpop.permute.xlu0 %5205
  %5207 = vrot.lane.b32.xlu0 %v4892, 96
  %v5208 = vpop.permute.xlu0 %5207
  %5209 = vrot.lane.b32.xlu0 %v4901, 96
  %v5210 = vpop.permute.xlu0 %5209
  %5211 = vrot.lane.b32.xlu0 %v4910, 96
  %v5212 = vpop.permute.xlu0 %5211
  %5213 = vrot.lane.b32.xlu0 %v4919, 96
  %v5214 = vpop.permute.xlu0 %5213
  %5215 = vrot.lane.b32.xlu0 %v4928, 96
  %v5216 = vpop.permute.xlu0 %5215
  %5217 = vrot.lane.b32.xlu0 %v4937, 96
  %v5218 = vpop.permute.xlu0 %5217
  %5219 = vrot.lane.b32.xlu0 %v4946, 96
  %v5220 = vpop.permute.xlu0 %5219
  %5221 = vrot.lane.b32.xlu0 %v4955, 96
  %v5222 = vpop.permute.xlu0 %5221
  %5223 = vrot.lane.b32.xlu0 %v4964, 96
  %v5224 = vpop.permute.xlu0 %5223
  %5225 = vrot.lane.b32.xlu0 %v4973, 96
  %v5226 = vpop.permute.xlu0 %5225
  %5227 = vrot.lane.b32.xlu0 %v4982, 96
  %v5228 = vpop.permute.xlu0 %5227
  %5229 = vrot.lane.b32.xlu0 %v4991, 96
  %v5230 = vpop.permute.xlu0 %5229
  %5231 = vrot.lane.b32.xlu0 %v5000, 96
  %v5232 = vpop.permute.xlu0 %5231
  %5233 = vrot.lane.b32.xlu0 %v5009, 96
  %v5234 = vpop.permute.xlu0 %5233
  %5235 = vrot.lane.b32.xlu0 %v5018, 96
  %v5236 = vpop.permute.xlu0 %5235
  %5237 = vrot.lane.b32.xlu0 %v5027, 96
  %v5238 = vpop.permute.xlu0 %5237
  %5239 = vrot.lane.b32.xlu0 %v5036, 96
  %v5240 = vpop.permute.xlu0 %5239
  %5241 = vrot.lane.b32.xlu0 %v5045, 96
  %v5242 = vpop.permute.xlu0 %5241
  %5243 = vrot.lane.b32.xlu0 %v5054, 96
  %v5244 = vpop.permute.xlu0 %5243
  %5245 = vrot.lane.b32.xlu0 %v5063, 96
  %v5246 = vpop.permute.xlu0 %5245
  %5247 = vrot.lane.b32.xlu0 %v5072, 96
  %v5248 = vpop.permute.xlu0 %5247
  %5249 = vrot.lane.b32.xlu0 %v5081, 96
  %v5250 = vpop.permute.xlu0 %5249
  %5251 = vrot.lane.b32.xlu0 %v5090, 96
  %v5252 = vpop.permute.xlu0 %5251
  %vm5334 = vcmask 1044224
  %5335 = vst.msk [vmem:[#allocation3] sm:$0xf] %vm5334, %v5092
  %5336 = vst.msk [vmem:[#allocation3 + $0xc] sm:$0xf] %vm5334, %v5094
  %5337 = vst.msk [vmem:[#allocation3 + $0x18] sm:$0xf] %vm5334, %v5096
  %5338 = vst.msk [vmem:[#allocation3 + $0x24] sm:$0xf] %vm5334, %v5098
  %5339 = vst.msk [vmem:[#allocation3 + $0x30] sm:$0xf] %vm5334, %v5100
  %5340 = vst.msk [vmem:[#allocation3 + $0x3c] sm:$0xf] %vm5334, %v5102
  %5341 = vst.msk [vmem:[#allocation3 + $0x48] sm:$0xf] %vm5334, %v5104
  %5342 = vst.msk [vmem:[#allocation3 + $0x54] sm:$0xf] %vm5334, %v5106
  %5343 = vst.msk [vmem:[#allocation3 + $0x60] sm:$0xf] %vm5334, %v5108
  %5344 = vst.msk [vmem:[#allocation3 + $0x6c] sm:$0xf] %vm5334, %v5110
  %5345 = vst.msk [vmem:[#allocation3 + $0x78] sm:$0xf] %vm5334, %v5112
  %5346 = vst.msk [vmem:[#allocation3 + $0x84] sm:$0xf] %vm5334, %v5114
  %5347 = vst.msk [vmem:[#allocation3 + $0x90] sm:$0xf] %vm5334, %v5116
  %5348 = vst.msk [vmem:[#allocation3 + $0x9c] sm:$0xf] %vm5334, %v5118
  %5349 = vst.msk [vmem:[#allocation3 + $0xa8] sm:$0xf] %vm5334, %v5120
  %5350 = vst.msk [vmem:[#allocation3 + $0xb4] sm:$0xf] %vm5334, %v5122
  %5351 = vst.msk [vmem:[#allocation3 + $0xc0] sm:$0xf] %vm5334, %v5124
  %5352 = vst.msk [vmem:[#allocation3 + $0xcc] sm:$0xf] %vm5334, %v5126
  %5353 = vst.msk [vmem:[#allocation3 + $0xd8] sm:$0xf] %vm5334, %v5128
  %5354 = vst.msk [vmem:[#allocation3 + $0xe4] sm:$0xf] %vm5334, %v5130
  %5355 = vst.msk [vmem:[#allocation3 + $0xf0] sm:$0xf] %vm5334, %v5132
  %5356 = vst.msk [vmem:[#allocation3 + $0xfc] sm:$0xf] %vm5334, %v5134
  %5357 = vst.msk [vmem:[#allocation3 + $0x108] sm:$0xf] %vm5334, %v5136
  %5358 = vst.msk [vmem:[#allocation3 + $0x114] sm:$0xf] %vm5334, %v5138
  %5359 = vst.msk [vmem:[#allocation3 + $0x120] sm:$0xf] %vm5334, %v5140
  %5360 = vst.msk [vmem:[#allocation3 + $0x12c] sm:$0xf] %vm5334, %v5142
  %5361 = vst.msk [vmem:[#allocation3 + $0x138] sm:$0xf] %vm5334, %v5144
  %5362 = vst.msk [vmem:[#allocation3 + $0x144] sm:$0xf] %vm5334, %v5146
  %5363 = vst.msk [vmem:[#allocation3 + $0x150] sm:$0xf] %vm5334, %v5148
  %5364 = vst.msk [vmem:[#allocation3 + $0x15c] sm:$0xf] %vm5334, %v5150
  %5365 = vst.msk [vmem:[#allocation3 + $0x168] sm:$0xf] %vm5334, %v5152
  %5366 = vst.msk [vmem:[#allocation3 + $0x174] sm:$0xf] %vm5334, %v5154
  %5367 = vst.msk [vmem:[#allocation3 + $0x180] sm:$0xf] %vm5334, %v5156
  %5368 = vst.msk [vmem:[#allocation3 + $0x18c] sm:$0xf] %vm5334, %v5158
  %5369 = vst.msk [vmem:[#allocation3 + $0x198] sm:$0xf] %vm5334, %v5160
  %5370 = vst.msk [vmem:[#allocation3 + $0x1a4] sm:$0xf] %vm5334, %v5162
  %5371 = vst.msk [vmem:[#allocation3 + $0x1b0] sm:$0xf] %vm5334, %v5164
  %5372 = vst.msk [vmem:[#allocation3 + $0x1bc] sm:$0xf] %vm5334, %v5166
  %5373 = vst.msk [vmem:[#allocation3 + $0x1c8] sm:$0xf] %vm5334, %v5168
  %5374 = vst.msk [vmem:[#allocation3 + $0x1d4] sm:$0xf] %vm5334, %v5170
  %5375 = vst.msk [vmem:[#allocation3 + $0x1e0] sm:$0xf] %vm5334, %v5172
  %5376 = vst.msk [vmem:[#allocation3 + $0x1ec] sm:$0xf] %vm5334, %v5174
  %5377 = vst.msk [vmem:[#allocation3 + $0x1f8] sm:$0xf] %vm5334, %v5176
  %5378 = vst.msk [vmem:[#allocation3 + $0x204] sm:$0xf] %vm5334, %v5178
  %5379 = vst.msk [vmem:[#allocation3 + $0x210] sm:$0xf] %vm5334, %v5180
  %5380 = vst.msk [vmem:[#allocation3 + $0x21c] sm:$0xf] %vm5334, %v5182
  %5381 = vst.msk [vmem:[#allocation3 + $0x228] sm:$0xf] %vm5334, %v5184
  %5382 = vst.msk [vmem:[#allocation3 + $0x234] sm:$0xf] %vm5334, %v5186
  %5383 = vst.msk [vmem:[#allocation3 + $0x240] sm:$0xf] %vm5334, %v5188
  %5384 = vst.msk [vmem:[#allocation3 + $0x24c] sm:$0xf] %vm5334, %v5190
  %5385 = vst.msk [vmem:[#allocation3 + $0x258] sm:$0xf] %vm5334, %v5192
  %5386 = vst.msk [vmem:[#allocation3 + $0x264] sm:$0xf] %vm5334, %v5194
  %5387 = vst.msk [vmem:[#allocation3 + $0x270] sm:$0xf] %vm5334, %v5196
  %5388 = vst.msk [vmem:[#allocation3 + $0x27c] sm:$0xf] %vm5334, %v5198
  %5389 = vst.msk [vmem:[#allocation3 + $0x288] sm:$0xf] %vm5334, %v5200
  %5390 = vst.msk [vmem:[#allocation3 + $0x294] sm:$0xf] %vm5334, %v5202
  %5391 = vst.msk [vmem:[#allocation3 + $0x2a0] sm:$0xf] %vm5334, %v5204
  %5392 = vst.msk [vmem:[#allocation3 + $0x2ac] sm:$0xf] %vm5334, %v5206
  %5393 = vst.msk [vmem:[#allocation3 + $0x2b8] sm:$0xf] %vm5334, %v5208
  %5394 = vst.msk [vmem:[#allocation3 + $0x2c4] sm:$0xf] %vm5334, %v5210
  %5395 = vst.msk [vmem:[#allocation3 + $0x2d0] sm:$0xf] %vm5334, %v5212
  %5396 = vst.msk [vmem:[#allocation3 + $0x2dc] sm:$0xf] %vm5334, %v5214
  %5397 = vst.msk [vmem:[#allocation3 + $0x2e8] sm:$0xf] %vm5334, %v5216
  %5398 = vst.msk [vmem:[#allocation3 + $0x2f4] sm:$0xf] %vm5334, %v5218
  %5399 = vst.msk [vmem:[#allocation3 + $0x300] sm:$0xf] %vm5334, %v5220
  %5400 = vst.msk [vmem:[#allocation3 + $0x30c] sm:$0xf] %vm5334, %v5222
  %5401 = vst.msk [vmem:[#allocation3 + $0x318] sm:$0xf] %vm5334, %v5224
  %5402 = vst.msk [vmem:[#allocation3 + $0x324] sm:$0xf] %vm5334, %v5226
  %5403 = vst.msk [vmem:[#allocation3 + $0x330] sm:$0xf] %vm5334, %v5228
  %5404 = vst.msk [vmem:[#allocation3 + $0x33c] sm:$0xf] %vm5334, %v5230
  %5405 = vst.msk [vmem:[#allocation3 + $0x348] sm:$0xf] %vm5334, %v5232
  %5406 = vst.msk [vmem:[#allocation3 + $0x354] sm:$0xf] %vm5334, %v5234
  %5407 = vst.msk [vmem:[#allocation3 + $0x360] sm:$0xf] %vm5334, %v5236
  %5408 = vst.msk [vmem:[#allocation3 + $0x36c] sm:$0xf] %vm5334, %v5238
  %5409 = vst.msk [vmem:[#allocation3 + $0x378] sm:$0xf] %vm5334, %v5240
  %5410 = vst.msk [vmem:[#allocation3 + $0x384] sm:$0xf] %vm5334, %v5242
  %5411 = vst.msk [vmem:[#allocation3 + $0x390] sm:$0xf] %vm5334, %v5244
  %5412 = vst.msk [vmem:[#allocation3 + $0x39c] sm:$0xf] %vm5334, %v5246
  %5413 = vst.msk [vmem:[#allocation3 + $0x3a8] sm:$0xf] %vm5334, %v5248
  %5414 = vst.msk [vmem:[#allocation3 + $0x3b4] sm:$0xf] %vm5334, %v5250
  %5415 = vst.msk [vmem:[#allocation3 + $0x3c0] sm:$0xf] %vm5334, %v5252
  %v5416 = vld [vmem:[#allocation2 + $0x10] sm:$0xf]
  %v5417 = vld [vmem:[#allocation2 + $0x14] sm:$0xf]
  %v5418 = vld [vmem:[#allocation2 + $0x18] sm:$0xf]
  %v5419 = vld [vmem:[#allocation2 + $0x1c] sm:$0xf]
  %v5420 = vld [vmem:[#allocation2 + $0x20] sm:$0xf]
  %v5421 = vld [vmem:[#allocation2 + $0x24] sm:$0xf]
  %v5422 = vld [vmem:[#allocation2 + $0x28] sm:$0xf]
  %v5423 = vld [vmem:[#allocation2 + $0x2c] sm:$0xf]
  %v5424 = vld [vmem:[#allocation2 + $0x30] sm:$0xf]
  %v5425 = vld [vmem:[#allocation2 + $0x34] sm:$0xf]
  %v5426 = vld [vmem:[#allocation2 + $0x38] sm:$0xf]
  %v5427 = vld [vmem:[#allocation2 + $0x3c] sm:$0xf]
  %v5428 = vld [vmem:[#allocation2 + $0x40] sm:$0xf]
  %v5429 = vld [vmem:[#allocation2 + $0x44] sm:$0xf]
  %v5430 = vld [vmem:[#allocation2 + $0x48] sm:$0xf]
  %v5431 = vld [vmem:[#allocation2 + $0x4c] sm:$0xf]
  %v5432 = vld [vmem:[#allocation2 + $0x50] sm:$0xf]
  %v5433 = vld [vmem:[#allocation2 + $0x54] sm:$0xf]
  %v5434 = vld [vmem:[#allocation2 + $0x58] sm:$0xf]
  %v5435 = vld [vmem:[#allocation2 + $0x5c] sm:$0xf]
  %v5436 = vld [vmem:[#allocation2 + $0x60] sm:$0xf]
  %v5437 = vld [vmem:[#allocation2 + $0x64] sm:$0xf]
  %v5438 = vld [vmem:[#allocation2 + $0x68] sm:$0xf]
  %v5439 = vld [vmem:[#allocation2 + $0x6c] sm:$0xf]
  %v5440 = vld [vmem:[#allocation2 + $0x70] sm:$0xf]
  %v5441 = vld [vmem:[#allocation2 + $0x74] sm:$0xf]
  %v5442 = vld [vmem:[#allocation2 + $0x78] sm:$0xf]
  %v5443 = vld [vmem:[#allocation2 + $0x7c] sm:$0xf]
  %v5444 = vld [vmem:[#allocation2 + $0x80] sm:$0xf]
  %v5445 = vld [vmem:[#allocation2 + $0x84] sm:$0xf]
  %v5446 = vld [vmem:[#allocation2 + $0x88] sm:$0xf]
  %v5447 = vld [vmem:[#allocation2 + $0x8c] sm:$0xf]
  %v5448 = vld [vmem:[#allocation2 + $0x90] sm:$0xf]
  %v5449 = vld [vmem:[#allocation2 + $0x94] sm:$0xf]
  %v5450 = vld [vmem:[#allocation2 + $0x98] sm:$0xf]
  %v5451 = vld [vmem:[#allocation2 + $0x9c] sm:$0xf]
  %v5452 = vld [vmem:[#allocation2 + $0xa0] sm:$0xf]
  %v5453 = vld [vmem:[#allocation2 + $0xa4] sm:$0xf]
  %v5454 = vld [vmem:[#allocation2 + $0xa8] sm:$0xf]
  %v5455 = vld [vmem:[#allocation2 + $0xac] sm:$0xf]
  %v5456 = vld [vmem:[#allocation2 + $0xb0] sm:$0xf]
  %v5457 = vld [vmem:[#allocation2 + $0xb4] sm:$0xf]
  %v5458 = vld [vmem:[#allocation2 + $0xb8] sm:$0xf]
  %v5459 = vld [vmem:[#allocation2 + $0xbc] sm:$0xf]
  %v5460 = vld [vmem:[#allocation2 + $0xc0] sm:$0xf]
  %v5461 = vld [vmem:[#allocation2 + $0xc4] sm:$0xf]
  %v5462 = vld [vmem:[#allocation2 + $0xc8] sm:$0xf]
  %v5463 = vld [vmem:[#allocation2 + $0xcc] sm:$0xf]
  %v5464 = vld [vmem:[#allocation2 + $0xd0] sm:$0xf]
  %v5465 = vld [vmem:[#allocation2 + $0xd4] sm:$0xf]
  %v5466 = vld [vmem:[#allocation2 + $0xd8] sm:$0xf]
  %v5467 = vld [vmem:[#allocation2 + $0xdc] sm:$0xf]
  %v5468 = vld [vmem:[#allocation2 + $0xe0] sm:$0xf]
  %v5469 = vld [vmem:[#allocation2 + $0xe4] sm:$0xf]
  %v5470 = vld [vmem:[#allocation2 + $0xe8] sm:$0xf]
  %v5471 = vld [vmem:[#allocation2 + $0xec] sm:$0xf]
  %v5472 = vld [vmem:[#allocation2 + $0xf0] sm:$0xf]
  %v5473 = vld [vmem:[#allocation2 + $0xf4] sm:$0xf]
  %v5474 = vld [vmem:[#allocation2 + $0xf8] sm:$0xf]
  %v5475 = vld [vmem:[#allocation2 + $0xfc] sm:$0xf]
  %v5476 = vld [vmem:[#allocation2 + $0x100] sm:$0xf]
  %v5477 = vld [vmem:[#allocation2 + $0x104] sm:$0xf]
  %v5478 = vld [vmem:[#allocation2 + $0x108] sm:$0xf]
  %v5479 = vld [vmem:[#allocation2 + $0x10c] sm:$0xf]
  %v5480 = vld [vmem:[#allocation2 + $0x110] sm:$0xf]
  %v5481 = vld [vmem:[#allocation2 + $0x114] sm:$0xf]
  %v5482 = vld [vmem:[#allocation2 + $0x118] sm:$0xf]
  %v5483 = vld [vmem:[#allocation2 + $0x11c] sm:$0xf]
  %v5484 = vld [vmem:[#allocation2 + $0x120] sm:$0xf]
  %v5485 = vld [vmem:[#allocation2 + $0x124] sm:$0xf]
  %v5486 = vld [vmem:[#allocation2 + $0x128] sm:$0xf]
  %v5487 = vld [vmem:[#allocation2 + $0x12c] sm:$0xf]
  %v5488 = vld [vmem:[#allocation2 + $0x130] sm:$0xf]
  %v5489 = vld [vmem:[#allocation2 + $0x134] sm:$0xf]
  %v5490 = vld [vmem:[#allocation2 + $0x138] sm:$0xf]
  %v5491 = vld [vmem:[#allocation2 + $0x13c] sm:$0xf]
  %v5492 = vld [vmem:[#allocation2 + $0x140] sm:$0xf]
  %v5493 = vld [vmem:[#allocation2 + $0x144] sm:$0xf]
  %v5494 = vld [vmem:[#allocation2 + $0x148] sm:$0xf]
  %v5495 = vld [vmem:[#allocation2 + $0x14c] sm:$0xf]
  %v5496 = vld [vmem:[#allocation2 + $0x150] sm:$0xf]
  %5497 = vst.msk [vmem:[#allocation3 + $0x4] sm:$0xf] %vm917, %v5416
  %5498 = vst.msk [vmem:[#allocation3 + $0x10] sm:$0xf] %vm917, %v5417
  %5499 = vst.msk [vmem:[#allocation3 + $0x1c] sm:$0xf] %vm917, %v5418
  %5500 = vst.msk [vmem:[#allocation3 + $0x28] sm:$0xf] %vm917, %v5419
  %5501 = vst.msk [vmem:[#allocation3 + $0x34] sm:$0xf] %vm917, %v5420
  %5502 = vst.msk [vmem:[#allocation3 + $0x40] sm:$0xf] %vm917, %v5421
  %5503 = vst.msk [vmem:[#allocation3 + $0x4c] sm:$0xf] %vm917, %v5422
  %5504 = vst.msk [vmem:[#allocation3 + $0x58] sm:$0xf] %vm917, %v5423
  %5505 = vst.msk [vmem:[#allocation3 + $0x64] sm:$0xf] %vm917, %v5424
  %5506 = vst.msk [vmem:[#allocation3 + $0x70] sm:$0xf] %vm917, %v5425
  %5507 = vst.msk [vmem:[#allocation3 + $0x7c] sm:$0xf] %vm917, %v5426
  %5508 = vst.msk [vmem:[#allocation3 + $0x88] sm:$0xf] %vm917, %v5427
  %5509 = vst.msk [vmem:[#allocation3 + $0x94] sm:$0xf] %vm917, %v5428
  %5510 = vst.msk [vmem:[#allocation3 + $0xa0] sm:$0xf] %vm917, %v5429
  %5511 = vst.msk [vmem:[#allocation3 + $0xac] sm:$0xf] %vm917, %v5430
  %5512 = vst.msk [vmem:[#allocation3 + $0xb8] sm:$0xf] %vm917, %v5431
  %5513 = vst.msk [vmem:[#allocation3 + $0xc4] sm:$0xf] %vm917, %v5432
  %5514 = vst.msk [vmem:[#allocation3 + $0xd0] sm:$0xf] %vm917, %v5433
  %5515 = vst.msk [vmem:[#allocation3 + $0xdc] sm:$0xf] %vm917, %v5434
  %5516 = vst.msk [vmem:[#allocation3 + $0xe8] sm:$0xf] %vm917, %v5435
  %5517 = vst.msk [vmem:[#allocation3 + $0xf4] sm:$0xf] %vm917, %v5436
  %5518 = vst.msk [vmem:[#allocation3 + $0x100] sm:$0xf] %vm917, %v5437
  %5519 = vst.msk [vmem:[#allocation3 + $0x10c] sm:$0xf] %vm917, %v5438
  %5520 = vst.msk [vmem:[#allocation3 + $0x118] sm:$0xf] %vm917, %v5439
  %5521 = vst.msk [vmem:[#allocation3 + $0x124] sm:$0xf] %vm917, %v5440
  %5522 = vst.msk [vmem:[#allocation3 + $0x130] sm:$0xf] %vm917, %v5441
  %5523 = vst.msk [vmem:[#allocation3 + $0x13c] sm:$0xf] %vm917, %v5442
  %5524 = vst.msk [vmem:[#allocation3 + $0x148] sm:$0xf] %vm917, %v5443
  %5525 = vst.msk [vmem:[#allocation3 + $0x154] sm:$0xf] %vm917, %v5444
  %5526 = vst.msk [vmem:[#allocation3 + $0x160] sm:$0xf] %vm917, %v5445
  %5527 = vst.msk [vmem:[#allocation3 + $0x16c] sm:$0xf] %vm917, %v5446
  %5528 = vst.msk [vmem:[#allocation3 + $0x178] sm:$0xf] %vm917, %v5447
  %5529 = vst.msk [vmem:[#allocation3 + $0x184] sm:$0xf] %vm917, %v5448
  %5530 = vst.msk [vmem:[#allocation3 + $0x190] sm:$0xf] %vm917, %v5449
  %5531 = vst.msk [vmem:[#allocation3 + $0x19c] sm:$0xf] %vm917, %v5450
  %5532 = vst.msk [vmem:[#allocation3 + $0x1a8] sm:$0xf] %vm917, %v5451
  %5533 = vst.msk [vmem:[#allocation3 + $0x1b4] sm:$0xf] %vm917, %v5452
  %5534 = vst.msk [vmem:[#allocation3 + $0x1c0] sm:$0xf] %vm917, %v5453
  %5535 = vst.msk [vmem:[#allocation3 + $0x1cc] sm:$0xf] %vm917, %v5454
  %5536 = vst.msk [vmem:[#allocation3 + $0x1d8] sm:$0xf] %vm917, %v5455
  %5537 = vst.msk [vmem:[#allocation3 + $0x1e4] sm:$0xf] %vm917, %v5456
  %5538 = vst.msk [vmem:[#allocation3 + $0x1f0] sm:$0xf] %vm917, %v5457
  %5539 = vst.msk [vmem:[#allocation3 + $0x1fc] sm:$0xf] %vm917, %v5458
  %5540 = vst.msk [vmem:[#allocation3 + $0x208] sm:$0xf] %vm917, %v5459
  %5541 = vst.msk [vmem:[#allocation3 + $0x214] sm:$0xf] %vm917, %v5460
  %5542 = vst.msk [vmem:[#allocation3 + $0x220] sm:$0xf] %vm917, %v5461
  %5543 = vst.msk [vmem:[#allocation3 + $0x22c] sm:$0xf] %vm917, %v5462
  %5544 = vst.msk [vmem:[#allocation3 + $0x238] sm:$0xf] %vm917, %v5463
  %5545 = vst.msk [vmem:[#allocation3 + $0x244] sm:$0xf] %vm917, %v5464
  %5546 = vst.msk [vmem:[#allocation3 + $0x250] sm:$0xf] %vm917, %v5465
  %5547 = vst.msk [vmem:[#allocation3 + $0x25c] sm:$0xf] %vm917, %v5466
  %5548 = vst.msk [vmem:[#allocation3 + $0x268] sm:$0xf] %vm917, %v5467
  %5549 = vst.msk [vmem:[#allocation3 + $0x274] sm:$0xf] %vm917, %v5468
  %5550 = vst.msk [vmem:[#allocation3 + $0x280] sm:$0xf] %vm917, %v5469
  %5551 = vst.msk [vmem:[#allocation3 + $0x28c] sm:$0xf] %vm917, %v5470
  %5552 = vst.msk [vmem:[#allocation3 + $0x298] sm:$0xf] %vm917, %v5471
  %5553 = vst.msk [vmem:[#allocation3 + $0x2a4] sm:$0xf] %vm917, %v5472
  %5554 = vst.msk [vmem:[#allocation3 + $0x2b0] sm:$0xf] %vm917, %v5473
  %5555 = vst.msk [vmem:[#allocation3 + $0x2bc] sm:$0xf] %vm917, %v5474
  %5556 = vst.msk [vmem:[#allocation3 + $0x2c8] sm:$0xf] %vm917, %v5475
  %5557 = vst.msk [vmem:[#allocation3 + $0x2d4] sm:$0xf] %vm917, %v5476
  %5558 = vst.msk [vmem:[#allocation3 + $0x2e0] sm:$0xf] %vm917, %v5477
  %5559 = vst.msk [vmem:[#allocation3 + $0x2ec] sm:$0xf] %vm917, %v5478
  %5560 = vst.msk [vmem:[#allocation3 + $0x2f8] sm:$0xf] %vm917, %v5479
  %5561 = vst.msk [vmem:[#allocation3 + $0x304] sm:$0xf] %vm917, %v5480
  %5562 = vst.msk [vmem:[#allocation3 + $0x310] sm:$0xf] %vm917, %v5481
  %5563 = vst.msk [vmem:[#allocation3 + $0x31c] sm:$0xf] %vm917, %v5482
  %5564 = vst.msk [vmem:[#allocation3 + $0x328] sm:$0xf] %vm917, %v5483
  %5565 = vst.msk [vmem:[#allocation3 + $0x334] sm:$0xf] %vm917, %v5484
  %5566 = vst.msk [vmem:[#allocation3 + $0x340] sm:$0xf] %vm917, %v5485
  %5567 = vst.msk [vmem:[#allocation3 + $0x34c] sm:$0xf] %vm917, %v5486
  %5568 = vst.msk [vmem:[#allocation3 + $0x358] sm:$0xf] %vm917, %v5487
  %5569 = vst.msk [vmem:[#allocation3 + $0x364] sm:$0xf] %vm917, %v5488
  %5570 = vst.msk [vmem:[#allocation3 + $0x370] sm:$0xf] %vm917, %v5489
  %5571 = vst.msk [vmem:[#allocation3 + $0x37c] sm:$0xf] %vm917, %v5490
  %5572 = vst.msk [vmem:[#allocation3 + $0x388] sm:$0xf] %vm917, %v5491
  %5573 = vst.msk [vmem:[#allocation3 + $0x394] sm:$0xf] %vm917, %v5492
  %5574 = vst.msk [vmem:[#allocation3 + $0x3a0] sm:$0xf] %vm917, %v5493
  %5575 = vst.msk [vmem:[#allocation3 + $0x3ac] sm:$0xf] %vm917, %v5494
  %5576 = vst.msk [vmem:[#allocation3 + $0x3b8] sm:$0xf] %vm917, %v5495
  %5577 = vst.msk [vmem:[#allocation3 + $0x3c4] sm:$0xf] %vm917, %v5496
  %v5578 = vld [vmem:[#allocation2 + $0x10] sm:$0xf]
  %v5579 = vld [vmem:[#allocation2 + $0x14] sm:$0xf]
  %v5580 = vld [vmem:[#allocation2 + $0x18] sm:$0xf]
  %v5581 = vld [vmem:[#allocation2 + $0x1c] sm:$0xf]
  %v5582 = vld [vmem:[#allocation2 + $0x20] sm:$0xf]
  %v5583 = vld [vmem:[#allocation2 + $0x24] sm:$0xf]
  %v5584 = vld [vmem:[#allocation2 + $0x28] sm:$0xf]
  %v5585 = vld [vmem:[#allocation2 + $0x2c] sm:$0xf]
  %v5586 = vld [vmem:[#allocation2 + $0x30] sm:$0xf]
  %v5587 = vld [vmem:[#allocation2 + $0x34] sm:$0xf]
  %v5588 = vld [vmem:[#allocation2 + $0x38] sm:$0xf]
  %v5589 = vld [vmem:[#allocation2 + $0x3c] sm:$0xf]
  %v5590 = vld [vmem:[#allocation2 + $0x40] sm:$0xf]
  %v5591 = vld [vmem:[#allocation2 + $0x44] sm:$0xf]
  %v5592 = vld [vmem:[#allocation2 + $0x48] sm:$0xf]
  %v5593 = vld [vmem:[#allocation2 + $0x4c] sm:$0xf]
  %v5594 = vld [vmem:[#allocation2 + $0x50] sm:$0xf]
  %v5595 = vld [vmem:[#allocation2 + $0x54] sm:$0xf]
  %v5596 = vld [vmem:[#allocation2 + $0x58] sm:$0xf]
  %v5597 = vld [vmem:[#allocation2 + $0x5c] sm:$0xf]
  %v5598 = vld [vmem:[#allocation2 + $0x60] sm:$0xf]
  %v5599 = vld [vmem:[#allocation2 + $0x64] sm:$0xf]
  %v5600 = vld [vmem:[#allocation2 + $0x68] sm:$0xf]
  %v5601 = vld [vmem:[#allocation2 + $0x6c] sm:$0xf]
  %v5602 = vld [vmem:[#allocation2 + $0x70] sm:$0xf]
  %v5603 = vld [vmem:[#allocation2 + $0x74] sm:$0xf]
  %v5604 = vld [vmem:[#allocation2 + $0x78] sm:$0xf]
  %v5605 = vld [vmem:[#allocation2 + $0x7c] sm:$0xf]
  %v5606 = vld [vmem:[#allocation2 + $0x80] sm:$0xf]
  %v5607 = vld [vmem:[#allocation2 + $0x84] sm:$0xf]
  %v5608 = vld [vmem:[#allocation2 + $0x88] sm:$0xf]
  %v5609 = vld [vmem:[#allocation2 + $0x8c] sm:$0xf]
  %v5610 = vld [vmem:[#allocation2 + $0x90] sm:$0xf]
  %v5611 = vld [vmem:[#allocation2 + $0x94] sm:$0xf]
  %v5612 = vld [vmem:[#allocation2 + $0x98] sm:$0xf]
  %v5613 = vld [vmem:[#allocation2 + $0x9c] sm:$0xf]
  %v5614 = vld [vmem:[#allocation2 + $0xa0] sm:$0xf]
  %v5615 = vld [vmem:[#allocation2 + $0xa4] sm:$0xf]
  %v5616 = vld [vmem:[#allocation2 + $0xa8] sm:$0xf]
  %v5617 = vld [vmem:[#allocation2 + $0xac] sm:$0xf]
  %v5618 = vld [vmem:[#allocation2 + $0xb0] sm:$0xf]
  %v5619 = vld [vmem:[#allocation2 + $0xb4] sm:$0xf]
  %v5620 = vld [vmem:[#allocation2 + $0xb8] sm:$0xf]
  %v5621 = vld [vmem:[#allocation2 + $0xbc] sm:$0xf]
  %v5622 = vld [vmem:[#allocation2 + $0xc0] sm:$0xf]
  %v5623 = vld [vmem:[#allocation2 + $0xc4] sm:$0xf]
  %v5624 = vld [vmem:[#allocation2 + $0xc8] sm:$0xf]
  %v5625 = vld [vmem:[#allocation2 + $0xcc] sm:$0xf]
  %v5626 = vld [vmem:[#allocation2 + $0xd0] sm:$0xf]
  %v5627 = vld [vmem:[#allocation2 + $0xd4] sm:$0xf]
  %v5628 = vld [vmem:[#allocation2 + $0xd8] sm:$0xf]
  %v5629 = vld [vmem:[#allocation2 + $0xdc] sm:$0xf]
  %v5630 = vld [vmem:[#allocation2 + $0xe0] sm:$0xf]
  %v5631 = vld [vmem:[#allocation2 + $0xe4] sm:$0xf]
  %v5632 = vld [vmem:[#allocation2 + $0xe8] sm:$0xf]
  %v5633 = vld [vmem:[#allocation2 + $0xec] sm:$0xf]
  %v5634 = vld [vmem:[#allocation2 + $0xf0] sm:$0xf]
  %v5635 = vld [vmem:[#allocation2 + $0xf4] sm:$0xf]
  %v5636 = vld [vmem:[#allocation2 + $0xf8] sm:$0xf]
  %v5637 = vld [vmem:[#allocation2 + $0xfc] sm:$0xf]
  %v5638 = vld [vmem:[#allocation2 + $0x100] sm:$0xf]
  %v5639 = vld [vmem:[#allocation2 + $0x104] sm:$0xf]
  %v5640 = vld [vmem:[#allocation2 + $0x108] sm:$0xf]
  %v5641 = vld [vmem:[#allocation2 + $0x10c] sm:$0xf]
  %v5642 = vld [vmem:[#allocation2 + $0x110] sm:$0xf]
  %v5643 = vld [vmem:[#allocation2 + $0x114] sm:$0xf]
  %v5644 = vld [vmem:[#allocation2 + $0x118] sm:$0xf]
  %v5645 = vld [vmem:[#allocation2 + $0x11c] sm:$0xf]
  %v5646 = vld [vmem:[#allocation2 + $0x120] sm:$0xf]
  %v5647 = vld [vmem:[#allocation2 + $0x124] sm:$0xf]
  %v5648 = vld [vmem:[#allocation2 + $0x128] sm:$0xf]
  %v5649 = vld [vmem:[#allocation2 + $0x12c] sm:$0xf]
  %v5650 = vld [vmem:[#allocation2 + $0x130] sm:$0xf]
  %v5651 = vld [vmem:[#allocation2 + $0x134] sm:$0xf]
  %v5652 = vld [vmem:[#allocation2 + $0x138] sm:$0xf]
  %v5653 = vld [vmem:[#allocation2 + $0x13c] sm:$0xf]
  %v5654 = vld [vmem:[#allocation2 + $0x140] sm:$0xf]
  %v5655 = vld [vmem:[#allocation2 + $0x144] sm:$0xf]
  %v5656 = vld [vmem:[#allocation2 + $0x148] sm:$0xf]
  %v5657 = vld [vmem:[#allocation2 + $0x14c] sm:$0xf]
  %v5658 = vld [vmem:[#allocation2 + $0x150] sm:$0xf]
  %v5659 = vld [vmem:[#allocation2 + $0x154] sm:$0x1]
  %vm5660 = vsmask.f32 3328
  %vm5661 = vsmask.f32 7440
  %vm5662 = vmor %vm5660, %vm5661
  %v5664 = vshrl.u32 %v5578, 16
  %v5666 = vrot.slane %v5664, 4
  %v5667 = vshll.u32 %v5578, 16
  %v5669 = vrot.slane %v5667, 5
  %v5670 = vor.u32 %v5666, %v5669
  %v5671 = vrot.slane %v5670, 4
  %v5673 = vshll.u32 %v5579, 16
  %v5675 = vrot.slane %v5673, 5
  %v5676 = vsel %vm5662, %v5671, %v5675
  %v5677 = vshrl.u32 %v5579, 16
  %v5679 = vrot.slane %v5677, 4
  %v5680 = vor.u32 %v5679, %v5675
  %v5681 = vrot.slane %v5680, 4
  %v5683 = vshll.u32 %v5580, 16
  %v5685 = vrot.slane %v5683, 5
  %v5686 = vsel %vm5662, %v5681, %v5685
  %v5687 = vshrl.u32 %v5580, 16
  %v5689 = vrot.slane %v5687, 4
  %v5690 = vor.u32 %v5689, %v5685
  %v5691 = vrot.slane %v5690, 4
  %v5693 = vshll.u32 %v5581, 16
  %v5695 = vrot.slane %v5693, 5
  %v5696 = vsel %vm5662, %v5691, %v5695
  %v5697 = vshrl.u32 %v5581, 16
  %v5699 = vrot.slane %v5697, 4
  %v5700 = vor.u32 %v5699, %v5695
  %v5701 = vrot.slane %v5700, 4
  %v5703 = vshll.u32 %v5582, 16
  %v5705 = vrot.slane %v5703, 5
  %v5706 = vsel %vm5662, %v5701, %v5705
  %v5707 = vshrl.u32 %v5582, 16
  %v5709 = vrot.slane %v5707, 4
  %v5710 = vor.u32 %v5709, %v5705
  %v5711 = vrot.slane %v5710, 4
  %v5713 = vshll.u32 %v5583, 16
  %v5715 = vrot.slane %v5713, 5
  %v5716 = vsel %vm5662, %v5711, %v5715
  %v5717 = vshrl.u32 %v5583, 16
  %v5719 = vrot.slane %v5717, 4
  %v5720 = vor.u32 %v5719, %v5715
  %v5721 = vrot.slane %v5720, 4
  %v5723 = vshll.u32 %v5584, 16
  %v5725 = vrot.slane %v5723, 5
  %v5726 = vsel %vm5662, %v5721, %v5725
  %v5727 = vshrl.u32 %v5584, 16
  %v5729 = vrot.slane %v5727, 4
  %v5730 = vor.u32 %v5729, %v5725
  %v5731 = vrot.slane %v5730, 4
  %v5733 = vshll.u32 %v5585, 16
  %v5735 = vrot.slane %v5733, 5
  %v5736 = vsel %vm5662, %v5731, %v5735
  %v5737 = vshrl.u32 %v5585, 16
  %v5739 = vrot.slane %v5737, 4
  %v5740 = vor.u32 %v5739, %v5735
  %v5741 = vrot.slane %v5740, 4
  %v5743 = vshll.u32 %v5586, 16
  %v5745 = vrot.slane %v5743, 5
  %v5746 = vsel %vm5662, %v5741, %v5745
  %v5747 = vshrl.u32 %v5586, 16
  %v5749 = vrot.slane %v5747, 4
  %v5750 = vor.u32 %v5749, %v5745
  %v5751 = vrot.slane %v5750, 4
  %v5753 = vshll.u32 %v5587, 16
  %v5755 = vrot.slane %v5753, 5
  %v5756 = vsel %vm5662, %v5751, %v5755
  %v5757 = vshrl.u32 %v5587, 16
  %v5759 = vrot.slane %v5757, 4
  %v5760 = vor.u32 %v5759, %v5755
  %v5761 = vrot.slane %v5760, 4
  %v5763 = vshll.u32 %v5588, 16
  %v5765 = vrot.slane %v5763, 5
  %v5766 = vsel %vm5662, %v5761, %v5765
  %v5767 = vshrl.u32 %v5588, 16
  %v5769 = vrot.slane %v5767, 4
  %v5770 = vor.u32 %v5769, %v5765
  %v5771 = vrot.slane %v5770, 4
  %v5773 = vshll.u32 %v5589, 16
  %v5775 = vrot.slane %v5773, 5
  %v5776 = vsel %vm5662, %v5771, %v5775
  %v5777 = vshrl.u32 %v5589, 16
  %v5779 = vrot.slane %v5777, 4
  %v5780 = vor.u32 %v5779, %v5775
  %v5781 = vrot.slane %v5780, 4
  %v5783 = vshll.u32 %v5590, 16
  %v5785 = vrot.slane %v5783, 5
  %v5786 = vsel %vm5662, %v5781, %v5785
  %v5787 = vshrl.u32 %v5590, 16
  %v5789 = vrot.slane %v5787, 4
  %v5790 = vor.u32 %v5789, %v5785
  %v5791 = vrot.slane %v5790, 4
  %v5793 = vshll.u32 %v5591, 16
  %v5795 = vrot.slane %v5793, 5
  %v5796 = vsel %vm5662, %v5791, %v5795
  %v5797 = vshrl.u32 %v5591, 16
  %v5799 = vrot.slane %v5797, 4
  %v5800 = vor.u32 %v5799, %v5795
  %v5801 = vrot.slane %v5800, 4
  %v5803 = vshll.u32 %v5592, 16
  %v5805 = vrot.slane %v5803, 5
  %v5806 = vsel %vm5662, %v5801, %v5805
  %v5807 = vshrl.u32 %v5592, 16
  %v5809 = vrot.slane %v5807, 4
  %v5810 = vor.u32 %v5809, %v5805
  %v5811 = vrot.slane %v5810, 4
  %v5813 = vshll.u32 %v5593, 16
  %v5815 = vrot.slane %v5813, 5
  %v5816 = vsel %vm5662, %v5811, %v5815
  %v5817 = vshrl.u32 %v5593, 16
  %v5819 = vrot.slane %v5817, 4
  %v5820 = vor.u32 %v5819, %v5815
  %v5821 = vrot.slane %v5820, 4
  %v5823 = vshll.u32 %v5594, 16
  %v5825 = vrot.slane %v5823, 5
  %v5826 = vsel %vm5662, %v5821, %v5825
  %v5827 = vshrl.u32 %v5594, 16
  %v5829 = vrot.slane %v5827, 4
  %v5830 = vor.u32 %v5829, %v5825
  %v5831 = vrot.slane %v5830, 4
  %v5833 = vshll.u32 %v5595, 16
  %v5835 = vrot.slane %v5833, 5
  %v5836 = vsel %vm5662, %v5831, %v5835
  %v5837 = vshrl.u32 %v5595, 16
  %v5839 = vrot.slane %v5837, 4
  %v5840 = vor.u32 %v5839, %v5835
  %v5841 = vrot.slane %v5840, 4
  %v5843 = vshll.u32 %v5596, 16
  %v5845 = vrot.slane %v5843, 5
  %v5846 = vsel %vm5662, %v5841, %v5845
  %v5847 = vshrl.u32 %v5596, 16
  %v5849 = vrot.slane %v5847, 4
  %v5850 = vor.u32 %v5849, %v5845
  %v5851 = vrot.slane %v5850, 4
  %v5853 = vshll.u32 %v5597, 16
  %v5855 = vrot.slane %v5853, 5
  %v5856 = vsel %vm5662, %v5851, %v5855
  %v5857 = vshrl.u32 %v5597, 16
  %v5859 = vrot.slane %v5857, 4
  %v5860 = vor.u32 %v5859, %v5855
  %v5861 = vrot.slane %v5860, 4
  %v5863 = vshll.u32 %v5598, 16
  %v5865 = vrot.slane %v5863, 5
  %v5866 = vsel %vm5662, %v5861, %v5865
  %v5867 = vshrl.u32 %v5598, 16
  %v5869 = vrot.slane %v5867, 4
  %v5870 = vor.u32 %v5869, %v5865
  %v5871 = vrot.slane %v5870, 4
  %v5873 = vshll.u32 %v5599, 16
  %v5875 = vrot.slane %v5873, 5
  %v5876 = vsel %vm5662, %v5871, %v5875
  %v5877 = vshrl.u32 %v5599, 16
  %v5879 = vrot.slane %v5877, 4
  %v5880 = vor.u32 %v5879, %v5875
  %v5881 = vrot.slane %v5880, 4
  %v5883 = vshll.u32 %v5600, 16
  %v5885 = vrot.slane %v5883, 5
  %v5886 = vsel %vm5662, %v5881, %v5885
  %v5887 = vshrl.u32 %v5600, 16
  %v5889 = vrot.slane %v5887, 4
  %v5890 = vor.u32 %v5889, %v5885
  %v5891 = vrot.slane %v5890, 4
  %v5893 = vshll.u32 %v5601, 16
  %v5895 = vrot.slane %v5893, 5
  %v5896 = vsel %vm5662, %v5891, %v5895
  %v5897 = vshrl.u32 %v5601, 16
  %v5899 = vrot.slane %v5897, 4
  %v5900 = vor.u32 %v5899, %v5895
  %v5901 = vrot.slane %v5900, 4
  %v5903 = vshll.u32 %v5602, 16
  %v5905 = vrot.slane %v5903, 5
  %v5906 = vsel %vm5662, %v5901, %v5905
  %v5907 = vshrl.u32 %v5602, 16
  %v5909 = vrot.slane %v5907, 4
  %v5910 = vor.u32 %v5909, %v5905
  %v5911 = vrot.slane %v5910, 4
  %v5913 = vshll.u32 %v5603, 16
  %v5915 = vrot.slane %v5913, 5
  %v5916 = vsel %vm5662, %v5911, %v5915
  %v5917 = vshrl.u32 %v5603, 16
  %v5919 = vrot.slane %v5917, 4
  %v5920 = vor.u32 %v5919, %v5915
  %v5921 = vrot.slane %v5920, 4
  %v5923 = vshll.u32 %v5604, 16
  %v5925 = vrot.slane %v5923, 5
  %v5926 = vsel %vm5662, %v5921, %v5925
  %v5927 = vshrl.u32 %v5604, 16
  %v5929 = vrot.slane %v5927, 4
  %v5930 = vor.u32 %v5929, %v5925
  %v5931 = vrot.slane %v5930, 4
  %v5933 = vshll.u32 %v5605, 16
  %v5935 = vrot.slane %v5933, 5
  %v5936 = vsel %vm5662, %v5931, %v5935
  %v5937 = vshrl.u32 %v5605, 16
  %v5939 = vrot.slane %v5937, 4
  %v5940 = vor.u32 %v5939, %v5935
  %v5941 = vrot.slane %v5940, 4
  %v5943 = vshll.u32 %v5606, 16
  %v5945 = vrot.slane %v5943, 5
  %v5946 = vsel %vm5662, %v5941, %v5945
  %v5947 = vshrl.u32 %v5606, 16
  %v5949 = vrot.slane %v5947, 4
  %v5950 = vor.u32 %v5949, %v5945
  %v5951 = vrot.slane %v5950, 4
  %v5953 = vshll.u32 %v5607, 16
  %v5955 = vrot.slane %v5953, 5
  %v5956 = vsel %vm5662, %v5951, %v5955
  %v5957 = vshrl.u32 %v5607, 16
  %v5959 = vrot.slane %v5957, 4
  %v5960 = vor.u32 %v5959, %v5955
  %v5961 = vrot.slane %v5960, 4
  %v5963 = vshll.u32 %v5608, 16
  %v5965 = vrot.slane %v5963, 5
  %v5966 = vsel %vm5662, %v5961, %v5965
  %v5967 = vshrl.u32 %v5608, 16
  %v5969 = vrot.slane %v5967, 4
  %v5970 = vor.u32 %v5969, %v5965
  %v5971 = vrot.slane %v5970, 4
  %v5973 = vshll.u32 %v5609, 16
  %v5975 = vrot.slane %v5973, 5
  %v5976 = vsel %vm5662, %v5971, %v5975
  %v5977 = vshrl.u32 %v5609, 16
  %v5979 = vrot.slane %v5977, 4
  %v5980 = vor.u32 %v5979, %v5975
  %v5981 = vrot.slane %v5980, 4
  %v5983 = vshll.u32 %v5610, 16
  %v5985 = vrot.slane %v5983, 5
  %v5986 = vsel %vm5662, %v5981, %v5985
  %v5987 = vshrl.u32 %v5610, 16
  %v5989 = vrot.slane %v5987, 4
  %v5990 = vor.u32 %v5989, %v5985
  %v5991 = vrot.slane %v5990, 4
  %v5993 = vshll.u32 %v5611, 16
  %v5995 = vrot.slane %v5993, 5
  %v5996 = vsel %vm5662, %v5991, %v5995
  %v5997 = vshrl.u32 %v5611, 16
  %v5999 = vrot.slane %v5997, 4
  %v6000 = vor.u32 %v5999, %v5995
  %v6001 = vrot.slane %v6000, 4
  %v6003 = vshll.u32 %v5612, 16
  %v6005 = vrot.slane %v6003, 5
  %v6006 = vsel %vm5662, %v6001, %v6005
  %v6007 = vshrl.u32 %v5612, 16
  %v6009 = vrot.slane %v6007, 4
  %v6010 = vor.u32 %v6009, %v6005
  %v6011 = vrot.slane %v6010, 4
  %v6013 = vshll.u32 %v5613, 16
  %v6015 = vrot.slane %v6013, 5
  %v6016 = vsel %vm5662, %v6011, %v6015
  %v6017 = vshrl.u32 %v5613, 16
  %v6019 = vrot.slane %v6017, 4
  %v6020 = vor.u32 %v6019, %v6015
  %v6021 = vrot.slane %v6020, 4
  %v6023 = vshll.u32 %v5614, 16
  %v6025 = vrot.slane %v6023, 5
  %v6026 = vsel %vm5662, %v6021, %v6025
  %v6027 = vshrl.u32 %v5614, 16
  %v6029 = vrot.slane %v6027, 4
  %v6030 = vor.u32 %v6029, %v6025
  %v6031 = vrot.slane %v6030, 4
  %v6033 = vshll.u32 %v5615, 16
  %v6035 = vrot.slane %v6033, 5
  %v6036 = vsel %vm5662, %v6031, %v6035
  %v6037 = vshrl.u32 %v5615, 16
  %v6039 = vrot.slane %v6037, 4
  %v6040 = vor.u32 %v6039, %v6035
  %v6041 = vrot.slane %v6040, 4
  %v6043 = vshll.u32 %v5616, 16
  %v6045 = vrot.slane %v6043, 5
  %v6046 = vsel %vm5662, %v6041, %v6045
  %v6047 = vshrl.u32 %v5616, 16
  %v6049 = vrot.slane %v6047, 4
  %v6050 = vor.u32 %v6049, %v6045
  %v6051 = vrot.slane %v6050, 4
  %v6053 = vshll.u32 %v5617, 16
  %v6055 = vrot.slane %v6053, 5
  %v6056 = vsel %vm5662, %v6051, %v6055
  %v6057 = vshrl.u32 %v5617, 16
  %v6059 = vrot.slane %v6057, 4
  %v6060 = vor.u32 %v6059, %v6055
  %v6061 = vrot.slane %v6060, 4
  %v6063 = vshll.u32 %v5618, 16
  %v6065 = vrot.slane %v6063, 5
  %v6066 = vsel %vm5662, %v6061, %v6065
  %v6067 = vshrl.u32 %v5618, 16
  %v6069 = vrot.slane %v6067, 4
  %v6070 = vor.u32 %v6069, %v6065
  %v6071 = vrot.slane %v6070, 4
  %v6073 = vshll.u32 %v5619, 16
  %v6075 = vrot.slane %v6073, 5
  %v6076 = vsel %vm5662, %v6071, %v6075
  %v6077 = vshrl.u32 %v5619, 16
  %v6079 = vrot.slane %v6077, 4
  %v6080 = vor.u32 %v6079, %v6075
  %v6081 = vrot.slane %v6080, 4
  %v6083 = vshll.u32 %v5620, 16
  %v6085 = vrot.slane %v6083, 5
  %v6086 = vsel %vm5662, %v6081, %v6085
  %v6087 = vshrl.u32 %v5620, 16
  %v6089 = vrot.slane %v6087, 4
  %v6090 = vor.u32 %v6089, %v6085
  %v6091 = vrot.slane %v6090, 4
  %v6093 = vshll.u32 %v5621, 16
  %v6095 = vrot.slane %v6093, 5
  %v6096 = vsel %vm5662, %v6091, %v6095
  %v6097 = vshrl.u32 %v5621, 16
  %v6099 = vrot.slane %v6097, 4
  %v6100 = vor.u32 %v6099, %v6095
  %v6101 = vrot.slane %v6100, 4
  %v6103 = vshll.u32 %v5622, 16
  %v6105 = vrot.slane %v6103, 5
  %v6106 = vsel %vm5662, %v6101, %v6105
  %v6107 = vshrl.u32 %v5622, 16
  %v6109 = vrot.slane %v6107, 4
  %v6110 = vor.u32 %v6109, %v6105
  %v6111 = vrot.slane %v6110, 4
  %v6113 = vshll.u32 %v5623, 16
  %v6115 = vrot.slane %v6113, 5
  %v6116 = vsel %vm5662, %v6111, %v6115
  %v6117 = vshrl.u32 %v5623, 16
  %v6119 = vrot.slane %v6117, 4
  %v6120 = vor.u32 %v6119, %v6115
  %v6121 = vrot.slane %v6120, 4
  %v6123 = vshll.u32 %v5624, 16
  %v6125 = vrot.slane %v6123, 5
  %v6126 = vsel %vm5662, %v6121, %v6125
  %v6127 = vshrl.u32 %v5624, 16
  %v6129 = vrot.slane %v6127, 4
  %v6130 = vor.u32 %v6129, %v6125
  %v6131 = vrot.slane %v6130, 4
  %v6133 = vshll.u32 %v5625, 16
  %v6135 = vrot.slane %v6133, 5
  %v6136 = vsel %vm5662, %v6131, %v6135
  %v6137 = vshrl.u32 %v5625, 16
  %v6139 = vrot.slane %v6137, 4
  %v6140 = vor.u32 %v6139, %v6135
  %v6141 = vrot.slane %v6140, 4
  %v6143 = vshll.u32 %v5626, 16
  %v6145 = vrot.slane %v6143, 5
  %v6146 = vsel %vm5662, %v6141, %v6145
  %v6147 = vshrl.u32 %v5626, 16
  %v6149 = vrot.slane %v6147, 4
  %v6150 = vor.u32 %v6149, %v6145
  %v6151 = vrot.slane %v6150, 4
  %v6153 = vshll.u32 %v5627, 16
  %v6155 = vrot.slane %v6153, 5
  %v6156 = vsel %vm5662, %v6151, %v6155
  %v6157 = vshrl.u32 %v5627, 16
  %v6159 = vrot.slane %v6157, 4
  %v6160 = vor.u32 %v6159, %v6155
  %v6161 = vrot.slane %v6160, 4
  %v6163 = vshll.u32 %v5628, 16
  %v6165 = vrot.slane %v6163, 5
  %v6166 = vsel %vm5662, %v6161, %v6165
  %v6167 = vshrl.u32 %v5628, 16
  %v6169 = vrot.slane %v6167, 4
  %v6170 = vor.u32 %v6169, %v6165
  %v6171 = vrot.slane %v6170, 4
  %v6173 = vshll.u32 %v5629, 16
  %v6175 = vrot.slane %v6173, 5
  %v6176 = vsel %vm5662, %v6171, %v6175
  %v6177 = vshrl.u32 %v5629, 16
  %v6179 = vrot.slane %v6177, 4
  %v6180 = vor.u32 %v6179, %v6175
  %v6181 = vrot.slane %v6180, 4
  %v6183 = vshll.u32 %v5630, 16
  %v6185 = vrot.slane %v6183, 5
  %v6186 = vsel %vm5662, %v6181, %v6185
  %v6187 = vshrl.u32 %v5630, 16
  %v6189 = vrot.slane %v6187, 4
  %v6190 = vor.u32 %v6189, %v6185
  %v6191 = vrot.slane %v6190, 4
  %v6193 = vshll.u32 %v5631, 16
  %v6195 = vrot.slane %v6193, 5
  %v6196 = vsel %vm5662, %v6191, %v6195
  %v6197 = vshrl.u32 %v5631, 16
  %v6199 = vrot.slane %v6197, 4
  %v6200 = vor.u32 %v6199, %v6195
  %v6201 = vrot.slane %v6200, 4
  %v6203 = vshll.u32 %v5632, 16
  %v6205 = vrot.slane %v6203, 5
  %v6206 = vsel %vm5662, %v6201, %v6205
  %v6207 = vshrl.u32 %v5632, 16
  %v6209 = vrot.slane %v6207, 4
  %v6210 = vor.u32 %v6209, %v6205
  %v6211 = vrot.slane %v6210, 4
  %v6213 = vshll.u32 %v5633, 16
  %v6215 = vrot.slane %v6213, 5
  %v6216 = vsel %vm5662, %v6211, %v6215
  %v6217 = vshrl.u32 %v5633, 16
  %v6219 = vrot.slane %v6217, 4
  %v6220 = vor.u32 %v6219, %v6215
  %v6221 = vrot.slane %v6220, 4
  %v6223 = vshll.u32 %v5634, 16
  %v6225 = vrot.slane %v6223, 5
  %v6226 = vsel %vm5662, %v6221, %v6225
  %v6227 = vshrl.u32 %v5634, 16
  %v6229 = vrot.slane %v6227, 4
  %v6230 = vor.u32 %v6229, %v6225
  %v6231 = vrot.slane %v6230, 4
  %v6233 = vshll.u32 %v5635, 16
  %v6235 = vrot.slane %v6233, 5
  %v6236 = vsel %vm5662, %v6231, %v6235
  %v6237 = vshrl.u32 %v5635, 16
  %v6239 = vrot.slane %v6237, 4
  %v6240 = vor.u32 %v6239, %v6235
  %v6241 = vrot.slane %v6240, 4
  %v6243 = vshll.u32 %v5636, 16
  %v6245 = vrot.slane %v6243, 5
  %v6246 = vsel %vm5662, %v6241, %v6245
  %v6247 = vshrl.u32 %v5636, 16
  %v6249 = vrot.slane %v6247, 4
  %v6250 = vor.u32 %v6249, %v6245
  %v6251 = vrot.slane %v6250, 4
  %v6253 = vshll.u32 %v5637, 16
  %v6255 = vrot.slane %v6253, 5
  %v6256 = vsel %vm5662, %v6251, %v6255
  %v6257 = vshrl.u32 %v5637, 16
  %v6259 = vrot.slane %v6257, 4
  %v6260 = vor.u32 %v6259, %v6255
  %v6261 = vrot.slane %v6260, 4
  %v6263 = vshll.u32 %v5638, 16
  %v6265 = vrot.slane %v6263, 5
  %v6266 = vsel %vm5662, %v6261, %v6265
  %v6267 = vshrl.u32 %v5638, 16
  %v6269 = vrot.slane %v6267, 4
  %v6270 = vor.u32 %v6269, %v6265
  %v6271 = vrot.slane %v6270, 4
  %v6273 = vshll.u32 %v5639, 16
  %v6275 = vrot.slane %v6273, 5
  %v6276 = vsel %vm5662, %v6271, %v6275
  %v6277 = vshrl.u32 %v5639, 16
  %v6279 = vrot.slane %v6277, 4
  %v6280 = vor.u32 %v6279, %v6275
  %v6281 = vrot.slane %v6280, 4
  %v6283 = vshll.u32 %v5640, 16
  %v6285 = vrot.slane %v6283, 5
  %v6286 = vsel %vm5662, %v6281, %v6285
  %v6287 = vshrl.u32 %v5640, 16
  %v6289 = vrot.slane %v6287, 4
  %v6290 = vor.u32 %v6289, %v6285
  %v6291 = vrot.slane %v6290, 4
  %v6293 = vshll.u32 %v5641, 16
  %v6295 = vrot.slane %v6293, 5
  %v6296 = vsel %vm5662, %v6291, %v6295
  %v6297 = vshrl.u32 %v5641, 16
  %v6299 = vrot.slane %v6297, 4
  %v6300 = vor.u32 %v6299, %v6295
  %v6301 = vrot.slane %v6300, 4
  %v6303 = vshll.u32 %v5642, 16
  %v6305 = vrot.slane %v6303, 5
  %v6306 = vsel %vm5662, %v6301, %v6305
  %v6307 = vshrl.u32 %v5642, 16
  %v6309 = vrot.slane %v6307, 4
  %v6310 = vor.u32 %v6309, %v6305
  %v6311 = vrot.slane %v6310, 4
  %v6313 = vshll.u32 %v5643, 16
  %v6315 = vrot.slane %v6313, 5
  %v6316 = vsel %vm5662, %v6311, %v6315
  %v6317 = vshrl.u32 %v5643, 16
  %v6319 = vrot.slane %v6317, 4
  %v6320 = vor.u32 %v6319, %v6315
  %v6321 = vrot.slane %v6320, 4
  %v6323 = vshll.u32 %v5644, 16
  %v6325 = vrot.slane %v6323, 5
  %v6326 = vsel %vm5662, %v6321, %v6325
  %v6327 = vshrl.u32 %v5644, 16
  %v6329 = vrot.slane %v6327, 4
  %v6330 = vor.u32 %v6329, %v6325
  %v6331 = vrot.slane %v6330, 4
  %v6333 = vshll.u32 %v5645, 16
  %v6335 = vrot.slane %v6333, 5
  %v6336 = vsel %vm5662, %v6331, %v6335
  %v6337 = vshrl.u32 %v5645, 16
  %v6339 = vrot.slane %v6337, 4
  %v6340 = vor.u32 %v6339, %v6335
  %v6341 = vrot.slane %v6340, 4
  %v6343 = vshll.u32 %v5646, 16
  %v6345 = vrot.slane %v6343, 5
  %v6346 = vsel %vm5662, %v6341, %v6345
  %v6347 = vshrl.u32 %v5646, 16
  %v6349 = vrot.slane %v6347, 4
  %v6350 = vor.u32 %v6349, %v6345
  %v6351 = vrot.slane %v6350, 4
  %v6353 = vshll.u32 %v5647, 16
  %v6355 = vrot.slane %v6353, 5
  %v6356 = vsel %vm5662, %v6351, %v6355
  %v6357 = vshrl.u32 %v5647, 16
  %v6359 = vrot.slane %v6357, 4
  %v6360 = vor.u32 %v6359, %v6355
  %v6361 = vrot.slane %v6360, 4
  %v6363 = vshll.u32 %v5648, 16
  %v6365 = vrot.slane %v6363, 5
  %v6366 = vsel %vm5662, %v6361, %v6365
  %v6367 = vshrl.u32 %v5648, 16
  %v6369 = vrot.slane %v6367, 4
  %v6370 = vor.u32 %v6369, %v6365
  %v6371 = vrot.slane %v6370, 4
  %v6373 = vshll.u32 %v5649, 16
  %v6375 = vrot.slane %v6373, 5
  %v6376 = vsel %vm5662, %v6371, %v6375
  %v6377 = vshrl.u32 %v5649, 16
  %v6379 = vrot.slane %v6377, 4
  %v6380 = vor.u32 %v6379, %v6375
  %v6381 = vrot.slane %v6380, 4
  %v6383 = vshll.u32 %v5650, 16
  %v6385 = vrot.slane %v6383, 5
  %v6386 = vsel %vm5662, %v6381, %v6385
  %v6387 = vshrl.u32 %v5650, 16
  %v6389 = vrot.slane %v6387, 4
  %v6390 = vor.u32 %v6389, %v6385
  %v6391 = vrot.slane %v6390, 4
  %v6393 = vshll.u32 %v5651, 16
  %v6395 = vrot.slane %v6393, 5
  %v6396 = vsel %vm5662, %v6391, %v6395
  %v6397 = vshrl.u32 %v5651, 16
  %v6399 = vrot.slane %v6397, 4
  %v6400 = vor.u32 %v6399, %v6395
  %v6401 = vrot.slane %v6400, 4
  %v6403 = vshll.u32 %v5652, 16
  %v6405 = vrot.slane %v6403, 5
  %v6406 = vsel %vm5662, %v6401, %v6405
  %v6407 = vshrl.u32 %v5652, 16
  %v6409 = vrot.slane %v6407, 4
  %v6410 = vor.u32 %v6409, %v6405
  %v6411 = vrot.slane %v6410, 4
  %v6413 = vshll.u32 %v5653, 16
  %v6415 = vrot.slane %v6413, 5
  %v6416 = vsel %vm5662, %v6411, %v6415
  %v6417 = vshrl.u32 %v5653, 16
  %v6419 = vrot.slane %v6417, 4
  %v6420 = vor.u32 %v6419, %v6415
  %v6421 = vrot.slane %v6420, 4
  %v6423 = vshll.u32 %v5654, 16
  %v6425 = vrot.slane %v6423, 5
  %v6426 = vsel %vm5662, %v6421, %v6425
  %v6427 = vshrl.u32 %v5654, 16
  %v6429 = vrot.slane %v6427, 4
  %v6430 = vor.u32 %v6429, %v6425
  %v6431 = vrot.slane %v6430, 4
  %v6433 = vshll.u32 %v5655, 16
  %v6435 = vrot.slane %v6433, 5
  %v6436 = vsel %vm5662, %v6431, %v6435
  %v6437 = vshrl.u32 %v5655, 16
  %v6439 = vrot.slane %v6437, 4
  %v6440 = vor.u32 %v6439, %v6435
  %v6441 = vrot.slane %v6440, 4
  %v6443 = vshll.u32 %v5656, 16
  %v6445 = vrot.slane %v6443, 5
  %v6446 = vsel %vm5662, %v6441, %v6445
  %v6447 = vshrl.u32 %v5656, 16
  %v6449 = vrot.slane %v6447, 4
  %v6450 = vor.u32 %v6449, %v6445
  %v6451 = vrot.slane %v6450, 4
  %v6453 = vshll.u32 %v5657, 16
  %v6455 = vrot.slane %v6453, 5
  %v6456 = vsel %vm5662, %v6451, %v6455
  %v6457 = vshrl.u32 %v5657, 16
  %v6459 = vrot.slane %v6457, 4
  %v6460 = vor.u32 %v6459, %v6455
  %v6461 = vrot.slane %v6460, 4
  %v6463 = vshll.u32 %v5658, 16
  %v6465 = vrot.slane %v6463, 5
  %v6466 = vsel %vm5662, %v6461, %v6465
  %v6467 = vshrl.u32 %v5658, 16
  %v6469 = vrot.slane %v6467, 4
  %v6470 = vor.u32 %v6469, %v6465
  %v6471 = vrot.slane %v6470, 4
  %v6473 = vshll.u32 %v5659, 16
  %v6475 = vrot.slane %v6473, 5
  %v6476 = vsel %vm5662, %v6471, %v6475
  %6477 = vrot.lane.b32.xlu0 %v5676, 32
  %v6478 = vpop.permute.xlu0 %6477
  %6479 = vrot.lane.b32.xlu0 %v5686, 32
  %v6480 = vpop.permute.xlu0 %6479
  %6481 = vrot.lane.b32.xlu0 %v5696, 32
  %v6482 = vpop.permute.xlu0 %6481
  %6483 = vrot.lane.b32.xlu0 %v5706, 32
  %v6484 = vpop.permute.xlu0 %6483
  %6485 = vrot.lane.b32.xlu0 %v5716, 32
  %v6486 = vpop.permute.xlu0 %6485
  %6487 = vrot.lane.b32.xlu0 %v5726, 32
  %v6488 = vpop.permute.xlu0 %6487
  %6489 = vrot.lane.b32.xlu0 %v5736, 32
  %v6490 = vpop.permute.xlu0 %6489
  %6491 = vrot.lane.b32.xlu0 %v5746, 32
  %v6492 = vpop.permute.xlu0 %6491
  %6493 = vrot.lane.b32.xlu0 %v5756, 32
  %v6494 = vpop.permute.xlu0 %6493
  %6495 = vrot.lane.b32.xlu0 %v5766, 32
  %v6496 = vpop.permute.xlu0 %6495
  %6497 = vrot.lane.b32.xlu0 %v5776, 32
  %v6498 = vpop.permute.xlu0 %6497
  %6499 = vrot.lane.b32.xlu0 %v5786, 32
  %v6500 = vpop.permute.xlu0 %6499
  %6501 = vrot.lane.b32.xlu0 %v5796, 32
  %v6502 = vpop.permute.xlu0 %6501
  %6503 = vrot.lane.b32.xlu0 %v5806, 32
  %v6504 = vpop.permute.xlu0 %6503
  %6505 = vrot.lane.b32.xlu0 %v5816, 32
  %v6506 = vpop.permute.xlu0 %6505
  %6507 = vrot.lane.b32.xlu0 %v5826, 32
  %v6508 = vpop.permute.xlu0 %6507
  %6509 = vrot.lane.b32.xlu0 %v5836, 32
  %v6510 = vpop.permute.xlu0 %6509
  %6511 = vrot.lane.b32.xlu0 %v5846, 32
  %v6512 = vpop.permute.xlu0 %6511
  %6513 = vrot.lane.b32.xlu0 %v5856, 32
  %v6514 = vpop.permute.xlu0 %6513
  %6515 = vrot.lane.b32.xlu0 %v5866, 32
  %v6516 = vpop.permute.xlu0 %6515
  %6517 = vrot.lane.b32.xlu0 %v5876, 32
  %v6518 = vpop.permute.xlu0 %6517
  %6519 = vrot.lane.b32.xlu0 %v5886, 32
  %v6520 = vpop.permute.xlu0 %6519
  %6521 = vrot.lane.b32.xlu0 %v5896, 32
  %v6522 = vpop.permute.xlu0 %6521
  %6523 = vrot.lane.b32.xlu0 %v5906, 32
  %v6524 = vpop.permute.xlu0 %6523
  %6525 = vrot.lane.b32.xlu0 %v5916, 32
  %v6526 = vpop.permute.xlu0 %6525
  %6527 = vrot.lane.b32.xlu0 %v5926, 32
  %v6528 = vpop.permute.xlu0 %6527
  %6529 = vrot.lane.b32.xlu0 %v5936, 32
  %v6530 = vpop.permute.xlu0 %6529
  %6531 = vrot.lane.b32.xlu0 %v5946, 32
  %v6532 = vpop.permute.xlu0 %6531
  %6533 = vrot.lane.b32.xlu0 %v5956, 32
  %v6534 = vpop.permute.xlu0 %6533
  %6535 = vrot.lane.b32.xlu0 %v5966, 32
  %v6536 = vpop.permute.xlu0 %6535
  %6537 = vrot.lane.b32.xlu0 %v5976, 32
  %v6538 = vpop.permute.xlu0 %6537
  %6539 = vrot.lane.b32.xlu0 %v5986, 32
  %v6540 = vpop.permute.xlu0 %6539
  %6541 = vrot.lane.b32.xlu0 %v5996, 32
  %v6542 = vpop.permute.xlu0 %6541
  %6543 = vrot.lane.b32.xlu0 %v6006, 32
  %v6544 = vpop.permute.xlu0 %6543
  %6545 = vrot.lane.b32.xlu0 %v6016, 32
  %v6546 = vpop.permute.xlu0 %6545
  %6547 = vrot.lane.b32.xlu0 %v6026, 32
  %v6548 = vpop.permute.xlu0 %6547
  %6549 = vrot.lane.b32.xlu0 %v6036, 32
  %v6550 = vpop.permute.xlu0 %6549
  %6551 = vrot.lane.b32.xlu0 %v6046, 32
  %v6552 = vpop.permute.xlu0 %6551
  %6553 = vrot.lane.b32.xlu0 %v6056, 32
  %v6554 = vpop.permute.xlu0 %6553
  %6555 = vrot.lane.b32.xlu0 %v6066, 32
  %v6556 = vpop.permute.xlu0 %6555
  %6557 = vrot.lane.b32.xlu0 %v6076, 32
  %v6558 = vpop.permute.xlu0 %6557
  %6559 = vrot.lane.b32.xlu0 %v6086, 32
  %v6560 = vpop.permute.xlu0 %6559
  %6561 = vrot.lane.b32.xlu0 %v6096, 32
  %v6562 = vpop.permute.xlu0 %6561
  %6563 = vrot.lane.b32.xlu0 %v6106, 32
  %v6564 = vpop.permute.xlu0 %6563
  %6565 = vrot.lane.b32.xlu0 %v6116, 32
  %v6566 = vpop.permute.xlu0 %6565
  %6567 = vrot.lane.b32.xlu0 %v6126, 32
  %v6568 = vpop.permute.xlu0 %6567
  %6569 = vrot.lane.b32.xlu0 %v6136, 32
  %v6570 = vpop.permute.xlu0 %6569
  %6571 = vrot.lane.b32.xlu0 %v6146, 32
  %v6572 = vpop.permute.xlu0 %6571
  %6573 = vrot.lane.b32.xlu0 %v6156, 32
  %v6574 = vpop.permute.xlu0 %6573
  %6575 = vrot.lane.b32.xlu0 %v6166, 32
  %v6576 = vpop.permute.xlu0 %6575
  %6577 = vrot.lane.b32.xlu0 %v6176, 32
  %v6578 = vpop.permute.xlu0 %6577
  %6579 = vrot.lane.b32.xlu0 %v6186, 32
  %v6580 = vpop.permute.xlu0 %6579
  %6581 = vrot.lane.b32.xlu0 %v6196, 32
  %v6582 = vpop.permute.xlu0 %6581
  %6583 = vrot.lane.b32.xlu0 %v6206, 32
  %v6584 = vpop.permute.xlu0 %6583
  %6585 = vrot.lane.b32.xlu0 %v6216, 32
  %v6586 = vpop.permute.xlu0 %6585
  %6587 = vrot.lane.b32.xlu0 %v6226, 32
  %v6588 = vpop.permute.xlu0 %6587
  %6589 = vrot.lane.b32.xlu0 %v6236, 32
  %v6590 = vpop.permute.xlu0 %6589
  %6591 = vrot.lane.b32.xlu0 %v6246, 32
  %v6592 = vpop.permute.xlu0 %6591
  %6593 = vrot.lane.b32.xlu0 %v6256, 32
  %v6594 = vpop.permute.xlu0 %6593
  %6595 = vrot.lane.b32.xlu0 %v6266, 32
  %v6596 = vpop.permute.xlu0 %6595
  %6597 = vrot.lane.b32.xlu0 %v6276, 32
  %v6598 = vpop.permute.xlu0 %6597
  %6599 = vrot.lane.b32.xlu0 %v6286, 32
  %v6600 = vpop.permute.xlu0 %6599
  %6601 = vrot.lane.b32.xlu0 %v6296, 32
  %v6602 = vpop.permute.xlu0 %6601
  %6603 = vrot.lane.b32.xlu0 %v6306, 32
  %v6604 = vpop.permute.xlu0 %6603
  %6605 = vrot.lane.b32.xlu0 %v6316, 32
  %v6606 = vpop.permute.xlu0 %6605
  %6607 = vrot.lane.b32.xlu0 %v6326, 32
  %v6608 = vpop.permute.xlu0 %6607
  %6609 = vrot.lane.b32.xlu0 %v6336, 32
  %v6610 = vpop.permute.xlu0 %6609
  %6611 = vrot.lane.b32.xlu0 %v6346, 32
  %v6612 = vpop.permute.xlu0 %6611
  %6613 = vrot.lane.b32.xlu0 %v6356, 32
  %v6614 = vpop.permute.xlu0 %6613
  %6615 = vrot.lane.b32.xlu0 %v6366, 32
  %v6616 = vpop.permute.xlu0 %6615
  %6617 = vrot.lane.b32.xlu0 %v6376, 32
  %v6618 = vpop.permute.xlu0 %6617
  %6619 = vrot.lane.b32.xlu0 %v6386, 32
  %v6620 = vpop.permute.xlu0 %6619
  %6621 = vrot.lane.b32.xlu0 %v6396, 32
  %v6622 = vpop.permute.xlu0 %6621
  %6623 = vrot.lane.b32.xlu0 %v6406, 32
  %v6624 = vpop.permute.xlu0 %6623
  %6625 = vrot.lane.b32.xlu0 %v6416, 32
  %v6626 = vpop.permute.xlu0 %6625
  %6627 = vrot.lane.b32.xlu0 %v6426, 32
  %v6628 = vpop.permute.xlu0 %6627
  %6629 = vrot.lane.b32.xlu0 %v6436, 32
  %v6630 = vpop.permute.xlu0 %6629
  %6631 = vrot.lane.b32.xlu0 %v6446, 32
  %v6632 = vpop.permute.xlu0 %6631
  %6633 = vrot.lane.b32.xlu0 %v6456, 32
  %v6634 = vpop.permute.xlu0 %6633
  %6635 = vrot.lane.b32.xlu0 %v6466, 32
  %v6636 = vpop.permute.xlu0 %6635
  %6637 = vrot.lane.b32.xlu0 %v6476, 32
  %v6638 = vpop.permute.xlu0 %6637
  %6720 = vst.msk [vmem:[#allocation3 + $0x4] sm:$0xf] %vm3051, %v6478
  %6721 = vst.msk [vmem:[#allocation3 + $0x10] sm:$0xf] %vm3051, %v6480
  %6722 = vst.msk [vmem:[#allocation3 + $0x1c] sm:$0xf] %vm3051, %v6482
  %6723 = vst.msk [vmem:[#allocation3 + $0x28] sm:$0xf] %vm3051, %v6484
  %6724 = vst.msk [vmem:[#allocation3 + $0x34] sm:$0xf] %vm3051, %v6486
  %6725 = vst.msk [vmem:[#allocation3 + $0x40] sm:$0xf] %vm3051, %v6488
  %6726 = vst.msk [vmem:[#allocation3 + $0x4c] sm:$0xf] %vm3051, %v6490
  %6727 = vst.msk [vmem:[#allocation3 + $0x58] sm:$0xf] %vm3051, %v6492
  %6728 = vst.msk [vmem:[#allocation3 + $0x64] sm:$0xf] %vm3051, %v6494
  %6729 = vst.msk [vmem:[#allocation3 + $0x70] sm:$0xf] %vm3051, %v6496
  %6730 = vst.msk [vmem:[#allocation3 + $0x7c] sm:$0xf] %vm3051, %v6498
  %6731 = vst.msk [vmem:[#allocation3 + $0x88] sm:$0xf] %vm3051, %v6500
  %6732 = vst.msk [vmem:[#allocation3 + $0x94] sm:$0xf] %vm3051, %v6502
  %6733 = vst.msk [vmem:[#allocation3 + $0xa0] sm:$0xf] %vm3051, %v6504
  %6734 = vst.msk [vmem:[#allocation3 + $0xac] sm:$0xf] %vm3051, %v6506
  %6735 = vst.msk [vmem:[#allocation3 + $0xb8] sm:$0xf] %vm3051, %v6508
  %6736 = vst.msk [vmem:[#allocation3 + $0xc4] sm:$0xf] %vm3051, %v6510
  %6737 = vst.msk [vmem:[#allocation3 + $0xd0] sm:$0xf] %vm3051, %v6512
  %6738 = vst.msk [vmem:[#allocation3 + $0xdc] sm:$0xf] %vm3051, %v6514
  %6739 = vst.msk [vmem:[#allocation3 + $0xe8] sm:$0xf] %vm3051, %v6516
  %6740 = vst.msk [vmem:[#allocation3 + $0xf4] sm:$0xf] %vm3051, %v6518
  %6741 = vst.msk [vmem:[#allocation3 + $0x100] sm:$0xf] %vm3051, %v6520
  %6742 = vst.msk [vmem:[#allocation3 + $0x10c] sm:$0xf] %vm3051, %v6522
  %6743 = vst.msk [vmem:[#allocation3 + $0x118] sm:$0xf] %vm3051, %v6524
  %6744 = vst.msk [vmem:[#allocation3 + $0x124] sm:$0xf] %vm3051, %v6526
  %6745 = vst.msk [vmem:[#allocation3 + $0x130] sm:$0xf] %vm3051, %v6528
  %6746 = vst.msk [vmem:[#allocation3 + $0x13c] sm:$0xf] %vm3051, %v6530
  %6747 = vst.msk [vmem:[#allocation3 + $0x148] sm:$0xf] %vm3051, %v6532
  %6748 = vst.msk [vmem:[#allocation3 + $0x154] sm:$0xf] %vm3051, %v6534
  %6749 = vst.msk [vmem:[#allocation3 + $0x160] sm:$0xf] %vm3051, %v6536
  %6750 = vst.msk [vmem:[#allocation3 + $0x16c] sm:$0xf] %vm3051, %v6538
  %6751 = vst.msk [vmem:[#allocation3 + $0x178] sm:$0xf] %vm3051, %v6540
  %6752 = vst.msk [vmem:[#allocation3 + $0x184] sm:$0xf] %vm3051, %v6542
  %6753 = vst.msk [vmem:[#allocation3 + $0x190] sm:$0xf] %vm3051, %v6544
  %6754 = vst.msk [vmem:[#allocation3 + $0x19c] sm:$0xf] %vm3051, %v6546
  %6755 = vst.msk [vmem:[#allocation3 + $0x1a8] sm:$0xf] %vm3051, %v6548
  %6756 = vst.msk [vmem:[#allocation3 + $0x1b4] sm:$0xf] %vm3051, %v6550
  %6757 = vst.msk [vmem:[#allocation3 + $0x1c0] sm:$0xf] %vm3051, %v6552
  %6758 = vst.msk [vmem:[#allocation3 + $0x1cc] sm:$0xf] %vm3051, %v6554
  %6759 = vst.msk [vmem:[#allocation3 + $0x1d8] sm:$0xf] %vm3051, %v6556
  %6760 = vst.msk [vmem:[#allocation3 + $0x1e4] sm:$0xf] %vm3051, %v6558
  %6761 = vst.msk [vmem:[#allocation3 + $0x1f0] sm:$0xf] %vm3051, %v6560
  %6762 = vst.msk [vmem:[#allocation3 + $0x1fc] sm:$0xf] %vm3051, %v6562
  %6763 = vst.msk [vmem:[#allocation3 + $0x208] sm:$0xf] %vm3051, %v6564
  %6764 = vst.msk [vmem:[#allocation3 + $0x214] sm:$0xf] %vm3051, %v6566
  %6765 = vst.msk [vmem:[#allocation3 + $0x220] sm:$0xf] %vm3051, %v6568
  %6766 = vst.msk [vmem:[#allocation3 + $0x22c] sm:$0xf] %vm3051, %v6570
  %6767 = vst.msk [vmem:[#allocation3 + $0x238] sm:$0xf] %vm3051, %v6572
  %6768 = vst.msk [vmem:[#allocation3 + $0x244] sm:$0xf] %vm3051, %v6574
  %6769 = vst.msk [vmem:[#allocation3 + $0x250] sm:$0xf] %vm3051, %v6576
  %6770 = vst.msk [vmem:[#allocation3 + $0x25c] sm:$0xf] %vm3051, %v6578
  %6771 = vst.msk [vmem:[#allocation3 + $0x268] sm:$0xf] %vm3051, %v6580
  %6772 = vst.msk [vmem:[#allocation3 + $0x274] sm:$0xf] %vm3051, %v6582
  %6773 = vst.msk [vmem:[#allocation3 + $0x280] sm:$0xf] %vm3051, %v6584
  %6774 = vst.msk [vmem:[#allocation3 + $0x28c] sm:$0xf] %vm3051, %v6586
  %6775 = vst.msk [vmem:[#allocation3 + $0x298] sm:$0xf] %vm3051, %v6588
  %6776 = vst.msk [vmem:[#allocation3 + $0x2a4] sm:$0xf] %vm3051, %v6590
  %6777 = vst.msk [vmem:[#allocation3 + $0x2b0] sm:$0xf] %vm3051, %v6592
  %6778 = vst.msk [vmem:[#allocation3 + $0x2bc] sm:$0xf] %vm3051, %v6594
  %6779 = vst.msk [vmem:[#allocation3 + $0x2c8] sm:$0xf] %vm3051, %v6596
  %6780 = vst.msk [vmem:[#allocation3 + $0x2d4] sm:$0xf] %vm3051, %v6598
  %6781 = vst.msk [vmem:[#allocation3 + $0x2e0] sm:$0xf] %vm3051, %v6600
  %6782 = vst.msk [vmem:[#allocation3 + $0x2ec] sm:$0xf] %vm3051, %v6602
  %6783 = vst.msk [vmem:[#allocation3 + $0x2f8] sm:$0xf] %vm3051, %v6604
  %6784 = vst.msk [vmem:[#allocation3 + $0x304] sm:$0xf] %vm3051, %v6606
  %6785 = vst.msk [vmem:[#allocation3 + $0x310] sm:$0xf] %vm3051, %v6608
  %6786 = vst.msk [vmem:[#allocation3 + $0x31c] sm:$0xf] %vm3051, %v6610
  %6787 = vst.msk [vmem:[#allocation3 + $0x328] sm:$0xf] %vm3051, %v6612
  %6788 = vst.msk [vmem:[#allocation3 + $0x334] sm:$0xf] %vm3051, %v6614
  %6789 = vst.msk [vmem:[#allocation3 + $0x340] sm:$0xf] %vm3051, %v6616
  %6790 = vst.msk [vmem:[#allocation3 + $0x34c] sm:$0xf] %vm3051, %v6618
  %6791 = vst.msk [vmem:[#allocation3 + $0x358] sm:$0xf] %vm3051, %v6620
  %6792 = vst.msk [vmem:[#allocation3 + $0x364] sm:$0xf] %vm3051, %v6622
  %6793 = vst.msk [vmem:[#allocation3 + $0x370] sm:$0xf] %vm3051, %v6624
  %6794 = vst.msk [vmem:[#allocation3 + $0x37c] sm:$0xf] %vm3051, %v6626
  %6795 = vst.msk [vmem:[#allocation3 + $0x388] sm:$0xf] %vm3051, %v6628
  %6796 = vst.msk [vmem:[#allocation3 + $0x394] sm:$0xf] %vm3051, %v6630
  %6797 = vst.msk [vmem:[#allocation3 + $0x3a0] sm:$0xf] %vm3051, %v6632
  %6798 = vst.msk [vmem:[#allocation3 + $0x3ac] sm:$0xf] %vm3051, %v6634
  %6799 = vst.msk [vmem:[#allocation3 + $0x3b8] sm:$0xf] %vm3051, %v6636
  %6800 = vst.msk [vmem:[#allocation3 + $0x3c4] sm:$0xf] %vm3051, %v6638
  %v6801 = vld [vmem:[#allocation2 + $0x18] sm:$0xf]
  %v6802 = vld [vmem:[#allocation2 + $0x1c] sm:$0xf]
  %v6803 = vld [vmem:[#allocation2 + $0x20] sm:$0xf]
  %v6804 = vld [vmem:[#allocation2 + $0x24] sm:$0xf]
  %v6805 = vld [vmem:[#allocation2 + $0x28] sm:$0xf]
  %v6806 = vld [vmem:[#allocation2 + $0x2c] sm:$0xf]
  %v6807 = vld [vmem:[#allocation2 + $0x30] sm:$0xf]
  %v6808 = vld [vmem:[#allocation2 + $0x34] sm:$0xf]
  %v6809 = vld [vmem:[#allocation2 + $0x38] sm:$0xf]
  %v6810 = vld [vmem:[#allocation2 + $0x3c] sm:$0xf]
  %v6811 = vld [vmem:[#allocation2 + $0x40] sm:$0xf]
  %v6812 = vld [vmem:[#allocation2 + $0x44] sm:$0xf]
  %v6813 = vld [vmem:[#allocation2 + $0x48] sm:$0xf]
  %v6814 = vld [vmem:[#allocation2 + $0x4c] sm:$0xf]
  %v6815 = vld [vmem:[#allocation2 + $0x50] sm:$0xf]
  %v6816 = vld [vmem:[#allocation2 + $0x54] sm:$0xf]
  %v6817 = vld [vmem:[#allocation2 + $0x58] sm:$0xf]
  %v6818 = vld [vmem:[#allocation2 + $0x5c] sm:$0xf]
  %v6819 = vld [vmem:[#allocation2 + $0x60] sm:$0xf]
  %v6820 = vld [vmem:[#allocation2 + $0x64] sm:$0xf]
  %v6821 = vld [vmem:[#allocation2 + $0x68] sm:$0xf]
  %v6822 = vld [vmem:[#allocation2 + $0x6c] sm:$0xf]
  %v6823 = vld [vmem:[#allocation2 + $0x70] sm:$0xf]
  %v6824 = vld [vmem:[#allocation2 + $0x74] sm:$0xf]
  %v6825 = vld [vmem:[#allocation2 + $0x78] sm:$0xf]
  %v6826 = vld [vmem:[#allocation2 + $0x7c] sm:$0xf]
  %v6827 = vld [vmem:[#allocation2 + $0x80] sm:$0xf]
  %v6828 = vld [vmem:[#allocation2 + $0x84] sm:$0xf]
  %v6829 = vld [vmem:[#allocation2 + $0x88] sm:$0xf]
  %v6830 = vld [vmem:[#allocation2 + $0x8c] sm:$0xf]
  %v6831 = vld [vmem:[#allocation2 + $0x90] sm:$0xf]
  %v6832 = vld [vmem:[#allocation2 + $0x94] sm:$0xf]
  %v6833 = vld [vmem:[#allocation2 + $0x98] sm:$0xf]
  %v6834 = vld [vmem:[#allocation2 + $0x9c] sm:$0xf]
  %v6835 = vld [vmem:[#allocation2 + $0xa0] sm:$0xf]
  %v6836 = vld [vmem:[#allocation2 + $0xa4] sm:$0xf]
  %v6837 = vld [vmem:[#allocation2 + $0xa8] sm:$0xf]
  %v6838 = vld [vmem:[#allocation2 + $0xac] sm:$0xf]
  %v6839 = vld [vmem:[#allocation2 + $0xb0] sm:$0xf]
  %v6840 = vld [vmem:[#allocation2 + $0xb4] sm:$0xf]
  %v6841 = vld [vmem:[#allocation2 + $0xb8] sm:$0xf]
  %v6842 = vld [vmem:[#allocation2 + $0xbc] sm:$0xf]
  %v6843 = vld [vmem:[#allocation2 + $0xc0] sm:$0xf]
  %v6844 = vld [vmem:[#allocation2 + $0xc4] sm:$0xf]
  %v6845 = vld [vmem:[#allocation2 + $0xc8] sm:$0xf]
  %v6846 = vld [vmem:[#allocation2 + $0xcc] sm:$0xf]
  %v6847 = vld [vmem:[#allocation2 + $0xd0] sm:$0xf]
  %v6848 = vld [vmem:[#allocation2 + $0xd4] sm:$0xf]
  %v6849 = vld [vmem:[#allocation2 + $0xd8] sm:$0xf]
  %v6850 = vld [vmem:[#allocation2 + $0xdc] sm:$0xf]
  %v6851 = vld [vmem:[#allocation2 + $0xe0] sm:$0xf]
  %v6852 = vld [vmem:[#allocation2 + $0xe4] sm:$0xf]
  %v6853 = vld [vmem:[#allocation2 + $0xe8] sm:$0xf]
  %v6854 = vld [vmem:[#allocation2 + $0xec] sm:$0xf]
  %v6855 = vld [vmem:[#allocation2 + $0xf0] sm:$0xf]
  %v6856 = vld [vmem:[#allocation2 + $0xf4] sm:$0xf]
  %v6857 = vld [vmem:[#allocation2 + $0xf8] sm:$0xf]
  %v6858 = vld [vmem:[#allocation2 + $0xfc] sm:$0xf]
  %v6859 = vld [vmem:[#allocation2 + $0x100] sm:$0xf]
  %v6860 = vld [vmem:[#allocation2 + $0x104] sm:$0xf]
  %v6861 = vld [vmem:[#allocation2 + $0x108] sm:$0xf]
  %v6862 = vld [vmem:[#allocation2 + $0x10c] sm:$0xf]
  %v6863 = vld [vmem:[#allocation2 + $0x110] sm:$0xf]
  %v6864 = vld [vmem:[#allocation2 + $0x114] sm:$0xf]
  %v6865 = vld [vmem:[#allocation2 + $0x118] sm:$0xf]
  %v6866 = vld [vmem:[#allocation2 + $0x11c] sm:$0xf]
  %v6867 = vld [vmem:[#allocation2 + $0x120] sm:$0xf]
  %v6868 = vld [vmem:[#allocation2 + $0x124] sm:$0xf]
  %v6869 = vld [vmem:[#allocation2 + $0x128] sm:$0xf]
  %v6870 = vld [vmem:[#allocation2 + $0x12c] sm:$0xf]
  %v6871 = vld [vmem:[#allocation2 + $0x130] sm:$0xf]
  %v6872 = vld [vmem:[#allocation2 + $0x134] sm:$0xf]
  %v6873 = vld [vmem:[#allocation2 + $0x138] sm:$0xf]
  %v6874 = vld [vmem:[#allocation2 + $0x13c] sm:$0xf]
  %v6875 = vld [vmem:[#allocation2 + $0x140] sm:$0xf]
  %v6876 = vld [vmem:[#allocation2 + $0x144] sm:$0xf]
  %v6877 = vld [vmem:[#allocation2 + $0x148] sm:$0xf]
  %v6878 = vld [vmem:[#allocation2 + $0x14c] sm:$0xf]
  %v6879 = vld [vmem:[#allocation2 + $0x150] sm:$0xf]
  %v6880 = vld [vmem:[#allocation2 + $0x154] sm:$0xf]
  %v6881 = vld [vmem:[#allocation2 + $0x158] sm:$0xf]
  %v6882 = vld [vmem:[#allocation2 + $0x15c] sm:$0x1]
  %v6884 = vshrl.u32 %v6801, 16
  %v6886 = vrot.slane %v6884, 4
  %v6887 = vshll.u32 %v6801, 16
  %v6889 = vrot.slane %v6887, 5
  %v6890 = vor.u32 %v6886, %v6889
  %v6891 = vrot.slane %v6890, 4
  %v6893 = vshll.u32 %v6802, 16
  %v6895 = vrot.slane %v6893, 5
  %v6896 = vsel %vm5662, %v6891, %v6895
  %v6897 = vshrl.u32 %v6802, 16
  %v6899 = vrot.slane %v6897, 4
  %v6900 = vor.u32 %v6899, %v6895
  %v6901 = vrot.slane %v6900, 4
  %v6903 = vshll.u32 %v6803, 16
  %v6905 = vrot.slane %v6903, 5
  %v6906 = vsel %vm5662, %v6901, %v6905
  %v6907 = vshrl.u32 %v6803, 16
  %v6909 = vrot.slane %v6907, 4
  %v6910 = vor.u32 %v6909, %v6905
  %v6911 = vrot.slane %v6910, 4
  %v6913 = vshll.u32 %v6804, 16
  %v6915 = vrot.slane %v6913, 5
  %v6916 = vsel %vm5662, %v6911, %v6915
  %v6917 = vshrl.u32 %v6804, 16
  %v6919 = vrot.slane %v6917, 4
  %v6920 = vor.u32 %v6919, %v6915
  %v6921 = vrot.slane %v6920, 4
  %v6923 = vshll.u32 %v6805, 16
  %v6925 = vrot.slane %v6923, 5
  %v6926 = vsel %vm5662, %v6921, %v6925
  %v6927 = vshrl.u32 %v6805, 16
  %v6929 = vrot.slane %v6927, 4
  %v6930 = vor.u32 %v6929, %v6925
  %v6931 = vrot.slane %v6930, 4
  %v6933 = vshll.u32 %v6806, 16
  %v6935 = vrot.slane %v6933, 5
  %v6936 = vsel %vm5662, %v6931, %v6935
  %v6937 = vshrl.u32 %v6806, 16
  %v6939 = vrot.slane %v6937, 4
  %v6940 = vor.u32 %v6939, %v6935
  %v6941 = vrot.slane %v6940, 4
  %v6943 = vshll.u32 %v6807, 16
  %v6945 = vrot.slane %v6943, 5
  %v6946 = vsel %vm5662, %v6941, %v6945
  %v6947 = vshrl.u32 %v6807, 16
  %v6949 = vrot.slane %v6947, 4
  %v6950 = vor.u32 %v6949, %v6945
  %v6951 = vrot.slane %v6950, 4
  %v6953 = vshll.u32 %v6808, 16
  %v6955 = vrot.slane %v6953, 5
  %v6956 = vsel %vm5662, %v6951, %v6955
  %v6957 = vshrl.u32 %v6808, 16
  %v6959 = vrot.slane %v6957, 4
  %v6960 = vor.u32 %v6959, %v6955
  %v6961 = vrot.slane %v6960, 4
  %v6963 = vshll.u32 %v6809, 16
  %v6965 = vrot.slane %v6963, 5
  %v6966 = vsel %vm5662, %v6961, %v6965
  %v6967 = vshrl.u32 %v6809, 16
  %v6969 = vrot.slane %v6967, 4
  %v6970 = vor.u32 %v6969, %v6965
  %v6971 = vrot.slane %v6970, 4
  %v6973 = vshll.u32 %v6810, 16
  %v6975 = vrot.slane %v6973, 5
  %v6976 = vsel %vm5662, %v6971, %v6975
  %v6977 = vshrl.u32 %v6810, 16
  %v6979 = vrot.slane %v6977, 4
  %v6980 = vor.u32 %v6979, %v6975
  %v6981 = vrot.slane %v6980, 4
  %v6983 = vshll.u32 %v6811, 16
  %v6985 = vrot.slane %v6983, 5
  %v6986 = vsel %vm5662, %v6981, %v6985
  %v6987 = vshrl.u32 %v6811, 16
  %v6989 = vrot.slane %v6987, 4
  %v6990 = vor.u32 %v6989, %v6985
  %v6991 = vrot.slane %v6990, 4
  %v6993 = vshll.u32 %v6812, 16
  %v6995 = vrot.slane %v6993, 5
  %v6996 = vsel %vm5662, %v6991, %v6995
  %v6997 = vshrl.u32 %v6812, 16
  %v6999 = vrot.slane %v6997, 4
  %v7000 = vor.u32 %v6999, %v6995
  %v7001 = vrot.slane %v7000, 4
  %v7003 = vshll.u32 %v6813, 16
  %v7005 = vrot.slane %v7003, 5
  %v7006 = vsel %vm5662, %v7001, %v7005
  %v7007 = vshrl.u32 %v6813, 16
  %v7009 = vrot.slane %v7007, 4
  %v7010 = vor.u32 %v7009, %v7005
  %v7011 = vrot.slane %v7010, 4
  %v7013 = vshll.u32 %v6814, 16
  %v7015 = vrot.slane %v7013, 5
  %v7016 = vsel %vm5662, %v7011, %v7015
  %v7017 = vshrl.u32 %v6814, 16
  %v7019 = vrot.slane %v7017, 4
  %v7020 = vor.u32 %v7019, %v7015
  %v7021 = vrot.slane %v7020, 4
  %v7023 = vshll.u32 %v6815, 16
  %v7025 = vrot.slane %v7023, 5
  %v7026 = vsel %vm5662, %v7021, %v7025
  %v7027 = vshrl.u32 %v6815, 16
  %v7029 = vrot.slane %v7027, 4
  %v7030 = vor.u32 %v7029, %v7025
  %v7031 = vrot.slane %v7030, 4
  %v7033 = vshll.u32 %v6816, 16
  %v7035 = vrot.slane %v7033, 5
  %v7036 = vsel %vm5662, %v7031, %v7035
  %v7037 = vshrl.u32 %v6816, 16
  %v7039 = vrot.slane %v7037, 4
  %v7040 = vor.u32 %v7039, %v7035
  %v7041 = vrot.slane %v7040, 4
  %v7043 = vshll.u32 %v6817, 16
  %v7045 = vrot.slane %v7043, 5
  %v7046 = vsel %vm5662, %v7041, %v7045
  %v7047 = vshrl.u32 %v6817, 16
  %v7049 = vrot.slane %v7047, 4
  %v7050 = vor.u32 %v7049, %v7045
  %v7051 = vrot.slane %v7050, 4
  %v7053 = vshll.u32 %v6818, 16
  %v7055 = vrot.slane %v7053, 5
  %v7056 = vsel %vm5662, %v7051, %v7055
  %v7057 = vshrl.u32 %v6818, 16
  %v7059 = vrot.slane %v7057, 4
  %v7060 = vor.u32 %v7059, %v7055
  %v7061 = vrot.slane %v7060, 4
  %v7063 = vshll.u32 %v6819, 16
  %v7065 = vrot.slane %v7063, 5
  %v7066 = vsel %vm5662, %v7061, %v7065
  %v7067 = vshrl.u32 %v6819, 16
  %v7069 = vrot.slane %v7067, 4
  %v7070 = vor.u32 %v7069, %v7065
  %v7071 = vrot.slane %v7070, 4
  %v7073 = vshll.u32 %v6820, 16
  %v7075 = vrot.slane %v7073, 5
  %v7076 = vsel %vm5662, %v7071, %v7075
  %v7077 = vshrl.u32 %v6820, 16
  %v7079 = vrot.slane %v7077, 4
  %v7080 = vor.u32 %v7079, %v7075
  %v7081 = vrot.slane %v7080, 4
  %v7083 = vshll.u32 %v6821, 16
  %v7085 = vrot.slane %v7083, 5
  %v7086 = vsel %vm5662, %v7081, %v7085
  %v7087 = vshrl.u32 %v6821, 16
  %v7089 = vrot.slane %v7087, 4
  %v7090 = vor.u32 %v7089, %v7085
  %v7091 = vrot.slane %v7090, 4
  %v7093 = vshll.u32 %v6822, 16
  %v7095 = vrot.slane %v7093, 5
  %v7096 = vsel %vm5662, %v7091, %v7095
  %v7097 = vshrl.u32 %v6822, 16
  %v7099 = vrot.slane %v7097, 4
  %v7100 = vor.u32 %v7099, %v7095
  %v7101 = vrot.slane %v7100, 4
  %v7103 = vshll.u32 %v6823, 16
  %v7105 = vrot.slane %v7103, 5
  %v7106 = vsel %vm5662, %v7101, %v7105
  %v7107 = vshrl.u32 %v6823, 16
  %v7109 = vrot.slane %v7107, 4
  %v7110 = vor.u32 %v7109, %v7105
  %v7111 = vrot.slane %v7110, 4
  %v7113 = vshll.u32 %v6824, 16
  %v7115 = vrot.slane %v7113, 5
  %v7116 = vsel %vm5662, %v7111, %v7115
  %v7117 = vshrl.u32 %v6824, 16
  %v7119 = vrot.slane %v7117, 4
  %v7120 = vor.u32 %v7119, %v7115
  %v7121 = vrot.slane %v7120, 4
  %v7123 = vshll.u32 %v6825, 16
  %v7125 = vrot.slane %v7123, 5
  %v7126 = vsel %vm5662, %v7121, %v7125
  %v7127 = vshrl.u32 %v6825, 16
  %v7129 = vrot.slane %v7127, 4
  %v7130 = vor.u32 %v7129, %v7125
  %v7131 = vrot.slane %v7130, 4
  %v7133 = vshll.u32 %v6826, 16
  %v7135 = vrot.slane %v7133, 5
  %v7136 = vsel %vm5662, %v7131, %v7135
  %v7137 = vshrl.u32 %v6826, 16
  %v7139 = vrot.slane %v7137, 4
  %v7140 = vor.u32 %v7139, %v7135
  %v7141 = vrot.slane %v7140, 4
  %v7143 = vshll.u32 %v6827, 16
  %v7145 = vrot.slane %v7143, 5
  %v7146 = vsel %vm5662, %v7141, %v7145
  %v7147 = vshrl.u32 %v6827, 16
  %v7149 = vrot.slane %v7147, 4
  %v7150 = vor.u32 %v7149, %v7145
  %v7151 = vrot.slane %v7150, 4
  %v7153 = vshll.u32 %v6828, 16
  %v7155 = vrot.slane %v7153, 5
  %v7156 = vsel %vm5662, %v7151, %v7155
  %v7157 = vshrl.u32 %v6828, 16
  %v7159 = vrot.slane %v7157, 4
  %v7160 = vor.u32 %v7159, %v7155
  %v7161 = vrot.slane %v7160, 4
  %v7163 = vshll.u32 %v6829, 16
  %v7165 = vrot.slane %v7163, 5
  %v7166 = vsel %vm5662, %v7161, %v7165
  %v7167 = vshrl.u32 %v6829, 16
  %v7169 = vrot.slane %v7167, 4
  %v7170 = vor.u32 %v7169, %v7165
  %v7171 = vrot.slane %v7170, 4
  %v7173 = vshll.u32 %v6830, 16
  %v7175 = vrot.slane %v7173, 5
  %v7176 = vsel %vm5662, %v7171, %v7175
  %v7177 = vshrl.u32 %v6830, 16
  %v7179 = vrot.slane %v7177, 4
  %v7180 = vor.u32 %v7179, %v7175
  %v7181 = vrot.slane %v7180, 4
  %v7183 = vshll.u32 %v6831, 16
  %v7185 = vrot.slane %v7183, 5
  %v7186 = vsel %vm5662, %v7181, %v7185
  %v7187 = vshrl.u32 %v6831, 16
  %v7189 = vrot.slane %v7187, 4
  %v7190 = vor.u32 %v7189, %v7185
  %v7191 = vrot.slane %v7190, 4
  %v7193 = vshll.u32 %v6832, 16
  %v7195 = vrot.slane %v7193, 5
  %v7196 = vsel %vm5662, %v7191, %v7195
  %v7197 = vshrl.u32 %v6832, 16
  %v7199 = vrot.slane %v7197, 4
  %v7200 = vor.u32 %v7199, %v7195
  %v7201 = vrot.slane %v7200, 4
  %v7203 = vshll.u32 %v6833, 16
  %v7205 = vrot.slane %v7203, 5
  %v7206 = vsel %vm5662, %v7201, %v7205
  %v7207 = vshrl.u32 %v6833, 16
  %v7209 = vrot.slane %v7207, 4
  %v7210 = vor.u32 %v7209, %v7205
  %v7211 = vrot.slane %v7210, 4
  %v7213 = vshll.u32 %v6834, 16
  %v7215 = vrot.slane %v7213, 5
  %v7216 = vsel %vm5662, %v7211, %v7215
  %v7217 = vshrl.u32 %v6834, 16
  %v7219 = vrot.slane %v7217, 4
  %v7220 = vor.u32 %v7219, %v7215
  %v7221 = vrot.slane %v7220, 4
  %v7223 = vshll.u32 %v6835, 16
  %v7225 = vrot.slane %v7223, 5
  %v7226 = vsel %vm5662, %v7221, %v7225
  %v7227 = vshrl.u32 %v6835, 16
  %v7229 = vrot.slane %v7227, 4
  %v7230 = vor.u32 %v7229, %v7225
  %v7231 = vrot.slane %v7230, 4
  %v7233 = vshll.u32 %v6836, 16
  %v7235 = vrot.slane %v7233, 5
  %v7236 = vsel %vm5662, %v7231, %v7235
  %v7237 = vshrl.u32 %v6836, 16
  %v7239 = vrot.slane %v7237, 4
  %v7240 = vor.u32 %v7239, %v7235
  %v7241 = vrot.slane %v7240, 4
  %v7243 = vshll.u32 %v6837, 16
  %v7245 = vrot.slane %v7243, 5
  %v7246 = vsel %vm5662, %v7241, %v7245
  %v7247 = vshrl.u32 %v6837, 16
  %v7249 = vrot.slane %v7247, 4
  %v7250 = vor.u32 %v7249, %v7245
  %v7251 = vrot.slane %v7250, 4
  %v7253 = vshll.u32 %v6838, 16
  %v7255 = vrot.slane %v7253, 5
  %v7256 = vsel %vm5662, %v7251, %v7255
  %v7257 = vshrl.u32 %v6838, 16
  %v7259 = vrot.slane %v7257, 4
  %v7260 = vor.u32 %v7259, %v7255
  %v7261 = vrot.slane %v7260, 4
  %v7263 = vshll.u32 %v6839, 16
  %v7265 = vrot.slane %v7263, 5
  %v7266 = vsel %vm5662, %v7261, %v7265
  %v7267 = vshrl.u32 %v6839, 16
  %v7269 = vrot.slane %v7267, 4
  %v7270 = vor.u32 %v7269, %v7265
  %v7271 = vrot.slane %v7270, 4
  %v7273 = vshll.u32 %v6840, 16
  %v7275 = vrot.slane %v7273, 5
  %v7276 = vsel %vm5662, %v7271, %v7275
  %v7277 = vshrl.u32 %v6840, 16
  %v7279 = vrot.slane %v7277, 4
  %v7280 = vor.u32 %v7279, %v7275
  %v7281 = vrot.slane %v7280, 4
  %v7283 = vshll.u32 %v6841, 16
  %v7285 = vrot.slane %v7283, 5
  %v7286 = vsel %vm5662, %v7281, %v7285
  %v7287 = vshrl.u32 %v6841, 16
  %v7289 = vrot.slane %v7287, 4
  %v7290 = vor.u32 %v7289, %v7285
  %v7291 = vrot.slane %v7290, 4
  %v7293 = vshll.u32 %v6842, 16
  %v7295 = vrot.slane %v7293, 5
  %v7296 = vsel %vm5662, %v7291, %v7295
  %v7297 = vshrl.u32 %v6842, 16
  %v7299 = vrot.slane %v7297, 4
  %v7300 = vor.u32 %v7299, %v7295
  %v7301 = vrot.slane %v7300, 4
  %v7303 = vshll.u32 %v6843, 16
  %v7305 = vrot.slane %v7303, 5
  %v7306 = vsel %vm5662, %v7301, %v7305
  %v7307 = vshrl.u32 %v6843, 16
  %v7309 = vrot.slane %v7307, 4
  %v7310 = vor.u32 %v7309, %v7305
  %v7311 = vrot.slane %v7310, 4
  %v7313 = vshll.u32 %v6844, 16
  %v7315 = vrot.slane %v7313, 5
  %v7316 = vsel %vm5662, %v7311, %v7315
  %v7317 = vshrl.u32 %v6844, 16
  %v7319 = vrot.slane %v7317, 4
  %v7320 = vor.u32 %v7319, %v7315
  %v7321 = vrot.slane %v7320, 4
  %v7323 = vshll.u32 %v6845, 16
  %v7325 = vrot.slane %v7323, 5
  %v7326 = vsel %vm5662, %v7321, %v7325
  %v7327 = vshrl.u32 %v6845, 16
  %v7329 = vrot.slane %v7327, 4
  %v7330 = vor.u32 %v7329, %v7325
  %v7331 = vrot.slane %v7330, 4
  %v7333 = vshll.u32 %v6846, 16
  %v7335 = vrot.slane %v7333, 5
  %v7336 = vsel %vm5662, %v7331, %v7335
  %v7337 = vshrl.u32 %v6846, 16
  %v7339 = vrot.slane %v7337, 4
  %v7340 = vor.u32 %v7339, %v7335
  %v7341 = vrot.slane %v7340, 4
  %v7343 = vshll.u32 %v6847, 16
  %v7345 = vrot.slane %v7343, 5
  %v7346 = vsel %vm5662, %v7341, %v7345
  %v7347 = vshrl.u32 %v6847, 16
  %v7349 = vrot.slane %v7347, 4
  %v7350 = vor.u32 %v7349, %v7345
  %v7351 = vrot.slane %v7350, 4
  %v7353 = vshll.u32 %v6848, 16
  %v7355 = vrot.slane %v7353, 5
  %v7356 = vsel %vm5662, %v7351, %v7355
  %v7357 = vshrl.u32 %v6848, 16
  %v7359 = vrot.slane %v7357, 4
  %v7360 = vor.u32 %v7359, %v7355
  %v7361 = vrot.slane %v7360, 4
  %v7363 = vshll.u32 %v6849, 16
  %v7365 = vrot.slane %v7363, 5
  %v7366 = vsel %vm5662, %v7361, %v7365
  %v7367 = vshrl.u32 %v6849, 16
  %v7369 = vrot.slane %v7367, 4
  %v7370 = vor.u32 %v7369, %v7365
  %v7371 = vrot.slane %v7370, 4
  %v7373 = vshll.u32 %v6850, 16
  %v7375 = vrot.slane %v7373, 5
  %v7376 = vsel %vm5662, %v7371, %v7375
  %v7377 = vshrl.u32 %v6850, 16
  %v7379 = vrot.slane %v7377, 4
  %v7380 = vor.u32 %v7379, %v7375
  %v7381 = vrot.slane %v7380, 4
  %v7383 = vshll.u32 %v6851, 16
  %v7385 = vrot.slane %v7383, 5
  %v7386 = vsel %vm5662, %v7381, %v7385
  %v7387 = vshrl.u32 %v6851, 16
  %v7389 = vrot.slane %v7387, 4
  %v7390 = vor.u32 %v7389, %v7385
  %v7391 = vrot.slane %v7390, 4
  %v7393 = vshll.u32 %v6852, 16
  %v7395 = vrot.slane %v7393, 5
  %v7396 = vsel %vm5662, %v7391, %v7395
  %v7397 = vshrl.u32 %v6852, 16
  %v7399 = vrot.slane %v7397, 4
  %v7400 = vor.u32 %v7399, %v7395
  %v7401 = vrot.slane %v7400, 4
  %v7403 = vshll.u32 %v6853, 16
  %v7405 = vrot.slane %v7403, 5
  %v7406 = vsel %vm5662, %v7401, %v7405
  %v7407 = vshrl.u32 %v6853, 16
  %v7409 = vrot.slane %v7407, 4
  %v7410 = vor.u32 %v7409, %v7405
  %v7411 = vrot.slane %v7410, 4
  %v7413 = vshll.u32 %v6854, 16
  %v7415 = vrot.slane %v7413, 5
  %v7416 = vsel %vm5662, %v7411, %v7415
  %v7417 = vshrl.u32 %v6854, 16
  %v7419 = vrot.slane %v7417, 4
  %v7420 = vor.u32 %v7419, %v7415
  %v7421 = vrot.slane %v7420, 4
  %v7423 = vshll.u32 %v6855, 16
  %v7425 = vrot.slane %v7423, 5
  %v7426 = vsel %vm5662, %v7421, %v7425
  %v7427 = vshrl.u32 %v6855, 16
  %v7429 = vrot.slane %v7427, 4
  %v7430 = vor.u32 %v7429, %v7425
  %v7431 = vrot.slane %v7430, 4
  %v7433 = vshll.u32 %v6856, 16
  %v7435 = vrot.slane %v7433, 5
  %v7436 = vsel %vm5662, %v7431, %v7435
  %v7437 = vshrl.u32 %v6856, 16
  %v7439 = vrot.slane %v7437, 4
  %v7440 = vor.u32 %v7439, %v7435
  %v7441 = vrot.slane %v7440, 4
  %v7443 = vshll.u32 %v6857, 16
  %v7445 = vrot.slane %v7443, 5
  %v7446 = vsel %vm5662, %v7441, %v7445
  %v7447 = vshrl.u32 %v6857, 16
  %v7449 = vrot.slane %v7447, 4
  %v7450 = vor.u32 %v7449, %v7445
  %v7451 = vrot.slane %v7450, 4
  %v7453 = vshll.u32 %v6858, 16
  %v7455 = vrot.slane %v7453, 5
  %v7456 = vsel %vm5662, %v7451, %v7455
  %v7457 = vshrl.u32 %v6858, 16
  %v7459 = vrot.slane %v7457, 4
  %v7460 = vor.u32 %v7459, %v7455
  %v7461 = vrot.slane %v7460, 4
  %v7463 = vshll.u32 %v6859, 16
  %v7465 = vrot.slane %v7463, 5
  %v7466 = vsel %vm5662, %v7461, %v7465
  %v7467 = vshrl.u32 %v6859, 16
  %v7469 = vrot.slane %v7467, 4
  %v7470 = vor.u32 %v7469, %v7465
  %v7471 = vrot.slane %v7470, 4
  %v7473 = vshll.u32 %v6860, 16
  %v7475 = vrot.slane %v7473, 5
  %v7476 = vsel %vm5662, %v7471, %v7475
  %v7477 = vshrl.u32 %v6860, 16
  %v7479 = vrot.slane %v7477, 4
  %v7480 = vor.u32 %v7479, %v7475
  %v7481 = vrot.slane %v7480, 4
  %v7483 = vshll.u32 %v6861, 16
  %v7485 = vrot.slane %v7483, 5
  %v7486 = vsel %vm5662, %v7481, %v7485
  %v7487 = vshrl.u32 %v6861, 16
  %v7489 = vrot.slane %v7487, 4
  %v7490 = vor.u32 %v7489, %v7485
  %v7491 = vrot.slane %v7490, 4
  %v7493 = vshll.u32 %v6862, 16
  %v7495 = vrot.slane %v7493, 5
  %v7496 = vsel %vm5662, %v7491, %v7495
  %v7497 = vshrl.u32 %v6862, 16
  %v7499 = vrot.slane %v7497, 4
  %v7500 = vor.u32 %v7499, %v7495
  %v7501 = vrot.slane %v7500, 4
  %v7503 = vshll.u32 %v6863, 16
  %v7505 = vrot.slane %v7503, 5
  %v7506 = vsel %vm5662, %v7501, %v7505
  %v7507 = vshrl.u32 %v6863, 16
  %v7509 = vrot.slane %v7507, 4
  %v7510 = vor.u32 %v7509, %v7505
  %v7511 = vrot.slane %v7510, 4
  %v7513 = vshll.u32 %v6864, 16
  %v7515 = vrot.slane %v7513, 5
  %v7516 = vsel %vm5662, %v7511, %v7515
  %v7517 = vshrl.u32 %v6864, 16
  %v7519 = vrot.slane %v7517, 4
  %v7520 = vor.u32 %v7519, %v7515
  %v7521 = vrot.slane %v7520, 4
  %v7523 = vshll.u32 %v6865, 16
  %v7525 = vrot.slane %v7523, 5
  %v7526 = vsel %vm5662, %v7521, %v7525
  %v7527 = vshrl.u32 %v6865, 16
  %v7529 = vrot.slane %v7527, 4
  %v7530 = vor.u32 %v7529, %v7525
  %v7531 = vrot.slane %v7530, 4
  %v7533 = vshll.u32 %v6866, 16
  %v7535 = vrot.slane %v7533, 5
  %v7536 = vsel %vm5662, %v7531, %v7535
  %v7537 = vshrl.u32 %v6866, 16
  %v7539 = vrot.slane %v7537, 4
  %v7540 = vor.u32 %v7539, %v7535
  %v7541 = vrot.slane %v7540, 4
  %v7543 = vshll.u32 %v6867, 16
  %v7545 = vrot.slane %v7543, 5
  %v7546 = vsel %vm5662, %v7541, %v7545
  %v7547 = vshrl.u32 %v6867, 16
  %v7549 = vrot.slane %v7547, 4
  %v7550 = vor.u32 %v7549, %v7545
  %v7551 = vrot.slane %v7550, 4
  %v7553 = vshll.u32 %v6868, 16
  %v7555 = vrot.slane %v7553, 5
  %v7556 = vsel %vm5662, %v7551, %v7555
  %v7557 = vshrl.u32 %v6868, 16
  %v7559 = vrot.slane %v7557, 4
  %v7560 = vor.u32 %v7559, %v7555
  %v7561 = vrot.slane %v7560, 4
  %v7563 = vshll.u32 %v6869, 16
  %v7565 = vrot.slane %v7563, 5
  %v7566 = vsel %vm5662, %v7561, %v7565
  %v7567 = vshrl.u32 %v6869, 16
  %v7569 = vrot.slane %v7567, 4
  %v7570 = vor.u32 %v7569, %v7565
  %v7571 = vrot.slane %v7570, 4
  %v7573 = vshll.u32 %v6870, 16
  %v7575 = vrot.slane %v7573, 5
  %v7576 = vsel %vm5662, %v7571, %v7575
  %v7577 = vshrl.u32 %v6870, 16
  %v7579 = vrot.slane %v7577, 4
  %v7580 = vor.u32 %v7579, %v7575
  %v7581 = vrot.slane %v7580, 4
  %v7583 = vshll.u32 %v6871, 16
  %v7585 = vrot.slane %v7583, 5
  %v7586 = vsel %vm5662, %v7581, %v7585
  %v7587 = vshrl.u32 %v6871, 16
  %v7589 = vrot.slane %v7587, 4
  %v7590 = vor.u32 %v7589, %v7585
  %v7591 = vrot.slane %v7590, 4
  %v7593 = vshll.u32 %v6872, 16
  %v7595 = vrot.slane %v7593, 5
  %v7596 = vsel %vm5662, %v7591, %v7595
  %v7597 = vshrl.u32 %v6872, 16
  %v7599 = vrot.slane %v7597, 4
  %v7600 = vor.u32 %v7599, %v7595
  %v7601 = vrot.slane %v7600, 4
  %v7603 = vshll.u32 %v6873, 16
  %v7605 = vrot.slane %v7603, 5
  %v7606 = vsel %vm5662, %v7601, %v7605
  %v7607 = vshrl.u32 %v6873, 16
  %v7609 = vrot.slane %v7607, 4
  %v7610 = vor.u32 %v7609, %v7605
  %v7611 = vrot.slane %v7610, 4
  %v7613 = vshll.u32 %v6874, 16
  %v7615 = vrot.slane %v7613, 5
  %v7616 = vsel %vm5662, %v7611, %v7615
  %v7617 = vshrl.u32 %v6874, 16
  %v7619 = vrot.slane %v7617, 4
  %v7620 = vor.u32 %v7619, %v7615
  %v7621 = vrot.slane %v7620, 4
  %v7623 = vshll.u32 %v6875, 16
  %v7625 = vrot.slane %v7623, 5
  %v7626 = vsel %vm5662, %v7621, %v7625
  %v7627 = vshrl.u32 %v6875, 16
  %v7629 = vrot.slane %v7627, 4
  %v7630 = vor.u32 %v7629, %v7625
  %v7631 = vrot.slane %v7630, 4
  %v7633 = vshll.u32 %v6876, 16
  %v7635 = vrot.slane %v7633, 5
  %v7636 = vsel %vm5662, %v7631, %v7635
  %v7637 = vshrl.u32 %v6876, 16
  %v7639 = vrot.slane %v7637, 4
  %v7640 = vor.u32 %v7639, %v7635
  %v7641 = vrot.slane %v7640, 4
  %v7643 = vshll.u32 %v6877, 16
  %v7645 = vrot.slane %v7643, 5
  %v7646 = vsel %vm5662, %v7641, %v7645
  %v7647 = vshrl.u32 %v6877, 16
  %v7649 = vrot.slane %v7647, 4
  %v7650 = vor.u32 %v7649, %v7645
  %v7651 = vrot.slane %v7650, 4
  %v7653 = vshll.u32 %v6878, 16
  %v7655 = vrot.slane %v7653, 5
  %v7656 = vsel %vm5662, %v7651, %v7655
  %v7657 = vshrl.u32 %v6878, 16
  %v7659 = vrot.slane %v7657, 4
  %v7660 = vor.u32 %v7659, %v7655
  %v7661 = vrot.slane %v7660, 4
  %v7663 = vshll.u32 %v6879, 16
  %v7665 = vrot.slane %v7663, 5
  %v7666 = vsel %vm5662, %v7661, %v7665
  %v7667 = vshrl.u32 %v6879, 16
  %v7669 = vrot.slane %v7667, 4
  %v7670 = vor.u32 %v7669, %v7665
  %v7671 = vrot.slane %v7670, 4
  %v7673 = vshll.u32 %v6880, 16
  %v7675 = vrot.slane %v7673, 5
  %v7676 = vsel %vm5662, %v7671, %v7675
  %v7677 = vshrl.u32 %v6880, 16
  %v7679 = vrot.slane %v7677, 4
  %v7680 = vor.u32 %v7679, %v7675
  %v7681 = vrot.slane %v7680, 4
  %v7683 = vshll.u32 %v6881, 16
  %v7685 = vrot.slane %v7683, 5
  %v7686 = vsel %vm5662, %v7681, %v7685
  %v7687 = vshrl.u32 %v6881, 16
  %v7689 = vrot.slane %v7687, 4
  %v7690 = vor.u32 %v7689, %v7685
  %v7691 = vrot.slane %v7690, 4
  %v7693 = vshll.u32 %v6882, 16
  %v7695 = vrot.slane %v7693, 5
  %v7696 = vsel %vm5662, %v7691, %v7695
  %7697 = vrot.lane.b32.xlu0 %v6896, 64
  %v7698 = vpop.permute.xlu0 %7697
  %7699 = vrot.lane.b32.xlu0 %v6906, 64
  %v7700 = vpop.permute.xlu0 %7699
  %7701 = vrot.lane.b32.xlu0 %v6916, 64
  %v7702 = vpop.permute.xlu0 %7701
  %7703 = vrot.lane.b32.xlu0 %v6926, 64
  %v7704 = vpop.permute.xlu0 %7703
  %7705 = vrot.lane.b32.xlu0 %v6936, 64
  %v7706 = vpop.permute.xlu0 %7705
  %7707 = vrot.lane.b32.xlu0 %v6946, 64
  %v7708 = vpop.permute.xlu0 %7707
  %7709 = vrot.lane.b32.xlu0 %v6956, 64
  %v7710 = vpop.permute.xlu0 %7709
  %7711 = vrot.lane.b32.xlu0 %v6966, 64
  %v7712 = vpop.permute.xlu0 %7711
  %7713 = vrot.lane.b32.xlu0 %v6976, 64
  %v7714 = vpop.permute.xlu0 %7713
  %7715 = vrot.lane.b32.xlu0 %v6986, 64
  %v7716 = vpop.permute.xlu0 %7715
  %7717 = vrot.lane.b32.xlu0 %v6996, 64
  %v7718 = vpop.permute.xlu0 %7717
  %7719 = vrot.lane.b32.xlu0 %v7006, 64
  %v7720 = vpop.permute.xlu0 %7719
  %7721 = vrot.lane.b32.xlu0 %v7016, 64
  %v7722 = vpop.permute.xlu0 %7721
  %7723 = vrot.lane.b32.xlu0 %v7026, 64
  %v7724 = vpop.permute.xlu0 %7723
  %7725 = vrot.lane.b32.xlu0 %v7036, 64
  %v7726 = vpop.permute.xlu0 %7725
  %7727 = vrot.lane.b32.xlu0 %v7046, 64
  %v7728 = vpop.permute.xlu0 %7727
  %7729 = vrot.lane.b32.xlu0 %v7056, 64
  %v7730 = vpop.permute.xlu0 %7729
  %7731 = vrot.lane.b32.xlu0 %v7066, 64
  %v7732 = vpop.permute.xlu0 %7731
  %7733 = vrot.lane.b32.xlu0 %v7076, 64
  %v7734 = vpop.permute.xlu0 %7733
  %7735 = vrot.lane.b32.xlu0 %v7086, 64
  %v7736 = vpop.permute.xlu0 %7735
  %7737 = vrot.lane.b32.xlu0 %v7096, 64
  %v7738 = vpop.permute.xlu0 %7737
  %7739 = vrot.lane.b32.xlu0 %v7106, 64
  %v7740 = vpop.permute.xlu0 %7739
  %7741 = vrot.lane.b32.xlu0 %v7116, 64
  %v7742 = vpop.permute.xlu0 %7741
  %7743 = vrot.lane.b32.xlu0 %v7126, 64
  %v7744 = vpop.permute.xlu0 %7743
  %7745 = vrot.lane.b32.xlu0 %v7136, 64
  %v7746 = vpop.permute.xlu0 %7745
  %7747 = vrot.lane.b32.xlu0 %v7146, 64
  %v7748 = vpop.permute.xlu0 %7747
  %7749 = vrot.lane.b32.xlu0 %v7156, 64
  %v7750 = vpop.permute.xlu0 %7749
  %7751 = vrot.lane.b32.xlu0 %v7166, 64
  %v7752 = vpop.permute.xlu0 %7751
  %7753 = vrot.lane.b32.xlu0 %v7176, 64
  %v7754 = vpop.permute.xlu0 %7753
  %7755 = vrot.lane.b32.xlu0 %v7186, 64
  %v7756 = vpop.permute.xlu0 %7755
  %7757 = vrot.lane.b32.xlu0 %v7196, 64
  %v7758 = vpop.permute.xlu0 %7757
  %7759 = vrot.lane.b32.xlu0 %v7206, 64
  %v7760 = vpop.permute.xlu0 %7759
  %7761 = vrot.lane.b32.xlu0 %v7216, 64
  %v7762 = vpop.permute.xlu0 %7761
  %7763 = vrot.lane.b32.xlu0 %v7226, 64
  %v7764 = vpop.permute.xlu0 %7763
  %7765 = vrot.lane.b32.xlu0 %v7236, 64
  %v7766 = vpop.permute.xlu0 %7765
  %7767 = vrot.lane.b32.xlu0 %v7246, 64
  %v7768 = vpop.permute.xlu0 %7767
  %7769 = vrot.lane.b32.xlu0 %v7256, 64
  %v7770 = vpop.permute.xlu0 %7769
  %7771 = vrot.lane.b32.xlu0 %v7266, 64
  %v7772 = vpop.permute.xlu0 %7771
  %7773 = vrot.lane.b32.xlu0 %v7276, 64
  %v7774 = vpop.permute.xlu0 %7773
  %7775 = vrot.lane.b32.xlu0 %v7286, 64
  %v7776 = vpop.permute.xlu0 %7775
  %7777 = vrot.lane.b32.xlu0 %v7296, 64
  %v7778 = vpop.permute.xlu0 %7777
  %7779 = vrot.lane.b32.xlu0 %v7306, 64
  %v7780 = vpop.permute.xlu0 %7779
  %7781 = vrot.lane.b32.xlu0 %v7316, 64
  %v7782 = vpop.permute.xlu0 %7781
  %7783 = vrot.lane.b32.xlu0 %v7326, 64
  %v7784 = vpop.permute.xlu0 %7783
  %7785 = vrot.lane.b32.xlu0 %v7336, 64
  %v7786 = vpop.permute.xlu0 %7785
  %7787 = vrot.lane.b32.xlu0 %v7346, 64
  %v7788 = vpop.permute.xlu0 %7787
  %7789 = vrot.lane.b32.xlu0 %v7356, 64
  %v7790 = vpop.permute.xlu0 %7789
  %7791 = vrot.lane.b32.xlu0 %v7366, 64
  %v7792 = vpop.permute.xlu0 %7791
  %7793 = vrot.lane.b32.xlu0 %v7376, 64
  %v7794 = vpop.permute.xlu0 %7793
  %7795 = vrot.lane.b32.xlu0 %v7386, 64
  %v7796 = vpop.permute.xlu0 %7795
  %7797 = vrot.lane.b32.xlu0 %v7396, 64
  %v7798 = vpop.permute.xlu0 %7797
  %7799 = vrot.lane.b32.xlu0 %v7406, 64
  %v7800 = vpop.permute.xlu0 %7799
  %7801 = vrot.lane.b32.xlu0 %v7416, 64
  %v7802 = vpop.permute.xlu0 %7801
  %7803 = vrot.lane.b32.xlu0 %v7426, 64
  %v7804 = vpop.permute.xlu0 %7803
  %7805 = vrot.lane.b32.xlu0 %v7436, 64
  %v7806 = vpop.permute.xlu0 %7805
  %7807 = vrot.lane.b32.xlu0 %v7446, 64
  %v7808 = vpop.permute.xlu0 %7807
  %7809 = vrot.lane.b32.xlu0 %v7456, 64
  %v7810 = vpop.permute.xlu0 %7809
  %7811 = vrot.lane.b32.xlu0 %v7466, 64
  %v7812 = vpop.permute.xlu0 %7811
  %7813 = vrot.lane.b32.xlu0 %v7476, 64
  %v7814 = vpop.permute.xlu0 %7813
  %7815 = vrot.lane.b32.xlu0 %v7486, 64
  %v7816 = vpop.permute.xlu0 %7815
  %7817 = vrot.lane.b32.xlu0 %v7496, 64
  %v7818 = vpop.permute.xlu0 %7817
  %7819 = vrot.lane.b32.xlu0 %v7506, 64
  %v7820 = vpop.permute.xlu0 %7819
  %7821 = vrot.lane.b32.xlu0 %v7516, 64
  %v7822 = vpop.permute.xlu0 %7821
  %7823 = vrot.lane.b32.xlu0 %v7526, 64
  %v7824 = vpop.permute.xlu0 %7823
  %7825 = vrot.lane.b32.xlu0 %v7536, 64
  %v7826 = vpop.permute.xlu0 %7825
  %7827 = vrot.lane.b32.xlu0 %v7546, 64
  %v7828 = vpop.permute.xlu0 %7827
  %7829 = vrot.lane.b32.xlu0 %v7556, 64
  %v7830 = vpop.permute.xlu0 %7829
  %7831 = vrot.lane.b32.xlu0 %v7566, 64
  %v7832 = vpop.permute.xlu0 %7831
  %7833 = vrot.lane.b32.xlu0 %v7576, 64
  %v7834 = vpop.permute.xlu0 %7833
  %7835 = vrot.lane.b32.xlu0 %v7586, 64
  %v7836 = vpop.permute.xlu0 %7835
  %7837 = vrot.lane.b32.xlu0 %v7596, 64
  %v7838 = vpop.permute.xlu0 %7837
  %7839 = vrot.lane.b32.xlu0 %v7606, 64
  %v7840 = vpop.permute.xlu0 %7839
  %7841 = vrot.lane.b32.xlu0 %v7616, 64
  %v7842 = vpop.permute.xlu0 %7841
  %7843 = vrot.lane.b32.xlu0 %v7626, 64
  %v7844 = vpop.permute.xlu0 %7843
  %7845 = vrot.lane.b32.xlu0 %v7636, 64
  %v7846 = vpop.permute.xlu0 %7845
  %7847 = vrot.lane.b32.xlu0 %v7646, 64
  %v7848 = vpop.permute.xlu0 %7847
  %7849 = vrot.lane.b32.xlu0 %v7656, 64
  %v7850 = vpop.permute.xlu0 %7849
  %7851 = vrot.lane.b32.xlu0 %v7666, 64
  %v7852 = vpop.permute.xlu0 %7851
  %7853 = vrot.lane.b32.xlu0 %v7676, 64
  %v7854 = vpop.permute.xlu0 %7853
  %7855 = vrot.lane.b32.xlu0 %v7686, 64
  %v7856 = vpop.permute.xlu0 %7855
  %7857 = vrot.lane.b32.xlu0 %v7696, 64
  %v7858 = vpop.permute.xlu0 %7857
  %7940 = vst.msk [vmem:[#allocation3 + $0x4] sm:$0xf] %vm4194, %v7698
  %7941 = vst.msk [vmem:[#allocation3 + $0x10] sm:$0xf] %vm4194, %v7700
  %7942 = vst.msk [vmem:[#allocation3 + $0x1c] sm:$0xf] %vm4194, %v7702
  %7943 = vst.msk [vmem:[#allocation3 + $0x28] sm:$0xf] %vm4194, %v7704
  %7944 = vst.msk [vmem:[#allocation3 + $0x34] sm:$0xf] %vm4194, %v7706
  %7945 = vst.msk [vmem:[#allocation3 + $0x40] sm:$0xf] %vm4194, %v7708
  %7946 = vst.msk [vmem:[#allocation3 + $0x4c] sm:$0xf] %vm4194, %v7710
  %7947 = vst.msk [vmem:[#allocation3 + $0x58] sm:$0xf] %vm4194, %v7712
  %7948 = vst.msk [vmem:[#allocation3 + $0x64] sm:$0xf] %vm4194, %v7714
  %7949 = vst.msk [vmem:[#allocation3 + $0x70] sm:$0xf] %vm4194, %v7716
  %7950 = vst.msk [vmem:[#allocation3 + $0x7c] sm:$0xf] %vm4194, %v7718
  %7951 = vst.msk [vmem:[#allocation3 + $0x88] sm:$0xf] %vm4194, %v7720
  %7952 = vst.msk [vmem:[#allocation3 + $0x94] sm:$0xf] %vm4194, %v7722
  %7953 = vst.msk [vmem:[#allocation3 + $0xa0] sm:$0xf] %vm4194, %v7724
  %7954 = vst.msk [vmem:[#allocation3 + $0xac] sm:$0xf] %vm4194, %v7726
  %7955 = vst.msk [vmem:[#allocation3 + $0xb8] sm:$0xf] %vm4194, %v7728
  %7956 = vst.msk [vmem:[#allocation3 + $0xc4] sm:$0xf] %vm4194, %v7730
  %7957 = vst.msk [vmem:[#allocation3 + $0xd0] sm:$0xf] %vm4194, %v7732
  %7958 = vst.msk [vmem:[#allocation3 + $0xdc] sm:$0xf] %vm4194, %v7734
  %7959 = vst.msk [vmem:[#allocation3 + $0xe8] sm:$0xf] %vm4194, %v7736
  %7960 = vst.msk [vmem:[#allocation3 + $0xf4] sm:$0xf] %vm4194, %v7738
  %7961 = vst.msk [vmem:[#allocation3 + $0x100] sm:$0xf] %vm4194, %v7740
  %7962 = vst.msk [vmem:[#allocation3 + $0x10c] sm:$0xf] %vm4194, %v7742
  %7963 = vst.msk [vmem:[#allocation3 + $0x118] sm:$0xf] %vm4194, %v7744
  %7964 = vst.msk [vmem:[#allocation3 + $0x124] sm:$0xf] %vm4194, %v7746
  %7965 = vst.msk [vmem:[#allocation3 + $0x130] sm:$0xf] %vm4194, %v7748
  %7966 = vst.msk [vmem:[#allocation3 + $0x13c] sm:$0xf] %vm4194, %v7750
  %7967 = vst.msk [vmem:[#allocation3 + $0x148] sm:$0xf] %vm4194, %v7752
  %7968 = vst.msk [vmem:[#allocation3 + $0x154] sm:$0xf] %vm4194, %v7754
  %7969 = vst.msk [vmem:[#allocation3 + $0x160] sm:$0xf] %vm4194, %v7756
  %7970 = vst.msk [vmem:[#allocation3 + $0x16c] sm:$0xf] %vm4194, %v7758
  %7971 = vst.msk [vmem:[#allocation3 + $0x178] sm:$0xf] %vm4194, %v7760
  %7972 = vst.msk [vmem:[#allocation3 + $0x184] sm:$0xf] %vm4194, %v7762
  %7973 = vst.msk [vmem:[#allocation3 + $0x190] sm:$0xf] %vm4194, %v7764
  %7974 = vst.msk [vmem:[#allocation3 + $0x19c] sm:$0xf] %vm4194, %v7766
  %7975 = vst.msk [vmem:[#allocation3 + $0x1a8] sm:$0xf] %vm4194, %v7768
  %7976 = vst.msk [vmem:[#allocation3 + $0x1b4] sm:$0xf] %vm4194, %v7770
  %7977 = vst.msk [vmem:[#allocation3 + $0x1c0] sm:$0xf] %vm4194, %v7772
  %7978 = vst.msk [vmem:[#allocation3 + $0x1cc] sm:$0xf] %vm4194, %v7774
  %7979 = vst.msk [vmem:[#allocation3 + $0x1d8] sm:$0xf] %vm4194, %v7776
  %7980 = vst.msk [vmem:[#allocation3 + $0x1e4] sm:$0xf] %vm4194, %v7778
  %7981 = vst.msk [vmem:[#allocation3 + $0x1f0] sm:$0xf] %vm4194, %v7780
  %7982 = vst.msk [vmem:[#allocation3 + $0x1fc] sm:$0xf] %vm4194, %v7782
  %7983 = vst.msk [vmem:[#allocation3 + $0x208] sm:$0xf] %vm4194, %v7784
  %7984 = vst.msk [vmem:[#allocation3 + $0x214] sm:$0xf] %vm4194, %v7786
  %7985 = vst.msk [vmem:[#allocation3 + $0x220] sm:$0xf] %vm4194, %v7788
  %7986 = vst.msk [vmem:[#allocation3 + $0x22c] sm:$0xf] %vm4194, %v7790
  %7987 = vst.msk [vmem:[#allocation3 + $0x238] sm:$0xf] %vm4194, %v7792
  %7988 = vst.msk [vmem:[#allocation3 + $0x244] sm:$0xf] %vm4194, %v7794
  %7989 = vst.msk [vmem:[#allocation3 + $0x250] sm:$0xf] %vm4194, %v7796
  %7990 = vst.msk [vmem:[#allocation3 + $0x25c] sm:$0xf] %vm4194, %v7798
  %7991 = vst.msk [vmem:[#allocation3 + $0x268] sm:$0xf] %vm4194, %v7800
  %7992 = vst.msk [vmem:[#allocation3 + $0x274] sm:$0xf] %vm4194, %v7802
  %7993 = vst.msk [vmem:[#allocation3 + $0x280] sm:$0xf] %vm4194, %v7804
  %7994 = vst.msk [vmem:[#allocation3 + $0x28c] sm:$0xf] %vm4194, %v7806
  %7995 = vst.msk [vmem:[#allocation3 + $0x298] sm:$0xf] %vm4194, %v7808
  %7996 = vst.msk [vmem:[#allocation3 + $0x2a4] sm:$0xf] %vm4194, %v7810
  %7997 = vst.msk [vmem:[#allocation3 + $0x2b0] sm:$0xf] %vm4194, %v7812
  %7998 = vst.msk [vmem:[#allocation3 + $0x2bc] sm:$0xf] %vm4194, %v7814
  %7999 = vst.msk [vmem:[#allocation3 + $0x2c8] sm:$0xf] %vm4194, %v7816
  %8000 = vst.msk [vmem:[#allocation3 + $0x2d4] sm:$0xf] %vm4194, %v7818
  %8001 = vst.msk [vmem:[#allocation3 + $0x2e0] sm:$0xf] %vm4194, %v7820
  %8002 = vst.msk [vmem:[#allocation3 + $0x2ec] sm:$0xf] %vm4194, %v7822
  %8003 = vst.msk [vmem:[#allocation3 + $0x2f8] sm:$0xf] %vm4194, %v7824
  %8004 = vst.msk [vmem:[#allocation3 + $0x304] sm:$0xf] %vm4194, %v7826
  %8005 = vst.msk [vmem:[#allocation3 + $0x310] sm:$0xf] %vm4194, %v7828
  %8006 = vst.msk [vmem:[#allocation3 + $0x31c] sm:$0xf] %vm4194, %v7830
  %8007 = vst.msk [vmem:[#allocation3 + $0x328] sm:$0xf] %vm4194, %v7832
  %8008 = vst.msk [vmem:[#allocation3 + $0x334] sm:$0xf] %vm4194, %v7834
  %8009 = vst.msk [vmem:[#allocation3 + $0x340] sm:$0xf] %vm4194, %v7836
  %8010 = vst.msk [vmem:[#allocation3 + $0x34c] sm:$0xf] %vm4194, %v7838
  %8011 = vst.msk [vmem:[#allocation3 + $0x358] sm:$0xf] %vm4194, %v7840
  %8012 = vst.msk [vmem:[#allocation3 + $0x364] sm:$0xf] %vm4194, %v7842
  %8013 = vst.msk [vmem:[#allocation3 + $0x370] sm:$0xf] %vm4194, %v7844
  %8014 = vst.msk [vmem:[#allocation3 + $0x37c] sm:$0xf] %vm4194, %v7846
  %8015 = vst.msk [vmem:[#allocation3 + $0x388] sm:$0xf] %vm4194, %v7848
  %8016 = vst.msk [vmem:[#allocation3 + $0x394] sm:$0xf] %vm4194, %v7850
  %8017 = vst.msk [vmem:[#allocation3 + $0x3a0] sm:$0xf] %vm4194, %v7852
  %8018 = vst.msk [vmem:[#allocation3 + $0x3ac] sm:$0xf] %vm4194, %v7854
  %8019 = vst.msk [vmem:[#allocation3 + $0x3b8] sm:$0xf] %vm4194, %v7856
  %8020 = vst.msk [vmem:[#allocation3 + $0x3c4] sm:$0xf] %vm4194, %v7858
  %v8021 = vld [vmem:[#allocation2 + $0x18] sm:$0xe]
  %v8022 = vld [vmem:[#allocation2 + $0x1c] sm:$0xf]
  %v8023 = vld [vmem:[#allocation2 + $0x20] sm:$0xf]
  %v8024 = vld [vmem:[#allocation2 + $0x24] sm:$0xf]
  %v8025 = vld [vmem:[#allocation2 + $0x28] sm:$0xf]
  %v8026 = vld [vmem:[#allocation2 + $0x2c] sm:$0xf]
  %v8027 = vld [vmem:[#allocation2 + $0x30] sm:$0xf]
  %v8028 = vld [vmem:[#allocation2 + $0x34] sm:$0xf]
  %v8029 = vld [vmem:[#allocation2 + $0x38] sm:$0xf]
  %v8030 = vld [vmem:[#allocation2 + $0x3c] sm:$0xf]
  %v8031 = vld [vmem:[#allocation2 + $0x40] sm:$0xf]
  %v8032 = vld [vmem:[#allocation2 + $0x44] sm:$0xf]
  %v8033 = vld [vmem:[#allocation2 + $0x48] sm:$0xf]
  %v8034 = vld [vmem:[#allocation2 + $0x4c] sm:$0xf]
  %v8035 = vld [vmem:[#allocation2 + $0x50] sm:$0xf]
  %v8036 = vld [vmem:[#allocation2 + $0x54] sm:$0xf]
  %v8037 = vld [vmem:[#allocation2 + $0x58] sm:$0xf]
  %v8038 = vld [vmem:[#allocation2 + $0x5c] sm:$0xf]
  %v8039 = vld [vmem:[#allocation2 + $0x60] sm:$0xf]
  %v8040 = vld [vmem:[#allocation2 + $0x64] sm:$0xf]
  %v8041 = vld [vmem:[#allocation2 + $0x68] sm:$0xf]
  %v8042 = vld [vmem:[#allocation2 + $0x6c] sm:$0xf]
  %v8043 = vld [vmem:[#allocation2 + $0x70] sm:$0xf]
  %v8044 = vld [vmem:[#allocation2 + $0x74] sm:$0xf]
  %v8045 = vld [vmem:[#allocation2 + $0x78] sm:$0xf]
  %v8046 = vld [vmem:[#allocation2 + $0x7c] sm:$0xf]
  %v8047 = vld [vmem:[#allocation2 + $0x80] sm:$0xf]
  %v8048 = vld [vmem:[#allocation2 + $0x84] sm:$0xf]
  %v8049 = vld [vmem:[#allocation2 + $0x88] sm:$0xf]
  %v8050 = vld [vmem:[#allocation2 + $0x8c] sm:$0xf]
  %v8051 = vld [vmem:[#allocation2 + $0x90] sm:$0xf]
  %v8052 = vld [vmem:[#allocation2 + $0x94] sm:$0xf]
  %v8053 = vld [vmem:[#allocation2 + $0x98] sm:$0xf]
  %v8054 = vld [vmem:[#allocation2 + $0x9c] sm:$0xf]
  %v8055 = vld [vmem:[#allocation2 + $0xa0] sm:$0xf]
  %v8056 = vld [vmem:[#allocation2 + $0xa4] sm:$0xf]
  %v8057 = vld [vmem:[#allocation2 + $0xa8] sm:$0xf]
  %v8058 = vld [vmem:[#allocation2 + $0xac] sm:$0xf]
  %v8059 = vld [vmem:[#allocation2 + $0xb0] sm:$0xf]
  %v8060 = vld [vmem:[#allocation2 + $0xb4] sm:$0xf]
  %v8061 = vld [vmem:[#allocation2 + $0xb8] sm:$0xf]
  %v8062 = vld [vmem:[#allocation2 + $0xbc] sm:$0xf]
  %v8063 = vld [vmem:[#allocation2 + $0xc0] sm:$0xf]
  %v8064 = vld [vmem:[#allocation2 + $0xc4] sm:$0xf]
  %v8065 = vld [vmem:[#allocation2 + $0xc8] sm:$0xf]
  %v8066 = vld [vmem:[#allocation2 + $0xcc] sm:$0xf]
  %v8067 = vld [vmem:[#allocation2 + $0xd0] sm:$0xf]
  %v8068 = vld [vmem:[#allocation2 + $0xd4] sm:$0xf]
  %v8069 = vld [vmem:[#allocation2 + $0xd8] sm:$0xf]
  %v8070 = vld [vmem:[#allocation2 + $0xdc] sm:$0xf]
  %v8071 = vld [vmem:[#allocation2 + $0xe0] sm:$0xf]
  %v8072 = vld [vmem:[#allocation2 + $0xe4] sm:$0xf]
  %v8073 = vld [vmem:[#allocation2 + $0xe8] sm:$0xf]
  %v8074 = vld [vmem:[#allocation2 + $0xec] sm:$0xf]
  %v8075 = vld [vmem:[#allocation2 + $0xf0] sm:$0xf]
  %v8076 = vld [vmem:[#allocation2 + $0xf4] sm:$0xf]
  %v8077 = vld [vmem:[#allocation2 + $0xf8] sm:$0xf]
  %v8078 = vld [vmem:[#allocation2 + $0xfc] sm:$0xf]
  %v8079 = vld [vmem:[#allocation2 + $0x100] sm:$0xf]
  %v8080 = vld [vmem:[#allocation2 + $0x104] sm:$0xf]
  %v8081 = vld [vmem:[#allocation2 + $0x108] sm:$0xf]
  %v8082 = vld [vmem:[#allocation2 + $0x10c] sm:$0xf]
  %v8083 = vld [vmem:[#allocation2 + $0x110] sm:$0xf]
  %v8084 = vld [vmem:[#allocation2 + $0x114] sm:$0xf]
  %v8085 = vld [vmem:[#allocation2 + $0x118] sm:$0xf]
  %v8086 = vld [vmem:[#allocation2 + $0x11c] sm:$0xf]
  %v8087 = vld [vmem:[#allocation2 + $0x120] sm:$0xf]
  %v8088 = vld [vmem:[#allocation2 + $0x124] sm:$0xf]
  %v8089 = vld [vmem:[#allocation2 + $0x128] sm:$0xf]
  %v8090 = vld [vmem:[#allocation2 + $0x12c] sm:$0xf]
  %v8091 = vld [vmem:[#allocation2 + $0x130] sm:$0xf]
  %v8092 = vld [vmem:[#allocation2 + $0x134] sm:$0xf]
  %v8093 = vld [vmem:[#allocation2 + $0x138] sm:$0xf]
  %v8094 = vld [vmem:[#allocation2 + $0x13c] sm:$0xf]
  %v8095 = vld [vmem:[#allocation2 + $0x140] sm:$0xf]
  %v8096 = vld [vmem:[#allocation2 + $0x144] sm:$0xf]
  %v8097 = vld [vmem:[#allocation2 + $0x148] sm:$0xf]
  %v8098 = vld [vmem:[#allocation2 + $0x14c] sm:$0xf]
  %v8099 = vld [vmem:[#allocation2 + $0x150] sm:$0xf]
  %v8100 = vld [vmem:[#allocation2 + $0x154] sm:$0xf]
  %v8101 = vld [vmem:[#allocation2 + $0x158] sm:$0xf]
  %v8102 = vld [vmem:[#allocation2 + $0x15c] sm:$0x1]
  %vm8185 = vcmask 1042432
  %vm8186 = vcmask 1046532
  %vm8187 = vmor %vm8185, %vm8186
  %v8188 = vrot.slane %v8021, 5
  %v8189 = vrot.slane %v8188, 4
  %v8190 = vrot.slane %v8022, 5
  %v8191 = vsel %vm8187, %v8189, %v8190
  %v8192 = vrot.slane %v8190, 4
  %v8193 = vrot.slane %v8023, 5
  %v8194 = vsel %vm8187, %v8192, %v8193
  %v8195 = vrot.slane %v8193, 4
  %v8196 = vrot.slane %v8024, 5
  %v8197 = vsel %vm8187, %v8195, %v8196
  %v8198 = vrot.slane %v8196, 4
  %v8199 = vrot.slane %v8025, 5
  %v8200 = vsel %vm8187, %v8198, %v8199
  %v8201 = vrot.slane %v8199, 4
  %v8202 = vrot.slane %v8026, 5
  %v8203 = vsel %vm8187, %v8201, %v8202
  %v8204 = vrot.slane %v8202, 4
  %v8205 = vrot.slane %v8027, 5
  %v8206 = vsel %vm8187, %v8204, %v8205
  %v8207 = vrot.slane %v8205, 4
  %v8208 = vrot.slane %v8028, 5
  %v8209 = vsel %vm8187, %v8207, %v8208
  %v8210 = vrot.slane %v8208, 4
  %v8211 = vrot.slane %v8029, 5
  %v8212 = vsel %vm8187, %v8210, %v8211
  %v8213 = vrot.slane %v8211, 4
  %v8214 = vrot.slane %v8030, 5
  %v8215 = vsel %vm8187, %v8213, %v8214
  %v8216 = vrot.slane %v8214, 4
  %v8217 = vrot.slane %v8031, 5
  %v8218 = vsel %vm8187, %v8216, %v8217
  %v8219 = vrot.slane %v8217, 4
  %v8220 = vrot.slane %v8032, 5
  %v8221 = vsel %vm8187, %v8219, %v8220
  %v8222 = vrot.slane %v8220, 4
  %v8223 = vrot.slane %v8033, 5
  %v8224 = vsel %vm8187, %v8222, %v8223
  %v8225 = vrot.slane %v8223, 4
  %v8226 = vrot.slane %v8034, 5
  %v8227 = vsel %vm8187, %v8225, %v8226
  %v8228 = vrot.slane %v8226, 4
  %v8229 = vrot.slane %v8035, 5
  %v8230 = vsel %vm8187, %v8228, %v8229
  %v8231 = vrot.slane %v8229, 4
  %v8232 = vrot.slane %v8036, 5
  %v8233 = vsel %vm8187, %v8231, %v8232
  %v8234 = vrot.slane %v8232, 4
  %v8235 = vrot.slane %v8037, 5
  %v8236 = vsel %vm8187, %v8234, %v8235
  %v8237 = vrot.slane %v8235, 4
  %v8238 = vrot.slane %v8038, 5
  %v8239 = vsel %vm8187, %v8237, %v8238
  %v8240 = vrot.slane %v8238, 4
  %v8241 = vrot.slane %v8039, 5
  %v8242 = vsel %vm8187, %v8240, %v8241
  %v8243 = vrot.slane %v8241, 4
  %v8244 = vrot.slane %v8040, 5
  %v8245 = vsel %vm8187, %v8243, %v8244
  %v8246 = vrot.slane %v8244, 4
  %v8247 = vrot.slane %v8041, 5
  %v8248 = vsel %vm8187, %v8246, %v8247
  %v8249 = vrot.slane %v8247, 4
  %v8250 = vrot.slane %v8042, 5
  %v8251 = vsel %vm8187, %v8249, %v8250
  %v8252 = vrot.slane %v8250, 4
  %v8253 = vrot.slane %v8043, 5
  %v8254 = vsel %vm8187, %v8252, %v8253
  %v8255 = vrot.slane %v8253, 4
  %v8256 = vrot.slane %v8044, 5
  %v8257 = vsel %vm8187, %v8255, %v8256
  %v8258 = vrot.slane %v8256, 4
  %v8259 = vrot.slane %v8045, 5
  %v8260 = vsel %vm8187, %v8258, %v8259
  %v8261 = vrot.slane %v8259, 4
  %v8262 = vrot.slane %v8046, 5
  %v8263 = vsel %vm8187, %v8261, %v8262
  %v8264 = vrot.slane %v8262, 4
  %v8265 = vrot.slane %v8047, 5
  %v8266 = vsel %vm8187, %v8264, %v8265
  %v8267 = vrot.slane %v8265, 4
  %v8268 = vrot.slane %v8048, 5
  %v8269 = vsel %vm8187, %v8267, %v8268
  %v8270 = vrot.slane %v8268, 4
  %v8271 = vrot.slane %v8049, 5
  %v8272 = vsel %vm8187, %v8270, %v8271
  %v8273 = vrot.slane %v8271, 4
  %v8274 = vrot.slane %v8050, 5
  %v8275 = vsel %vm8187, %v8273, %v8274
  %v8276 = vrot.slane %v8274, 4
  %v8277 = vrot.slane %v8051, 5
  %v8278 = vsel %vm8187, %v8276, %v8277
  %v8279 = vrot.slane %v8277, 4
  %v8280 = vrot.slane %v8052, 5
  %v8281 = vsel %vm8187, %v8279, %v8280
  %v8282 = vrot.slane %v8280, 4
  %v8283 = vrot.slane %v8053, 5
  %v8284 = vsel %vm8187, %v8282, %v8283
  %v8285 = vrot.slane %v8283, 4
  %v8286 = vrot.slane %v8054, 5
  %v8287 = vsel %vm8187, %v8285, %v8286
  %v8288 = vrot.slane %v8286, 4
  %v8289 = vrot.slane %v8055, 5
  %v8290 = vsel %vm8187, %v8288, %v8289
  %v8291 = vrot.slane %v8289, 4
  %v8292 = vrot.slane %v8056, 5
  %v8293 = vsel %vm8187, %v8291, %v8292
  %v8294 = vrot.slane %v8292, 4
  %v8295 = vrot.slane %v8057, 5
  %v8296 = vsel %vm8187, %v8294, %v8295
  %v8297 = vrot.slane %v8295, 4
  %v8298 = vrot.slane %v8058, 5
  %v8299 = vsel %vm8187, %v8297, %v8298
  %v8300 = vrot.slane %v8298, 4
  %v8301 = vrot.slane %v8059, 5
  %v8302 = vsel %vm8187, %v8300, %v8301
  %v8303 = vrot.slane %v8301, 4
  %v8304 = vrot.slane %v8060, 5
  %v8305 = vsel %vm8187, %v8303, %v8304
  %v8306 = vrot.slane %v8304, 4
  %v8307 = vrot.slane %v8061, 5
  %v8308 = vsel %vm8187, %v8306, %v8307
  %v8309 = vrot.slane %v8307, 4
  %v8310 = vrot.slane %v8062, 5
  %v8311 = vsel %vm8187, %v8309, %v8310
  %v8312 = vrot.slane %v8310, 4
  %v8313 = vrot.slane %v8063, 5
  %v8314 = vsel %vm8187, %v8312, %v8313
  %v8315 = vrot.slane %v8313, 4
  %v8316 = vrot.slane %v8064, 5
  %v8317 = vsel %vm8187, %v8315, %v8316
  %v8318 = vrot.slane %v8316, 4
  %v8319 = vrot.slane %v8065, 5
  %v8320 = vsel %vm8187, %v8318, %v8319
  %v8321 = vrot.slane %v8319, 4
  %v8322 = vrot.slane %v8066, 5
  %v8323 = vsel %vm8187, %v8321, %v8322
  %v8324 = vrot.slane %v8322, 4
  %v8325 = vrot.slane %v8067, 5
  %v8326 = vsel %vm8187, %v8324, %v8325
  %v8327 = vrot.slane %v8325, 4
  %v8328 = vrot.slane %v8068, 5
  %v8329 = vsel %vm8187, %v8327, %v8328
  %v8330 = vrot.slane %v8328, 4
  %v8331 = vrot.slane %v8069, 5
  %v8332 = vsel %vm8187, %v8330, %v8331
  %v8333 = vrot.slane %v8331, 4
  %v8334 = vrot.slane %v8070, 5
  %v8335 = vsel %vm8187, %v8333, %v8334
  %v8336 = vrot.slane %v8334, 4
  %v8337 = vrot.slane %v8071, 5
  %v8338 = vsel %vm8187, %v8336, %v8337
  %v8339 = vrot.slane %v8337, 4
  %v8340 = vrot.slane %v8072, 5
  %v8341 = vsel %vm8187, %v8339, %v8340
  %v8342 = vrot.slane %v8340, 4
  %v8343 = vrot.slane %v8073, 5
  %v8344 = vsel %vm8187, %v8342, %v8343
  %v8345 = vrot.slane %v8343, 4
  %v8346 = vrot.slane %v8074, 5
  %v8347 = vsel %vm8187, %v8345, %v8346
  %v8348 = vrot.slane %v8346, 4
  %v8349 = vrot.slane %v8075, 5
  %v8350 = vsel %vm8187, %v8348, %v8349
  %v8351 = vrot.slane %v8349, 4
  %v8352 = vrot.slane %v8076, 5
  %v8353 = vsel %vm8187, %v8351, %v8352
  %v8354 = vrot.slane %v8352, 4
  %v8355 = vrot.slane %v8077, 5
  %v8356 = vsel %vm8187, %v8354, %v8355
  %v8357 = vrot.slane %v8355, 4
  %v8358 = vrot.slane %v8078, 5
  %v8359 = vsel %vm8187, %v8357, %v8358
  %v8360 = vrot.slane %v8358, 4
  %v8361 = vrot.slane %v8079, 5
  %v8362 = vsel %vm8187, %v8360, %v8361
  %v8363 = vrot.slane %v8361, 4
  %v8364 = vrot.slane %v8080, 5
  %v8365 = vsel %vm8187, %v8363, %v8364
  %v8366 = vrot.slane %v8364, 4
  %v8367 = vrot.slane %v8081, 5
  %v8368 = vsel %vm8187, %v8366, %v8367
  %v8369 = vrot.slane %v8367, 4
  %v8370 = vrot.slane %v8082, 5
  %v8371 = vsel %vm8187, %v8369, %v8370
  %v8372 = vrot.slane %v8370, 4
  %v8373 = vrot.slane %v8083, 5
  %v8374 = vsel %vm8187, %v8372, %v8373
  %v8375 = vrot.slane %v8373, 4
  %v8376 = vrot.slane %v8084, 5
  %v8377 = vsel %vm8187, %v8375, %v8376
  %v8378 = vrot.slane %v8376, 4
  %v8379 = vrot.slane %v8085, 5
  %v8380 = vsel %vm8187, %v8378, %v8379
  %v8381 = vrot.slane %v8379, 4
  %v8382 = vrot.slane %v8086, 5
  %v8383 = vsel %vm8187, %v8381, %v8382
  %v8384 = vrot.slane %v8382, 4
  %v8385 = vrot.slane %v8087, 5
  %v8386 = vsel %vm8187, %v8384, %v8385
  %v8387 = vrot.slane %v8385, 4
  %v8388 = vrot.slane %v8088, 5
  %v8389 = vsel %vm8187, %v8387, %v8388
  %v8390 = vrot.slane %v8388, 4
  %v8391 = vrot.slane %v8089, 5
  %v8392 = vsel %vm8187, %v8390, %v8391
  %v8393 = vrot.slane %v8391, 4
  %v8394 = vrot.slane %v8090, 5
  %v8395 = vsel %vm8187, %v8393, %v8394
  %v8396 = vrot.slane %v8394, 4
  %v8397 = vrot.slane %v8091, 5
  %v8398 = vsel %vm8187, %v8396, %v8397
  %v8399 = vrot.slane %v8397, 4
  %v8400 = vrot.slane %v8092, 5
  %v8401 = vsel %vm8187, %v8399, %v8400
  %v8402 = vrot.slane %v8400, 4
  %v8403 = vrot.slane %v8093, 5
  %v8404 = vsel %vm8187, %v8402, %v8403
  %v8405 = vrot.slane %v8403, 4
  %v8406 = vrot.slane %v8094, 5
  %v8407 = vsel %vm8187, %v8405, %v8406
  %v8408 = vrot.slane %v8406, 4
  %v8409 = vrot.slane %v8095, 5
  %v8410 = vsel %vm8187, %v8408, %v8409
  %v8411 = vrot.slane %v8409, 4
  %v8412 = vrot.slane %v8096, 5
  %v8413 = vsel %vm8187, %v8411, %v8412
  %v8414 = vrot.slane %v8412, 4
  %v8415 = vrot.slane %v8097, 5
  %v8416 = vsel %vm8187, %v8414, %v8415
  %v8417 = vrot.slane %v8415, 4
  %v8418 = vrot.slane %v8098, 5
  %v8419 = vsel %vm8187, %v8417, %v8418
  %v8420 = vrot.slane %v8418, 4
  %v8421 = vrot.slane %v8099, 5
  %v8422 = vsel %vm8187, %v8420, %v8421
  %v8423 = vrot.slane %v8421, 4
  %v8424 = vrot.slane %v8100, 5
  %v8425 = vsel %vm8187, %v8423, %v8424
  %v8426 = vrot.slane %v8424, 4
  %v8427 = vrot.slane %v8101, 5
  %v8428 = vsel %vm8187, %v8426, %v8427
  %v8429 = vrot.slane %v8427, 4
  %v8430 = vrot.slane %v8102, 5
  %v8431 = vsel %vm8187, %v8429, %v8430
  %8432 = vrot.lane.b32.xlu0 %v8191, 96
  %v8433 = vpop.permute.xlu0 %8432
  %8434 = vrot.lane.b32.xlu0 %v8194, 96
  %v8435 = vpop.permute.xlu0 %8434
  %8436 = vrot.lane.b32.xlu0 %v8197, 96
  %v8437 = vpop.permute.xlu0 %8436
  %8438 = vrot.lane.b32.xlu0 %v8200, 96
  %v8439 = vpop.permute.xlu0 %8438
  %8440 = vrot.lane.b32.xlu0 %v8203, 96
  %v8441 = vpop.permute.xlu0 %8440
  %8442 = vrot.lane.b32.xlu0 %v8206, 96
  %v8443 = vpop.permute.xlu0 %8442
  %8444 = vrot.lane.b32.xlu0 %v8209, 96
  %v8445 = vpop.permute.xlu0 %8444
  %8446 = vrot.lane.b32.xlu0 %v8212, 96
  %v8447 = vpop.permute.xlu0 %8446
  %8448 = vrot.lane.b32.xlu0 %v8215, 96
  %v8449 = vpop.permute.xlu0 %8448
  %8450 = vrot.lane.b32.xlu0 %v8218, 96
  %v8451 = vpop.permute.xlu0 %8450
  %8452 = vrot.lane.b32.xlu0 %v8221, 96
  %v8453 = vpop.permute.xlu0 %8452
  %8454 = vrot.lane.b32.xlu0 %v8224, 96
  %v8455 = vpop.permute.xlu0 %8454
  %8456 = vrot.lane.b32.xlu0 %v8227, 96
  %v8457 = vpop.permute.xlu0 %8456
  %8458 = vrot.lane.b32.xlu0 %v8230, 96
  %v8459 = vpop.permute.xlu0 %8458
  %8460 = vrot.lane.b32.xlu0 %v8233, 96
  %v8461 = vpop.permute.xlu0 %8460
  %8462 = vrot.lane.b32.xlu0 %v8236, 96
  %v8463 = vpop.permute.xlu0 %8462
  %8464 = vrot.lane.b32.xlu0 %v8239, 96
  %v8465 = vpop.permute.xlu0 %8464
  %8466 = vrot.lane.b32.xlu0 %v8242, 96
  %v8467 = vpop.permute.xlu0 %8466
  %8468 = vrot.lane.b32.xlu0 %v8245, 96
  %v8469 = vpop.permute.xlu0 %8468
  %8470 = vrot.lane.b32.xlu0 %v8248, 96
  %v8471 = vpop.permute.xlu0 %8470
  %8472 = vrot.lane.b32.xlu0 %v8251, 96
  %v8473 = vpop.permute.xlu0 %8472
  %8474 = vrot.lane.b32.xlu0 %v8254, 96
  %v8475 = vpop.permute.xlu0 %8474
  %8476 = vrot.lane.b32.xlu0 %v8257, 96
  %v8477 = vpop.permute.xlu0 %8476
  %8478 = vrot.lane.b32.xlu0 %v8260, 96
  %v8479 = vpop.permute.xlu0 %8478
  %8480 = vrot.lane.b32.xlu0 %v8263, 96
  %v8481 = vpop.permute.xlu0 %8480
  %8482 = vrot.lane.b32.xlu0 %v8266, 96
  %v8483 = vpop.permute.xlu0 %8482
  %8484 = vrot.lane.b32.xlu0 %v8269, 96
  %v8485 = vpop.permute.xlu0 %8484
  %8486 = vrot.lane.b32.xlu0 %v8272, 96
  %v8487 = vpop.permute.xlu0 %8486
  %8488 = vrot.lane.b32.xlu0 %v8275, 96
  %v8489 = vpop.permute.xlu0 %8488
  %8490 = vrot.lane.b32.xlu0 %v8278, 96
  %v8491 = vpop.permute.xlu0 %8490
  %8492 = vrot.lane.b32.xlu0 %v8281, 96
  %v8493 = vpop.permute.xlu0 %8492
  %8494 = vrot.lane.b32.xlu0 %v8284, 96
  %v8495 = vpop.permute.xlu0 %8494
  %8496 = vrot.lane.b32.xlu0 %v8287, 96
  %v8497 = vpop.permute.xlu0 %8496
  %8498 = vrot.lane.b32.xlu0 %v8290, 96
  %v8499 = vpop.permute.xlu0 %8498
  %8500 = vrot.lane.b32.xlu0 %v8293, 96
  %v8501 = vpop.permute.xlu0 %8500
  %8502 = vrot.lane.b32.xlu0 %v8296, 96
  %v8503 = vpop.permute.xlu0 %8502
  %8504 = vrot.lane.b32.xlu0 %v8299, 96
  %v8505 = vpop.permute.xlu0 %8504
  %8506 = vrot.lane.b32.xlu0 %v8302, 96
  %v8507 = vpop.permute.xlu0 %8506
  %8508 = vrot.lane.b32.xlu0 %v8305, 96
  %v8509 = vpop.permute.xlu0 %8508
  %8510 = vrot.lane.b32.xlu0 %v8308, 96
  %v8511 = vpop.permute.xlu0 %8510
  %8512 = vrot.lane.b32.xlu0 %v8311, 96
  %v8513 = vpop.permute.xlu0 %8512
  %8514 = vrot.lane.b32.xlu0 %v8314, 96
  %v8515 = vpop.permute.xlu0 %8514
  %8516 = vrot.lane.b32.xlu0 %v8317, 96
  %v8517 = vpop.permute.xlu0 %8516
  %8518 = vrot.lane.b32.xlu0 %v8320, 96
  %v8519 = vpop.permute.xlu0 %8518
  %8520 = vrot.lane.b32.xlu0 %v8323, 96
  %v8521 = vpop.permute.xlu0 %8520
  %8522 = vrot.lane.b32.xlu0 %v8326, 96
  %v8523 = vpop.permute.xlu0 %8522
  %8524 = vrot.lane.b32.xlu0 %v8329, 96
  %v8525 = vpop.permute.xlu0 %8524
  %8526 = vrot.lane.b32.xlu0 %v8332, 96
  %v8527 = vpop.permute.xlu0 %8526
  %8528 = vrot.lane.b32.xlu0 %v8335, 96
  %v8529 = vpop.permute.xlu0 %8528
  %8530 = vrot.lane.b32.xlu0 %v8338, 96
  %v8531 = vpop.permute.xlu0 %8530
  %8532 = vrot.lane.b32.xlu0 %v8341, 96
  %v8533 = vpop.permute.xlu0 %8532
  %8534 = vrot.lane.b32.xlu0 %v8344, 96
  %v8535 = vpop.permute.xlu0 %8534
  %8536 = vrot.lane.b32.xlu0 %v8347, 96
  %v8537 = vpop.permute.xlu0 %8536
  %8538 = vrot.lane.b32.xlu0 %v8350, 96
  %v8539 = vpop.permute.xlu0 %8538
  %8540 = vrot.lane.b32.xlu0 %v8353, 96
  %v8541 = vpop.permute.xlu0 %8540
  %8542 = vrot.lane.b32.xlu0 %v8356, 96
  %v8543 = vpop.permute.xlu0 %8542
  %8544 = vrot.lane.b32.xlu0 %v8359, 96
  %v8545 = vpop.permute.xlu0 %8544
  %8546 = vrot.lane.b32.xlu0 %v8362, 96
  %v8547 = vpop.permute.xlu0 %8546
  %8548 = vrot.lane.b32.xlu0 %v8365, 96
  %v8549 = vpop.permute.xlu0 %8548
  %8550 = vrot.lane.b32.xlu0 %v8368, 96
  %v8551 = vpop.permute.xlu0 %8550
  %8552 = vrot.lane.b32.xlu0 %v8371, 96
  %v8553 = vpop.permute.xlu0 %8552
  %8554 = vrot.lane.b32.xlu0 %v8374, 96
  %v8555 = vpop.permute.xlu0 %8554
  %8556 = vrot.lane.b32.xlu0 %v8377, 96
  %v8557 = vpop.permute.xlu0 %8556
  %8558 = vrot.lane.b32.xlu0 %v8380, 96
  %v8559 = vpop.permute.xlu0 %8558
  %8560 = vrot.lane.b32.xlu0 %v8383, 96
  %v8561 = vpop.permute.xlu0 %8560
  %8562 = vrot.lane.b32.xlu0 %v8386, 96
  %v8563 = vpop.permute.xlu0 %8562
  %8564 = vrot.lane.b32.xlu0 %v8389, 96
  %v8565 = vpop.permute.xlu0 %8564
  %8566 = vrot.lane.b32.xlu0 %v8392, 96
  %v8567 = vpop.permute.xlu0 %8566
  %8568 = vrot.lane.b32.xlu0 %v8395, 96
  %v8569 = vpop.permute.xlu0 %8568
  %8570 = vrot.lane.b32.xlu0 %v8398, 96
  %v8571 = vpop.permute.xlu0 %8570
  %8572 = vrot.lane.b32.xlu0 %v8401, 96
  %v8573 = vpop.permute.xlu0 %8572
  %8574 = vrot.lane.b32.xlu0 %v8404, 96
  %v8575 = vpop.permute.xlu0 %8574
  %8576 = vrot.lane.b32.xlu0 %v8407, 96
  %v8577 = vpop.permute.xlu0 %8576
  %8578 = vrot.lane.b32.xlu0 %v8410, 96
  %v8579 = vpop.permute.xlu0 %8578
  %8580 = vrot.lane.b32.xlu0 %v8413, 96
  %v8581 = vpop.permute.xlu0 %8580
  %8582 = vrot.lane.b32.xlu0 %v8416, 96
  %v8583 = vpop.permute.xlu0 %8582
  %8584 = vrot.lane.b32.xlu0 %v8419, 96
  %v8585 = vpop.permute.xlu0 %8584
  %8586 = vrot.lane.b32.xlu0 %v8422, 96
  %v8587 = vpop.permute.xlu0 %8586
  %8588 = vrot.lane.b32.xlu0 %v8425, 96
  %v8589 = vpop.permute.xlu0 %8588
  %8590 = vrot.lane.b32.xlu0 %v8428, 96
  %v8591 = vpop.permute.xlu0 %8590
  %8592 = vrot.lane.b32.xlu0 %v8431, 96
  %v8593 = vpop.permute.xlu0 %8592
  %8675 = vst.msk [vmem:[#allocation3 + $0x4] sm:$0xf] %vm5334, %v8433
  %8676 = vst.msk [vmem:[#allocation3 + $0x10] sm:$0xf] %vm5334, %v8435
  %8677 = vst.msk [vmem:[#allocation3 + $0x1c] sm:$0xf] %vm5334, %v8437
  %8678 = vst.msk [vmem:[#allocation3 + $0x28] sm:$0xf] %vm5334, %v8439
  %8679 = vst.msk [vmem:[#allocation3 + $0x34] sm:$0xf] %vm5334, %v8441
  %8680 = vst.msk [vmem:[#allocation3 + $0x40] sm:$0xf] %vm5334, %v8443
  %8681 = vst.msk [vmem:[#allocation3 + $0x4c] sm:$0xf] %vm5334, %v8445
  %8682 = vst.msk [vmem:[#allocation3 + $0x58] sm:$0xf] %vm5334, %v8447
  %8683 = vst.msk [vmem:[#allocation3 + $0x64] sm:$0xf] %vm5334, %v8449
  %8684 = vst.msk [vmem:[#allocation3 + $0x70] sm:$0xf] %vm5334, %v8451
  %8685 = vst.msk [vmem:[#allocation3 + $0x7c] sm:$0xf] %vm5334, %v8453
  %8686 = vst.msk [vmem:[#allocation3 + $0x88] sm:$0xf] %vm5334, %v8455
  %8687 = vst.msk [vmem:[#allocation3 + $0x94] sm:$0xf] %vm5334, %v8457
  %8688 = vst.msk [vmem:[#allocation3 + $0xa0] sm:$0xf] %vm5334, %v8459
  %8689 = vst.msk [vmem:[#allocation3 + $0xac] sm:$0xf] %vm5334, %v8461
  %8690 = vst.msk [vmem:[#allocation3 + $0xb8] sm:$0xf] %vm5334, %v8463
  %8691 = vst.msk [vmem:[#allocation3 + $0xc4] sm:$0xf] %vm5334, %v8465
  %8692 = vst.msk [vmem:[#allocation3 + $0xd0] sm:$0xf] %vm5334, %v8467
  %8693 = vst.msk [vmem:[#allocation3 + $0xdc] sm:$0xf] %vm5334, %v8469
  %8694 = vst.msk [vmem:[#allocation3 + $0xe8] sm:$0xf] %vm5334, %v8471
  %8695 = vst.msk [vmem:[#allocation3 + $0xf4] sm:$0xf] %vm5334, %v8473
  %8696 = vst.msk [vmem:[#allocation3 + $0x100] sm:$0xf] %vm5334, %v8475
  %8697 = vst.msk [vmem:[#allocation3 + $0x10c] sm:$0xf] %vm5334, %v8477
  %8698 = vst.msk [vmem:[#allocation3 + $0x118] sm:$0xf] %vm5334, %v8479
  %8699 = vst.msk [vmem:[#allocation3 + $0x124] sm:$0xf] %vm5334, %v8481
  %8700 = vst.msk [vmem:[#allocation3 + $0x130] sm:$0xf] %vm5334, %v8483
  %8701 = vst.msk [vmem:[#allocation3 + $0x13c] sm:$0xf] %vm5334, %v8485
  %8702 = vst.msk [vmem:[#allocation3 + $0x148] sm:$0xf] %vm5334, %v8487
  %8703 = vst.msk [vmem:[#allocation3 + $0x154] sm:$0xf] %vm5334, %v8489
  %8704 = vst.msk [vmem:[#allocation3 + $0x160] sm:$0xf] %vm5334, %v8491
  %8705 = vst.msk [vmem:[#allocation3 + $0x16c] sm:$0xf] %vm5334, %v8493
  %8706 = vst.msk [vmem:[#allocation3 + $0x178] sm:$0xf] %vm5334, %v8495
  %8707 = vst.msk [vmem:[#allocation3 + $0x184] sm:$0xf] %vm5334, %v8497
  %8708 = vst.msk [vmem:[#allocation3 + $0x190] sm:$0xf] %vm5334, %v8499
  %8709 = vst.msk [vmem:[#allocation3 + $0x19c] sm:$0xf] %vm5334, %v8501
  %8710 = vst.msk [vmem:[#allocation3 + $0x1a8] sm:$0xf] %vm5334, %v8503
  %8711 = vst.msk [vmem:[#allocation3 + $0x1b4] sm:$0xf] %vm5334, %v8505
  %8712 = vst.msk [vmem:[#allocation3 + $0x1c0] sm:$0xf] %vm5334, %v8507
  %8713 = vst.msk [vmem:[#allocation3 + $0x1cc] sm:$0xf] %vm5334, %v8509
  %8714 = vst.msk [vmem:[#allocation3 + $0x1d8] sm:$0xf] %vm5334, %v8511
  %8715 = vst.msk [vmem:[#allocation3 + $0x1e4] sm:$0xf] %vm5334, %v8513
  %8716 = vst.msk [vmem:[#allocation3 + $0x1f0] sm:$0xf] %vm5334, %v8515
  %8717 = vst.msk [vmem:[#allocation3 + $0x1fc] sm:$0xf] %vm5334, %v8517
  %8718 = vst.msk [vmem:[#allocation3 + $0x208] sm:$0xf] %vm5334, %v8519
  %8719 = vst.msk [vmem:[#allocation3 + $0x214] sm:$0xf] %vm5334, %v8521
  %8720 = vst.msk [vmem:[#allocation3 + $0x220] sm:$0xf] %vm5334, %v8523
  %8721 = vst.msk [vmem:[#allocation3 + $0x22c] sm:$0xf] %vm5334, %v8525
  %8722 = vst.msk [vmem:[#allocation3 + $0x238] sm:$0xf] %vm5334, %v8527
  %8723 = vst.msk [vmem:[#allocation3 + $0x244] sm:$0xf] %vm5334, %v8529
  %8724 = vst.msk [vmem:[#allocation3 + $0x250] sm:$0xf] %vm5334, %v8531
  %8725 = vst.msk [vmem:[#allocation3 + $0x25c] sm:$0xf] %vm5334, %v8533
  %8726 = vst.msk [vmem:[#allocation3 + $0x268] sm:$0xf] %vm5334, %v8535
  %8727 = vst.msk [vmem:[#allocation3 + $0x274] sm:$0xf] %vm5334, %v8537
  %8728 = vst.msk [vmem:[#allocation3 + $0x280] sm:$0xf] %vm5334, %v8539
  %8729 = vst.msk [vmem:[#allocation3 + $0x28c] sm:$0xf] %vm5334, %v8541
  %8730 = vst.msk [vmem:[#allocation3 + $0x298] sm:$0xf] %vm5334, %v8543
  %8731 = vst.msk [vmem:[#allocation3 + $0x2a4] sm:$0xf] %vm5334, %v8545
  %8732 = vst.msk [vmem:[#allocation3 + $0x2b0] sm:$0xf] %vm5334, %v8547
  %8733 = vst.msk [vmem:[#allocation3 + $0x2bc] sm:$0xf] %vm5334, %v8549
  %8734 = vst.msk [vmem:[#allocation3 + $0x2c8] sm:$0xf] %vm5334, %v8551
  %8735 = vst.msk [vmem:[#allocation3 + $0x2d4] sm:$0xf] %vm5334, %v8553
  %8736 = vst.msk [vmem:[#allocation3 + $0x2e0] sm:$0xf] %vm5334, %v8555
  %8737 = vst.msk [vmem:[#allocation3 + $0x2ec] sm:$0xf] %vm5334, %v8557
  %8738 = vst.msk [vmem:[#allocation3 + $0x2f8] sm:$0xf] %vm5334, %v8559
  %8739 = vst.msk [vmem:[#allocation3 + $0x304] sm:$0xf] %vm5334, %v8561
  %8740 = vst.msk [vmem:[#allocation3 + $0x310] sm:$0xf] %vm5334, %v8563
  %8741 = vst.msk [vmem:[#allocation3 + $0x31c] sm:$0xf] %vm5334, %v8565
  %8742 = vst.msk [vmem:[#allocation3 + $0x328] sm:$0xf] %vm5334, %v8567
  %8743 = vst.msk [vmem:[#allocation3 + $0x334] sm:$0xf] %vm5334, %v8569
  %8744 = vst.msk [vmem:[#allocation3 + $0x340] sm:$0xf] %vm5334, %v8571
  %8745 = vst.msk [vmem:[#allocation3 + $0x34c] sm:$0xf] %vm5334, %v8573
  %8746 = vst.msk [vmem:[#allocation3 + $0x358] sm:$0xf] %vm5334, %v8575
  %8747 = vst.msk [vmem:[#allocation3 + $0x364] sm:$0xf] %vm5334, %v8577
  %8748 = vst.msk [vmem:[#allocation3 + $0x370] sm:$0xf] %vm5334, %v8579
  %8749 = vst.msk [vmem:[#allocation3 + $0x37c] sm:$0xf] %vm5334, %v8581
  %8750 = vst.msk [vmem:[#allocation3 + $0x388] sm:$0xf] %vm5334, %v8583
  %8751 = vst.msk [vmem:[#allocation3 + $0x394] sm:$0xf] %vm5334, %v8585
  %8752 = vst.msk [vmem:[#allocation3 + $0x3a0] sm:$0xf] %vm5334, %v8587
  %8753 = vst.msk [vmem:[#allocation3 + $0x3ac] sm:$0xf] %vm5334, %v8589
  %8754 = vst.msk [vmem:[#allocation3 + $0x3b8] sm:$0xf] %vm5334, %v8591
  %8755 = vst.msk [vmem:[#allocation3 + $0x3c4] sm:$0xf] %vm5334, %v8593
  %v8756 = vld [vmem:[#allocation2 + $0x18] sm:$0xe]
  %v8757 = vld [vmem:[#allocation2 + $0x1c] sm:$0xf]
  %v8758 = vld [vmem:[#allocation2 + $0x20] sm:$0xf]
  %v8759 = vld [vmem:[#allocation2 + $0x24] sm:$0xf]
  %v8760 = vld [vmem:[#allocation2 + $0x28] sm:$0xf]
  %v8761 = vld [vmem:[#allocation2 + $0x2c] sm:$0xf]
  %v8762 = vld [vmem:[#allocation2 + $0x30] sm:$0xf]
  %v8763 = vld [vmem:[#allocation2 + $0x34] sm:$0xf]
  %v8764 = vld [vmem:[#allocation2 + $0x38] sm:$0xf]
  %v8765 = vld [vmem:[#allocation2 + $0x3c] sm:$0xf]
  %v8766 = vld [vmem:[#allocation2 + $0x40] sm:$0xf]
  %v8767 = vld [vmem:[#allocation2 + $0x44] sm:$0xf]
  %v8768 = vld [vmem:[#allocation2 + $0x48] sm:$0xf]
  %v8769 = vld [vmem:[#allocation2 + $0x4c] sm:$0xf]
  %v8770 = vld [vmem:[#allocation2 + $0x50] sm:$0xf]
  %v8771 = vld [vmem:[#allocation2 + $0x54] sm:$0xf]
  %v8772 = vld [vmem:[#allocation2 + $0x58] sm:$0xf]
  %v8773 = vld [vmem:[#allocation2 + $0x5c] sm:$0xf]
  %v8774 = vld [vmem:[#allocation2 + $0x60] sm:$0xf]
  %v8775 = vld [vmem:[#allocation2 + $0x64] sm:$0xf]
  %v8776 = vld [vmem:[#allocation2 + $0x68] sm:$0xf]
  %v8777 = vld [vmem:[#allocation2 + $0x6c] sm:$0xf]
  %v8778 = vld [vmem:[#allocation2 + $0x70] sm:$0xf]
  %v8779 = vld [vmem:[#allocation2 + $0x74] sm:$0xf]
  %v8780 = vld [vmem:[#allocation2 + $0x78] sm:$0xf]
  %v8781 = vld [vmem:[#allocation2 + $0x7c] sm:$0xf]
  %v8782 = vld [vmem:[#allocation2 + $0x80] sm:$0xf]
  %v8783 = vld [vmem:[#allocation2 + $0x84] sm:$0xf]
  %v8784 = vld [vmem:[#allocation2 + $0x88] sm:$0xf]
  %v8785 = vld [vmem:[#allocation2 + $0x8c] sm:$0xf]
  %v8786 = vld [vmem:[#allocation2 + $0x90] sm:$0xf]
  %v8787 = vld [vmem:[#allocation2 + $0x94] sm:$0xf]
  %v8788 = vld [vmem:[#allocation2 + $0x98] sm:$0xf]
  %v8789 = vld [vmem:[#allocation2 + $0x9c] sm:$0xf]
  %v8790 = vld [vmem:[#allocation2 + $0xa0] sm:$0xf]
  %v8791 = vld [vmem:[#allocation2 + $0xa4] sm:$0xf]
  %v8792 = vld [vmem:[#allocation2 + $0xa8] sm:$0xf]
  %v8793 = vld [vmem:[#allocation2 + $0xac] sm:$0xf]
  %v8794 = vld [vmem:[#allocation2 + $0xb0] sm:$0xf]
  %v8795 = vld [vmem:[#allocation2 + $0xb4] sm:$0xf]
  %v8796 = vld [vmem:[#allocation2 + $0xb8] sm:$0xf]
  %v8797 = vld [vmem:[#allocation2 + $0xbc] sm:$0xf]
  %v8798 = vld [vmem:[#allocation2 + $0xc0] sm:$0xf]
  %v8799 = vld [vmem:[#allocation2 + $0xc4] sm:$0xf]
  %v8800 = vld [vmem:[#allocation2 + $0xc8] sm:$0xf]
  %v8801 = vld [vmem:[#allocation2 + $0xcc] sm:$0xf]
  %v8802 = vld [vmem:[#allocation2 + $0xd0] sm:$0xf]
  %v8803 = vld [vmem:[#allocation2 + $0xd4] sm:$0xf]
  %v8804 = vld [vmem:[#allocation2 + $0xd8] sm:$0xf]
  %v8805 = vld [vmem:[#allocation2 + $0xdc] sm:$0xf]
  %v8806 = vld [vmem:[#allocation2 + $0xe0] sm:$0xf]
  %v8807 = vld [vmem:[#allocation2 + $0xe4] sm:$0xf]
  %v8808 = vld [vmem:[#allocation2 + $0xe8] sm:$0xf]
  %v8809 = vld [vmem:[#allocation2 + $0xec] sm:$0xf]
  %v8810 = vld [vmem:[#allocation2 + $0xf0] sm:$0xf]
  %v8811 = vld [vmem:[#allocation2 + $0xf4] sm:$0xf]
  %v8812 = vld [vmem:[#allocation2 + $0xf8] sm:$0xf]
  %v8813 = vld [vmem:[#allocation2 + $0xfc] sm:$0xf]
  %v8814 = vld [vmem:[#allocation2 + $0x100] sm:$0xf]
  %v8815 = vld [vmem:[#allocation2 + $0x104] sm:$0xf]
  %v8816 = vld [vmem:[#allocation2 + $0x108] sm:$0xf]
  %v8817 = vld [vmem:[#allocation2 + $0x10c] sm:$0xf]
  %v8818 = vld [vmem:[#allocation2 + $0x110] sm:$0xf]
  %v8819 = vld [vmem:[#allocation2 + $0x114] sm:$0xf]
  %v8820 = vld [vmem:[#allocation2 + $0x118] sm:$0xf]
  %v8821 = vld [vmem:[#allocation2 + $0x11c] sm:$0xf]
  %v8822 = vld [vmem:[#allocation2 + $0x120] sm:$0xf]
  %v8823 = vld [vmem:[#allocation2 + $0x124] sm:$0xf]
  %v8824 = vld [vmem:[#allocation2 + $0x128] sm:$0xf]
  %v8825 = vld [vmem:[#allocation2 + $0x12c] sm:$0xf]
  %v8826 = vld [vmem:[#allocation2 + $0x130] sm:$0xf]
  %v8827 = vld [vmem:[#allocation2 + $0x134] sm:$0xf]
  %v8828 = vld [vmem:[#allocation2 + $0x138] sm:$0xf]
  %v8829 = vld [vmem:[#allocation2 + $0x13c] sm:$0xf]
  %v8830 = vld [vmem:[#allocation2 + $0x140] sm:$0xf]
  %v8831 = vld [vmem:[#allocation2 + $0x144] sm:$0xf]
  %v8832 = vld [vmem:[#allocation2 + $0x148] sm:$0xf]
  %v8833 = vld [vmem:[#allocation2 + $0x14c] sm:$0xf]
  %v8834 = vld [vmem:[#allocation2 + $0x150] sm:$0xf]
  %v8835 = vld [vmem:[#allocation2 + $0x154] sm:$0xf]
  %v8836 = vld [vmem:[#allocation2 + $0x158] sm:$0xf]
  %v8837 = vld [vmem:[#allocation2 + $0x15c] sm:$0x3]
  %vm8838 = vsmask.f32 2304
  %vm8839 = vsmask.f32 6416
  %vm8840 = vmor %vm8838, %vm8839
  %v8842 = vshrl.u32 %v8756, 16
  %v8844 = vrot.slane %v8842, 5
  %v8845 = vshll.u32 %v8756, 16
  %v8847 = vrot.slane %v8845, 6
  %v8848 = vor.u32 %v8844, %v8847
  %v8849 = vrot.slane %v8848, 4
  %v8851 = vshrl.u32 %v8757, 16
  %v8853 = vrot.slane %v8851, 5
  %v8854 = vshll.u32 %v8757, 16
  %v8856 = vrot.slane %v8854, 6
  %v8857 = vor.u32 %v8853, %v8856
  %v8858 = vsel %vm8840, %v8849, %v8857
  %v8859 = vrot.slane %v8857, 4
  %v8861 = vshrl.u32 %v8758, 16
  %v8863 = vrot.slane %v8861, 5
  %v8864 = vshll.u32 %v8758, 16
  %v8866 = vrot.slane %v8864, 6
  %v8867 = vor.u32 %v8863, %v8866
  %v8868 = vsel %vm8840, %v8859, %v8867
  %v8869 = vrot.slane %v8867, 4
  %v8871 = vshrl.u32 %v8759, 16
  %v8873 = vrot.slane %v8871, 5
  %v8874 = vshll.u32 %v8759, 16
  %v8876 = vrot.slane %v8874, 6
  %v8877 = vor.u32 %v8873, %v8876
  %v8878 = vsel %vm8840, %v8869, %v8877
  %v8879 = vrot.slane %v8877, 4
  %v8881 = vshrl.u32 %v8760, 16
  %v8883 = vrot.slane %v8881, 5
  %v8884 = vshll.u32 %v8760, 16
  %v8886 = vrot.slane %v8884, 6
  %v8887 = vor.u32 %v8883, %v8886
  %v8888 = vsel %vm8840, %v8879, %v8887
  %v8889 = vrot.slane %v8887, 4
  %v8891 = vshrl.u32 %v8761, 16
  %v8893 = vrot.slane %v8891, 5
  %v8894 = vshll.u32 %v8761, 16
  %v8896 = vrot.slane %v8894, 6
  %v8897 = vor.u32 %v8893, %v8896
  %v8898 = vsel %vm8840, %v8889, %v8897
  %v8899 = vrot.slane %v8897, 4
  %v8901 = vshrl.u32 %v8762, 16
  %v8903 = vrot.slane %v8901, 5
  %v8904 = vshll.u32 %v8762, 16
  %v8906 = vrot.slane %v8904, 6
  %v8907 = vor.u32 %v8903, %v8906
  %v8908 = vsel %vm8840, %v8899, %v8907
  %v8909 = vrot.slane %v8907, 4
  %v8911 = vshrl.u32 %v8763, 16
  %v8913 = vrot.slane %v8911, 5
  %v8914 = vshll.u32 %v8763, 16
  %v8916 = vrot.slane %v8914, 6
  %v8917 = vor.u32 %v8913, %v8916
  %v8918 = vsel %vm8840, %v8909, %v8917
  %v8919 = vrot.slane %v8917, 4
  %v8921 = vshrl.u32 %v8764, 16
  %v8923 = vrot.slane %v8921, 5
  %v8924 = vshll.u32 %v8764, 16
  %v8926 = vrot.slane %v8924, 6
  %v8927 = vor.u32 %v8923, %v8926
  %v8928 = vsel %vm8840, %v8919, %v8927
  %v8929 = vrot.slane %v8927, 4
  %v8931 = vshrl.u32 %v8765, 16
  %v8933 = vrot.slane %v8931, 5
  %v8934 = vshll.u32 %v8765, 16
  %v8936 = vrot.slane %v8934, 6
  %v8937 = vor.u32 %v8933, %v8936
  %v8938 = vsel %vm8840, %v8929, %v8937
  %v8939 = vrot.slane %v8937, 4
  %v8941 = vshrl.u32 %v8766, 16
  %v8943 = vrot.slane %v8941, 5
  %v8944 = vshll.u32 %v8766, 16
  %v8946 = vrot.slane %v8944, 6
  %v8947 = vor.u32 %v8943, %v8946
  %v8948 = vsel %vm8840, %v8939, %v8947
  %v8949 = vrot.slane %v8947, 4
  %v8951 = vshrl.u32 %v8767, 16
  %v8953 = vrot.slane %v8951, 5
  %v8954 = vshll.u32 %v8767, 16
  %v8956 = vrot.slane %v8954, 6
  %v8957 = vor.u32 %v8953, %v8956
  %v8958 = vsel %vm8840, %v8949, %v8957
  %v8959 = vrot.slane %v8957, 4
  %v8961 = vshrl.u32 %v8768, 16
  %v8963 = vrot.slane %v8961, 5
  %v8964 = vshll.u32 %v8768, 16
  %v8966 = vrot.slane %v8964, 6
  %v8967 = vor.u32 %v8963, %v8966
  %v8968 = vsel %vm8840, %v8959, %v8967
  %v8969 = vrot.slane %v8967, 4
  %v8971 = vshrl.u32 %v8769, 16
  %v8973 = vrot.slane %v8971, 5
  %v8974 = vshll.u32 %v8769, 16
  %v8976 = vrot.slane %v8974, 6
  %v8977 = vor.u32 %v8973, %v8976
  %v8978 = vsel %vm8840, %v8969, %v8977
  %v8979 = vrot.slane %v8977, 4
  %v8981 = vshrl.u32 %v8770, 16
  %v8983 = vrot.slane %v8981, 5
  %v8984 = vshll.u32 %v8770, 16
  %v8986 = vrot.slane %v8984, 6
  %v8987 = vor.u32 %v8983, %v8986
  %v8988 = vsel %vm8840, %v8979, %v8987
  %v8989 = vrot.slane %v8987, 4
  %v8991 = vshrl.u32 %v8771, 16
  %v8993 = vrot.slane %v8991, 5
  %v8994 = vshll.u32 %v8771, 16
  %v8996 = vrot.slane %v8994, 6
  %v8997 = vor.u32 %v8993, %v8996
  %v8998 = vsel %vm8840, %v8989, %v8997
  %v8999 = vrot.slane %v8997, 4
  %v9001 = vshrl.u32 %v8772, 16
  %v9003 = vrot.slane %v9001, 5
  %v9004 = vshll.u32 %v8772, 16
  %v9006 = vrot.slane %v9004, 6
  %v9007 = vor.u32 %v9003, %v9006
  %v9008 = vsel %vm8840, %v8999, %v9007
  %v9009 = vrot.slane %v9007, 4
  %v9011 = vshrl.u32 %v8773, 16
  %v9013 = vrot.slane %v9011, 5
  %v9014 = vshll.u32 %v8773, 16
  %v9016 = vrot.slane %v9014, 6
  %v9017 = vor.u32 %v9013, %v9016
  %v9018 = vsel %vm8840, %v9009, %v9017
  %v9019 = vrot.slane %v9017, 4
  %v9021 = vshrl.u32 %v8774, 16
  %v9023 = vrot.slane %v9021, 5
  %v9024 = vshll.u32 %v8774, 16
  %v9026 = vrot.slane %v9024, 6
  %v9027 = vor.u32 %v9023, %v9026
  %v9028 = vsel %vm8840, %v9019, %v9027
  %v9029 = vrot.slane %v9027, 4
  %v9031 = vshrl.u32 %v8775, 16
  %v9033 = vrot.slane %v9031, 5
  %v9034 = vshll.u32 %v8775, 16
  %v9036 = vrot.slane %v9034, 6
  %v9037 = vor.u32 %v9033, %v9036
  %v9038 = vsel %vm8840, %v9029, %v9037
  %v9039 = vrot.slane %v9037, 4
  %v9041 = vshrl.u32 %v8776, 16
  %v9043 = vrot.slane %v9041, 5
  %v9044 = vshll.u32 %v8776, 16
  %v9046 = vrot.slane %v9044, 6
  %v9047 = vor.u32 %v9043, %v9046
  %v9048 = vsel %vm8840, %v9039, %v9047
  %v9049 = vrot.slane %v9047, 4
  %v9051 = vshrl.u32 %v8777, 16
  %v9053 = vrot.slane %v9051, 5
  %v9054 = vshll.u32 %v8777, 16
  %v9056 = vrot.slane %v9054, 6
  %v9057 = vor.u32 %v9053, %v9056
  %v9058 = vsel %vm8840, %v9049, %v9057
  %v9059 = vrot.slane %v9057, 4
  %v9061 = vshrl.u32 %v8778, 16
  %v9063 = vrot.slane %v9061, 5
  %v9064 = vshll.u32 %v8778, 16
  %v9066 = vrot.slane %v9064, 6
  %v9067 = vor.u32 %v9063, %v9066
  %v9068 = vsel %vm8840, %v9059, %v9067
  %v9069 = vrot.slane %v9067, 4
  %v9071 = vshrl.u32 %v8779, 16
  %v9073 = vrot.slane %v9071, 5
  %v9074 = vshll.u32 %v8779, 16
  %v9076 = vrot.slane %v9074, 6
  %v9077 = vor.u32 %v9073, %v9076
  %v9078 = vsel %vm8840, %v9069, %v9077
  %v9079 = vrot.slane %v9077, 4
  %v9081 = vshrl.u32 %v8780, 16
  %v9083 = vrot.slane %v9081, 5
  %v9084 = vshll.u32 %v8780, 16
  %v9086 = vrot.slane %v9084, 6
  %v9087 = vor.u32 %v9083, %v9086
  %v9088 = vsel %vm8840, %v9079, %v9087
  %v9089 = vrot.slane %v9087, 4
  %v9091 = vshrl.u32 %v8781, 16
  %v9093 = vrot.slane %v9091, 5
  %v9094 = vshll.u32 %v8781, 16
  %v9096 = vrot.slane %v9094, 6
  %v9097 = vor.u32 %v9093, %v9096
  %v9098 = vsel %vm8840, %v9089, %v9097
  %v9099 = vrot.slane %v9097, 4
  %v9101 = vshrl.u32 %v8782, 16
  %v9103 = vrot.slane %v9101, 5
  %v9104 = vshll.u32 %v8782, 16
  %v9106 = vrot.slane %v9104, 6
  %v9107 = vor.u32 %v9103, %v9106
  %v9108 = vsel %vm8840, %v9099, %v9107
  %v9109 = vrot.slane %v9107, 4
  %v9111 = vshrl.u32 %v8783, 16
  %v9113 = vrot.slane %v9111, 5
  %v9114 = vshll.u32 %v8783, 16
  %v9116 = vrot.slane %v9114, 6
  %v9117 = vor.u32 %v9113, %v9116
  %v9118 = vsel %vm8840, %v9109, %v9117
  %v9119 = vrot.slane %v9117, 4
  %v9121 = vshrl.u32 %v8784, 16
  %v9123 = vrot.slane %v9121, 5
  %v9124 = vshll.u32 %v8784, 16
  %v9126 = vrot.slane %v9124, 6
  %v9127 = vor.u32 %v9123, %v9126
  %v9128 = vsel %vm8840, %v9119, %v9127
  %v9129 = vrot.slane %v9127, 4
  %v9131 = vshrl.u32 %v8785, 16
  %v9133 = vrot.slane %v9131, 5
  %v9134 = vshll.u32 %v8785, 16
  %v9136 = vrot.slane %v9134, 6
  %v9137 = vor.u32 %v9133, %v9136
  %v9138 = vsel %vm8840, %v9129, %v9137
  %v9139 = vrot.slane %v9137, 4
  %v9141 = vshrl.u32 %v8786, 16
  %v9143 = vrot.slane %v9141, 5
  %v9144 = vshll.u32 %v8786, 16
  %v9146 = vrot.slane %v9144, 6
  %v9147 = vor.u32 %v9143, %v9146
  %v9148 = vsel %vm8840, %v9139, %v9147
  %v9149 = vrot.slane %v9147, 4
  %v9151 = vshrl.u32 %v8787, 16
  %v9153 = vrot.slane %v9151, 5
  %v9154 = vshll.u32 %v8787, 16
  %v9156 = vrot.slane %v9154, 6
  %v9157 = vor.u32 %v9153, %v9156
  %v9158 = vsel %vm8840, %v9149, %v9157
  %v9159 = vrot.slane %v9157, 4
  %v9161 = vshrl.u32 %v8788, 16
  %v9163 = vrot.slane %v9161, 5
  %v9164 = vshll.u32 %v8788, 16
  %v9166 = vrot.slane %v9164, 6
  %v9167 = vor.u32 %v9163, %v9166
  %v9168 = vsel %vm8840, %v9159, %v9167
  %v9169 = vrot.slane %v9167, 4
  %v9171 = vshrl.u32 %v8789, 16
  %v9173 = vrot.slane %v9171, 5
  %v9174 = vshll.u32 %v8789, 16
  %v9176 = vrot.slane %v9174, 6
  %v9177 = vor.u32 %v9173, %v9176
  %v9178 = vsel %vm8840, %v9169, %v9177
  %v9179 = vrot.slane %v9177, 4
  %v9181 = vshrl.u32 %v8790, 16
  %v9183 = vrot.slane %v9181, 5
  %v9184 = vshll.u32 %v8790, 16
  %v9186 = vrot.slane %v9184, 6
  %v9187 = vor.u32 %v9183, %v9186
  %v9188 = vsel %vm8840, %v9179, %v9187
  %v9189 = vrot.slane %v9187, 4
  %v9191 = vshrl.u32 %v8791, 16
  %v9193 = vrot.slane %v9191, 5
  %v9194 = vshll.u32 %v8791, 16
  %v9196 = vrot.slane %v9194, 6
  %v9197 = vor.u32 %v9193, %v9196
  %v9198 = vsel %vm8840, %v9189, %v9197
  %v9199 = vrot.slane %v9197, 4
  %v9201 = vshrl.u32 %v8792, 16
  %v9203 = vrot.slane %v9201, 5
  %v9204 = vshll.u32 %v8792, 16
  %v9206 = vrot.slane %v9204, 6
  %v9207 = vor.u32 %v9203, %v9206
  %v9208 = vsel %vm8840, %v9199, %v9207
  %v9209 = vrot.slane %v9207, 4
  %v9211 = vshrl.u32 %v8793, 16
  %v9213 = vrot.slane %v9211, 5
  %v9214 = vshll.u32 %v8793, 16
  %v9216 = vrot.slane %v9214, 6
  %v9217 = vor.u32 %v9213, %v9216
  %v9218 = vsel %vm8840, %v9209, %v9217
  %v9219 = vrot.slane %v9217, 4
  %v9221 = vshrl.u32 %v8794, 16
  %v9223 = vrot.slane %v9221, 5
  %v9224 = vshll.u32 %v8794, 16
  %v9226 = vrot.slane %v9224, 6
  %v9227 = vor.u32 %v9223, %v9226
  %v9228 = vsel %vm8840, %v9219, %v9227
  %v9229 = vrot.slane %v9227, 4
  %v9231 = vshrl.u32 %v8795, 16
  %v9233 = vrot.slane %v9231, 5
  %v9234 = vshll.u32 %v8795, 16
  %v9236 = vrot.slane %v9234, 6
  %v9237 = vor.u32 %v9233, %v9236
  %v9238 = vsel %vm8840, %v9229, %v9237
  %v9239 = vrot.slane %v9237, 4
  %v9241 = vshrl.u32 %v8796, 16
  %v9243 = vrot.slane %v9241, 5
  %v9244 = vshll.u32 %v8796, 16
  %v9246 = vrot.slane %v9244, 6
  %v9247 = vor.u32 %v9243, %v9246
  %v9248 = vsel %vm8840, %v9239, %v9247
  %v9249 = vrot.slane %v9247, 4
  %v9251 = vshrl.u32 %v8797, 16
  %v9253 = vrot.slane %v9251, 5
  %v9254 = vshll.u32 %v8797, 16
  %v9256 = vrot.slane %v9254, 6
  %v9257 = vor.u32 %v9253, %v9256
  %v9258 = vsel %vm8840, %v9249, %v9257
  %v9259 = vrot.slane %v9257, 4
  %v9261 = vshrl.u32 %v8798, 16
  %v9263 = vrot.slane %v9261, 5
  %v9264 = vshll.u32 %v8798, 16
  %v9266 = vrot.slane %v9264, 6
  %v9267 = vor.u32 %v9263, %v9266
  %v9268 = vsel %vm8840, %v9259, %v9267
  %v9269 = vrot.slane %v9267, 4
  %v9271 = vshrl.u32 %v8799, 16
  %v9273 = vrot.slane %v9271, 5
  %v9274 = vshll.u32 %v8799, 16
  %v9276 = vrot.slane %v9274, 6
  %v9277 = vor.u32 %v9273, %v9276
  %v9278 = vsel %vm8840, %v9269, %v9277
  %v9279 = vrot.slane %v9277, 4
  %v9281 = vshrl.u32 %v8800, 16
  %v9283 = vrot.slane %v9281, 5
  %v9284 = vshll.u32 %v8800, 16
  %v9286 = vrot.slane %v9284, 6
  %v9287 = vor.u32 %v9283, %v9286
  %v9288 = vsel %vm8840, %v9279, %v9287
  %v9289 = vrot.slane %v9287, 4
  %v9291 = vshrl.u32 %v8801, 16
  %v9293 = vrot.slane %v9291, 5
  %v9294 = vshll.u32 %v8801, 16
  %v9296 = vrot.slane %v9294, 6
  %v9297 = vor.u32 %v9293, %v9296
  %v9298 = vsel %vm8840, %v9289, %v9297
  %v9299 = vrot.slane %v9297, 4
  %v9301 = vshrl.u32 %v8802, 16
  %v9303 = vrot.slane %v9301, 5
  %v9304 = vshll.u32 %v8802, 16
  %v9306 = vrot.slane %v9304, 6
  %v9307 = vor.u32 %v9303, %v9306
  %v9308 = vsel %vm8840, %v9299, %v9307
  %v9309 = vrot.slane %v9307, 4
  %v9311 = vshrl.u32 %v8803, 16
  %v9313 = vrot.slane %v9311, 5
  %v9314 = vshll.u32 %v8803, 16
  %v9316 = vrot.slane %v9314, 6
  %v9317 = vor.u32 %v9313, %v9316
  %v9318 = vsel %vm8840, %v9309, %v9317
  %v9319 = vrot.slane %v9317, 4
  %v9321 = vshrl.u32 %v8804, 16
  %v9323 = vrot.slane %v9321, 5
  %v9324 = vshll.u32 %v8804, 16
  %v9326 = vrot.slane %v9324, 6
  %v9327 = vor.u32 %v9323, %v9326
  %v9328 = vsel %vm8840, %v9319, %v9327
  %v9329 = vrot.slane %v9327, 4
  %v9331 = vshrl.u32 %v8805, 16
  %v9333 = vrot.slane %v9331, 5
  %v9334 = vshll.u32 %v8805, 16
  %v9336 = vrot.slane %v9334, 6
  %v9337 = vor.u32 %v9333, %v9336
  %v9338 = vsel %vm8840, %v9329, %v9337
  %v9339 = vrot.slane %v9337, 4
  %v9341 = vshrl.u32 %v8806, 16
  %v9343 = vrot.slane %v9341, 5
  %v9344 = vshll.u32 %v8806, 16
  %v9346 = vrot.slane %v9344, 6
  %v9347 = vor.u32 %v9343, %v9346
  %v9348 = vsel %vm8840, %v9339, %v9347
  %v9349 = vrot.slane %v9347, 4
  %v9351 = vshrl.u32 %v8807, 16
  %v9353 = vrot.slane %v9351, 5
  %v9354 = vshll.u32 %v8807, 16
  %v9356 = vrot.slane %v9354, 6
  %v9357 = vor.u32 %v9353, %v9356
  %v9358 = vsel %vm8840, %v9349, %v9357
  %v9359 = vrot.slane %v9357, 4
  %v9361 = vshrl.u32 %v8808, 16
  %v9363 = vrot.slane %v9361, 5
  %v9364 = vshll.u32 %v8808, 16
  %v9366 = vrot.slane %v9364, 6
  %v9367 = vor.u32 %v9363, %v9366
  %v9368 = vsel %vm8840, %v9359, %v9367
  %v9369 = vrot.slane %v9367, 4
  %v9371 = vshrl.u32 %v8809, 16
  %v9373 = vrot.slane %v9371, 5
  %v9374 = vshll.u32 %v8809, 16
  %v9376 = vrot.slane %v9374, 6
  %v9377 = vor.u32 %v9373, %v9376
  %v9378 = vsel %vm8840, %v9369, %v9377
  %v9379 = vrot.slane %v9377, 4
  %v9381 = vshrl.u32 %v8810, 16
  %v9383 = vrot.slane %v9381, 5
  %v9384 = vshll.u32 %v8810, 16
  %v9386 = vrot.slane %v9384, 6
  %v9387 = vor.u32 %v9383, %v9386
  %v9388 = vsel %vm8840, %v9379, %v9387
  %v9389 = vrot.slane %v9387, 4
  %v9391 = vshrl.u32 %v8811, 16
  %v9393 = vrot.slane %v9391, 5
  %v9394 = vshll.u32 %v8811, 16
  %v9396 = vrot.slane %v9394, 6
  %v9397 = vor.u32 %v9393, %v9396
  %v9398 = vsel %vm8840, %v9389, %v9397
  %v9399 = vrot.slane %v9397, 4
  %v9401 = vshrl.u32 %v8812, 16
  %v9403 = vrot.slane %v9401, 5
  %v9404 = vshll.u32 %v8812, 16
  %v9406 = vrot.slane %v9404, 6
  %v9407 = vor.u32 %v9403, %v9406
  %v9408 = vsel %vm8840, %v9399, %v9407
  %v9409 = vrot.slane %v9407, 4
  %v9411 = vshrl.u32 %v8813, 16
  %v9413 = vrot.slane %v9411, 5
  %v9414 = vshll.u32 %v8813, 16
  %v9416 = vrot.slane %v9414, 6
  %v9417 = vor.u32 %v9413, %v9416
  %v9418 = vsel %vm8840, %v9409, %v9417
  %v9419 = vrot.slane %v9417, 4
  %v9421 = vshrl.u32 %v8814, 16
  %v9423 = vrot.slane %v9421, 5
  %v9424 = vshll.u32 %v8814, 16
  %v9426 = vrot.slane %v9424, 6
  %v9427 = vor.u32 %v9423, %v9426
  %v9428 = vsel %vm8840, %v9419, %v9427
  %v9429 = vrot.slane %v9427, 4
  %v9431 = vshrl.u32 %v8815, 16
  %v9433 = vrot.slane %v9431, 5
  %v9434 = vshll.u32 %v8815, 16
  %v9436 = vrot.slane %v9434, 6
  %v9437 = vor.u32 %v9433, %v9436
  %v9438 = vsel %vm8840, %v9429, %v9437
  %v9439 = vrot.slane %v9437, 4
  %v9441 = vshrl.u32 %v8816, 16
  %v9443 = vrot.slane %v9441, 5
  %v9444 = vshll.u32 %v8816, 16
  %v9446 = vrot.slane %v9444, 6
  %v9447 = vor.u32 %v9443, %v9446
  %v9448 = vsel %vm8840, %v9439, %v9447
  %v9449 = vrot.slane %v9447, 4
  %v9451 = vshrl.u32 %v8817, 16
  %v9453 = vrot.slane %v9451, 5
  %v9454 = vshll.u32 %v8817, 16
  %v9456 = vrot.slane %v9454, 6
  %v9457 = vor.u32 %v9453, %v9456
  %v9458 = vsel %vm8840, %v9449, %v9457
  %v9459 = vrot.slane %v9457, 4
  %v9461 = vshrl.u32 %v8818, 16
  %v9463 = vrot.slane %v9461, 5
  %v9464 = vshll.u32 %v8818, 16
  %v9466 = vrot.slane %v9464, 6
  %v9467 = vor.u32 %v9463, %v9466
  %v9468 = vsel %vm8840, %v9459, %v9467
  %v9469 = vrot.slane %v9467, 4
  %v9471 = vshrl.u32 %v8819, 16
  %v9473 = vrot.slane %v9471, 5
  %v9474 = vshll.u32 %v8819, 16
  %v9476 = vrot.slane %v9474, 6
  %v9477 = vor.u32 %v9473, %v9476
  %v9478 = vsel %vm8840, %v9469, %v9477
  %v9479 = vrot.slane %v9477, 4
  %v9481 = vshrl.u32 %v8820, 16
  %v9483 = vrot.slane %v9481, 5
  %v9484 = vshll.u32 %v8820, 16
  %v9486 = vrot.slane %v9484, 6
  %v9487 = vor.u32 %v9483, %v9486
  %v9488 = vsel %vm8840, %v9479, %v9487
  %v9489 = vrot.slane %v9487, 4
  %v9491 = vshrl.u32 %v8821, 16
  %v9493 = vrot.slane %v9491, 5
  %v9494 = vshll.u32 %v8821, 16
  %v9496 = vrot.slane %v9494, 6
  %v9497 = vor.u32 %v9493, %v9496
  %v9498 = vsel %vm8840, %v9489, %v9497
  %v9499 = vrot.slane %v9497, 4
  %v9501 = vshrl.u32 %v8822, 16
  %v9503 = vrot.slane %v9501, 5
  %v9504 = vshll.u32 %v8822, 16
  %v9506 = vrot.slane %v9504, 6
  %v9507 = vor.u32 %v9503, %v9506
  %v9508 = vsel %vm8840, %v9499, %v9507
  %v9509 = vrot.slane %v9507, 4
  %v9511 = vshrl.u32 %v8823, 16
  %v9513 = vrot.slane %v9511, 5
  %v9514 = vshll.u32 %v8823, 16
  %v9516 = vrot.slane %v9514, 6
  %v9517 = vor.u32 %v9513, %v9516
  %v9518 = vsel %vm8840, %v9509, %v9517
  %v9519 = vrot.slane %v9517, 4
  %v9521 = vshrl.u32 %v8824, 16
  %v9523 = vrot.slane %v9521, 5
  %v9524 = vshll.u32 %v8824, 16
  %v9526 = vrot.slane %v9524, 6
  %v9527 = vor.u32 %v9523, %v9526
  %v9528 = vsel %vm8840, %v9519, %v9527
  %v9529 = vrot.slane %v9527, 4
  %v9531 = vshrl.u32 %v8825, 16
  %v9533 = vrot.slane %v9531, 5
  %v9534 = vshll.u32 %v8825, 16
  %v9536 = vrot.slane %v9534, 6
  %v9537 = vor.u32 %v9533, %v9536
  %v9538 = vsel %vm8840, %v9529, %v9537
  %v9539 = vrot.slane %v9537, 4
  %v9541 = vshrl.u32 %v8826, 16
  %v9543 = vrot.slane %v9541, 5
  %v9544 = vshll.u32 %v8826, 16
  %v9546 = vrot.slane %v9544, 6
  %v9547 = vor.u32 %v9543, %v9546
  %v9548 = vsel %vm8840, %v9539, %v9547
  %v9549 = vrot.slane %v9547, 4
  %v9551 = vshrl.u32 %v8827, 16
  %v9553 = vrot.slane %v9551, 5
  %v9554 = vshll.u32 %v8827, 16
  %v9556 = vrot.slane %v9554, 6
  %v9557 = vor.u32 %v9553, %v9556
  %v9558 = vsel %vm8840, %v9549, %v9557
  %v9559 = vrot.slane %v9557, 4
  %v9561 = vshrl.u32 %v8828, 16
  %v9563 = vrot.slane %v9561, 5
  %v9564 = vshll.u32 %v8828, 16
  %v9566 = vrot.slane %v9564, 6
  %v9567 = vor.u32 %v9563, %v9566
  %v9568 = vsel %vm8840, %v9559, %v9567
  %v9569 = vrot.slane %v9567, 4
  %v9571 = vshrl.u32 %v8829, 16
  %v9573 = vrot.slane %v9571, 5
  %v9574 = vshll.u32 %v8829, 16
  %v9576 = vrot.slane %v9574, 6
  %v9577 = vor.u32 %v9573, %v9576
  %v9578 = vsel %vm8840, %v9569, %v9577
  %v9579 = vrot.slane %v9577, 4
  %v9581 = vshrl.u32 %v8830, 16
  %v9583 = vrot.slane %v9581, 5
  %v9584 = vshll.u32 %v8830, 16
  %v9586 = vrot.slane %v9584, 6
  %v9587 = vor.u32 %v9583, %v9586
  %v9588 = vsel %vm8840, %v9579, %v9587
  %v9589 = vrot.slane %v9587, 4
  %v9591 = vshrl.u32 %v8831, 16
  %v9593 = vrot.slane %v9591, 5
  %v9594 = vshll.u32 %v8831, 16
  %v9596 = vrot.slane %v9594, 6
  %v9597 = vor.u32 %v9593, %v9596
  %v9598 = vsel %vm8840, %v9589, %v9597
  %v9599 = vrot.slane %v9597, 4
  %v9601 = vshrl.u32 %v8832, 16
  %v9603 = vrot.slane %v9601, 5
  %v9604 = vshll.u32 %v8832, 16
  %v9606 = vrot.slane %v9604, 6
  %v9607 = vor.u32 %v9603, %v9606
  %v9608 = vsel %vm8840, %v9599, %v9607
  %v9609 = vrot.slane %v9607, 4
  %v9611 = vshrl.u32 %v8833, 16
  %v9613 = vrot.slane %v9611, 5
  %v9614 = vshll.u32 %v8833, 16
  %v9616 = vrot.slane %v9614, 6
  %v9617 = vor.u32 %v9613, %v9616
  %v9618 = vsel %vm8840, %v9609, %v9617
  %v9619 = vrot.slane %v9617, 4
  %v9621 = vshrl.u32 %v8834, 16
  %v9623 = vrot.slane %v9621, 5
  %v9624 = vshll.u32 %v8834, 16
  %v9626 = vrot.slane %v9624, 6
  %v9627 = vor.u32 %v9623, %v9626
  %v9628 = vsel %vm8840, %v9619, %v9627
  %v9629 = vrot.slane %v9627, 4
  %v9631 = vshrl.u32 %v8835, 16
  %v9633 = vrot.slane %v9631, 5
  %v9634 = vshll.u32 %v8835, 16
  %v9636 = vrot.slane %v9634, 6
  %v9637 = vor.u32 %v9633, %v9636
  %v9638 = vsel %vm8840, %v9629, %v9637
  %v9639 = vrot.slane %v9637, 4
  %v9641 = vshrl.u32 %v8836, 16
  %v9643 = vrot.slane %v9641, 5
  %v9644 = vshll.u32 %v8836, 16
  %v9646 = vrot.slane %v9644, 6
  %v9647 = vor.u32 %v9643, %v9646
  %v9648 = vsel %vm8840, %v9639, %v9647
  %v9649 = vrot.slane %v9647, 4
  %v9651 = vshrl.u32 %v8837, 16
  %v9653 = vrot.slane %v9651, 5
  %v9654 = vshll.u32 %v8837, 16
  %v9656 = vrot.slane %v9654, 6
  %v9657 = vor.u32 %v9653, %v9656
  %v9658 = vsel %vm8840, %v9649, %v9657
  %9740 = vst.msk [vmem:[#allocation3 + $0x8] sm:$0xf] %vm917, %v8858
  %9741 = vst.msk [vmem:[#allocation3 + $0x14] sm:$0xf] %vm917, %v8868
  %9742 = vst.msk [vmem:[#allocation3 + $0x20] sm:$0xf] %vm917, %v8878
  %9743 = vst.msk [vmem:[#allocation3 + $0x2c] sm:$0xf] %vm917, %v8888
  %9744 = vst.msk [vmem:[#allocation3 + $0x38] sm:$0xf] %vm917, %v8898
  %9745 = vst.msk [vmem:[#allocation3 + $0x44] sm:$0xf] %vm917, %v8908
  %9746 = vst.msk [vmem:[#allocation3 + $0x50] sm:$0xf] %vm917, %v8918
  %9747 = vst.msk [vmem:[#allocation3 + $0x5c] sm:$0xf] %vm917, %v8928
  %9748 = vst.msk [vmem:[#allocation3 + $0x68] sm:$0xf] %vm917, %v8938
  %9749 = vst.msk [vmem:[#allocation3 + $0x74] sm:$0xf] %vm917, %v8948
  %9750 = vst.msk [vmem:[#allocation3 + $0x80] sm:$0xf] %vm917, %v8958
  %9751 = vst.msk [vmem:[#allocation3 + $0x8c] sm:$0xf] %vm917, %v8968
  %9752 = vst.msk [vmem:[#allocation3 + $0x98] sm:$0xf] %vm917, %v8978
  %9753 = vst.msk [vmem:[#allocation3 + $0xa4] sm:$0xf] %vm917, %v8988
  %9754 = vst.msk [vmem:[#allocation3 + $0xb0] sm:$0xf] %vm917, %v8998
  %9755 = vst.msk [vmem:[#allocation3 + $0xbc] sm:$0xf] %vm917, %v9008
  %9756 = vst.msk [vmem:[#allocation3 + $0xc8] sm:$0xf] %vm917, %v9018
  %9757 = vst.msk [vmem:[#allocation3 + $0xd4] sm:$0xf] %vm917, %v9028
  %9758 = vst.msk [vmem:[#allocation3 + $0xe0] sm:$0xf] %vm917, %v9038
  %9759 = vst.msk [vmem:[#allocation3 + $0xec] sm:$0xf] %vm917, %v9048
  %9760 = vst.msk [vmem:[#allocation3 + $0xf8] sm:$0xf] %vm917, %v9058
  %9761 = vst.msk [vmem:[#allocation3 + $0x104] sm:$0xf] %vm917, %v9068
  %9762 = vst.msk [vmem:[#allocation3 + $0x110] sm:$0xf] %vm917, %v9078
  %9763 = vst.msk [vmem:[#allocation3 + $0x11c] sm:$0xf] %vm917, %v9088
  %9764 = vst.msk [vmem:[#allocation3 + $0x128] sm:$0xf] %vm917, %v9098
  %9765 = vst.msk [vmem:[#allocation3 + $0x134] sm:$0xf] %vm917, %v9108
  %9766 = vst.msk [vmem:[#allocation3 + $0x140] sm:$0xf] %vm917, %v9118
  %9767 = vst.msk [vmem:[#allocation3 + $0x14c] sm:$0xf] %vm917, %v9128
  %9768 = vst.msk [vmem:[#allocation3 + $0x158] sm:$0xf] %vm917, %v9138
  %9769 = vst.msk [vmem:[#allocation3 + $0x164] sm:$0xf] %vm917, %v9148
  %9770 = vst.msk [vmem:[#allocation3 + $0x170] sm:$0xf] %vm917, %v9158
  %9771 = vst.msk [vmem:[#allocation3 + $0x17c] sm:$0xf] %vm917, %v9168
  %9772 = vst.msk [vmem:[#allocation3 + $0x188] sm:$0xf] %vm917, %v9178
  %9773 = vst.msk [vmem:[#allocation3 + $0x194] sm:$0xf] %vm917, %v9188
  %9774 = vst.msk [vmem:[#allocation3 + $0x1a0] sm:$0xf] %vm917, %v9198
  %9775 = vst.msk [vmem:[#allocation3 + $0x1ac] sm:$0xf] %vm917, %v9208
  %9776 = vst.msk [vmem:[#allocation3 + $0x1b8] sm:$0xf] %vm917, %v9218
  %9777 = vst.msk [vmem:[#allocation3 + $0x1c4] sm:$0xf] %vm917, %v9228
  %9778 = vst.msk [vmem:[#allocation3 + $0x1d0] sm:$0xf] %vm917, %v9238
  %9779 = vst.msk [vmem:[#allocation3 + $0x1dc] sm:$0xf] %vm917, %v9248
  %9780 = vst.msk [vmem:[#allocation3 + $0x1e8] sm:$0xf] %vm917, %v9258
  %9781 = vst.msk [vmem:[#allocation3 + $0x1f4] sm:$0xf] %vm917, %v9268
  %9782 = vst.msk [vmem:[#allocation3 + $0x200] sm:$0xf] %vm917, %v9278
  %9783 = vst.msk [vmem:[#allocation3 + $0x20c] sm:$0xf] %vm917, %v9288
  %9784 = vst.msk [vmem:[#allocation3 + $0x218] sm:$0xf] %vm917, %v9298
  %9785 = vst.msk [vmem:[#allocation3 + $0x224] sm:$0xf] %vm917, %v9308
  %9786 = vst.msk [vmem:[#allocation3 + $0x230] sm:$0xf] %vm917, %v9318
  %9787 = vst.msk [vmem:[#allocation3 + $0x23c] sm:$0xf] %vm917, %v9328
  %9788 = vst.msk [vmem:[#allocation3 + $0x248] sm:$0xf] %vm917, %v9338
  %9789 = vst.msk [vmem:[#allocation3 + $0x254] sm:$0xf] %vm917, %v9348
  %9790 = vst.msk [vmem:[#allocation3 + $0x260] sm:$0xf] %vm917, %v9358
  %9791 = vst.msk [vmem:[#allocation3 + $0x26c] sm:$0xf] %vm917, %v9368
  %9792 = vst.msk [vmem:[#allocation3 + $0x278] sm:$0xf] %vm917, %v9378
  %9793 = vst.msk [vmem:[#allocation3 + $0x284] sm:$0xf] %vm917, %v9388
  %9794 = vst.msk [vmem:[#allocation3 + $0x290] sm:$0xf] %vm917, %v9398
  %9795 = vst.msk [vmem:[#allocation3 + $0x29c] sm:$0xf] %vm917, %v9408
  %9796 = vst.msk [vmem:[#allocation3 + $0x2a8] sm:$0xf] %vm917, %v9418
  %9797 = vst.msk [vmem:[#allocation3 + $0x2b4] sm:$0xf] %vm917, %v9428
  %9798 = vst.msk [vmem:[#allocation3 + $0x2c0] sm:$0xf] %vm917, %v9438
  %9799 = vst.msk [vmem:[#allocation3 + $0x2cc] sm:$0xf] %vm917, %v9448
  %9800 = vst.msk [vmem:[#allocation3 + $0x2d8] sm:$0xf] %vm917, %v9458
  %9801 = vst.msk [vmem:[#allocation3 + $0x2e4] sm:$0xf] %vm917, %v9468
  %9802 = vst.msk [vmem:[#allocation3 + $0x2f0] sm:$0xf] %vm917, %v9478
  %9803 = vst.msk [vmem:[#allocation3 + $0x2fc] sm:$0xf] %vm917, %v9488
  %9804 = vst.msk [vmem:[#allocation3 + $0x308] sm:$0xf] %vm917, %v9498
  %9805 = vst.msk [vmem:[#allocation3 + $0x314] sm:$0xf] %vm917, %v9508
  %9806 = vst.msk [vmem:[#allocation3 + $0x320] sm:$0xf] %vm917, %v9518
  %9807 = vst.msk [vmem:[#allocation3 + $0x32c] sm:$0xf] %vm917, %v9528
  %9808 = vst.msk [vmem:[#allocation3 + $0x338] sm:$0xf] %vm917, %v9538
  %9809 = vst.msk [vmem:[#allocation3 + $0x344] sm:$0xf] %vm917, %v9548
  %9810 = vst.msk [vmem:[#allocation3 + $0x350] sm:$0xf] %vm917, %v9558
  %9811 = vst.msk [vmem:[#allocation3 + $0x35c] sm:$0xf] %vm917, %v9568
  %9812 = vst.msk [vmem:[#allocation3 + $0x368] sm:$0xf] %vm917, %v9578
  %9813 = vst.msk [vmem:[#allocation3 + $0x374] sm:$0xf] %vm917, %v9588
  %9814 = vst.msk [vmem:[#allocation3 + $0x380] sm:$0xf] %vm917, %v9598
  %9815 = vst.msk [vmem:[#allocation3 + $0x38c] sm:$0xf] %vm917, %v9608
  %9816 = vst.msk [vmem:[#allocation3 + $0x398] sm:$0xf] %vm917, %v9618
  %9817 = vst.msk [vmem:[#allocation3 + $0x3a4] sm:$0xf] %vm917, %v9628
  %9818 = vst.msk [vmem:[#allocation3 + $0x3b0] sm:$0xf] %vm917, %v9638
  %9819 = vst.msk [vmem:[#allocation3 + $0x3bc] sm:$0xf] %vm917, %v9648
  %9820 = vst.msk [vmem:[#allocation3 + $0x3c8] sm:$0xf] %vm917, %v9658
  %v9821 = vld [vmem:[#allocation3] sm:$0xff]
  %v9822 = vld [vmem:[#allocation3 + $0x8] sm:$0xf]
  %v9823 = vld [vmem:[#allocation3 + $0xc] sm:$0xff]
  %v9824 = vld [vmem:[#allocation3 + $0x14] sm:$0xf]
  %v9825 = vld [vmem:[#allocation3 + $0x18] sm:$0xff]
  %v9826 = vld [vmem:[#allocation3 + $0x20] sm:$0xf]
  %v9827 = vld [vmem:[#allocation3 + $0x24] sm:$0xff]
  %v9828 = vld [vmem:[#allocation3 + $0x2c] sm:$0xf]
  %v9829 = vld [vmem:[#allocation3 + $0x30] sm:$0xff]
  %v9830 = vld [vmem:[#allocation3 + $0x38] sm:$0xf]
  %v9831 = vld [vmem:[#allocation3 + $0x3c] sm:$0xff]
  %v9832 = vld [vmem:[#allocation3 + $0x44] sm:$0xf]
  %v9833 = vld [vmem:[#allocation3 + $0x48] sm:$0xff]
  %v9834 = vld [vmem:[#allocation3 + $0x50] sm:$0xf]
  %v9835 = vld [vmem:[#allocation3 + $0x54] sm:$0xff]
  %v9836 = vld [vmem:[#allocation3 + $0x5c] sm:$0xf]
  %v9837 = vld [vmem:[#allocation3 + $0x60] sm:$0xff]
  %v9838 = vld [vmem:[#allocation3 + $0x68] sm:$0xf]
  %v9839 = vld [vmem:[#allocation3 + $0x6c] sm:$0xff]
  %v9840 = vld [vmem:[#allocation3 + $0x74] sm:$0xf]
  %v9841 = vld [vmem:[#allocation3 + $0x78] sm:$0xff]
  %v9842 = vld [vmem:[#allocation3 + $0x80] sm:$0xf]
  %v9843 = vld [vmem:[#allocation3 + $0x84] sm:$0xff]
  %v9844 = vld [vmem:[#allocation3 + $0x8c] sm:$0xf]
  %v9845 = vld [vmem:[#allocation3 + $0x90] sm:$0xff]
  %v9846 = vld [vmem:[#allocation3 + $0x98] sm:$0xf]
  %v9847 = vld [vmem:[#allocation3 + $0x9c] sm:$0xff]
  %v9848 = vld [vmem:[#allocation3 + $0xa4] sm:$0xf]
  %v9849 = vld [vmem:[#allocation3 + $0xa8] sm:$0xff]
  %v9850 = vld [vmem:[#allocation3 + $0xb0] sm:$0xf]
  %v9851 = vld [vmem:[#allocation3 + $0xb4] sm:$0xff]
  %v9852 = vld [vmem:[#allocation3 + $0xbc] sm:$0xf]
  %v9853 = vld [vmem:[#allocation3 + $0xc0] sm:$0xff]
  %v9854 = vld [vmem:[#allocation3 + $0xc8] sm:$0xf]
  %v9855 = vld [vmem:[#allocation3 + $0xcc] sm:$0xff]
  %v9856 = vld [vmem:[#allocation3 + $0xd4] sm:$0xf]
  %v9857 = vld [vmem:[#allocation3 + $0xd8] sm:$0xff]
  %v9858 = vld [vmem:[#allocation3 + $0xe0] sm:$0xf]
  %v9859 = vld [vmem:[#allocation3 + $0xe4] sm:$0xff]
  %v9860 = vld [vmem:[#allocation3 + $0xec] sm:$0xf]
  %v9861 = vld [vmem:[#allocation3 + $0xf0] sm:$0xff]
  %v9862 = vld [vmem:[#allocation3 + $0xf8] sm:$0xf]
  %v9863 = vld [vmem:[#allocation3 + $0xfc] sm:$0xff]
  %v9864 = vld [vmem:[#allocation3 + $0x104] sm:$0xf]
  %v9865 = vld [vmem:[#allocation3 + $0x108] sm:$0xff]
  %v9866 = vld [vmem:[#allocation3 + $0x110] sm:$0xf]
  %v9867 = vld [vmem:[#allocation3 + $0x114] sm:$0xff]
  %v9868 = vld [vmem:[#allocation3 + $0x11c] sm:$0xf]
  %v9869 = vld [vmem:[#allocation3 + $0x120] sm:$0xff]
  %v9870 = vld [vmem:[#allocation3 + $0x128] sm:$0xf]
  %v9871 = vld [vmem:[#allocation3 + $0x12c] sm:$0xff]
  %v9872 = vld [vmem:[#allocation3 + $0x134] sm:$0xf]
  %v9873 = vld [vmem:[#allocation3 + $0x138] sm:$0xff]
  %v9874 = vld [vmem:[#allocation3 + $0x140] sm:$0xf]
  %v9875 = vld [vmem:[#allocation3 + $0x144] sm:$0xff]
  %v9876 = vld [vmem:[#allocation3 + $0x14c] sm:$0xf]
  %v9877 = vld [vmem:[#allocation3 + $0x150] sm:$0xff]
  %v9878 = vld [vmem:[#allocation3 + $0x158] sm:$0xf]
  %v9879 = vld [vmem:[#allocation3 + $0x15c] sm:$0xff]
  %v9880 = vld [vmem:[#allocation3 + $0x164] sm:$0xf]
  %v9881 = vld [vmem:[#allocation3 + $0x168] sm:$0xff]
  %v9882 = vld [vmem:[#allocation3 + $0x170] sm:$0xf]
  %v9883 = vld [vmem:[#allocation3 + $0x174] sm:$0xff]
  %v9884 = vld [vmem:[#allocation3 + $0x17c] sm:$0xf]
  %v9885 = vld [vmem:[#allocation3 + $0x180] sm:$0xff]
  %v9886 = vld [vmem:[#allocation3 + $0x188] sm:$0xf]
  %v9887 = vld [vmem:[#allocation3 + $0x18c] sm:$0xff]
  %v9888 = vld [vmem:[#allocation3 + $0x194] sm:$0xf]
  %v9889 = vld [vmem:[#allocation3 + $0x198] sm:$0xff]
  %v9890 = vld [vmem:[#allocation3 + $0x1a0] sm:$0xf]
  %v9891 = vld [vmem:[#allocation3 + $0x1a4] sm:$0xff]
  %v9892 = vld [vmem:[#allocation3 + $0x1ac] sm:$0xf]
  %v9893 = vld [vmem:[#allocation3 + $0x1b0] sm:$0xff]
  %v9894 = vld [vmem:[#allocation3 + $0x1b8] sm:$0xf]
  %v9895 = vld [vmem:[#allocation3 + $0x1bc] sm:$0xff]
  %v9896 = vld [vmem:[#allocation3 + $0x1c4] sm:$0xf]
  %v9897 = vld [vmem:[#allocation3 + $0x1c8] sm:$0xff]
  %v9898 = vld [vmem:[#allocation3 + $0x1d0] sm:$0xf]
  %v9899 = vld [vmem:[#allocation3 + $0x1d4] sm:$0xff]
  %v9900 = vld [vmem:[#allocation3 + $0x1dc] sm:$0xf]
  %v9901 = vld [vmem:[#allocation3 + $0x1e0] sm:$0xff]
  %v9902 = vld [vmem:[#allocation3 + $0x1e8] sm:$0xf]
  %v9903 = vld [vmem:[#allocation3 + $0x1ec] sm:$0xff]
  %v9904 = vld [vmem:[#allocation3 + $0x1f4] sm:$0xf]
  %v9905 = vld [vmem:[#allocation3 + $0x1f8] sm:$0xff]
  %v9906 = vld [vmem:[#allocation3 + $0x200] sm:$0xf]
  %v9907 = vld [vmem:[#allocation3 + $0x204] sm:$0xff]
  %v9908 = vld [vmem:[#allocation3 + $0x20c] sm:$0xf]
  %v9909 = vld [vmem:[#allocation3 + $0x210] sm:$0xff]
  %v9910 = vld [vmem:[#allocation3 + $0x218] sm:$0xf]
  %v9911 = vld [vmem:[#allocation3 + $0x21c] sm:$0xff]
  %v9912 = vld [vmem:[#allocation3 + $0x224] sm:$0xf]
  %v9913 = vld [vmem:[#allocation3 + $0x228] sm:$0xff]
  %v9914 = vld [vmem:[#allocation3 + $0x230] sm:$0xf]
  %v9915 = vld [vmem:[#allocation3 + $0x234] sm:$0xff]
  %v9916 = vld [vmem:[#allocation3 + $0x23c] sm:$0xf]
  %v9917 = vld [vmem:[#allocation3 + $0x240] sm:$0xff]
  %v9918 = vld [vmem:[#allocation3 + $0x248] sm:$0xf]
  %v9919 = vld [vmem:[#allocation3 + $0x24c] sm:$0xff]
  %v9920 = vld [vmem:[#allocation3 + $0x254] sm:$0xf]
  %v9921 = vld [vmem:[#allocation3 + $0x258] sm:$0xff]
  %v9922 = vld [vmem:[#allocation3 + $0x260] sm:$0xf]
  %v9923 = vld [vmem:[#allocation3 + $0x264] sm:$0xff]
  %v9924 = vld [vmem:[#allocation3 + $0x26c] sm:$0xf]
  %v9925 = vld [vmem:[#allocation3 + $0x270] sm:$0xff]
  %v9926 = vld [vmem:[#allocation3 + $0x278] sm:$0xf]
  %v9927 = vld [vmem:[#allocation3 + $0x27c] sm:$0xff]
  %v9928 = vld [vmem:[#allocation3 + $0x284] sm:$0xf]
  %v9929 = vld [vmem:[#allocation3 + $0x288] sm:$0xff]
  %v9930 = vld [vmem:[#allocation3 + $0x290] sm:$0xf]
  %v9931 = vld [vmem:[#allocation3 + $0x294] sm:$0xff]
  %v9932 = vld [vmem:[#allocation3 + $0x29c] sm:$0xf]
  %v9933 = vld [vmem:[#allocation3 + $0x2a0] sm:$0xff]
  %v9934 = vld [vmem:[#allocation3 + $0x2a8] sm:$0xf]
  %v9935 = vld [vmem:[#allocation3 + $0x2ac] sm:$0xff]
  %v9936 = vld [vmem:[#allocation3 + $0x2b4] sm:$0xf]
  %v9937 = vld [vmem:[#allocation3 + $0x2b8] sm:$0xff]
  %v9938 = vld [vmem:[#allocation3 + $0x2c0] sm:$0xf]
  %v9939 = vld [vmem:[#allocation3 + $0x2c4] sm:$0xff]
  %v9940 = vld [vmem:[#allocation3 + $0x2cc] sm:$0xf]
  %v9941 = vld [vmem:[#allocation3 + $0x2d0] sm:$0xff]
  %v9942 = vld [vmem:[#allocation3 + $0x2d8] sm:$0xf]
  %v9943 = vld [vmem:[#allocation3 + $0x2dc] sm:$0xff]
  %v9944 = vld [vmem:[#allocation3 + $0x2e4] sm:$0xf]
  %v9945 = vld [vmem:[#allocation3 + $0x2e8] sm:$0xff]
  %v9946 = vld [vmem:[#allocation3 + $0x2f0] sm:$0xf]
  %v9947 = vld [vmem:[#allocation3 + $0x2f4] sm:$0xff]
  %v9948 = vld [vmem:[#allocation3 + $0x2fc] sm:$0xf]
  %v9949 = vld [vmem:[#allocation3 + $0x300] sm:$0xff]
  %v9950 = vld [vmem:[#allocation3 + $0x308] sm:$0xf]
  %v9951 = vld [vmem:[#allocation3 + $0x30c] sm:$0xff]
  %v9952 = vld [vmem:[#allocation3 + $0x314] sm:$0xf]
  %v9953 = vld [vmem:[#allocation3 + $0x318] sm:$0xff]
  %v9954 = vld [vmem:[#allocation3 + $0x320] sm:$0xf]
  %v9955 = vld [vmem:[#allocation3 + $0x324] sm:$0xff]
  %v9956 = vld [vmem:[#allocation3 + $0x32c] sm:$0xf]
  %v9957 = vld [vmem:[#allocation3 + $0x330] sm:$0xff]
  %v9958 = vld [vmem:[#allocation3 + $0x338] sm:$0xf]
  %v9959 = vld [vmem:[#allocation3 + $0x33c] sm:$0xff]
  %v9960 = vld [vmem:[#allocation3 + $0x344] sm:$0xf]
  %v9961 = vld [vmem:[#allocation3 + $0x348] sm:$0xff]
  %v9962 = vld [vmem:[#allocation3 + $0x350] sm:$0xf]
  %v9963 = vld [vmem:[#allocation3 + $0x354] sm:$0xff]
  %v9964 = vld [vmem:[#allocation3 + $0x35c] sm:$0xf]
  %v9965 = vld [vmem:[#allocation3 + $0x360] sm:$0xff]
  %v9966 = vld [vmem:[#allocation3 + $0x368] sm:$0xf]
  %v9967 = vld [vmem:[#allocation3 + $0x36c] sm:$0xff]
  %v9968 = vld [vmem:[#allocation3 + $0x374] sm:$0xf]
  %v9969 = vld [vmem:[#allocation3 + $0x378] sm:$0xff]
  %v9970 = vld [vmem:[#allocation3 + $0x380] sm:$0xf]
  %v9971 = vld [vmem:[#allocation3 + $0x384] sm:$0xff]
  %v9972 = vld [vmem:[#allocation3 + $0x38c] sm:$0xf]
  %v9973 = vld [vmem:[#allocation3 + $0x390] sm:$0xff]
  %v9974 = vld [vmem:[#allocation3 + $0x398] sm:$0xf]
  %v9975 = vld [vmem:[#allocation3 + $0x39c] sm:$0xff]
  %v9976 = vld [vmem:[#allocation3 + $0x3a4] sm:$0xf]
  %v9977 = vld [vmem:[#allocation3 + $0x3a8] sm:$0xff]
  %v9978 = vld [vmem:[#allocation3 + $0x3b0] sm:$0xf]
  %v9979 = vld [vmem:[#allocation3 + $0x3b4] sm:$0xff]
  %v9980 = vld [vmem:[#allocation3 + $0x3bc] sm:$0xf]
  %v9981 = vld [vmem:[#allocation3 + $0x3c0] sm:$0xff]
  %v9982 = vld [vmem:[#allocation3 + $0x3c8] sm:$0xf]
  %v9983 = vld [vmem:[%s2] sm:$0xf]
  %v9984 = vld [vmem:[%s2 + $0x4] sm:$0xf]
  %v9985 = vld [vmem:[%s2 + $0x8] sm:$0xf]
  %v9986 = vld [vmem:[%s2 + $0xc] sm:$0xf]
  %v9987 = vld [vmem:[%s2 + $0x10] sm:$0xf]
  %v9988 = vld [vmem:[%s2 + $0x14] sm:$0xf]
  %v9989 = vld [vmem:[%s2 + $0x18] sm:$0xf]
  %v9990 = vld [vmem:[%s2 + $0x1c] sm:$0xf]
  %v9991 = vld [vmem:[%s2 + $0x20] sm:$0xf]
  %v9992 = vld [vmem:[%s2 + $0x24] sm:$0xf]
  %v9993 = vld [vmem:[%s2 + $0x28] sm:$0xf]
  %v9994 = vld [vmem:[%s2 + $0x2c] sm:$0xf]
  %v9995 = vld [vmem:[%s2 + $0x30] sm:$0xf]
  %v9996 = vld [vmem:[%s2 + $0x34] sm:$0xf]
  %v9997 = vld [vmem:[%s2 + $0x38] sm:$0xf]
  %v9998 = vld [vmem:[%s2 + $0x3c] sm:$0xf]
  %v9999 = vld [vmem:[%s2 + $0x40] sm:$0xf]
  %v10000 = vld [vmem:[%s2 + $0x44] sm:$0xf]
  %v10001 = vld [vmem:[%s2 + $0x48] sm:$0xf]
  %v10002 = vld [vmem:[%s2 + $0x4c] sm:$0xf]
  %v10003 = vld [vmem:[%s2 + $0x50] sm:$0xf]
  %v10004 = vld [vmem:[%s2 + $0x54] sm:$0xf]
  %v10005 = vld [vmem:[%s2 + $0x58] sm:$0xf]
  %v10006 = vld [vmem:[%s2 + $0x5c] sm:$0xf]
  %v10007 = vld [vmem:[%s2 + $0x60] sm:$0xf]
  %v10008 = vld [vmem:[%s2 + $0x64] sm:$0xf]
  %v10009 = vld [vmem:[%s2 + $0x68] sm:$0xf]
  %v10010 = vld [vmem:[%s2 + $0x6c] sm:$0xf]
  %v10011 = vld [vmem:[%s2 + $0x70] sm:$0xf]
  %v10012 = vld [vmem:[%s2 + $0x74] sm:$0xf]
  %v10013 = vld [vmem:[%s2 + $0x78] sm:$0xf]
  %v10014 = vld [vmem:[%s2 + $0x7c] sm:$0xf]
  %v10015 = vld [vmem:[%s2 + $0x80] sm:$0xf]
  %v10016 = vld [vmem:[%s2 + $0x84] sm:$0xf]
  %v10017 = vld [vmem:[%s2 + $0x88] sm:$0xf]
  %v10018 = vld [vmem:[%s2 + $0x8c] sm:$0xf]
  %v10019 = vld [vmem:[%s3] sm:$0x1]
  %v10021 = vlaneseq
  %v10022 = vshrl.u32 %v10021, 7
  %v10023 = vsub.s32 0, %v10022
  %v10024 = vrot.slane %v10019, %v10023
  %v10188 = vunpack.c.l.b16 %v9821
  %v10189 = vunpack.c.h.b16 %v9821
  %v10190 = vunpack.c.l.b16 %v9822
  %v10191 = vunpack.c.l.b16 %v9823
  %v10192 = vunpack.c.h.b16 %v9823
  %v10193 = vunpack.c.l.b16 %v9824
  %v10194 = vunpack.c.l.b16 %v9825
  %v10195 = vunpack.c.h.b16 %v9825
  %v10196 = vunpack.c.l.b16 %v9826
  %v10197 = vunpack.c.l.b16 %v9827
  %v10198 = vunpack.c.h.b16 %v9827
  %v10199 = vunpack.c.l.b16 %v9828
  %v10200 = vunpack.c.l.b16 %v9829
  %v10201 = vunpack.c.h.b16 %v9829
  %v10202 = vunpack.c.l.b16 %v9830
  %v10203 = vunpack.c.l.b16 %v9831
  %v10204 = vunpack.c.h.b16 %v9831
  %v10205 = vunpack.c.l.b16 %v9832
  %v10206 = vunpack.c.l.b16 %v9833
  %v10207 = vunpack.c.h.b16 %v9833
  %v10208 = vunpack.c.l.b16 %v9834
  %v10209 = vunpack.c.l.b16 %v9835
  %v10210 = vunpack.c.h.b16 %v9835
  %v10211 = vunpack.c.l.b16 %v9836
  %v10212 = vunpack.c.l.b16 %v9837
  %v10213 = vunpack.c.h.b16 %v9837
  %v10214 = vunpack.c.l.b16 %v9838
  %v10215 = vunpack.c.l.b16 %v9839
  %v10216 = vunpack.c.h.b16 %v9839
  %v10217 = vunpack.c.l.b16 %v9840
  %v10218 = vunpack.c.l.b16 %v9841
  %v10219 = vunpack.c.h.b16 %v9841
  %v10220 = vunpack.c.l.b16 %v9842
  %v10221 = vunpack.c.l.b16 %v9843
  %v10222 = vunpack.c.h.b16 %v9843
  %v10223 = vunpack.c.l.b16 %v9844
  %v10224 = vunpack.c.l.b16 %v9845
  %v10225 = vunpack.c.h.b16 %v9845
  %v10226 = vunpack.c.l.b16 %v9846
  %v10227 = vunpack.c.l.b16 %v9847
  %v10228 = vunpack.c.h.b16 %v9847
  %v10229 = vunpack.c.l.b16 %v9848
  %v10230 = vunpack.c.l.b16 %v9849
  %v10231 = vunpack.c.h.b16 %v9849
  %v10232 = vunpack.c.l.b16 %v9850
  %v10233 = vunpack.c.l.b16 %v9851
  %v10234 = vunpack.c.h.b16 %v9851
  %v10235 = vunpack.c.l.b16 %v9852
  %v10236 = vunpack.c.l.b16 %v9853
  %v10237 = vunpack.c.h.b16 %v9853
  %v10238 = vunpack.c.l.b16 %v9854
  %v10239 = vunpack.c.l.b16 %v9855
  %v10240 = vunpack.c.h.b16 %v9855
  %v10241 = vunpack.c.l.b16 %v9856
  %v10242 = vunpack.c.l.b16 %v9857
  %v10243 = vunpack.c.h.b16 %v9857
  %v10244 = vunpack.c.l.b16 %v9858
  %v10245 = vunpack.c.l.b16 %v9859
  %v10246 = vunpack.c.h.b16 %v9859
  %v10247 = vunpack.c.l.b16 %v9860
  %v10248 = vunpack.c.l.b16 %v9861
  %v10249 = vunpack.c.h.b16 %v9861
  %v10250 = vunpack.c.l.b16 %v9862
  %v10251 = vunpack.c.l.b16 %v9863
  %v10252 = vunpack.c.h.b16 %v9863
  %v10253 = vunpack.c.l.b16 %v9864
  %v10254 = vunpack.c.l.b16 %v9865
  %v10255 = vunpack.c.h.b16 %v9865
  %v10256 = vunpack.c.l.b16 %v9866
  %v10257 = vunpack.c.l.b16 %v9867
  %v10258 = vunpack.c.h.b16 %v9867
  %v10259 = vunpack.c.l.b16 %v9868
  %v10260 = vunpack.c.l.b16 %v9869
  %v10261 = vunpack.c.h.b16 %v9869
  %v10262 = vunpack.c.l.b16 %v9870
  %v10263 = vunpack.c.l.b16 %v9871
  %v10264 = vunpack.c.h.b16 %v9871
  %v10265 = vunpack.c.l.b16 %v9872
  %v10266 = vunpack.c.l.b16 %v9873
  %v10267 = vunpack.c.h.b16 %v9873
  %v10268 = vunpack.c.l.b16 %v9874
  %v10269 = vunpack.c.l.b16 %v9875
  %v10270 = vunpack.c.h.b16 %v9875
  %v10271 = vunpack.c.l.b16 %v9876
  %v10272 = vunpack.c.l.b16 %v9877
  %v10273 = vunpack.c.h.b16 %v9877
  %v10274 = vunpack.c.l.b16 %v9878
  %v10275 = vunpack.c.l.b16 %v9879
  %v10276 = vunpack.c.h.b16 %v9879
  %v10277 = vunpack.c.l.b16 %v9880
  %v10278 = vunpack.c.l.b16 %v9881
  %v10279 = vunpack.c.h.b16 %v9881
  %v10280 = vunpack.c.l.b16 %v9882
  %v10281 = vunpack.c.l.b16 %v9883
  %v10282 = vunpack.c.h.b16 %v9883
  %v10283 = vunpack.c.l.b16 %v9884
  %v10284 = vunpack.c.l.b16 %v9885
  %v10285 = vunpack.c.h.b16 %v9885
  %v10286 = vunpack.c.l.b16 %v9886
  %v10287 = vunpack.c.l.b16 %v9887
  %v10288 = vunpack.c.h.b16 %v9887
  %v10289 = vunpack.c.l.b16 %v9888
  %v10290 = vunpack.c.l.b16 %v9889
  %v10291 = vunpack.c.h.b16 %v9889
  %v10292 = vunpack.c.l.b16 %v9890
  %v10293 = vunpack.c.l.b16 %v9891
  %v10294 = vunpack.c.h.b16 %v9891
  %v10295 = vunpack.c.l.b16 %v9892
  %v10296 = vunpack.c.l.b16 %v9893
  %v10297 = vunpack.c.h.b16 %v9893
  %v10298 = vunpack.c.l.b16 %v9894
  %v10299 = vunpack.c.l.b16 %v9895
  %v10300 = vunpack.c.h.b16 %v9895
  %v10301 = vunpack.c.l.b16 %v9896
  %v10302 = vunpack.c.l.b16 %v9897
  %v10303 = vunpack.c.h.b16 %v9897
  %v10304 = vunpack.c.l.b16 %v9898
  %v10305 = vunpack.c.l.b16 %v9899
  %v10306 = vunpack.c.h.b16 %v9899
  %v10307 = vunpack.c.l.b16 %v9900
  %v10308 = vunpack.c.l.b16 %v9901
  %v10309 = vunpack.c.h.b16 %v9901
  %v10310 = vunpack.c.l.b16 %v9902
  %v10311 = vunpack.c.l.b16 %v9903
  %v10312 = vunpack.c.h.b16 %v9903
  %v10313 = vunpack.c.l.b16 %v9904
  %v10314 = vunpack.c.l.b16 %v9905
  %v10315 = vunpack.c.h.b16 %v9905
  %v10316 = vunpack.c.l.b16 %v9906
  %v10317 = vunpack.c.l.b16 %v9907
  %v10318 = vunpack.c.h.b16 %v9907
  %v10319 = vunpack.c.l.b16 %v9908
  %v10320 = vunpack.c.l.b16 %v9909
  %v10321 = vunpack.c.h.b16 %v9909
  %v10322 = vunpack.c.l.b16 %v9910
  %v10323 = vunpack.c.l.b16 %v9911
  %v10324 = vunpack.c.h.b16 %v9911
  %v10325 = vunpack.c.l.b16 %v9912
  %v10326 = vunpack.c.l.b16 %v9913
  %v10327 = vunpack.c.h.b16 %v9913
  %v10328 = vunpack.c.l.b16 %v9914
  %v10329 = vunpack.c.l.b16 %v9915
  %v10330 = vunpack.c.h.b16 %v9915
  %v10331 = vunpack.c.l.b16 %v9916
  %v10332 = vunpack.c.l.b16 %v9917
  %v10333 = vunpack.c.h.b16 %v9917
  %v10334 = vunpack.c.l.b16 %v9918
  %v10335 = vunpack.c.l.b16 %v9919
  %v10336 = vunpack.c.h.b16 %v9919
  %v10337 = vunpack.c.l.b16 %v9920
  %v10338 = vunpack.c.l.b16 %v9921
  %v10339 = vunpack.c.h.b16 %v9921
  %v10340 = vunpack.c.l.b16 %v9922
  %v10341 = vunpack.c.l.b16 %v9923
  %v10342 = vunpack.c.h.b16 %v9923
  %v10343 = vunpack.c.l.b16 %v9924
  %v10344 = vunpack.c.l.b16 %v9925
  %v10345 = vunpack.c.h.b16 %v9925
  %v10346 = vunpack.c.l.b16 %v9926
  %v10347 = vunpack.c.l.b16 %v9927
  %v10348 = vunpack.c.h.b16 %v9927
  %v10349 = vunpack.c.l.b16 %v9928
  %v10350 = vunpack.c.l.b16 %v9929
  %v10351 = vunpack.c.h.b16 %v9929
  %v10352 = vunpack.c.l.b16 %v9930
  %v10353 = vunpack.c.l.b16 %v9931
  %v10354 = vunpack.c.h.b16 %v9931
  %v10355 = vunpack.c.l.b16 %v9932
  %v10356 = vunpack.c.l.b16 %v9933
  %v10357 = vunpack.c.h.b16 %v9933
  %v10358 = vunpack.c.l.b16 %v9934
  %v10359 = vunpack.c.l.b16 %v9935
  %v10360 = vunpack.c.h.b16 %v9935
  %v10361 = vunpack.c.l.b16 %v9936
  %v10362 = vunpack.c.l.b16 %v9937
  %v10363 = vunpack.c.h.b16 %v9937
  %v10364 = vunpack.c.l.b16 %v9938
  %v10365 = vunpack.c.l.b16 %v9939
  %v10366 = vunpack.c.h.b16 %v9939
  %v10367 = vunpack.c.l.b16 %v9940
  %v10368 = vunpack.c.l.b16 %v9941
  %v10369 = vunpack.c.h.b16 %v9941
  %v10370 = vunpack.c.l.b16 %v9942
  %v10371 = vunpack.c.l.b16 %v9943
  %v10372 = vunpack.c.h.b16 %v9943
  %v10373 = vunpack.c.l.b16 %v9944
  %v10374 = vunpack.c.l.b16 %v9945
  %v10375 = vunpack.c.h.b16 %v9945
  %v10376 = vunpack.c.l.b16 %v9946
  %v10377 = vunpack.c.l.b16 %v9947
  %v10378 = vunpack.c.h.b16 %v9947
  %v10379 = vunpack.c.l.b16 %v9948
  %v10380 = vunpack.c.l.b16 %v9949
  %v10381 = vunpack.c.h.b16 %v9949
  %v10382 = vunpack.c.l.b16 %v9950
  %v10383 = vunpack.c.l.b16 %v9951
  %v10384 = vunpack.c.h.b16 %v9951
  %v10385 = vunpack.c.l.b16 %v9952
  %v10386 = vunpack.c.l.b16 %v9953
  %v10387 = vunpack.c.h.b16 %v9953
  %v10388 = vunpack.c.l.b16 %v9954
  %v10389 = vunpack.c.l.b16 %v9955
  %v10390 = vunpack.c.h.b16 %v9955
  %v10391 = vunpack.c.l.b16 %v9956
  %v10392 = vunpack.c.l.b16 %v9957
  %v10393 = vunpack.c.h.b16 %v9957
  %v10394 = vunpack.c.l.b16 %v9958
  %v10395 = vunpack.c.l.b16 %v9959
  %v10396 = vunpack.c.h.b16 %v9959
  %v10397 = vunpack.c.l.b16 %v9960
  %v10398 = vunpack.c.l.b16 %v9961
  %v10399 = vunpack.c.h.b16 %v9961
  %v10400 = vunpack.c.l.b16 %v9962
  %v10401 = vunpack.c.l.b16 %v9963
  %v10402 = vunpack.c.h.b16 %v9963
  %v10403 = vunpack.c.l.b16 %v9964
  %v10404 = vunpack.c.l.b16 %v9965
  %v10405 = vunpack.c.h.b16 %v9965
  %v10406 = vunpack.c.l.b16 %v9966
  %v10407 = vunpack.c.l.b16 %v9967
  %v10408 = vunpack.c.h.b16 %v9967
  %v10409 = vunpack.c.l.b16 %v9968
  %v10410 = vunpack.c.l.b16 %v9969
  %v10411 = vunpack.c.h.b16 %v9969
  %v10412 = vunpack.c.l.b16 %v9970
  %v10413 = vunpack.c.l.b16 %v9971
  %v10414 = vunpack.c.h.b16 %v9971
  %v10415 = vunpack.c.l.b16 %v9972
  %v10416 = vunpack.c.l.b16 %v9973
  %v10417 = vunpack.c.h.b16 %v9973
  %v10418 = vunpack.c.l.b16 %v9974
  %v10419 = vunpack.c.l.b16 %v9975
  %v10420 = vunpack.c.h.b16 %v9975
  %v10421 = vunpack.c.l.b16 %v9976
  %v10422 = vunpack.c.l.b16 %v9977
  %v10423 = vunpack.c.h.b16 %v9977
  %v10424 = vunpack.c.l.b16 %v9978
  %v10425 = vunpack.c.l.b16 %v9979
  %v10426 = vunpack.c.h.b16 %v9979
  %v10427 = vunpack.c.l.b16 %v9980
  %v10428 = vunpack.c.l.b16 %v9981
  %v10429 = vunpack.c.h.b16 %v9981
  %v10430 = vunpack.c.l.b16 %v9982
  %v10431 = vpack.c.b16 %v10191, %v10188
  %v10432 = vpack.c.b16 %v10192, %v10189
  %v10433 = vpack.c.b16 %v10193, %v10190
  %v10434 = vpack.c.b16 %v10197, %v10194
  %v10435 = vpack.c.b16 %v10198, %v10195
  %v10436 = vpack.c.b16 %v10199, %v10196
  %v10437 = vpack.c.b16 %v10203, %v10200
  %v10438 = vpack.c.b16 %v10204, %v10201
  %v10439 = vpack.c.b16 %v10205, %v10202
  %v10440 = vpack.c.b16 %v10209, %v10206
  %v10441 = vpack.c.b16 %v10210, %v10207
  %v10442 = vpack.c.b16 %v10211, %v10208
  %v10443 = vpack.c.b16 %v10215, %v10212
  %v10444 = vpack.c.b16 %v10216, %v10213
  %v10445 = vpack.c.b16 %v10217, %v10214
  %v10446 = vpack.c.b16 %v10221, %v10218
  %v10447 = vpack.c.b16 %v10222, %v10219
  %v10448 = vpack.c.b16 %v10223, %v10220
  %v10449 = vpack.c.b16 %v10227, %v10224
  %v10450 = vpack.c.b16 %v10228, %v10225
  %v10451 = vpack.c.b16 %v10229, %v10226
  %v10452 = vpack.c.b16 %v10233, %v10230
  %v10453 = vpack.c.b16 %v10234, %v10231
  %v10454 = vpack.c.b16 %v10235, %v10232
  %v10455 = vpack.c.b16 %v10239, %v10236
  %v10456 = vpack.c.b16 %v10240, %v10237
  %v10457 = vpack.c.b16 %v10241, %v10238
  %v10458 = vpack.c.b16 %v10245, %v10242
  %v10459 = vpack.c.b16 %v10246, %v10243
  %v10460 = vpack.c.b16 %v10247, %v10244
  %v10461 = vpack.c.b16 %v10251, %v10248
  %v10462 = vpack.c.b16 %v10252, %v10249
  %v10463 = vpack.c.b16 %v10253, %v10250
  %v10464 = vpack.c.b16 %v10257, %v10254
  %v10465 = vpack.c.b16 %v10258, %v10255
  %v10466 = vpack.c.b16 %v10259, %v10256
  %v10467 = vpack.c.b16 %v10263, %v10260
  %v10468 = vpack.c.b16 %v10264, %v10261
  %v10469 = vpack.c.b16 %v10265, %v10262
  %v10470 = vpack.c.b16 %v10269, %v10266
  %v10471 = vpack.c.b16 %v10270, %v10267
  %v10472 = vpack.c.b16 %v10271, %v10268
  %v10473 = vpack.c.b16 %v10275, %v10272
  %v10474 = vpack.c.b16 %v10276, %v10273
  %v10475 = vpack.c.b16 %v10277, %v10274
  %v10476 = vpack.c.b16 %v10281, %v10278
  %v10477 = vpack.c.b16 %v10282, %v10279
  %v10478 = vpack.c.b16 %v10283, %v10280
  %v10479 = vpack.c.b16 %v10287, %v10284
  %v10480 = vpack.c.b16 %v10288, %v10285
  %v10481 = vpack.c.b16 %v10289, %v10286
  %v10482 = vpack.c.b16 %v10293, %v10290
  %v10483 = vpack.c.b16 %v10294, %v10291
  %v10484 = vpack.c.b16 %v10295, %v10292
  %v10485 = vpack.c.b16 %v10299, %v10296
  %v10486 = vpack.c.b16 %v10300, %v10297
  %v10487 = vpack.c.b16 %v10301, %v10298
  %v10488 = vpack.c.b16 %v10305, %v10302
  %v10489 = vpack.c.b16 %v10306, %v10303
  %v10490 = vpack.c.b16 %v10307, %v10304
  %v10491 = vpack.c.b16 %v10311, %v10308
  %v10492 = vpack.c.b16 %v10312, %v10309
  %v10493 = vpack.c.b16 %v10313, %v10310
  %v10494 = vpack.c.b16 %v10317, %v10314
  %v10495 = vpack.c.b16 %v10318, %v10315
  %v10496 = vpack.c.b16 %v10319, %v10316
  %v10497 = vpack.c.b16 %v10323, %v10320
  %v10498 = vpack.c.b16 %v10324, %v10321
  %v10499 = vpack.c.b16 %v10325, %v10322
  %v10500 = vpack.c.b16 %v10329, %v10326
  %v10501 = vpack.c.b16 %v10330, %v10327
  %v10502 = vpack.c.b16 %v10331, %v10328
  %v10503 = vpack.c.b16 %v10335, %v10332
  %v10504 = vpack.c.b16 %v10336, %v10333
  %v10505 = vpack.c.b16 %v10337, %v10334
  %v10506 = vpack.c.b16 %v10341, %v10338
  %v10507 = vpack.c.b16 %v10342, %v10339
  %v10508 = vpack.c.b16 %v10343, %v10340
  %v10509 = vpack.c.b16 %v10347, %v10344
  %v10510 = vpack.c.b16 %v10348, %v10345
  %v10511 = vpack.c.b16 %v10349, %v10346
  %v10512 = vpack.c.b16 %v10353, %v10350
  %v10513 = vpack.c.b16 %v10354, %v10351
  %v10514 = vpack.c.b16 %v10355, %v10352
  %v10515 = vpack.c.b16 %v10359, %v10356
  %v10516 = vpack.c.b16 %v10360, %v10357
  %v10517 = vpack.c.b16 %v10361, %v10358
  %v10518 = vpack.c.b16 %v10365, %v10362
  %v10519 = vpack.c.b16 %v10366, %v10363
  %v10520 = vpack.c.b16 %v10367, %v10364
  %v10521 = vpack.c.b16 %v10371, %v10368
  %v10522 = vpack.c.b16 %v10372, %v10369
  %v10523 = vpack.c.b16 %v10373, %v10370
  %v10524 = vpack.c.b16 %v10377, %v10374
  %v10525 = vpack.c.b16 %v10378, %v10375
  %v10526 = vpack.c.b16 %v10379, %v10376
  %v10527 = vpack.c.b16 %v10383, %v10380
  %v10528 = vpack.c.b16 %v10384, %v10381
  %v10529 = vpack.c.b16 %v10385, %v10382
  %v10530 = vpack.c.b16 %v10389, %v10386
  %v10531 = vpack.c.b16 %v10390, %v10387
  %v10532 = vpack.c.b16 %v10391, %v10388
  %v10533 = vpack.c.b16 %v10395, %v10392
  %v10534 = vpack.c.b16 %v10396, %v10393
  %v10535 = vpack.c.b16 %v10397, %v10394
  %v10536 = vpack.c.b16 %v10401, %v10398
  %v10537 = vpack.c.b16 %v10402, %v10399
  %v10538 = vpack.c.b16 %v10403, %v10400
  %v10539 = vpack.c.b16 %v10407, %v10404
  %v10540 = vpack.c.b16 %v10408, %v10405
  %v10541 = vpack.c.b16 %v10409, %v10406
  %v10542 = vpack.c.b16 %v10413, %v10410
  %v10543 = vpack.c.b16 %v10414, %v10411
  %v10544 = vpack.c.b16 %v10415, %v10412
  %v10545 = vpack.c.b16 %v10419, %v10416
  %v10546 = vpack.c.b16 %v10420, %v10417
  %v10547 = vpack.c.b16 %v10421, %v10418
  %v10548 = vpack.c.b16 %v10425, %v10422
  %v10549 = vpack.c.b16 %v10426, %v10423
  %v10550 = vpack.c.b16 %v10427, %v10424
  %v10551 = vpack.c.b16 %v10428, %v10428
  %v10552 = vpack.c.b16 %v10429, %v10429
  %v10553 = vpack.c.b16 %v10430, %v10430
  %v10672 = vunpack.c.l.b16 %v9983
  %v10673 = vunpack.c.l.b16 %v9984
  %v10674 = vunpack.c.l.b16 %v9985
  %v10675 = vunpack.c.l.b16 %v9986
  %v10676 = vunpack.c.l.b16 %v9987
  %v10677 = vunpack.c.l.b16 %v9988
  %v10678 = vunpack.c.l.b16 %v9989
  %v10679 = vunpack.c.l.b16 %v9990
  %v10680 = vunpack.c.l.b16 %v9991
  %v10681 = vunpack.c.l.b16 %v9992
  %v10682 = vunpack.c.l.b16 %v9993
  %v10683 = vunpack.c.l.b16 %v9994
  %v10684 = vunpack.c.l.b16 %v9995
  %v10685 = vunpack.c.l.b16 %v9996
  %v10686 = vunpack.c.l.b16 %v9997
  %v10687 = vunpack.c.l.b16 %v9998
  %v10688 = vunpack.c.l.b16 %v9999
  %v10689 = vunpack.c.l.b16 %v10000
  %v10690 = vunpack.c.l.b16 %v10001
  %v10691 = vunpack.c.l.b16 %v10002
  %v10692 = vunpack.c.l.b16 %v10003
  %v10693 = vunpack.c.l.b16 %v10004
  %v10694 = vunpack.c.l.b16 %v10005
  %v10695 = vunpack.c.l.b16 %v10006
  %v10696 = vunpack.c.l.b16 %v10007
  %v10697 = vunpack.c.l.b16 %v10008
  %v10698 = vunpack.c.l.b16 %v10009
  %v10699 = vunpack.c.l.b16 %v10010
  %v10700 = vunpack.c.l.b16 %v10011
  %v10701 = vunpack.c.l.b16 %v10012
  %v10702 = vunpack.c.l.b16 %v10013
  %v10703 = vunpack.c.l.b16 %v10014
  %v10704 = vunpack.c.l.b16 %v10015
  %v10705 = vunpack.c.l.b16 %v10016
  %v10706 = vunpack.c.l.b16 %v10017
  %v10707 = vunpack.c.l.b16 %v10018
  %v10708 = vpack.c.b16 %v10673, %v10672
  %v10709 = vpack.c.b16 %v10675, %v10674
  %v10710 = vpack.c.b16 %v10677, %v10676
  %v10711 = vpack.c.b16 %v10679, %v10678
  %v10712 = vpack.c.b16 %v10681, %v10680
  %v10713 = vpack.c.b16 %v10683, %v10682
  %v10714 = vpack.c.b16 %v10685, %v10684
  %v10715 = vpack.c.b16 %v10687, %v10686
  %v10716 = vpack.c.b16 %v10689, %v10688
  %v10717 = vpack.c.b16 %v10691, %v10690
  %v10718 = vpack.c.b16 %v10693, %v10692
  %v10719 = vpack.c.b16 %v10695, %v10694
  %v10720 = vpack.c.b16 %v10697, %v10696
  %v10721 = vpack.c.b16 %v10699, %v10698
  %v10722 = vpack.c.b16 %v10701, %v10700
  %v10723 = vpack.c.b16 %v10703, %v10702
  %v10724 = vpack.c.b16 %v10705, %v10704
  %v10725 = vpack.c.b16 %v10707, %v10706
  %vm10744 = vcmask 261120
  %v10746 = vsel %vm10744, %v10433, 0
  %v10749 = vsel %vm10744, %v10436, 0
  %v10752 = vsel %vm10744, %v10439, 0
  %v10755 = vsel %vm10744, %v10442, 0
  %v10758 = vsel %vm10744, %v10445, 0
  %v10761 = vsel %vm10744, %v10448, 0
  %v10764 = vsel %vm10744, %v10451, 0
  %v10767 = vsel %vm10744, %v10454, 0
  %v10770 = vsel %vm10744, %v10457, 0
  %v10773 = vsel %vm10744, %v10460, 0
  %v10776 = vsel %vm10744, %v10463, 0
  %v10779 = vsel %vm10744, %v10466, 0
  %v10782 = vsel %vm10744, %v10469, 0
  %v10785 = vsel %vm10744, %v10472, 0
  %v10788 = vsel %vm10744, %v10475, 0
  %v10791 = vsel %vm10744, %v10478, 0
  %v10794 = vsel %vm10744, %v10481, 0
  %v10797 = vsel %vm10744, %v10484, 0
  %v10800 = vsel %vm10744, %v10487, 0
  %v10803 = vsel %vm10744, %v10490, 0
  %v10806 = vsel %vm10744, %v10493, 0
  %v10809 = vsel %vm10744, %v10496, 0
  %v10812 = vsel %vm10744, %v10499, 0
  %v10815 = vsel %vm10744, %v10502, 0
  %v10818 = vsel %vm10744, %v10505, 0
  %v10821 = vsel %vm10744, %v10508, 0
  %v10824 = vsel %vm10744, %v10511, 0
  %v10827 = vsel %vm10744, %v10514, 0
  %v10830 = vsel %vm10744, %v10517, 0
  %v10833 = vsel %vm10744, %v10520, 0
  %v10836 = vsel %vm10744, %v10523, 0
  %v10839 = vsel %vm10744, %v10526, 0
  %v10842 = vsel %vm10744, %v10529, 0
  %v10845 = vsel %vm10744, %v10532, 0
  %v10848 = vsel %vm10744, %v10535, 0
  %v10851 = vsel %vm10744, %v10538, 0
  %v10854 = vsel %vm10744, %v10541, 0
  %v10857 = vsel %vm10744, %v10544, 0
  %v10860 = vsel %vm10744, %v10547, 0
  %v10863 = vsel %vm10744, %v10550, 0
  %v10866 = vsel %vm10744, %v10553, 0
  %10868 = vmatprep.subr.bf16.mxu0 0
  %10869 = vmatpush1.bf16.msra.mxu0 %v10708
  %10870 = vmatprep.subr.bf16.mxu0 0
  %10871 = vmatpush1.bf16.msra.mxu0 %v10709
  %10872 = vmatprep.subr.bf16.mxu0 0
  %10873 = vmatpush1.bf16.msra.mxu0 %v10710
  %10874 = vmatprep.subr.bf16.mxu0 0
  %10875 = vmatpush1.bf16.msra.mxu0 %v10711
  %10876 = vmatprep.subr.bf16.mxu0 0
  %10877 = vmatpush1.bf16.msra.mxu0 %v10712
  %10878 = vmatprep.subr.bf16.mxu0 0
  %10879 = vmatpush1.bf16.msra.mxu0 %v10713
  %10880 = vmatprep.subr.bf16.mxu0 0
  %10881 = vmatpush1.bf16.msra.mxu0 %v10714
  %10882 = vmatprep.subr.bf16.mxu0 0
  %10883 = vmatpush1.bf16.msra.mxu0 %v10715
  %10884 = vmatprep.subr.bf16.mxu0 0
  %10885 = vmatpush1.bf16.msra.mxu0 %v10716
  %10886 = vmatprep.subr.bf16.mxu0 0
  %10887 = vmatpush1.bf16.msra.mxu0 %v10717
  %10888 = vmatprep.subr.bf16.mxu0 0
  %10889 = vmatpush1.bf16.msra.mxu0 %v10718
  %10890 = vmatprep.subr.bf16.mxu0 0
  %10891 = vmatpush1.bf16.msra.mxu0 %v10719
  %10892 = vmatprep.subr.bf16.mxu0 0
  %10893 = vmatpush1.bf16.msra.mxu0 %v10720
  %10894 = vmatprep.subr.bf16.mxu0 0
  %10895 = vmatpush1.bf16.msra.mxu0 %v10721
  %10896 = vmatprep.subr.bf16.mxu0 0
  %10897 = vmatpush1.bf16.msra.mxu0 %v10722
  %10898 = vmatprep.subr.bf16.mxu0 0
  %10899 = vmatpush1.bf16.msra.mxu0 %v10723
  %10900 = vmatprep.mubr.bf16.mxu0 %v10432
  %10901 = vmatmul.mubr.bf16.gmra.mrb[0].mxu0 %v10431
  %v10902 = vpop.f32.mrb[0].mxu0
  %v10903 = vadd.f32 %v10024, %v10902
  %v10904 = vpop.f32.mrb[0].mxu0
  %v10905 = vpop.f32.mrb[0].mxu0
  %v10906 = vadd.f32 %v10024, %v10905
  %v10907 = vpop.f32.mrb[0].mxu0
  %10908 = vmatprep.mubr.bf16.mxu0 %v10435
  %10909 = vmatmul.mubr.bf16.gmra.mrb[0].mxu0 %v10434
  %v10910 = vpop.f32.mrb[0].mxu0
  %v10911 = vadd.f32 %v10024, %v10910
  %v10912 = vpop.f32.mrb[0].mxu0
  %v10913 = vpop.f32.mrb[0].mxu0
  %v10914 = vadd.f32 %v10024, %v10913
  %v10915 = vpop.f32.mrb[0].mxu0
  %10916 = vmatprep.mubr.bf16.mxu0 %v10438
  %10917 = vmatmul.mubr.bf16.gmra.mrb[0].mxu0 %v10437
  %v10918 = vpop.f32.mrb[0].mxu0
  %v10919 = vadd.f32 %v10024, %v10918
  %v10920 = vpop.f32.mrb[0].mxu0
  %v10921 = vpop.f32.mrb[0].mxu0
  %v10922 = vadd.f32 %v10024, %v10921
  %v10923 = vpop.f32.mrb[0].mxu0
  %10924 = vmatprep.mubr.bf16.mxu0 %v10441
  %10925 = vmatmul.mubr.bf16.gmra.mrb[0].mxu0 %v10440
  %v10926 = vpop.f32.mrb[0].mxu0
  %v10927 = vadd.f32 %v10024, %v10926
  %v10928 = vpop.f32.mrb[0].mxu0
  %v10929 = vpop.f32.mrb[0].mxu0
  %v10930 = vadd.f32 %v10024, %v10929
  %v10931 = vpop.f32.mrb[0].mxu0
  %10932 = vmatprep.mubr.bf16.mxu0 %v10444
  %10933 = vmatmul.mubr.bf16.gmra.mrb[0].mxu0 %v10443
  %v10934 = vpop.f32.mrb[0].mxu0
  %v10935 = vadd.f32 %v10024, %v10934
  %v10936 = vpop.f32.mrb[0].mxu0
  %v10937 = vpop.f32.mrb[0].mxu0
  %v10938 = vadd.f32 %v10024, %v10937
  %v10939 = vpop.f32.mrb[0].mxu0
  %10940 = vmatprep.mubr.bf16.mxu0 %v10447
  %10941 = vmatmul.mubr.bf16.gmra.mrb[0].mxu0 %v10446
  %v10942 = vpop.f32.mrb[0].mxu0
  %v10943 = vadd.f32 %v10024, %v10942
  %v10944 = vpop.f32.mrb[0].mxu0
  %v10945 = vpop.f32.mrb[0].mxu0
  %v10946 = vadd.f32 %v10024, %v10945
  %v10947 = vpop.f32.mrb[0].mxu0
  %10948 = vmatprep.mubr.bf16.mxu0 %v10450
  %10949 = vmatmul.mubr.bf16.gmra.mrb[0].mxu0 %v10449
  %v10950 = vpop.f32.mrb[0].mxu0
  %v10951 = vadd.f32 %v10024, %v10950
  %v10952 = vpop.f32.mrb[0].mxu0
  %v10953 = vpop.f32.mrb[0].mxu0
  %v10954 = vadd.f32 %v10024, %v10953
  %v10955 = vpop.f32.mrb[0].mxu0
  %10956 = vmatprep.mubr.bf16.mxu0 %v10453
  %10957 = vmatmul.mubr.bf16.gmra.mrb[0].mxu0 %v10452
  %v10958 = vpop.f32.mrb[0].mxu0
  %v10959 = vadd.f32 %v10024, %v10958
  %v10960 = vpop.f32.mrb[0].mxu0
  %v10961 = vpop.f32.mrb[0].mxu0
  %v10962 = vadd.f32 %v10024, %v10961
  %v10963 = vpop.f32.mrb[0].mxu0
  %10964 = vmatprep.mubr.bf16.mxu0 %v10456
  %10965 = vmatmul.mubr.bf16.gmra.mrb[0].mxu0 %v10455
  %v10966 = vpop.f32.mrb[0].mxu0
  %v10967 = vadd.f32 %v10024, %v10966
  %v10968 = vpop.f32.mrb[0].mxu0
  %v10969 = vpop.f32.mrb[0].mxu0
  %v10970 = vadd.f32 %v10024, %v10969
  %v10971 = vpop.f32.mrb[0].mxu0
  %10972 = vmatprep.mubr.bf16.mxu0 %v10459
  %10973 = vmatmul.mubr.bf16.gmra.mrb[0].mxu0 %v10458
  %v10974 = vpop.f32.mrb[0].mxu0
  %v10975 = vadd.f32 %v10024, %v10974
  %v10976 = vpop.f32.mrb[0].mxu0
  %v10977 = vpop.f32.mrb[0].mxu0
  %v10978 = vadd.f32 %v10024, %v10977
  %v10979 = vpop.f32.mrb[0].mxu0
  %10980 = vmatprep.mubr.bf16.mxu0 %v10462
  %10981 = vmatmul.mubr.bf16.gmra.mrb[0].mxu0 %v10461
  %v10982 = vpop.f32.mrb[0].mxu0
  %v10983 = vadd.f32 %v10024, %v10982
  %v10984 = vpop.f32.mrb[0].mxu0
  %v10985 = vpop.f32.mrb[0].mxu0
  %v10986 = vadd.f32 %v10024, %v10985
  %v10987 = vpop.f32.mrb[0].mxu0
  %10988 = vmatprep.mubr.bf16.mxu0 %v10465
  %10989 = vmatmul.mubr.bf16.gmra.mrb[0].mxu0 %v10464
  %v10990 = vpop.f32.mrb[0].mxu0
  %v10991 = vadd.f32 %v10024, %v10990
  %v10992 = vpop.f32.mrb[0].mxu0
  %v10993 = vpop.f32.mrb[0].mxu0
  %v10994 = vadd.f32 %v10024, %v10993
  %v10995 = vpop.f32.mrb[0].mxu0
  %10996 = vmatprep.mubr.bf16.mxu0 %v10468
  %10997 = vmatmul.mubr.bf16.gmra.mrb[0].mxu0 %v10467
  %v10998 = vpop.f32.mrb[0].mxu0
  %v10999 = vadd.f32 %v10024, %v10998
  %v11000 = vpop.f32.mrb[0].mxu0
  %v11001 = vpop.f32.mrb[0].mxu0
  %v11002 = vadd.f32 %v10024, %v11001
  %v11003 = vpop.f32.mrb[0].mxu0
  %11004 = vmatprep.mubr.bf16.mxu0 %v10471
  %11005 = vmatmul.mubr.bf16.gmra.mrb[0].mxu0 %v10470
  %v11006 = vpop.f32.mrb[0].mxu0
  %v11007 = vadd.f32 %v10024, %v11006
  %v11008 = vpop.f32.mrb[0].mxu0
  %v11009 = vpop.f32.mrb[0].mxu0
  %v11010 = vadd.f32 %v10024, %v11009
  %v11011 = vpop.f32.mrb[0].mxu0
  %11012 = vmatprep.mubr.bf16.mxu0 %v10474
  %11013 = vmatmul.mubr.bf16.gmra.mrb[0].mxu0 %v10473
  %v11014 = vpop.f32.mrb[0].mxu0
  %v11015 = vadd.f32 %v10024, %v11014
  %v11016 = vpop.f32.mrb[0].mxu0
  %v11017 = vpop.f32.mrb[0].mxu0
  %v11018 = vadd.f32 %v10024, %v11017
  %v11019 = vpop.f32.mrb[0].mxu0
  %11020 = vmatprep.mubr.bf16.mxu0 %v10477
  %11021 = vmatmul.mubr.bf16.gmra.mrb[0].mxu0 %v10476
  %v11022 = vpop.f32.mrb[0].mxu0
  %v11023 = vadd.f32 %v10024, %v11022
  %v11024 = vpop.f32.mrb[0].mxu0
  %v11025 = vpop.f32.mrb[0].mxu0
  %v11026 = vadd.f32 %v10024, %v11025
  %v11027 = vpop.f32.mrb[0].mxu0
  %11028 = vmatprep.mubr.bf16.mxu0 %v10480
  %11029 = vmatmul.mubr.bf16.gmra.mrb[0].mxu0 %v10479
  %v11030 = vpop.f32.mrb[0].mxu0
  %v11031 = vadd.f32 %v10024, %v11030
  %v11032 = vpop.f32.mrb[0].mxu0
  %v11033 = vpop.f32.mrb[0].mxu0
  %v11034 = vadd.f32 %v10024, %v11033
  %v11035 = vpop.f32.mrb[0].mxu0
  %11036 = vmatprep.mubr.bf16.mxu0 %v10483
  %11037 = vmatmul.mubr.bf16.gmra.mrb[0].mxu0 %v10482
  %v11038 = vpop.f32.mrb[0].mxu0
  %v11039 = vadd.f32 %v10024, %v11038
  %v11040 = vpop.f32.mrb[0].mxu0
  %v11041 = vpop.f32.mrb[0].mxu0
  %v11042 = vadd.f32 %v10024, %v11041
  %v11043 = vpop.f32.mrb[0].mxu0
  %11044 = vmatprep.mubr.bf16.mxu0 %v10486
  %11045 = vmatmul.mubr.bf16.gmra.mrb[0].mxu0 %v10485
  %v11046 = vpop.f32.mrb[0].mxu0
  %v11047 = vadd.f32 %v10024, %v11046
  %v11048 = vpop.f32.mrb[0].mxu0
  %v11049 = vpop.f32.mrb[0].mxu0
  %v11050 = vadd.f32 %v10024, %v11049
  %v11051 = vpop.f32.mrb[0].mxu0
  %11052 = vmatprep.mubr.bf16.mxu0 %v10489
  %11053 = vmatmul.mubr.bf16.gmra.mrb[0].mxu0 %v10488
  %v11054 = vpop.f32.mrb[0].mxu0
  %v11055 = vadd.f32 %v10024, %v11054
  %v11056 = vpop.f32.mrb[0].mxu0
  %v11057 = vpop.f32.mrb[0].mxu0
  %v11058 = vadd.f32 %v10024, %v11057
  %v11059 = vpop.f32.mrb[0].mxu0
  %11060 = vmatprep.mubr.bf16.mxu0 %v10492
  %11061 = vmatmul.mubr.bf16.gmra.mrb[0].mxu0 %v10491
  %v11062 = vpop.f32.mrb[0].mxu0
  %v11063 = vadd.f32 %v10024, %v11062
  %v11064 = vpop.f32.mrb[0].mxu0
  %v11065 = vpop.f32.mrb[0].mxu0
  %v11066 = vadd.f32 %v10024, %v11065
  %v11067 = vpop.f32.mrb[0].mxu0
  %11068 = vmatprep.mubr.bf16.mxu0 %v10495
  %11069 = vmatmul.mubr.bf16.gmra.mrb[0].mxu0 %v10494
  %v11070 = vpop.f32.mrb[0].mxu0
  %v11071 = vadd.f32 %v10024, %v11070
  %v11072 = vpop.f32.mrb[0].mxu0
  %v11073 = vpop.f32.mrb[0].mxu0
  %v11074 = vadd.f32 %v10024, %v11073
  %v11075 = vpop.f32.mrb[0].mxu0
  %11076 = vmatprep.mubr.bf16.mxu0 %v10498
  %11077 = vmatmul.mubr.bf16.gmra.mrb[0].mxu0 %v10497
  %v11078 = vpop.f32.mrb[0].mxu0
  %v11079 = vadd.f32 %v10024, %v11078
  %v11080 = vpop.f32.mrb[0].mxu0
  %v11081 = vpop.f32.mrb[0].mxu0
  %v11082 = vadd.f32 %v10024, %v11081
  %v11083 = vpop.f32.mrb[0].mxu0
  %11084 = vmatprep.mubr.bf16.mxu0 %v10501
  %11085 = vmatmul.mubr.bf16.gmra.mrb[0].mxu0 %v10500
  %v11086 = vpop.f32.mrb[0].mxu0
  %v11087 = vadd.f32 %v10024, %v11086
  %v11088 = vpop.f32.mrb[0].mxu0
  %v11089 = vpop.f32.mrb[0].mxu0
  %v11090 = vadd.f32 %v10024, %v11089
  %v11091 = vpop.f32.mrb[0].mxu0
  %11092 = vmatprep.mubr.bf16.mxu0 %v10504
  %11093 = vmatmul.mubr.bf16.gmra.mrb[0].mxu0 %v10503
  %v11094 = vpop.f32.mrb[0].mxu0
  %v11095 = vadd.f32 %v10024, %v11094
  %v11096 = vpop.f32.mrb[0].mxu0
  %v11097 = vpop.f32.mrb[0].mxu0
  %v11098 = vadd.f32 %v10024, %v11097
  %v11099 = vpop.f32.mrb[0].mxu0
  %11100 = vmatprep.mubr.bf16.mxu0 %v10507
  %11101 = vmatmul.mubr.bf16.gmra.mrb[0].mxu0 %v10506
  %v11102 = vpop.f32.mrb[0].mxu0
  %v11103 = vadd.f32 %v10024, %v11102
  %v11104 = vpop.f32.mrb[0].mxu0
  %v11105 = vpop.f32.mrb[0].mxu0
  %v11106 = vadd.f32 %v10024, %v11105
  %v11107 = vpop.f32.mrb[0].mxu0
  %11108 = vmatprep.mubr.bf16.mxu0 %v10510
  %11109 = vmatmul.mubr.bf16.gmra.mrb[0].mxu0 %v10509
  %v11110 = vpop.f32.mrb[0].mxu0
  %v11111 = vadd.f32 %v10024, %v11110
  %v11112 = vpop.f32.mrb[0].mxu0
  %v11113 = vpop.f32.mrb[0].mxu0
  %v11114 = vadd.f32 %v10024, %v11113
  %v11115 = vpop.f32.mrb[0].mxu0
  %11116 = vmatprep.mubr.bf16.mxu0 %v10513
  %11117 = vmatmul.mubr.bf16.gmra.mrb[0].mxu0 %v10512
  %v11118 = vpop.f32.mrb[0].mxu0
  %v11119 = vadd.f32 %v10024, %v11118
  %v11120 = vpop.f32.mrb[0].mxu0
  %v11121 = vpop.f32.mrb[0].mxu0
  %v11122 = vadd.f32 %v10024, %v11121
  %v11123 = vpop.f32.mrb[0].mxu0
  %11124 = vmatprep.mubr.bf16.mxu0 %v10516
  %11125 = vmatmul.mubr.bf16.gmra.mrb[0].mxu0 %v10515
  %v11126 = vpop.f32.mrb[0].mxu0
  %v11127 = vadd.f32 %v10024, %v11126
  %v11128 = vpop.f32.mrb[0].mxu0
  %v11129 = vpop.f32.mrb[0].mxu0
  %v11130 = vadd.f32 %v10024, %v11129
  %v11131 = vpop.f32.mrb[0].mxu0
  %11132 = vmatprep.mubr.bf16.mxu0 %v10519
  %11133 = vmatmul.mubr.bf16.gmra.mrb[0].mxu0 %v10518
  %v11134 = vpop.f32.mrb[0].mxu0
  %v11135 = vadd.f32 %v10024, %v11134
  %v11136 = vpop.f32.mrb[0].mxu0
  %v11137 = vpop.f32.mrb[0].mxu0
  %v11138 = vadd.f32 %v10024, %v11137
  %v11139 = vpop.f32.mrb[0].mxu0
  %11140 = vmatprep.mubr.bf16.mxu0 %v10522
  %11141 = vmatmul.mubr.bf16.gmra.mrb[0].mxu0 %v10521
  %v11142 = vpop.f32.mrb[0].mxu0
  %v11143 = vadd.f32 %v10024, %v11142
  %v11144 = vpop.f32.mrb[0].mxu0
  %v11145 = vpop.f32.mrb[0].mxu0
  %v11146 = vadd.f32 %v10024, %v11145
  %v11147 = vpop.f32.mrb[0].mxu0
  %11148 = vmatprep.mubr.bf16.mxu0 %v10525
  %11149 = vmatmul.mubr.bf16.gmra.mrb[0].mxu0 %v10524
  %v11150 = vpop.f32.mrb[0].mxu0
  %v11151 = vadd.f32 %v10024, %v11150
  %v11152 = vpop.f32.mrb[0].mxu0
  %v11153 = vpop.f32.mrb[0].mxu0
  %v11154 = vadd.f32 %v10024, %v11153
  %v11155 = vpop.f32.mrb[0].mxu0
  %11156 = vmatprep.mubr.bf16.mxu0 %v10528
  %11157 = vmatmul.mubr.bf16.gmra.mrb[0].mxu0 %v10527
  %v11158 = vpop.f32.mrb[0].mxu0
  %v11159 = vadd.f32 %v10024, %v11158
  %v11160 = vpop.f32.mrb[0].mxu0
  %v11161 = vpop.f32.mrb[0].mxu0
  %v11162 = vadd.f32 %v10024, %v11161
  %v11163 = vpop.f32.mrb[0].mxu0
  %11164 = vmatprep.mubr.bf16.mxu0 %v10531
  %11165 = vmatmul.mubr.bf16.gmra.mrb[0].mxu0 %v10530
  %v11166 = vpop.f32.mrb[0].mxu0
  %v11167 = vadd.f32 %v10024, %v11166
  %v11168 = vpop.f32.mrb[0].mxu0
  %v11169 = vpop.f32.mrb[0].mxu0
  %v11170 = vadd.f32 %v10024, %v11169
  %v11171 = vpop.f32.mrb[0].mxu0
  %11172 = vmatprep.mubr.bf16.mxu0 %v10534
  %11173 = vmatmul.mubr.bf16.gmra.mrb[0].mxu0 %v10533
  %v11174 = vpop.f32.mrb[0].mxu0
  %v11175 = vadd.f32 %v10024, %v11174
  %v11176 = vpop.f32.mrb[0].mxu0
  %v11177 = vpop.f32.mrb[0].mxu0
  %v11178 = vadd.f32 %v10024, %v11177
  %v11179 = vpop.f32.mrb[0].mxu0
  %11180 = vmatprep.mubr.bf16.mxu0 %v10537
  %11181 = vmatmul.mubr.bf16.gmra.mrb[0].mxu0 %v10536
  %v11182 = vpop.f32.mrb[0].mxu0
  %v11183 = vadd.f32 %v10024, %v11182
  %v11184 = vpop.f32.mrb[0].mxu0
  %v11185 = vpop.f32.mrb[0].mxu0
  %v11186 = vadd.f32 %v10024, %v11185
  %v11187 = vpop.f32.mrb[0].mxu0
  %11188 = vmatprep.mubr.bf16.mxu0 %v10540
  %11189 = vmatmul.mubr.bf16.gmra.mrb[0].mxu0 %v10539
  %v11190 = vpop.f32.mrb[0].mxu0
  %v11191 = vadd.f32 %v10024, %v11190
  %v11192 = vpop.f32.mrb[0].mxu0
  %v11193 = vpop.f32.mrb[0].mxu0
  %v11194 = vadd.f32 %v10024, %v11193
  %v11195 = vpop.f32.mrb[0].mxu0
  %11196 = vmatprep.mubr.bf16.mxu0 %v10543
  %11197 = vmatmul.mubr.bf16.gmra.mrb[0].mxu0 %v10542
  %v11198 = vpop.f32.mrb[0].mxu0
  %v11199 = vadd.f32 %v10024, %v11198
  %v11200 = vpop.f32.mrb[0].mxu0
  %v11201 = vpop.f32.mrb[0].mxu0
  %v11202 = vadd.f32 %v10024, %v11201
  %v11203 = vpop.f32.mrb[0].mxu0
  %11204 = vmatprep.mubr.bf16.mxu0 %v10546
  %11205 = vmatmul.mubr.bf16.gmra.mrb[0].mxu0 %v10545
  %v11206 = vpop.f32.mrb[0].mxu0
  %v11207 = vadd.f32 %v10024, %v11206
  %v11208 = vpop.f32.mrb[0].mxu0
  %v11209 = vpop.f32.mrb[0].mxu0
  %v11210 = vadd.f32 %v10024, %v11209
  %v11211 = vpop.f32.mrb[0].mxu0
  %11212 = vmatprep.mubr.bf16.mxu0 %v10549
  %11213 = vmatmul.mubr.bf16.gmra.mrb[0].mxu0 %v10548
  %v11214 = vpop.f32.mrb[0].mxu0
  %v11215 = vadd.f32 %v10024, %v11214
  %v11216 = vpop.f32.mrb[0].mxu0
  %v11217 = vpop.f32.mrb[0].mxu0
  %v11218 = vadd.f32 %v10024, %v11217
  %v11219 = vpop.f32.mrb[0].mxu0
  %11220 = vmatprep.mubr.bf16.mxu0 %v10552
  %11221 = vmatmul.mubr.bf16.gmra.mrb[0].mxu0 %v10551
  %v11222 = vpop.f32.mrb[0].mxu0
  %v11223 = vadd.f32 %v10024, %v11222
  %v11224 = vpop.f32.mrb[0].mxu0
  %v11225 = vpop.f32.mrb[0].mxu0
  %v11226 = vpop.f32.mrb[0].mxu0
  %11227 = vdwg.mxu0
  %11228 = vmatprep.subr.bf16.mxu0 0
  %11229 = vmatpush1.bf16.msra.mxu0 %v10724
  %11230 = vmatprep.subr.bf16.mxu0 0
  %11231 = vmatpush1.bf16.msra.mxu0 %v10725
  %11232 = vmatprep.subr.bf16.mxu0 0
  %11233 = vmatpush1.bf16.msra.mxu0 0
  %11234 = vmatprep.subr.bf16.mxu0 0
  %11235 = vmatpush1.bf16.msra.mxu0 0
  %11236 = vmatprep.subr.bf16.mxu0 0
  %11237 = vmatpush1.bf16.msra.mxu0 0
  %11238 = vmatprep.subr.bf16.mxu0 0
  %11239 = vmatpush1.bf16.msra.mxu0 0
  %11240 = vmatprep.subr.bf16.mxu0 0
  %11241 = vmatpush1.bf16.msra.mxu0 0
  %11242 = vmatprep.subr.bf16.mxu0 0
  %11243 = vmatpush1.bf16.msra.mxu0 0
  %11244 = vmatprep.subr.bf16.mxu0 0
  %11245 = vmatpush1.bf16.msra.mxu0 0
  %11246 = vmatprep.subr.bf16.mxu0 0
  %11247 = vmatpush1.bf16.msra.mxu0 0
  %11248 = vmatprep.subr.bf16.mxu0 0
  %11249 = vmatpush1.bf16.msra.mxu0 0
  %11250 = vmatprep.subr.bf16.mxu0 0
  %11251 = vmatpush1.bf16.msra.mxu0 0
  %11252 = vmatprep.subr.bf16.mxu0 0
  %11253 = vmatpush1.bf16.msra.mxu0 0
  %11254 = vmatprep.subr.bf16.mxu0 0
  %11255 = vmatpush1.bf16.msra.mxu0 0
  %11256 = vmatprep.subr.bf16.mxu0 0
  %11257 = vmatpush1.bf16.msra.mxu0 0
  %11258 = vmatprep.subr.bf16.mxu0 0
  %11259 = vmatpush1.bf16.msra.mxu0 0
  %11260 = vmatprep.mubr.bf16.mxu0 0
  %11261 = vmatmul.mubr.bf16.gmra.mrb[0].mxu0 %v10746
  %v11262 = vpop.f32.mrb[0].mxu0
  %v11263 = vadd.f32 %v10903, %v11262
  %v11264 = vpop.f32.mrb[0].mxu0
  %v11265 = vpop.f32.mrb[0].mxu0
  %v11266 = vadd.f32 %v10906, %v11265
  %v11267 = vpop.f32.mrb[0].mxu0
  %11268 = vmatprep.mubr.bf16.mxu0 0
  %11269 = vmatmul.mubr.bf16.gmra.mrb[0].mxu0 %v10749
  %v11270 = vpop.f32.mrb[0].mxu0
  %v11271 = vadd.f32 %v10911, %v11270
  %v11272 = vpop.f32.mrb[0].mxu0
  %v11273 = vpop.f32.mrb[0].mxu0
  %v11274 = vadd.f32 %v10914, %v11273
  %v11275 = vpop.f32.mrb[0].mxu0
  %11276 = vmatprep.mubr.bf16.mxu0 0
  %11277 = vmatmul.mubr.bf16.gmra.mrb[0].mxu0 %v10752
  %v11278 = vpop.f32.mrb[0].mxu0
  %v11279 = vadd.f32 %v10919, %v11278
  %v11280 = vpop.f32.mrb[0].mxu0
  %v11281 = vpop.f32.mrb[0].mxu0
  %v11282 = vadd.f32 %v10922, %v11281
  %v11283 = vpop.f32.mrb[0].mxu0
  %11284 = vmatprep.mubr.bf16.mxu0 0
  %11285 = vmatmul.mubr.bf16.gmra.mrb[0].mxu0 %v10755
  %v11286 = vpop.f32.mrb[0].mxu0
  %v11287 = vadd.f32 %v10927, %v11286
  %v11288 = vpop.f32.mrb[0].mxu0
  %v11289 = vpop.f32.mrb[0].mxu0
  %v11290 = vadd.f32 %v10930, %v11289
  %v11291 = vpop.f32.mrb[0].mxu0
  %11292 = vmatprep.mubr.bf16.mxu0 0
  %11293 = vmatmul.mubr.bf16.gmra.mrb[0].mxu0 %v10758
  %v11294 = vpop.f32.mrb[0].mxu0
  %v11295 = vadd.f32 %v10935, %v11294
  %v11296 = vpop.f32.mrb[0].mxu0
  %v11297 = vpop.f32.mrb[0].mxu0
  %v11298 = vadd.f32 %v10938, %v11297
  %v11299 = vpop.f32.mrb[0].mxu0
  %11300 = vmatprep.mubr.bf16.mxu0 0
  %11301 = vmatmul.mubr.bf16.gmra.mrb[0].mxu0 %v10761
  %v11302 = vpop.f32.mrb[0].mxu0
  %v11303 = vadd.f32 %v10943, %v11302
  %v11304 = vpop.f32.mrb[0].mxu0
  %v11305 = vpop.f32.mrb[0].mxu0
  %v11306 = vadd.f32 %v10946, %v11305
  %v11307 = vpop.f32.mrb[0].mxu0
  %11308 = vmatprep.mubr.bf16.mxu0 0
  %11309 = vmatmul.mubr.bf16.gmra.mrb[0].mxu0 %v10764
  %v11310 = vpop.f32.mrb[0].mxu0
  %v11311 = vadd.f32 %v10951, %v11310
  %v11312 = vpop.f32.mrb[0].mxu0
  %v11313 = vpop.f32.mrb[0].mxu0
  %v11314 = vadd.f32 %v10954, %v11313
  %v11315 = vpop.f32.mrb[0].mxu0
  %11316 = vmatprep.mubr.bf16.mxu0 0
  %11317 = vmatmul.mubr.bf16.gmra.mrb[0].mxu0 %v10767
  %v11318 = vpop.f32.mrb[0].mxu0
  %v11319 = vadd.f32 %v10959, %v11318
  %v11320 = vpop.f32.mrb[0].mxu0
  %v11321 = vpop.f32.mrb[0].mxu0
  %v11322 = vadd.f32 %v10962, %v11321
  %v11323 = vpop.f32.mrb[0].mxu0
  %11324 = vmatprep.mubr.bf16.mxu0 0
  %11325 = vmatmul.mubr.bf16.gmra.mrb[0].mxu0 %v10770
  %v11326 = vpop.f32.mrb[0].mxu0
  %v11327 = vadd.f32 %v10967, %v11326
  %v11328 = vpop.f32.mrb[0].mxu0
  %v11329 = vpop.f32.mrb[0].mxu0
  %v11330 = vadd.f32 %v10970, %v11329
  %v11331 = vpop.f32.mrb[0].mxu0
  %11332 = vmatprep.mubr.bf16.mxu0 0
  %11333 = vmatmul.mubr.bf16.gmra.mrb[0].mxu0 %v10773
  %v11334 = vpop.f32.mrb[0].mxu0
  %v11335 = vadd.f32 %v10975, %v11334
  %v11336 = vpop.f32.mrb[0].mxu0
  %v11337 = vpop.f32.mrb[0].mxu0
  %v11338 = vadd.f32 %v10978, %v11337
  %v11339 = vpop.f32.mrb[0].mxu0
  %11340 = vmatprep.mubr.bf16.mxu0 0
  %11341 = vmatmul.mubr.bf16.gmra.mrb[0].mxu0 %v10776
  %v11342 = vpop.f32.mrb[0].mxu0
  %v11343 = vadd.f32 %v10983, %v11342
  %v11344 = vpop.f32.mrb[0].mxu0
  %v11345 = vpop.f32.mrb[0].mxu0
  %v11346 = vadd.f32 %v10986, %v11345
  %v11347 = vpop.f32.mrb[0].mxu0
  %11348 = vmatprep.mubr.bf16.mxu0 0
  %11349 = vmatmul.mubr.bf16.gmra.mrb[0].mxu0 %v10779
  %v11350 = vpop.f32.mrb[0].mxu0
  %v11351 = vadd.f32 %v10991, %v11350
  %v11352 = vpop.f32.mrb[0].mxu0
  %v11353 = vpop.f32.mrb[0].mxu0
  %v11354 = vadd.f32 %v10994, %v11353
  %v11355 = vpop.f32.mrb[0].mxu0
  %11356 = vmatprep.mubr.bf16.mxu0 0
  %11357 = vmatmul.mubr.bf16.gmra.mrb[0].mxu0 %v10782
  %v11358 = vpop.f32.mrb[0].mxu0
  %v11359 = vadd.f32 %v10999, %v11358
  %v11360 = vpop.f32.mrb[0].mxu0
  %v11361 = vpop.f32.mrb[0].mxu0
  %v11362 = vadd.f32 %v11002, %v11361
  %v11363 = vpop.f32.mrb[0].mxu0
  %11364 = vmatprep.mubr.bf16.mxu0 0
  %11365 = vmatmul.mubr.bf16.gmra.mrb[0].mxu0 %v10785
  %v11366 = vpop.f32.mrb[0].mxu0
  %v11367 = vadd.f32 %v11007, %v11366
  %v11368 = vpop.f32.mrb[0].mxu0
  %v11369 = vpop.f32.mrb[0].mxu0
  %v11370 = vadd.f32 %v11010, %v11369
  %v11371 = vpop.f32.mrb[0].mxu0
  %11372 = vmatprep.mubr.bf16.mxu0 0
  %11373 = vmatmul.mubr.bf16.gmra.mrb[0].mxu0 %v10788
  %v11374 = vpop.f32.mrb[0].mxu0
  %v11375 = vadd.f32 %v11015, %v11374
  %v11376 = vpop.f32.mrb[0].mxu0
  %v11377 = vpop.f32.mrb[0].mxu0
  %v11378 = vadd.f32 %v11018, %v11377
  %v11379 = vpop.f32.mrb[0].mxu0
  %11380 = vmatprep.mubr.bf16.mxu0 0
  %11381 = vmatmul.mubr.bf16.gmra.mrb[0].mxu0 %v10791
  %v11382 = vpop.f32.mrb[0].mxu0
  %v11383 = vadd.f32 %v11023, %v11382
  %v11384 = vpop.f32.mrb[0].mxu0
  %v11385 = vpop.f32.mrb[0].mxu0
  %v11386 = vadd.f32 %v11026, %v11385
  %v11387 = vpop.f32.mrb[0].mxu0
  %11388 = vmatprep.mubr.bf16.mxu0 0
  %11389 = vmatmul.mubr.bf16.gmra.mrb[0].mxu0 %v10794
  %v11390 = vpop.f32.mrb[0].mxu0
  %v11391 = vadd.f32 %v11031, %v11390
  %v11392 = vpop.f32.mrb[0].mxu0
  %v11393 = vpop.f32.mrb[0].mxu0
  %v11394 = vadd.f32 %v11034, %v11393
  %v11395 = vpop.f32.mrb[0].mxu0
  %11396 = vmatprep.mubr.bf16.mxu0 0
  %11397 = vmatmul.mubr.bf16.gmra.mrb[0].mxu0 %v10797
  %v11398 = vpop.f32.mrb[0].mxu0
  %v11399 = vadd.f32 %v11039, %v11398
  %v11400 = vpop.f32.mrb[0].mxu0
  %v11401 = vpop.f32.mrb[0].mxu0
  %v11402 = vadd.f32 %v11042, %v11401
  %v11403 = vpop.f32.mrb[0].mxu0
  %11404 = vmatprep.mubr.bf16.mxu0 0
  %11405 = vmatmul.mubr.bf16.gmra.mrb[0].mxu0 %v10800
  %v11406 = vpop.f32.mrb[0].mxu0
  %v11407 = vadd.f32 %v11047, %v11406
  %v11408 = vpop.f32.mrb[0].mxu0
  %v11409 = vpop.f32.mrb[0].mxu0
  %v11410 = vadd.f32 %v11050, %v11409
  %v11411 = vpop.f32.mrb[0].mxu0
  %11412 = vmatprep.mubr.bf16.mxu0 0
  %11413 = vmatmul.mubr.bf16.gmra.mrb[0].mxu0 %v10803
  %v11414 = vpop.f32.mrb[0].mxu0
  %v11415 = vadd.f32 %v11055, %v11414
  %v11416 = vpop.f32.mrb[0].mxu0
  %v11417 = vpop.f32.mrb[0].mxu0
  %v11418 = vadd.f32 %v11058, %v11417
  %v11419 = vpop.f32.mrb[0].mxu0
  %11420 = vmatprep.mubr.bf16.mxu0 0
  %11421 = vmatmul.mubr.bf16.gmra.mrb[0].mxu0 %v10806
  %v11422 = vpop.f32.mrb[0].mxu0
  %v11423 = vadd.f32 %v11063, %v11422
  %v11424 = vpop.f32.mrb[0].mxu0
  %v11425 = vpop.f32.mrb[0].mxu0
  %v11426 = vadd.f32 %v11066, %v11425
  %v11427 = vpop.f32.mrb[0].mxu0
  %11428 = vmatprep.mubr.bf16.mxu0 0
  %11429 = vmatmul.mubr.bf16.gmra.mrb[0].mxu0 %v10809
  %v11430 = vpop.f32.mrb[0].mxu0
  %v11431 = vadd.f32 %v11071, %v11430
  %v11432 = vpop.f32.mrb[0].mxu0
  %v11433 = vpop.f32.mrb[0].mxu0
  %v11434 = vadd.f32 %v11074, %v11433
  %v11435 = vpop.f32.mrb[0].mxu0
  %11436 = vmatprep.mubr.bf16.mxu0 0
  %11437 = vmatmul.mubr.bf16.gmra.mrb[0].mxu0 %v10812
  %v11438 = vpop.f32.mrb[0].mxu0
  %v11439 = vadd.f32 %v11079, %v11438
  %v11440 = vpop.f32.mrb[0].mxu0
  %v11441 = vpop.f32.mrb[0].mxu0
  %v11442 = vadd.f32 %v11082, %v11441
  %v11443 = vpop.f32.mrb[0].mxu0
  %11444 = vmatprep.mubr.bf16.mxu0 0
  %11445 = vmatmul.mubr.bf16.gmra.mrb[0].mxu0 %v10815
  %v11446 = vpop.f32.mrb[0].mxu0
  %v11447 = vadd.f32 %v11087, %v11446
  %v11448 = vpop.f32.mrb[0].mxu0
  %v11449 = vpop.f32.mrb[0].mxu0
  %v11450 = vadd.f32 %v11090, %v11449
  %v11451 = vpop.f32.mrb[0].mxu0
  %11452 = vmatprep.mubr.bf16.mxu0 0
  %11453 = vmatmul.mubr.bf16.gmra.mrb[0].mxu0 %v10818
  %v11454 = vpop.f32.mrb[0].mxu0
  %v11455 = vadd.f32 %v11095, %v11454
  %v11456 = vpop.f32.mrb[0].mxu0
  %v11457 = vpop.f32.mrb[0].mxu0
  %v11458 = vadd.f32 %v11098, %v11457
  %v11459 = vpop.f32.mrb[0].mxu0
  %11460 = vmatprep.mubr.bf16.mxu0 0
  %11461 = vmatmul.mubr.bf16.gmra.mrb[0].mxu0 %v10821
  %v11462 = vpop.f32.mrb[0].mxu0
  %v11463 = vadd.f32 %v11103, %v11462
  %v11464 = vpop.f32.mrb[0].mxu0
  %v11465 = vpop.f32.mrb[0].mxu0
  %v11466 = vadd.f32 %v11106, %v11465
  %v11467 = vpop.f32.mrb[0].mxu0
  %11468 = vmatprep.mubr.bf16.mxu0 0
  %11469 = vmatmul.mubr.bf16.gmra.mrb[0].mxu0 %v10824
  %v11470 = vpop.f32.mrb[0].mxu0
  %v11471 = vadd.f32 %v11111, %v11470
  %v11472 = vpop.f32.mrb[0].mxu0
  %v11473 = vpop.f32.mrb[0].mxu0
  %v11474 = vadd.f32 %v11114, %v11473
  %v11475 = vpop.f32.mrb[0].mxu0
  %11476 = vmatprep.mubr.bf16.mxu0 0
  %11477 = vmatmul.mubr.bf16.gmra.mrb[0].mxu0 %v10827
  %v11478 = vpop.f32.mrb[0].mxu0
  %v11479 = vadd.f32 %v11119, %v11478
  %v11480 = vpop.f32.mrb[0].mxu0
  %v11481 = vpop.f32.mrb[0].mxu0
  %v11482 = vadd.f32 %v11122, %v11481
  %v11483 = vpop.f32.mrb[0].mxu0
  %11484 = vmatprep.mubr.bf16.mxu0 0
  %11485 = vmatmul.mubr.bf16.gmra.mrb[0].mxu0 %v10830
  %v11486 = vpop.f32.mrb[0].mxu0
  %v11487 = vadd.f32 %v11127, %v11486
  %v11488 = vpop.f32.mrb[0].mxu0
  %v11489 = vpop.f32.mrb[0].mxu0
  %v11490 = vadd.f32 %v11130, %v11489
  %v11491 = vpop.f32.mrb[0].mxu0
  %11492 = vmatprep.mubr.bf16.mxu0 0
  %11493 = vmatmul.mubr.bf16.gmra.mrb[0].mxu0 %v10833
  %v11494 = vpop.f32.mrb[0].mxu0
  %v11495 = vadd.f32 %v11135, %v11494
  %v11496 = vpop.f32.mrb[0].mxu0
  %v11497 = vpop.f32.mrb[0].mxu0
  %v11498 = vadd.f32 %v11138, %v11497
  %v11499 = vpop.f32.mrb[0].mxu0
  %11500 = vmatprep.mubr.bf16.mxu0 0
  %11501 = vmatmul.mubr.bf16.gmra.mrb[0].mxu0 %v10836
  %v11502 = vpop.f32.mrb[0].mxu0
  %v11503 = vadd.f32 %v11143, %v11502
  %v11504 = vpop.f32.mrb[0].mxu0
  %v11505 = vpop.f32.mrb[0].mxu0
  %v11506 = vadd.f32 %v11146, %v11505
  %v11507 = vpop.f32.mrb[0].mxu0
  %11508 = vmatprep.mubr.bf16.mxu0 0
  %11509 = vmatmul.mubr.bf16.gmra.mrb[0].mxu0 %v10839
  %v11510 = vpop.f32.mrb[0].mxu0
  %v11511 = vadd.f32 %v11151, %v11510
  %v11512 = vpop.f32.mrb[0].mxu0
  %v11513 = vpop.f32.mrb[0].mxu0
  %v11514 = vadd.f32 %v11154, %v11513
  %v11515 = vpop.f32.mrb[0].mxu0
  %11516 = vmatprep.mubr.bf16.mxu0 0
  %11517 = vmatmul.mubr.bf16.gmra.mrb[0].mxu0 %v10842
  %v11518 = vpop.f32.mrb[0].mxu0
  %v11519 = vadd.f32 %v11159, %v11518
  %v11520 = vpop.f32.mrb[0].mxu0
  %v11521 = vpop.f32.mrb[0].mxu0
  %v11522 = vadd.f32 %v11162, %v11521
  %v11523 = vpop.f32.mrb[0].mxu0
  %11524 = vmatprep.mubr.bf16.mxu0 0
  %11525 = vmatmul.mubr.bf16.gmra.mrb[0].mxu0 %v10845
  %v11526 = vpop.f32.mrb[0].mxu0
  %v11527 = vadd.f32 %v11167, %v11526
  %v11528 = vpop.f32.mrb[0].mxu0
  %v11529 = vpop.f32.mrb[0].mxu0
  %v11530 = vadd.f32 %v11170, %v11529
  %v11531 = vpop.f32.mrb[0].mxu0
  %11532 = vmatprep.mubr.bf16.mxu0 0
  %11533 = vmatmul.mubr.bf16.gmra.mrb[0].mxu0 %v10848
  %v11534 = vpop.f32.mrb[0].mxu0
  %v11535 = vadd.f32 %v11175, %v11534
  %v11536 = vpop.f32.mrb[0].mxu0
  %v11537 = vpop.f32.mrb[0].mxu0
  %v11538 = vadd.f32 %v11178, %v11537
  %v11539 = vpop.f32.mrb[0].mxu0
  %11540 = vmatprep.mubr.bf16.mxu0 0
  %11541 = vmatmul.mubr.bf16.gmra.mrb[0].mxu0 %v10851
  %v11542 = vpop.f32.mrb[0].mxu0
  %v11543 = vadd.f32 %v11183, %v11542
  %v11544 = vpop.f32.mrb[0].mxu0
  %v11545 = vpop.f32.mrb[0].mxu0
  %v11546 = vadd.f32 %v11186, %v11545
  %v11547 = vpop.f32.mrb[0].mxu0
  %11548 = vmatprep.mubr.bf16.mxu0 0
  %11549 = vmatmul.mubr.bf16.gmra.mrb[0].mxu0 %v10854
  %v11550 = vpop.f32.mrb[0].mxu0
  %v11551 = vadd.f32 %v11191, %v11550
  %v11552 = vpop.f32.mrb[0].mxu0
  %v11553 = vpop.f32.mrb[0].mxu0
  %v11554 = vadd.f32 %v11194, %v11553
  %v11555 = vpop.f32.mrb[0].mxu0
  %11556 = vmatprep.mubr.bf16.mxu0 0
  %11557 = vmatmul.mubr.bf16.gmra.mrb[0].mxu0 %v10857
  %v11558 = vpop.f32.mrb[0].mxu0
  %v11559 = vadd.f32 %v11199, %v11558
  %v11560 = vpop.f32.mrb[0].mxu0
  %v11561 = vpop.f32.mrb[0].mxu0
  %v11562 = vadd.f32 %v11202, %v11561
  %v11563 = vpop.f32.mrb[0].mxu0
  %11564 = vmatprep.mubr.bf16.mxu0 0
  %11565 = vmatmul.mubr.bf16.gmra.mrb[0].mxu0 %v10860
  %v11566 = vpop.f32.mrb[0].mxu0
  %v11567 = vadd.f32 %v11207, %v11566
  %v11568 = vpop.f32.mrb[0].mxu0
  %v11569 = vpop.f32.mrb[0].mxu0
  %v11570 = vadd.f32 %v11210, %v11569
  %v11571 = vpop.f32.mrb[0].mxu0
  %11572 = vmatprep.mubr.bf16.mxu0 0
  %11573 = vmatmul.mubr.bf16.gmra.mrb[0].mxu0 %v10863
  %v11574 = vpop.f32.mrb[0].mxu0
  %v11575 = vadd.f32 %v11215, %v11574
  %v11576 = vpop.f32.mrb[0].mxu0
  %v11577 = vpop.f32.mrb[0].mxu0
  %v11578 = vadd.f32 %v11218, %v11577
  %v11579 = vpop.f32.mrb[0].mxu0
  %11580 = vmatprep.mubr.bf16.mxu0 0
  %11581 = vmatmul.mubr.bf16.gmra.mrb[0].mxu0 %v10866
  %v11582 = vpop.f32.mrb[0].mxu0
  %v11583 = vadd.f32 %v11223, %v11582
  %v11584 = vpop.f32.mrb[0].mxu0
  %v11585 = vpop.f32.mrb[0].mxu0
  %v11586 = vpop.f32.mrb[0].mxu0
  %11587 = vdwg.mxu0
  %v11588 = vmax.f32 %v11263, 0.0
  %v11589 = vmax.f32 %v11266, 0.0
  %v11590 = vmax.f32 %v11271, 0.0
  %v11591 = vmax.f32 %v11274, 0.0
  %v11592 = vmax.f32 %v11279, 0.0
  %v11593 = vmax.f32 %v11282, 0.0
  %v11594 = vmax.f32 %v11287, 0.0
  %v11595 = vmax.f32 %v11290, 0.0
  %v11596 = vmax.f32 %v11295, 0.0
  %v11597 = vmax.f32 %v11298, 0.0
  %v11598 = vmax.f32 %v11303, 0.0
  %v11599 = vmax.f32 %v11306, 0.0
  %v11600 = vmax.f32 %v11311, 0.0
  %v11601 = vmax.f32 %v11314, 0.0
  %v11602 = vmax.f32 %v11319, 0.0
  %v11603 = vmax.f32 %v11322, 0.0
  %v11604 = vmax.f32 %v11327, 0.0
  %v11605 = vmax.f32 %v11330, 0.0
  %v11606 = vmax.f32 %v11335, 0.0
  %v11607 = vmax.f32 %v11338, 0.0
  %v11608 = vmax.f32 %v11343, 0.0
  %v11609 = vmax.f32 %v11346, 0.0
  %v11610 = vmax.f32 %v11351, 0.0
  %v11611 = vmax.f32 %v11354, 0.0
  %v11612 = vmax.f32 %v11359, 0.0
  %v11613 = vmax.f32 %v11362, 0.0
  %v11614 = vmax.f32 %v11367, 0.0
  %v11615 = vmax.f32 %v11370, 0.0
  %v11616 = vmax.f32 %v11375, 0.0
  %v11617 = vmax.f32 %v11378, 0.0
  %v11618 = vmax.f32 %v11383, 0.0
  %v11619 = vmax.f32 %v11386, 0.0
  %v11620 = vmax.f32 %v11391, 0.0
  %v11621 = vmax.f32 %v11394, 0.0
  %v11622 = vmax.f32 %v11399, 0.0
  %v11623 = vmax.f32 %v11402, 0.0
  %v11624 = vmax.f32 %v11407, 0.0
  %v11625 = vmax.f32 %v11410, 0.0
  %v11626 = vmax.f32 %v11415, 0.0
  %v11627 = vmax.f32 %v11418, 0.0
  %v11628 = vmax.f32 %v11423, 0.0
  %v11629 = vmax.f32 %v11426, 0.0
  %v11630 = vmax.f32 %v11431, 0.0
  %v11631 = vmax.f32 %v11434, 0.0
  %v11632 = vmax.f32 %v11439, 0.0
  %v11633 = vmax.f32 %v11442, 0.0
  %v11634 = vmax.f32 %v11447, 0.0
  %v11635 = vmax.f32 %v11450, 0.0
  %v11636 = vmax.f32 %v11455, 0.0
  %v11637 = vmax.f32 %v11458, 0.0
  %v11638 = vmax.f32 %v11463, 0.0
  %v11639 = vmax.f32 %v11466, 0.0
  %v11640 = vmax.f32 %v11471, 0.0
  %v11641 = vmax.f32 %v11474, 0.0
  %v11642 = vmax.f32 %v11479, 0.0
  %v11643 = vmax.f32 %v11482, 0.0
  %v11644 = vmax.f32 %v11487, 0.0
  %v11645 = vmax.f32 %v11490, 0.0
  %v11646 = vmax.f32 %v11495, 0.0
  %v11647 = vmax.f32 %v11498, 0.0
  %v11648 = vmax.f32 %v11503, 0.0
  %v11649 = vmax.f32 %v11506, 0.0
  %v11650 = vmax.f32 %v11511, 0.0
  %v11651 = vmax.f32 %v11514, 0.0
  %v11652 = vmax.f32 %v11519, 0.0
  %v11653 = vmax.f32 %v11522, 0.0
  %v11654 = vmax.f32 %v11527, 0.0
  %v11655 = vmax.f32 %v11530, 0.0
  %v11656 = vmax.f32 %v11535, 0.0
  %v11657 = vmax.f32 %v11538, 0.0
  %v11658 = vmax.f32 %v11543, 0.0
  %v11659 = vmax.f32 %v11546, 0.0
  %v11660 = vmax.f32 %v11551, 0.0
  %v11661 = vmax.f32 %v11554, 0.0
  %v11662 = vmax.f32 %v11559, 0.0
  %v11663 = vmax.f32 %v11562, 0.0
  %v11664 = vmax.f32 %v11567, 0.0
  %v11665 = vmax.f32 %v11570, 0.0
  %v11666 = vmax.f32 %v11575, 0.0
  %v11667 = vmax.f32 %v11578, 0.0
  %v11668 = vmax.f32 %v11583, 0.0
  %v11669 = vpack.c.bf16 %v11589, %v11588
  %v11670 = vpack.c.bf16 %v11591, %v11590
  %v11671 = vpack.c.bf16 %v11593, %v11592
  %v11672 = vpack.c.bf16 %v11595, %v11594
  %v11673 = vpack.c.bf16 %v11597, %v11596
  %v11674 = vpack.c.bf16 %v11599, %v11598
  %v11675 = vpack.c.bf16 %v11601, %v11600
  %v11676 = vpack.c.bf16 %v11603, %v11602
  %v11677 = vpack.c.bf16 %v11605, %v11604
  %v11678 = vpack.c.bf16 %v11607, %v11606
  %v11679 = vpack.c.bf16 %v11609, %v11608
  %v11680 = vpack.c.bf16 %v11611, %v11610
  %v11681 = vpack.c.bf16 %v11613, %v11612
  %v11682 = vpack.c.bf16 %v11615, %v11614
  %v11683 = vpack.c.bf16 %v11617, %v11616
  %v11684 = vpack.c.bf16 %v11619, %v11618
  %v11685 = vpack.c.bf16 %v11621, %v11620
  %v11686 = vpack.c.bf16 %v11623, %v11622
  %v11687 = vpack.c.bf16 %v11625, %v11624
  %v11688 = vpack.c.bf16 %v11627, %v11626
  %v11689 = vpack.c.bf16 %v11629, %v11628
  %v11690 = vpack.c.bf16 %v11631, %v11630
  %v11691 = vpack.c.bf16 %v11633, %v11632
  %v11692 = vpack.c.bf16 %v11635, %v11634
  %v11693 = vpack.c.bf16 %v11637, %v11636
  %v11694 = vpack.c.bf16 %v11639, %v11638
  %v11695 = vpack.c.bf16 %v11641, %v11640
  %v11696 = vpack.c.bf16 %v11643, %v11642
  %v11697 = vpack.c.bf16 %v11645, %v11644
  %v11698 = vpack.c.bf16 %v11647, %v11646
  %v11699 = vpack.c.bf16 %v11649, %v11648
  %v11700 = vpack.c.bf16 %v11651, %v11650
  %v11701 = vpack.c.bf16 %v11653, %v11652
  %v11702 = vpack.c.bf16 %v11655, %v11654
  %v11703 = vpack.c.bf16 %v11657, %v11656
  %v11704 = vpack.c.bf16 %v11659, %v11658
  %v11705 = vpack.c.bf16 %v11661, %v11660
  %v11706 = vpack.c.bf16 %v11663, %v11662
  %v11707 = vpack.c.bf16 %v11665, %v11664
  %v11708 = vpack.c.bf16 %v11667, %v11666
  %v11709 = vpack.c.bf16 %v11668, %v11668
  %v11710 = vld [vmem:[%s4] sm:$0xf]
  %v11711 = vld [vmem:[%s4 + $0x4] sm:$0xf]
  %v11712 = vld [vmem:[%s4 + $0x8] sm:$0xf]
  %v11713 = vld [vmem:[%s4 + $0xc] sm:$0xf]
  %v11714 = vld [vmem:[%s5] sm:$0x1]
  %v11716 = vlaneseq
  %v11717 = vshrl.u32 %v11716, 7
  %v11718 = vsub.s32 0, %v11717
  %v11719 = vrot.slane %v11714, %v11718
  %v11725 = vunpack.c.l.b16 %v11710
  %v11726 = vunpack.c.l.b16 %v11711
  %v11727 = vunpack.c.l.b16 %v11712
  %v11728 = vunpack.c.l.b16 %v11713
  %v11729 = vpack.c.b16 %v11726, %v11725
  %v11730 = vpack.c.b16 %v11728, %v11727
  %v11734 = vsel %vm10744, %v11669, 0
  %v11737 = vsel %vm10744, %v11670, 0
  %v11740 = vsel %vm10744, %v11671, 0
  %v11743 = vsel %vm10744, %v11672, 0
  %v11746 = vsel %vm10744, %v11673, 0
  %v11749 = vsel %vm10744, %v11674, 0
  %v11752 = vsel %vm10744, %v11675, 0
  %v11755 = vsel %vm10744, %v11676, 0
  %v11758 = vsel %vm10744, %v11677, 0
  %v11761 = vsel %vm10744, %v11678, 0
  %v11764 = vsel %vm10744, %v11679, 0
  %v11767 = vsel %vm10744, %v11680, 0
  %v11770 = vsel %vm10744, %v11681, 0
  %v11773 = vsel %vm10744, %v11682, 0
  %v11776 = vsel %vm10744, %v11683, 0
  %v11779 = vsel %vm10744, %v11684, 0
  %v11782 = vsel %vm10744, %v11685, 0
  %v11785 = vsel %vm10744, %v11686, 0
  %v11788 = vsel %vm10744, %v11687, 0
  %v11791 = vsel %vm10744, %v11688, 0
  %v11794 = vsel %vm10744, %v11689, 0
  %v11797 = vsel %vm10744, %v11690, 0
  %v11800 = vsel %vm10744, %v11691, 0
  %v11803 = vsel %vm10744, %v11692, 0
  %v11806 = vsel %vm10744, %v11693, 0
  %v11809 = vsel %vm10744, %v11694, 0
  %v11812 = vsel %vm10744, %v11695, 0
  %v11815 = vsel %vm10744, %v11696, 0
  %v11818 = vsel %vm10744, %v11697, 0
  %v11821 = vsel %vm10744, %v11698, 0
  %v11824 = vsel %vm10744, %v11699, 0
  %v11827 = vsel %vm10744, %v11700, 0
  %v11830 = vsel %vm10744, %v11701, 0
  %v11833 = vsel %vm10744, %v11702, 0
  %v11836 = vsel %vm10744, %v11703, 0
  %v11839 = vsel %vm10744, %v11704, 0
  %v11842 = vsel %vm10744, %v11705, 0
  %v11845 = vsel %vm10744, %v11706, 0
  %v11848 = vsel %vm10744, %v11707, 0
  %v11851 = vsel %vm10744, %v11708, 0
  %v11854 = vsel %vm10744, %v11709, 0
  %11856 = vmatprep.subr.bf16.mxu0 0
  %11857 = vmatpush1.bf16.msra.mxu0 %v11729
  %11858 = vmatprep.subr.bf16.mxu0 0
  %11859 = vmatpush1.bf16.msra.mxu0 %v11730
  %11860 = vmatprep.subr.bf16.mxu0 0
  %11861 = vmatpush1.bf16.msra.mxu0 0
  %11862 = vmatprep.subr.bf16.mxu0 0
  %11863 = vmatpush1.bf16.msra.mxu0 0
  %11864 = vmatprep.subr.bf16.mxu0 0
  %11865 = vmatpush1.bf16.msra.mxu0 0
  %11866 = vmatprep.subr.bf16.mxu0 0
  %11867 = vmatpush1.bf16.msra.mxu0 0
  %11868 = vmatprep.subr.bf16.mxu0 0
  %11869 = vmatpush1.bf16.msra.mxu0 0
  %11870 = vmatprep.subr.bf16.mxu0 0
  %11871 = vmatpush1.bf16.msra.mxu0 0
  %11872 = vmatprep.subr.bf16.mxu0 0
  %11873 = vmatpush1.bf16.msra.mxu0 0
  %11874 = vmatprep.subr.bf16.mxu0 0
  %11875 = vmatpush1.bf16.msra.mxu0 0
  %11876 = vmatprep.subr.bf16.mxu0 0
  %11877 = vmatpush1.bf16.msra.mxu0 0
  %11878 = vmatprep.subr.bf16.mxu0 0
  %11879 = vmatpush1.bf16.msra.mxu0 0
  %11880 = vmatprep.subr.bf16.mxu0 0
  %11881 = vmatpush1.bf16.msra.mxu0 0
  %11882 = vmatprep.subr.bf16.mxu0 0
  %11883 = vmatpush1.bf16.msra.mxu0 0
  %11884 = vmatprep.subr.bf16.mxu0 0
  %11885 = vmatpush1.bf16.msra.mxu0 0
  %11886 = vmatprep.subr.bf16.mxu0 0
  %11887 = vmatpush1.bf16.msra.mxu0 0
  %11888 = vmatprep.mubr.bf16.mxu0 0
  %11889 = vmatmul.mubr.bf16.gmra.mrb[0].mxu0 %v11734
  %v11890 = vpop.f32.mrb[0].mxu0
  %v11891 = vadd.f32 %v11719, %v11890
  %v11892 = vpop.f32.mrb[0].mxu0
  %v11893 = vpop.f32.mrb[0].mxu0
  %v11894 = vadd.f32 %v11719, %v11893
  %v11895 = vpop.f32.mrb[0].mxu0
  %11896 = vmatprep.mubr.bf16.mxu0 0
  %11897 = vmatmul.mubr.bf16.gmra.mrb[0].mxu0 %v11737
  %v11898 = vpop.f32.mrb[0].mxu0
  %v11899 = vadd.f32 %v11719, %v11898
  %v11900 = vpop.f32.mrb[0].mxu0
  %v11901 = vpop.f32.mrb[0].mxu0
  %v11902 = vadd.f32 %v11719, %v11901
  %v11903 = vpop.f32.mrb[0].mxu0
  %11904 = vmatprep.mubr.bf16.mxu0 0
  %11905 = vmatmul.mubr.bf16.gmra.mrb[0].mxu0 %v11740
  %v11906 = vpop.f32.mrb[0].mxu0
  %v11907 = vadd.f32 %v11719, %v11906
  %v11908 = vpop.f32.mrb[0].mxu0
  %v11909 = vpop.f32.mrb[0].mxu0
  %v11910 = vadd.f32 %v11719, %v11909
  %v11911 = vpop.f32.mrb[0].mxu0
  %11912 = vmatprep.mubr.bf16.mxu0 0
  %11913 = vmatmul.mubr.bf16.gmra.mrb[0].mxu0 %v11743
  %v11914 = vpop.f32.mrb[0].mxu0
  %v11915 = vadd.f32 %v11719, %v11914
  %v11916 = vpop.f32.mrb[0].mxu0
  %v11917 = vpop.f32.mrb[0].mxu0
  %v11918 = vadd.f32 %v11719, %v11917
  %v11919 = vpop.f32.mrb[0].mxu0
  %11920 = vmatprep.mubr.bf16.mxu0 0
  %11921 = vmatmul.mubr.bf16.gmra.mrb[0].mxu0 %v11746
  %v11922 = vpop.f32.mrb[0].mxu0
  %v11923 = vadd.f32 %v11719, %v11922
  %v11924 = vpop.f32.mrb[0].mxu0
  %v11925 = vpop.f32.mrb[0].mxu0
  %v11926 = vadd.f32 %v11719, %v11925
  %v11927 = vpop.f32.mrb[0].mxu0
  %11928 = vmatprep.mubr.bf16.mxu0 0
  %11929 = vmatmul.mubr.bf16.gmra.mrb[0].mxu0 %v11749
  %v11930 = vpop.f32.mrb[0].mxu0
  %v11931 = vadd.f32 %v11719, %v11930
  %v11932 = vpop.f32.mrb[0].mxu0
  %v11933 = vpop.f32.mrb[0].mxu0
  %v11934 = vadd.f32 %v11719, %v11933
  %v11935 = vpop.f32.mrb[0].mxu0
  %11936 = vmatprep.mubr.bf16.mxu0 0
  %11937 = vmatmul.mubr.bf16.gmra.mrb[0].mxu0 %v11752
  %v11938 = vpop.f32.mrb[0].mxu0
  %v11939 = vadd.f32 %v11719, %v11938
  %v11940 = vpop.f32.mrb[0].mxu0
  %v11941 = vpop.f32.mrb[0].mxu0
  %v11942 = vadd.f32 %v11719, %v11941
  %v11943 = vpop.f32.mrb[0].mxu0
  %11944 = vmatprep.mubr.bf16.mxu0 0
  %11945 = vmatmul.mubr.bf16.gmra.mrb[0].mxu0 %v11755
  %v11946 = vpop.f32.mrb[0].mxu0
  %v11947 = vadd.f32 %v11719, %v11946
  %v11948 = vpop.f32.mrb[0].mxu0
  %v11949 = vpop.f32.mrb[0].mxu0
  %v11950 = vadd.f32 %v11719, %v11949
  %v11951 = vpop.f32.mrb[0].mxu0
  %11952 = vmatprep.mubr.bf16.mxu0 0
  %11953 = vmatmul.mubr.bf16.gmra.mrb[0].mxu0 %v11758
  %v11954 = vpop.f32.mrb[0].mxu0
  %v11955 = vadd.f32 %v11719, %v11954
  %v11956 = vpop.f32.mrb[0].mxu0
  %v11957 = vpop.f32.mrb[0].mxu0
  %v11958 = vadd.f32 %v11719, %v11957
  %v11959 = vpop.f32.mrb[0].mxu0
  %11960 = vmatprep.mubr.bf16.mxu0 0
  %11961 = vmatmul.mubr.bf16.gmra.mrb[0].mxu0 %v11761
  %v11962 = vpop.f32.mrb[0].mxu0
  %v11963 = vadd.f32 %v11719, %v11962
  %v11964 = vpop.f32.mrb[0].mxu0
  %v11965 = vpop.f32.mrb[0].mxu0
  %v11966 = vadd.f32 %v11719, %v11965
  %v11967 = vpop.f32.mrb[0].mxu0
  %11968 = vmatprep.mubr.bf16.mxu0 0
  %11969 = vmatmul.mubr.bf16.gmra.mrb[0].mxu0 %v11764
  %v11970 = vpop.f32.mrb[0].mxu0
  %v11971 = vadd.f32 %v11719, %v11970
  %v11972 = vpop.f32.mrb[0].mxu0
  %v11973 = vpop.f32.mrb[0].mxu0
  %v11974 = vadd.f32 %v11719, %v11973
  %v11975 = vpop.f32.mrb[0].mxu0
  %11976 = vmatprep.mubr.bf16.mxu0 0
  %11977 = vmatmul.mubr.bf16.gmra.mrb[0].mxu0 %v11767
  %v11978 = vpop.f32.mrb[0].mxu0
  %v11979 = vadd.f32 %v11719, %v11978
  %v11980 = vpop.f32.mrb[0].mxu0
  %v11981 = vpop.f32.mrb[0].mxu0
  %v11982 = vadd.f32 %v11719, %v11981
  %v11983 = vpop.f32.mrb[0].mxu0
  %11984 = vmatprep.mubr.bf16.mxu0 0
  %11985 = vmatmul.mubr.bf16.gmra.mrb[0].mxu0 %v11770
  %v11986 = vpop.f32.mrb[0].mxu0
  %v11987 = vadd.f32 %v11719, %v11986
  %v11988 = vpop.f32.mrb[0].mxu0
  %v11989 = vpop.f32.mrb[0].mxu0
  %v11990 = vadd.f32 %v11719, %v11989
  %v11991 = vpop.f32.mrb[0].mxu0
  %11992 = vmatprep.mubr.bf16.mxu0 0
  %11993 = vmatmul.mubr.bf16.gmra.mrb[0].mxu0 %v11773
  %v11994 = vpop.f32.mrb[0].mxu0
  %v11995 = vadd.f32 %v11719, %v11994
  %v11996 = vpop.f32.mrb[0].mxu0
  %v11997 = vpop.f32.mrb[0].mxu0
  %v11998 = vadd.f32 %v11719, %v11997
  %v11999 = vpop.f32.mrb[0].mxu0
  %12000 = vmatprep.mubr.bf16.mxu0 0
  %12001 = vmatmul.mubr.bf16.gmra.mrb[0].mxu0 %v11776
  %v12002 = vpop.f32.mrb[0].mxu0
  %v12003 = vadd.f32 %v11719, %v12002
  %v12004 = vpop.f32.mrb[0].mxu0
  %v12005 = vpop.f32.mrb[0].mxu0
  %v12006 = vadd.f32 %v11719, %v12005
  %v12007 = vpop.f32.mrb[0].mxu0
  %12008 = vmatprep.mubr.bf16.mxu0 0
  %12009 = vmatmul.mubr.bf16.gmra.mrb[0].mxu0 %v11779
  %v12010 = vpop.f32.mrb[0].mxu0
  %v12011 = vadd.f32 %v11719, %v12010
  %v12012 = vpop.f32.mrb[0].mxu0
  %v12013 = vpop.f32.mrb[0].mxu0
  %v12014 = vadd.f32 %v11719, %v12013
  %v12015 = vpop.f32.mrb[0].mxu0
  %12016 = vmatprep.mubr.bf16.mxu0 0
  %12017 = vmatmul.mubr.bf16.gmra.mrb[0].mxu0 %v11782
  %v12018 = vpop.f32.mrb[0].mxu0
  %v12019 = vadd.f32 %v11719, %v12018
  %v12020 = vpop.f32.mrb[0].mxu0
  %v12021 = vpop.f32.mrb[0].mxu0
  %v12022 = vadd.f32 %v11719, %v12021
  %v12023 = vpop.f32.mrb[0].mxu0
  %12024 = vmatprep.mubr.bf16.mxu0 0
  %12025 = vmatmul.mubr.bf16.gmra.mrb[0].mxu0 %v11785
  %v12026 = vpop.f32.mrb[0].mxu0
  %v12027 = vadd.f32 %v11719, %v12026
  %v12028 = vpop.f32.mrb[0].mxu0
  %v12029 = vpop.f32.mrb[0].mxu0
  %v12030 = vadd.f32 %v11719, %v12029
  %v12031 = vpop.f32.mrb[0].mxu0
  %12032 = vmatprep.mubr.bf16.mxu0 0
  %12033 = vmatmul.mubr.bf16.gmra.mrb[0].mxu0 %v11788
  %v12034 = vpop.f32.mrb[0].mxu0
  %v12035 = vadd.f32 %v11719, %v12034
  %v12036 = vpop.f32.mrb[0].mxu0
  %v12037 = vpop.f32.mrb[0].mxu0
  %v12038 = vadd.f32 %v11719, %v12037
  %v12039 = vpop.f32.mrb[0].mxu0
  %12040 = vmatprep.mubr.bf16.mxu0 0
  %12041 = vmatmul.mubr.bf16.gmra.mrb[0].mxu0 %v11791
  %v12042 = vpop.f32.mrb[0].mxu0
  %v12043 = vadd.f32 %v11719, %v12042
  %v12044 = vpop.f32.mrb[0].mxu0
  %v12045 = vpop.f32.mrb[0].mxu0
  %v12046 = vadd.f32 %v11719, %v12045
  %v12047 = vpop.f32.mrb[0].mxu0
  %12048 = vmatprep.mubr.bf16.mxu0 0
  %12049 = vmatmul.mubr.bf16.gmra.mrb[0].mxu0 %v11794
  %v12050 = vpop.f32.mrb[0].mxu0
  %v12051 = vadd.f32 %v11719, %v12050
  %v12052 = vpop.f32.mrb[0].mxu0
  %v12053 = vpop.f32.mrb[0].mxu0
  %v12054 = vadd.f32 %v11719, %v12053
  %v12055 = vpop.f32.mrb[0].mxu0
  %12056 = vmatprep.mubr.bf16.mxu0 0
  %12057 = vmatmul.mubr.bf16.gmra.mrb[0].mxu0 %v11797
  %v12058 = vpop.f32.mrb[0].mxu0
  %v12059 = vadd.f32 %v11719, %v12058
  %v12060 = vpop.f32.mrb[0].mxu0
  %v12061 = vpop.f32.mrb[0].mxu0
  %v12062 = vadd.f32 %v11719, %v12061
  %v12063 = vpop.f32.mrb[0].mxu0
  %12064 = vmatprep.mubr.bf16.mxu0 0
  %12065 = vmatmul.mubr.bf16.gmra.mrb[0].mxu0 %v11800
  %v12066 = vpop.f32.mrb[0].mxu0
  %v12067 = vadd.f32 %v11719, %v12066
  %v12068 = vpop.f32.mrb[0].mxu0
  %v12069 = vpop.f32.mrb[0].mxu0
  %v12070 = vadd.f32 %v11719, %v12069
  %v12071 = vpop.f32.mrb[0].mxu0
  %12072 = vmatprep.mubr.bf16.mxu0 0
  %12073 = vmatmul.mubr.bf16.gmra.mrb[0].mxu0 %v11803
  %v12074 = vpop.f32.mrb[0].mxu0
  %v12075 = vadd.f32 %v11719, %v12074
  %v12076 = vpop.f32.mrb[0].mxu0
  %v12077 = vpop.f32.mrb[0].mxu0
  %v12078 = vadd.f32 %v11719, %v12077
  %v12079 = vpop.f32.mrb[0].mxu0
  %12080 = vmatprep.mubr.bf16.mxu0 0
  %12081 = vmatmul.mubr.bf16.gmra.mrb[0].mxu0 %v11806
  %v12082 = vpop.f32.mrb[0].mxu0
  %v12083 = vadd.f32 %v11719, %v12082
  %v12084 = vpop.f32.mrb[0].mxu0
  %v12085 = vpop.f32.mrb[0].mxu0
  %v12086 = vadd.f32 %v11719, %v12085
  %v12087 = vpop.f32.mrb[0].mxu0
  %12088 = vmatprep.mubr.bf16.mxu0 0
  %12089 = vmatmul.mubr.bf16.gmra.mrb[0].mxu0 %v11809
  %v12090 = vpop.f32.mrb[0].mxu0
  %v12091 = vadd.f32 %v11719, %v12090
  %v12092 = vpop.f32.mrb[0].mxu0
  %v12093 = vpop.f32.mrb[0].mxu0
  %v12094 = vadd.f32 %v11719, %v12093
  %v12095 = vpop.f32.mrb[0].mxu0
  %12096 = vmatprep.mubr.bf16.mxu0 0
  %12097 = vmatmul.mubr.bf16.gmra.mrb[0].mxu0 %v11812
  %v12098 = vpop.f32.mrb[0].mxu0
  %v12099 = vadd.f32 %v11719, %v12098
  %v12100 = vpop.f32.mrb[0].mxu0
  %v12101 = vpop.f32.mrb[0].mxu0
  %v12102 = vadd.f32 %v11719, %v12101
  %v12103 = vpop.f32.mrb[0].mxu0
  %12104 = vmatprep.mubr.bf16.mxu0 0
  %12105 = vmatmul.mubr.bf16.gmra.mrb[0].mxu0 %v11815
  %v12106 = vpop.f32.mrb[0].mxu0
  %v12107 = vadd.f32 %v11719, %v12106
  %v12108 = vpop.f32.mrb[0].mxu0
  %v12109 = vpop.f32.mrb[0].mxu0
  %v12110 = vadd.f32 %v11719, %v12109
  %v12111 = vpop.f32.mrb[0].mxu0
  %12112 = vmatprep.mubr.bf16.mxu0 0
  %12113 = vmatmul.mubr.bf16.gmra.mrb[0].mxu0 %v11818
  %v12114 = vpop.f32.mrb[0].mxu0
  %v12115 = vadd.f32 %v11719, %v12114
  %v12116 = vpop.f32.mrb[0].mxu0
  %v12117 = vpop.f32.mrb[0].mxu0
  %v12118 = vadd.f32 %v11719, %v12117
  %v12119 = vpop.f32.mrb[0].mxu0
  %12120 = vmatprep.mubr.bf16.mxu0 0
  %12121 = vmatmul.mubr.bf16.gmra.mrb[0].mxu0 %v11821
  %v12122 = vpop.f32.mrb[0].mxu0
  %v12123 = vadd.f32 %v11719, %v12122
  %v12124 = vpop.f32.mrb[0].mxu0
  %v12125 = vpop.f32.mrb[0].mxu0
  %v12126 = vadd.f32 %v11719, %v12125
  %v12127 = vpop.f32.mrb[0].mxu0
  %12128 = vmatprep.mubr.bf16.mxu0 0
  %12129 = vmatmul.mubr.bf16.gmra.mrb[0].mxu0 %v11824
  %v12130 = vpop.f32.mrb[0].mxu0
  %v12131 = vadd.f32 %v11719, %v12130
  %v12132 = vpop.f32.mrb[0].mxu0
  %v12133 = vpop.f32.mrb[0].mxu0
  %v12134 = vadd.f32 %v11719, %v12133
  %v12135 = vpop.f32.mrb[0].mxu0
  %12136 = vmatprep.mubr.bf16.mxu0 0
  %12137 = vmatmul.mubr.bf16.gmra.mrb[0].mxu0 %v11827
  %v12138 = vpop.f32.mrb[0].mxu0
  %v12139 = vadd.f32 %v11719, %v12138
  %v12140 = vpop.f32.mrb[0].mxu0
  %v12141 = vpop.f32.mrb[0].mxu0
  %v12142 = vadd.f32 %v11719, %v12141
  %v12143 = vpop.f32.mrb[0].mxu0
  %12144 = vmatprep.mubr.bf16.mxu0 0
  %12145 = vmatmul.mubr.bf16.gmra.mrb[0].mxu0 %v11830
  %v12146 = vpop.f32.mrb[0].mxu0
  %v12147 = vadd.f32 %v11719, %v12146
  %v12148 = vpop.f32.mrb[0].mxu0
  %v12149 = vpop.f32.mrb[0].mxu0
  %v12150 = vadd.f32 %v11719, %v12149
  %v12151 = vpop.f32.mrb[0].mxu0
  %12152 = vmatprep.mubr.bf16.mxu0 0
  %12153 = vmatmul.mubr.bf16.gmra.mrb[0].mxu0 %v11833
  %v12154 = vpop.f32.mrb[0].mxu0
  %v12155 = vadd.f32 %v11719, %v12154
  %v12156 = vpop.f32.mrb[0].mxu0
  %v12157 = vpop.f32.mrb[0].mxu0
  %v12158 = vadd.f32 %v11719, %v12157
  %v12159 = vpop.f32.mrb[0].mxu0
  %12160 = vmatprep.mubr.bf16.mxu0 0
  %12161 = vmatmul.mubr.bf16.gmra.mrb[0].mxu0 %v11836
  %v12162 = vpop.f32.mrb[0].mxu0
  %v12163 = vadd.f32 %v11719, %v12162
  %v12164 = vpop.f32.mrb[0].mxu0
  %v12165 = vpop.f32.mrb[0].mxu0
  %v12166 = vadd.f32 %v11719, %v12165
  %v12167 = vpop.f32.mrb[0].mxu0
  %12168 = vmatprep.mubr.bf16.mxu0 0
  %12169 = vmatmul.mubr.bf16.gmra.mrb[0].mxu0 %v11839
  %v12170 = vpop.f32.mrb[0].mxu0
  %v12171 = vadd.f32 %v11719, %v12170
  %v12172 = vpop.f32.mrb[0].mxu0
  %v12173 = vpop.f32.mrb[0].mxu0
  %v12174 = vadd.f32 %v11719, %v12173
  %v12175 = vpop.f32.mrb[0].mxu0
  %12176 = vmatprep.mubr.bf16.mxu0 0
  %12177 = vmatmul.mubr.bf16.gmra.mrb[0].mxu0 %v11842
  %v12178 = vpop.f32.mrb[0].mxu0
  %v12179 = vadd.f32 %v11719, %v12178
  %v12180 = vpop.f32.mrb[0].mxu0
  %v12181 = vpop.f32.mrb[0].mxu0
  %v12182 = vadd.f32 %v11719, %v12181
  %v12183 = vpop.f32.mrb[0].mxu0
  %12184 = vmatprep.mubr.bf16.mxu0 0
  %12185 = vmatmul.mubr.bf16.gmra.mrb[0].mxu0 %v11845
  %v12186 = vpop.f32.mrb[0].mxu0
  %v12187 = vadd.f32 %v11719, %v12186
  %v12188 = vpop.f32.mrb[0].mxu0
  %v12189 = vpop.f32.mrb[0].mxu0
  %v12190 = vadd.f32 %v11719, %v12189
  %v12191 = vpop.f32.mrb[0].mxu0
  %12192 = vmatprep.mubr.bf16.mxu0 0
  %12193 = vmatmul.mubr.bf16.gmra.mrb[0].mxu0 %v11848
  %v12194 = vpop.f32.mrb[0].mxu0
  %v12195 = vadd.f32 %v11719, %v12194
  %v12196 = vpop.f32.mrb[0].mxu0
  %v12197 = vpop.f32.mrb[0].mxu0
  %v12198 = vadd.f32 %v11719, %v12197
  %v12199 = vpop.f32.mrb[0].mxu0
  %12200 = vmatprep.mubr.bf16.mxu0 0
  %12201 = vmatmul.mubr.bf16.gmra.mrb[0].mxu0 %v11851
  %v12202 = vpop.f32.mrb[0].mxu0
  %v12203 = vadd.f32 %v11719, %v12202
  %v12204 = vpop.f32.mrb[0].mxu0
  %v12205 = vpop.f32.mrb[0].mxu0
  %v12206 = vadd.f32 %v11719, %v12205
  %v12207 = vpop.f32.mrb[0].mxu0
  %12208 = vmatprep.mubr.bf16.mxu0 0
  %12209 = vmatmul.mubr.bf16.gmra.mrb[0].mxu0 %v11854
  %v12210 = vpop.f32.mrb[0].mxu0
  %v12211 = vadd.f32 %v11719, %v12210
  %v12212 = vpop.f32.mrb[0].mxu0
  %v12213 = vpop.f32.mrb[0].mxu0
  %v12214 = vpop.f32.mrb[0].mxu0
  %12215 = vdwg.mxu0
  %v12216 = vld [vmem:[%s6] sm:$0x3f]
  %v12217 = vld [vmem:[#allocation2 + $0x10] sm:$0xf]
  %v12218 = vld [vmem:[#allocation2 + $0x14] sm:$0xf]
  %v12219 = vld [vmem:[#allocation2 + $0x18] sm:$0xf]
  %v12220 = vld [vmem:[#allocation2 + $0x1c] sm:$0xf]
  %v12221 = vld [vmem:[#allocation2 + $0x20] sm:$0xf]
  %v12222 = vld [vmem:[#allocation2 + $0x24] sm:$0xf]
  %v12223 = vld [vmem:[#allocation2 + $0x28] sm:$0xf]
  %v12224 = vld [vmem:[#allocation2 + $0x2c] sm:$0xf]
  %v12225 = vld [vmem:[#allocation2 + $0x30] sm:$0xf]
  %v12226 = vld [vmem:[#allocation2 + $0x34] sm:$0xf]
  %v12227 = vld [vmem:[#allocation2 + $0x38] sm:$0xf]
  %v12228 = vld [vmem:[#allocation2 + $0x3c] sm:$0xf]
  %v12229 = vld [vmem:[#allocation2 + $0x40] sm:$0xf]
  %v12230 = vld [vmem:[#allocation2 + $0x44] sm:$0xf]
  %v12231 = vld [vmem:[#allocation2 + $0x48] sm:$0xf]
  %v12232 = vld [vmem:[#allocation2 + $0x4c] sm:$0xf]
  %v12233 = vld [vmem:[#allocation2 + $0x50] sm:$0xf]
  %v12234 = vld [vmem:[#allocation2 + $0x54] sm:$0xf]
  %v12235 = vld [vmem:[#allocation2 + $0x58] sm:$0xf]
  %v12236 = vld [vmem:[#allocation2 + $0x5c] sm:$0xf]
  %v12237 = vld [vmem:[#allocation2 + $0x60] sm:$0xf]
  %v12238 = vld [vmem:[#allocation2 + $0x64] sm:$0xf]
  %v12239 = vld [vmem:[#allocation2 + $0x68] sm:$0xf]
  %v12240 = vld [vmem:[#allocation2 + $0x6c] sm:$0xf]
  %v12241 = vld [vmem:[#allocation2 + $0x70] sm:$0xf]
  %v12242 = vld [vmem:[#allocation2 + $0x74] sm:$0xf]
  %v12243 = vld [vmem:[#allocation2 + $0x78] sm:$0xf]
  %v12244 = vld [vmem:[#allocation2 + $0x7c] sm:$0xf]
  %v12245 = vld [vmem:[#allocation2 + $0x80] sm:$0xf]
  %v12246 = vld [vmem:[#allocation2 + $0x84] sm:$0xf]
  %v12247 = vld [vmem:[#allocation2 + $0x88] sm:$0xf]
  %v12248 = vld [vmem:[#allocation2 + $0x8c] sm:$0xf]
  %v12249 = vld [vmem:[#allocation2 + $0x90] sm:$0xf]
  %v12250 = vld [vmem:[#allocation2 + $0x94] sm:$0xf]
  %v12251 = vld [vmem:[#allocation2 + $0x98] sm:$0xf]
  %v12252 = vld [vmem:[#allocation2 + $0x9c] sm:$0xf]
  %v12253 = vld [vmem:[#allocation2 + $0xa0] sm:$0xf]
  %v12254 = vld [vmem:[#allocation2 + $0xa4] sm:$0xf]
  %v12255 = vld [vmem:[#allocation2 + $0xa8] sm:$0xf]
  %v12256 = vld [vmem:[#allocation2 + $0xac] sm:$0xf]
  %v12257 = vld [vmem:[#allocation2 + $0xb0] sm:$0xf]
  %v12258 = vld [vmem:[#allocation2 + $0xb4] sm:$0xf]
  %v12259 = vld [vmem:[#allocation2 + $0xb8] sm:$0xf]
  %v12260 = vld [vmem:[#allocation2 + $0xbc] sm:$0xf]
  %v12261 = vld [vmem:[#allocation2 + $0xc0] sm:$0xf]
  %v12262 = vld [vmem:[#allocation2 + $0xc4] sm:$0xf]
  %v12263 = vld [vmem:[#allocation2 + $0xc8] sm:$0xf]
  %v12264 = vld [vmem:[#allocation2 + $0xcc] sm:$0xf]
  %v12265 = vld [vmem:[#allocation2 + $0xd0] sm:$0xf]
  %v12266 = vld [vmem:[#allocation2 + $0xd4] sm:$0xf]
  %v12267 = vld [vmem:[#allocation2 + $0xd8] sm:$0xf]
  %v12268 = vld [vmem:[#allocation2 + $0xdc] sm:$0xf]
  %v12269 = vld [vmem:[#allocation2 + $0xe0] sm:$0xf]
  %v12270 = vld [vmem:[#allocation2 + $0xe4] sm:$0xf]
  %v12271 = vld [vmem:[#allocation2 + $0xe8] sm:$0xf]
  %v12272 = vld [vmem:[#allocation2 + $0xec] sm:$0xf]
  %v12273 = vld [vmem:[#allocation2 + $0xf0] sm:$0xf]
  %v12274 = vld [vmem:[#allocation2 + $0xf4] sm:$0xf]
  %v12275 = vld [vmem:[#allocation2 + $0xf8] sm:$0xf]
  %v12276 = vld [vmem:[#allocation2 + $0xfc] sm:$0xf]
  %v12277 = vld [vmem:[#allocation2 + $0x100] sm:$0xf]
  %v12278 = vld [vmem:[#allocation2 + $0x104] sm:$0xf]
  %v12279 = vld [vmem:[#allocation2 + $0x108] sm:$0xf]
  %v12280 = vld [vmem:[#allocation2 + $0x10c] sm:$0xf]
  %v12281 = vld [vmem:[#allocation2 + $0x110] sm:$0xf]
  %v12282 = vld [vmem:[#allocation2 + $0x114] sm:$0xf]
  %v12283 = vld [vmem:[#allocation2 + $0x118] sm:$0xf]
  %v12284 = vld [vmem:[#allocation2 + $0x11c] sm:$0xf]
  %v12285 = vld [vmem:[#allocation2 + $0x120] sm:$0xf]
  %v12286 = vld [vmem:[#allocation2 + $0x124] sm:$0xf]
  %v12287 = vld [vmem:[#allocation2 + $0x128] sm:$0xf]
  %v12288 = vld [vmem:[#allocation2 + $0x12c] sm:$0xf]
  %v12289 = vld [vmem:[#allocation2 + $0x130] sm:$0xf]
  %v12290 = vld [vmem:[#allocation2 + $0x134] sm:$0xf]
  %v12291 = vld [vmem:[#allocation2 + $0x138] sm:$0xf]
  %v12292 = vld [vmem:[#allocation2 + $0x13c] sm:$0xf]
  %v12293 = vld [vmem:[#allocation2 + $0x140] sm:$0xf]
  %v12294 = vld [vmem:[#allocation2 + $0x144] sm:$0xf]
  %v12295 = vld [vmem:[#allocation2 + $0x148] sm:$0xf]
  %v12296 = vld [vmem:[#allocation2 + $0x14c] sm:$0xf]
  %v12297 = vld [vmem:[#allocation2 + $0x150] sm:$0xf]
  %v12299 = vcombine.high %v12216, %v12216
  %v12301 = vunpack.c.l.s4 1966171168
  %v12302 = vunpack.c.0.s8 %v12301
  %v12303 = vlaneseq
  %v12304 = vshrl.u32 %v12303, 7
  %v12305 = vsub.s32 %v12302, %v12304
  %v12306 = vrot.slane %v12216, %v12305
  %v12308 = vunpack.c.l.s4 1966171168
  %v12309 = vunpack.c.0.s8 %v12308
  %v12310 = vlaneseq
  %v12311 = vshrl.u32 %v12310, 7
  %v12312 = vsub.s32 %v12309, %v12311
  %v12313 = vrot.slane %v12299, %v12312
  %v12314 = vcombine.high %v12306, %v12306
  %v12315 = vcombine.high %v12313, %v12313
  %v12317 = vunpack.c.l.s4 1966171168
  %v12318 = vunpack.c.0.s8 %v12317
  %v12319 = vlaneseq
  %v12320 = vshrl.u32 %v12319, 7
  %v12321 = vsub.s32 %v12318, %v12320
  %v12322 = vrot.slane %v12306, %v12321
  %v12324 = vunpack.c.l.s4 1966171168
  %v12325 = vunpack.c.0.s8 %v12324
  %v12326 = vlaneseq
  %v12327 = vshrl.u32 %v12326, 7
  %v12328 = vsub.s32 %v12325, %v12327
  %v12329 = vrot.slane %v12313, %v12328
  %v12331 = vunpack.c.l.s4 1966171168
  %v12332 = vunpack.c.0.s8 %v12331
  %v12333 = vlaneseq
  %v12334 = vshrl.u32 %v12333, 7
  %v12335 = vsub.s32 %v12332, %v12334
  %v12336 = vrot.slane %v12314, %v12335
  %v12338 = vunpack.c.l.s4 1966171168
  %v12339 = vunpack.c.0.s8 %v12338
  %v12340 = vlaneseq
  %v12341 = vshrl.u32 %v12340, 7
  %v12342 = vsub.s32 %v12339, %v12341
  %v12343 = vrot.slane %v12315, %v12342
  %v12344 = vcombine.high %v12322, %v12322
  %v12345 = vcombine.high %v12336, %v12336
  %v12432 = vunpack.c.l.b16 %v12217
  %v12433 = vunpack.c.l.b16 %v12218
  %v12434 = vunpack.c.l.b16 %v12219
  %v12435 = vunpack.c.l.b16 %v12220
  %v12436 = vunpack.c.l.b16 %v12221
  %v12437 = vunpack.c.l.b16 %v12222
  %v12438 = vunpack.c.l.b16 %v12223
  %v12439 = vunpack.c.l.b16 %v12224
  %v12440 = vunpack.c.l.b16 %v12225
  %v12441 = vunpack.c.l.b16 %v12226
  %v12442 = vunpack.c.l.b16 %v12227
  %v12443 = vunpack.c.l.b16 %v12228
  %v12444 = vunpack.c.l.b16 %v12229
  %v12445 = vunpack.c.l.b16 %v12230
  %v12446 = vunpack.c.l.b16 %v12231
  %v12447 = vunpack.c.l.b16 %v12232
  %v12448 = vunpack.c.l.b16 %v12233
  %v12449 = vunpack.c.l.b16 %v12234
  %v12450 = vunpack.c.l.b16 %v12235
  %v12451 = vunpack.c.l.b16 %v12236
  %v12452 = vunpack.c.l.b16 %v12237
  %v12453 = vunpack.c.l.b16 %v12238
  %v12454 = vunpack.c.l.b16 %v12239
  %v12455 = vunpack.c.l.b16 %v12240
  %v12456 = vunpack.c.l.b16 %v12241
  %v12457 = vunpack.c.l.b16 %v12242
  %v12458 = vunpack.c.l.b16 %v12243
  %v12459 = vunpack.c.l.b16 %v12244
  %v12460 = vunpack.c.l.b16 %v12245
  %v12461 = vunpack.c.l.b16 %v12246
  %v12462 = vunpack.c.l.b16 %v12247
  %v12463 = vunpack.c.l.b16 %v12248
  %v12464 = vunpack.c.l.b16 %v12249
  %v12465 = vunpack.c.l.b16 %v12250
  %v12466 = vunpack.c.l.b16 %v12251
  %v12467 = vunpack.c.l.b16 %v12252
  %v12468 = vunpack.c.l.b16 %v12253
  %v12469 = vunpack.c.l.b16 %v12254
  %v12470 = vunpack.c.l.b16 %v12255
  %v12471 = vunpack.c.l.b16 %v12256
  %v12472 = vunpack.c.l.b16 %v12257
  %v12473 = vunpack.c.l.b16 %v12258
  %v12474 = vunpack.c.l.b16 %v12259
  %v12475 = vunpack.c.l.b16 %v12260
  %v12476 = vunpack.c.l.b16 %v12261
  %v12477 = vunpack.c.l.b16 %v12262
  %v12478 = vunpack.c.l.b16 %v12263
  %v12479 = vunpack.c.l.b16 %v12264
  %v12480 = vunpack.c.l.b16 %v12265
  %v12481 = vunpack.c.l.b16 %v12266
  %v12482 = vunpack.c.l.b16 %v12267
  %v12483 = vunpack.c.l.b16 %v12268
  %v12484 = vunpack.c.l.b16 %v12269
  %v12485 = vunpack.c.l.b16 %v12270
  %v12486 = vunpack.c.l.b16 %v12271
  %v12487 = vunpack.c.l.b16 %v12272
  %v12488 = vunpack.c.l.b16 %v12273
  %v12489 = vunpack.c.l.b16 %v12274
  %v12490 = vunpack.c.l.b16 %v12275
  %v12491 = vunpack.c.l.b16 %v12276
  %v12492 = vunpack.c.l.b16 %v12277
  %v12493 = vunpack.c.l.b16 %v12278
  %v12494 = vunpack.c.l.b16 %v12279
  %v12495 = vunpack.c.l.b16 %v12280
  %v12496 = vunpack.c.l.b16 %v12281
  %v12497 = vunpack.c.l.b16 %v12282
  %v12498 = vunpack.c.l.b16 %v12283
  %v12499 = vunpack.c.l.b16 %v12284
  %v12500 = vunpack.c.l.b16 %v12285
  %v12501 = vunpack.c.l.b16 %v12286
  %v12502 = vunpack.c.l.b16 %v12287
  %v12503 = vunpack.c.l.b16 %v12288
  %v12504 = vunpack.c.l.b16 %v12289
  %v12505 = vunpack.c.l.b16 %v12290
  %v12506 = vunpack.c.l.b16 %v12291
  %v12507 = vunpack.c.l.b16 %v12292
  %v12508 = vunpack.c.l.b16 %v12293
  %v12509 = vunpack.c.l.b16 %v12294
  %v12510 = vunpack.c.l.b16 %v12295
  %v12511 = vunpack.c.l.b16 %v12296
  %v12512 = vunpack.c.l.b16 %v12297
  %v12513 = vpack.c.b16 %v12433, %v12432
  %v12514 = vpack.c.b16 %v12435, %v12434
  %v12515 = vpack.c.b16 %v12437, %v12436
  %v12516 = vpack.c.b16 %v12439, %v12438
  %v12517 = vpack.c.b16 %v12441, %v12440
  %v12518 = vpack.c.b16 %v12443, %v12442
  %v12519 = vpack.c.b16 %v12445, %v12444
  %v12520 = vpack.c.b16 %v12447, %v12446
  %v12521 = vpack.c.b16 %v12449, %v12448
  %v12522 = vpack.c.b16 %v12451, %v12450
  %v12523 = vpack.c.b16 %v12453, %v12452
  %v12524 = vpack.c.b16 %v12455, %v12454
  %v12525 = vpack.c.b16 %v12457, %v12456
  %v12526 = vpack.c.b16 %v12459, %v12458
  %v12527 = vpack.c.b16 %v12461, %v12460
  %v12528 = vpack.c.b16 %v12463, %v12462
  %v12529 = vpack.c.b16 %v12465, %v12464
  %v12530 = vpack.c.b16 %v12467, %v12466
  %v12531 = vpack.c.b16 %v12469, %v12468
  %v12532 = vpack.c.b16 %v12471, %v12470
  %v12533 = vpack.c.b16 %v12473, %v12472
  %v12534 = vpack.c.b16 %v12475, %v12474
  %v12535 = vpack.c.b16 %v12477, %v12476
  %v12536 = vpack.c.b16 %v12479, %v12478
  %v12537 = vpack.c.b16 %v12481, %v12480
  %v12538 = vpack.c.b16 %v12483, %v12482
  %v12539 = vpack.c.b16 %v12485, %v12484
  %v12540 = vpack.c.b16 %v12487, %v12486
  %v12541 = vpack.c.b16 %v12489, %v12488
  %v12542 = vpack.c.b16 %v12491, %v12490
  %v12543 = vpack.c.b16 %v12493, %v12492
  %v12544 = vpack.c.b16 %v12495, %v12494
  %v12545 = vpack.c.b16 %v12497, %v12496
  %v12546 = vpack.c.b16 %v12499, %v12498
  %v12547 = vpack.c.b16 %v12501, %v12500
  %v12548 = vpack.c.b16 %v12503, %v12502
  %v12549 = vpack.c.b16 %v12505, %v12504
  %v12550 = vpack.c.b16 %v12507, %v12506
  %v12551 = vpack.c.b16 %v12509, %v12508
  %v12552 = vpack.c.b16 %v12511, %v12510
  %v12553 = vpack.c.b16 %v12512, %v12512
  %vm12594 = vcmask 64512
  %v12596 = vsel %vm12594, %v12343, 0
  %vm12598 = vcmask 1043456
  %v12600 = vsel %vm12598, %v12553, 0
  %12602 = vmatprep.subr.bf16.mxu0 0
  %12603 = vmatpush1.bf16.msra.mxu0 %v12513
  %12604 = vmatprep.subr.bf16.mxu0 0
  %12605 = vmatpush1.bf16.msra.mxu0 %v12514
  %12606 = vmatprep.subr.bf16.mxu0 0
  %12607 = vmatpush1.bf16.msra.mxu0 %v12515
  %12608 = vmatprep.subr.bf16.mxu0 0
  %12609 = vmatpush1.bf16.msra.mxu0 %v12516
  %12610 = vmatprep.subr.bf16.mxu0 0
  %12611 = vmatpush1.bf16.msra.mxu0 %v12517
  %12612 = vmatprep.subr.bf16.mxu0 0
  %12613 = vmatpush1.bf16.msra.mxu0 %v12518
  %12614 = vmatprep.subr.bf16.mxu0 0
  %12615 = vmatpush1.bf16.msra.mxu0 %v12519
  %12616 = vmatprep.subr.bf16.mxu0 0
  %12617 = vmatpush1.bf16.msra.mxu0 %v12520
  %12618 = vmatprep.subr.bf16.mxu0 0
  %12619 = vmatpush1.bf16.msra.mxu0 %v12521
  %12620 = vmatprep.subr.bf16.mxu0 0
  %12621 = vmatpush1.bf16.msra.mxu0 %v12522
  %12622 = vmatprep.subr.bf16.mxu0 0
  %12623 = vmatpush1.bf16.msra.mxu0 %v12523
  %12624 = vmatprep.subr.bf16.mxu0 0
  %12625 = vmatpush1.bf16.msra.mxu0 %v12524
  %12626 = vmatprep.subr.bf16.mxu0 0
  %12627 = vmatpush1.bf16.msra.mxu0 %v12525
  %12628 = vmatprep.subr.bf16.mxu0 0
  %12629 = vmatpush1.bf16.msra.mxu0 %v12526
  %12630 = vmatprep.subr.bf16.mxu0 0
  %12631 = vmatpush1.bf16.msra.mxu0 %v12527
  %12632 = vmatprep.subr.bf16.mxu0 0
  %12633 = vmatpush1.bf16.msra.mxu0 %v12528
  %12634 = vmatprep.mubr.bf16.mxu0 %v12336
  %12635 = vmatmul.mubr.bf16.gmra.mrb[0].mxu0 %v12322
  %v12636 = vpop.f32.mrb[0].mxu0
  %v12637 = vadd.f32 0.0, %v12636
  %v12638 = vpop.f32.mrb[0].mxu0
  %v12639 = vpop.f32.mrb[0].mxu0
  %v12640 = vpop.f32.mrb[0].mxu0
  %12641 = vdwg.mxu0
  %12642 = vmatprep.subr.bf16.mxu0 0
  %12643 = vmatpush1.bf16.msra.mxu0 %v12529
  %12644 = vmatprep.subr.bf16.mxu0 0
  %12645 = vmatpush1.bf16.msra.mxu0 %v12530
  %12646 = vmatprep.subr.bf16.mxu0 0
  %12647 = vmatpush1.bf16.msra.mxu0 %v12531
  %12648 = vmatprep.subr.bf16.mxu0 0
  %12649 = vmatpush1.bf16.msra.mxu0 %v12532
  %12650 = vmatprep.subr.bf16.mxu0 0
  %12651 = vmatpush1.bf16.msra.mxu0 %v12533
  %12652 = vmatprep.subr.bf16.mxu0 0
  %12653 = vmatpush1.bf16.msra.mxu0 %v12534
  %12654 = vmatprep.subr.bf16.mxu0 0
  %12655 = vmatpush1.bf16.msra.mxu0 %v12535
  %12656 = vmatprep.subr.bf16.mxu0 0
  %12657 = vmatpush1.bf16.msra.mxu0 %v12536
  %12658 = vmatprep.subr.bf16.mxu0 0
  %12659 = vmatpush1.bf16.msra.mxu0 %v12537
  %12660 = vmatprep.subr.bf16.mxu0 0
  %12661 = vmatpush1.bf16.msra.mxu0 %v12538
  %12662 = vmatprep.subr.bf16.mxu0 0
  %12663 = vmatpush1.bf16.msra.mxu0 %v12539
  %12664 = vmatprep.subr.bf16.mxu0 0
  %12665 = vmatpush1.bf16.msra.mxu0 %v12540
  %12666 = vmatprep.subr.bf16.mxu0 0
  %12667 = vmatpush1.bf16.msra.mxu0 %v12541
  %12668 = vmatprep.subr.bf16.mxu0 0
  %12669 = vmatpush1.bf16.msra.mxu0 %v12542
  %12670 = vmatprep.subr.bf16.mxu0 0
  %12671 = vmatpush1.bf16.msra.mxu0 %v12543
  %12672 = vmatprep.subr.bf16.mxu0 0
  %12673 = vmatpush1.bf16.msra.mxu0 %v12544
  %12674 = vmatprep.mubr.bf16.mxu0 %v12345
  %12675 = vmatmul.mubr.bf16.gmra.mrb[0].mxu0 %v12344
  %v12676 = vpop.f32.mrb[0].mxu0
  %v12677 = vadd.f32 %v12637, %v12676
  %v12678 = vpop.f32.mrb[0].mxu0
  %v12679 = vpop.f32.mrb[0].mxu0
  %v12680 = vpop.f32.mrb[0].mxu0
  %12681 = vdwg.mxu0
  %12682 = vmatprep.subr.bf16.mxu0 0
  %12683 = vmatpush1.bf16.msra.mxu0 %v12545
  %12684 = vmatprep.subr.bf16.mxu0 0
  %12685 = vmatpush1.bf16.msra.mxu0 %v12546
  %12686 = vmatprep.subr.bf16.mxu0 0
  %12687 = vmatpush1.bf16.msra.mxu0 %v12547
  %12688 = vmatprep.subr.bf16.mxu0 0
  %12689 = vmatpush1.bf16.msra.mxu0 %v12548
  %12690 = vmatprep.subr.bf16.mxu0 0
  %12691 = vmatpush1.bf16.msra.mxu0 %v12549
  %12692 = vmatprep.subr.bf16.mxu0 0
  %12693 = vmatpush1.bf16.msra.mxu0 %v12550
  %12694 = vmatprep.subr.bf16.mxu0 0
  %12695 = vmatpush1.bf16.msra.mxu0 %v12551
  %12696 = vmatprep.subr.bf16.mxu0 0
  %12697 = vmatpush1.bf16.msra.mxu0 %v12552
  %12698 = vmatprep.subr.bf16.mxu0 0
  %12699 = vmatpush1.bf16.msra.mxu0 %v12600
  %12700 = vmatprep.subr.bf16.mxu0 0
  %12701 = vmatpush1.bf16.msra.mxu0 0
  %12702 = vmatprep.subr.bf16.mxu0 0
  %12703 = vmatpush1.bf16.msra.mxu0 0
  %12704 = vmatprep.subr.bf16.mxu0 0
  %12705 = vmatpush1.bf16.msra.mxu0 0
  %12706 = vmatprep.subr.bf16.mxu0 0
  %12707 = vmatpush1.bf16.msra.mxu0 0
  %12708 = vmatprep.subr.bf16.mxu0 0
  %12709 = vmatpush1.bf16.msra.mxu0 0
  %12710 = vmatprep.subr.bf16.mxu0 0
  %12711 = vmatpush1.bf16.msra.mxu0 0
  %12712 = vmatprep.subr.bf16.mxu0 0
  %12713 = vmatpush1.bf16.msra.mxu0 0
  %12714 = vmatprep.mubr.bf16.mxu0 %v12596
  %12715 = vmatmul.mubr.bf16.gmra.mrb[0].mxu0 %v12329
  %v12716 = vpop.f32.mrb[0].mxu0
  %v12717 = vadd.f32 %v12677, %v12716
  %v12718 = vpop.f32.mrb[0].mxu0
  %v12719 = vpop.f32.mrb[0].mxu0
  %v12720 = vpop.f32.mrb[0].mxu0
  %12721 = vdwg.mxu0
  %v12722 = vpack.c.bf16 %v12717, %v12717
  %v12723 = vld [vmem:[%s7] sm:$0xf]
  %v12724 = vld [vmem:[%s7 + $0x4] sm:$0xf]
  %v12725 = vld [vmem:[%s7 + $0x8] sm:$0xf]
  %v12726 = vld [vmem:[%s7 + $0xc] sm:$0xf]
  %v12727 = vld [vmem:[%s8] sm:$0x1]
  %v12729 = vlaneseq
  %v12730 = vshrl.u32 %v12729, 7
  %v12731 = vsub.s32 0, %v12730
  %v12732 = vrot.slane %v12727, %v12731
  %v12738 = vunpack.c.l.b16 %v12723
  %v12739 = vunpack.c.l.b16 %v12724
  %v12740 = vunpack.c.l.b16 %v12725
  %v12741 = vunpack.c.l.b16 %v12726
  %v12742 = vpack.c.b16 %v12739, %v12738
  %v12743 = vpack.c.b16 %v12741, %v12740
  %v12747 = vsel %vm10744, %v12722, 0
  %12749 = vmatprep.subr.bf16.mxu0 0
  %12750 = vmatpush1.bf16.msra.mxu0 %v12742
  %12751 = vmatprep.subr.bf16.mxu0 0
  %12752 = vmatpush1.bf16.msra.mxu0 %v12743
  %12753 = vmatprep.subr.bf16.mxu0 0
  %12754 = vmatpush1.bf16.msra.mxu0 0
  %12755 = vmatprep.subr.bf16.mxu0 0
  %12756 = vmatpush1.bf16.msra.mxu0 0
  %12757 = vmatprep.subr.bf16.mxu0 0
  %12758 = vmatpush1.bf16.msra.mxu0 0
  %12759 = vmatprep.subr.bf16.mxu0 0
  %12760 = vmatpush1.bf16.msra.mxu0 0
  %12761 = vmatprep.subr.bf16.mxu0 0
  %12762 = vmatpush1.bf16.msra.mxu0 0
  %12763 = vmatprep.subr.bf16.mxu0 0
  %12764 = vmatpush1.bf16.msra.mxu0 0
  %12765 = vmatprep.subr.bf16.mxu0 0
  %12766 = vmatpush1.bf16.msra.mxu0 0
  %12767 = vmatprep.subr.bf16.mxu0 0
  %12768 = vmatpush1.bf16.msra.mxu0 0
  %12769 = vmatprep.subr.bf16.mxu0 0
  %12770 = vmatpush1.bf16.msra.mxu0 0
  %12771 = vmatprep.subr.bf16.mxu0 0
  %12772 = vmatpush1.bf16.msra.mxu0 0
  %12773 = vmatprep.subr.bf16.mxu0 0
  %12774 = vmatpush1.bf16.msra.mxu0 0
  %12775 = vmatprep.subr.bf16.mxu0 0
  %12776 = vmatpush1.bf16.msra.mxu0 0
  %12777 = vmatprep.subr.bf16.mxu0 0
  %12778 = vmatpush1.bf16.msra.mxu0 0
  %12779 = vmatprep.subr.bf16.mxu0 0
  %12780 = vmatpush1.bf16.msra.mxu0 0
  %12781 = vmatprep.mubr.bf16.mxu0 0
  %12782 = vmatmul.mubr.bf16.gmra.mrb[0].mxu0 %v12747
  %v12783 = vpop.f32.mrb[0].mxu0
  %v12784 = vadd.f32 %v12732, %v12783
  %v12785 = vpop.f32.mrb[0].mxu0
  %v12786 = vpop.f32.mrb[0].mxu0
  %v12787 = vpop.f32.mrb[0].mxu0
  %12788 = vdwg.mxu0
  %v12789 = vmax.f32 %v12784, 0.0
  %v12790 = vpack.c.bf16 %v12789, %v12789
  %v12791 = vld [vmem:[%s9] sm:$0xf]
  %v12792 = vld [vmem:[%s9 + $0x4] sm:$0xf]
  %v12793 = vld [vmem:[%s9 + $0x8] sm:$0xf]
  %v12794 = vld [vmem:[%s9 + $0xc] sm:$0xf]
  %v12795 = vld [vmem:[%s10] sm:$0x1]
  %v12797 = vlaneseq
  %v12798 = vshrl.u32 %v12797, 7
  %v12799 = vsub.s32 0, %v12798
  %v12800 = vrot.slane %v12795, %v12799
  %v12806 = vunpack.c.l.b16 %v12791
  %v12807 = vunpack.c.l.b16 %v12792
  %v12808 = vunpack.c.l.b16 %v12793
  %v12809 = vunpack.c.l.b16 %v12794
  %v12810 = vpack.c.b16 %v12807, %v12806
  %v12811 = vpack.c.b16 %v12809, %v12808
  %v12815 = vsel %vm10744, %v12790, 0
  %12817 = vmatprep.subr.bf16.mxu0 0
  %12818 = vmatpush1.bf16.msra.mxu0 %v12810
  %12819 = vmatprep.subr.bf16.mxu0 0
  %12820 = vmatpush1.bf16.msra.mxu0 %v12811
  %12821 = vmatprep.subr.bf16.mxu0 0
  %12822 = vmatpush1.bf16.msra.mxu0 0
  %12823 = vmatprep.subr.bf16.mxu0 0
  %12824 = vmatpush1.bf16.msra.mxu0 0
  %12825 = vmatprep.subr.bf16.mxu0 0
  %12826 = vmatpush1.bf16.msra.mxu0 0
  %12827 = vmatprep.subr.bf16.mxu0 0
  %12828 = vmatpush1.bf16.msra.mxu0 0
  %12829 = vmatprep.subr.bf16.mxu0 0
  %12830 = vmatpush1.bf16.msra.mxu0 0
  %12831 = vmatprep.subr.bf16.mxu0 0
  %12832 = vmatpush1.bf16.msra.mxu0 0
  %12833 = vmatprep.subr.bf16.mxu0 0
  %12834 = vmatpush1.bf16.msra.mxu0 0
  %12835 = vmatprep.subr.bf16.mxu0 0
  %12836 = vmatpush1.bf16.msra.mxu0 0
  %12837 = vmatprep.subr.bf16.mxu0 0
  %12838 = vmatpush1.bf16.msra.mxu0 0
  %12839 = vmatprep.subr.bf16.mxu0 0
  %12840 = vmatpush1.bf16.msra.mxu0 0
  %12841 = vmatprep.subr.bf16.mxu0 0
  %12842 = vmatpush1.bf16.msra.mxu0 0
  %12843 = vmatprep.subr.bf16.mxu0 0
  %12844 = vmatpush1.bf16.msra.mxu0 0
  %12845 = vmatprep.subr.bf16.mxu0 0
  %12846 = vmatpush1.bf16.msra.mxu0 0
  %12847 = vmatprep.subr.bf16.mxu0 0
  %12848 = vmatpush1.bf16.msra.mxu0 0
  %12849 = vmatprep.mubr.bf16.mxu0 0
  %12850 = vmatmul.mubr.bf16.gmra.mrb[0].mxu0 %v12815
  %v12851 = vpop.f32.mrb[0].mxu0
  %v12852 = vadd.f32 %v12800, %v12851
  %v12853 = vpop.f32.mrb[0].mxu0
  %v12854 = vpop.f32.mrb[0].mxu0
  %v12855 = vpop.f32.mrb[0].mxu0
  %12856 = vdwg.mxu0
  %12857 = vst [vmem:[%s11] sm:$0xff] %v11891
  %12858 = vst [vmem:[%s11 + $0x8] sm:$0xff] %v11894
  %12859 = vst [vmem:[%s11 + $0x10] sm:$0xff] %v11899
  %12860 = vst [vmem:[%s11 + $0x18] sm:$0xff] %v11902
  %12861 = vst [vmem:[%s11 + $0x20] sm:$0xff] %v11907
  %12862 = vst [vmem:[%s11 + $0x28] sm:$0xff] %v11910
  %12863 = vst [vmem:[%s11 + $0x30] sm:$0xff] %v11915
  %12864 = vst [vmem:[%s11 + $0x38] sm:$0xff] %v11918
  %12865 = vst [vmem:[%s11 + $0x40] sm:$0xff] %v11923
  %12866 = vst [vmem:[%s11 + $0x48] sm:$0xff] %v11926
  %12867 = vst [vmem:[%s11 + $0x50] sm:$0xff] %v11931
  %12868 = vst [vmem:[%s11 + $0x58] sm:$0xff] %v11934
  %12869 = vst [vmem:[%s11 + $0x60] sm:$0xff] %v11939
  %12870 = vst [vmem:[%s11 + $0x68] sm:$0xff] %v11942
  %12871 = vst [vmem:[%s11 + $0x70] sm:$0xff] %v11947
  %12872 = vst [vmem:[%s11 + $0x78] sm:$0xff] %v11950
  %12873 = vst [vmem:[%s11 + $0x80] sm:$0xff] %v11955
  %12874 = vst [vmem:[%s11 + $0x88] sm:$0xff] %v11958
  %12875 = vst [vmem:[%s11 + $0x90] sm:$0xff] %v11963
  %12876 = vst [vmem:[%s11 + $0x98] sm:$0xff] %v11966
  %12877 = vst [vmem:[%s11 + $0xa0] sm:$0xff] %v11971
  %12878 = vst [vmem:[%s11 + $0xa8] sm:$0xff] %v11974
  %12879 = vst [vmem:[%s11 + $0xb0] sm:$0xff] %v11979
  %12880 = vst [vmem:[%s11 + $0xb8] sm:$0xff] %v11982
  %12881 = vst [vmem:[%s11 + $0xc0] sm:$0xff] %v11987
  %12882 = vst [vmem:[%s11 + $0xc8] sm:$0xff] %v11990
  %12883 = vst [vmem:[%s11 + $0xd0] sm:$0xff] %v11995
  %12884 = vst [vmem:[%s11 + $0xd8] sm:$0xff] %v11998
  %12885 = vst [vmem:[%s11 + $0xe0] sm:$0xff] %v12003
  %12886 = vst [vmem:[%s11 + $0xe8] sm:$0xff] %v12006
  %12887 = vst [vmem:[%s11 + $0xf0] sm:$0xff] %v12011
  %12888 = vst [vmem:[%s11 + $0xf8] sm:$0xff] %v12014
  %12889 = vst [vmem:[%s11 + $0x100] sm:$0xff] %v12019
  %12890 = vst [vmem:[%s11 + $0x108] sm:$0xff] %v12022
  %12891 = vst [vmem:[%s11 + $0x110] sm:$0xff] %v12027
  %12892 = vst [vmem:[%s11 + $0x118] sm:$0xff] %v12030
  %12893 = vst [vmem:[%s11 + $0x120] sm:$0xff] %v12035
  %12894 = vst [vmem:[%s11 + $0x128] sm:$0xff] %v12038
  %12895 = vst [vmem:[%s11 + $0x130] sm:$0xff] %v12043
  %12896 = vst [vmem:[%s11 + $0x138] sm:$0xff] %v12046
  %12897 = vst [vmem:[%s11 + $0x140] sm:$0xff] %v12051
  %12898 = vst [vmem:[%s11 + $0x148] sm:$0xff] %v12054
  %12899 = vst [vmem:[%s11 + $0x150] sm:$0xff] %v12059
  %12900 = vst [vmem:[%s11 + $0x158] sm:$0xff] %v12062
  %12901 = vst [vmem:[%s11 + $0x160] sm:$0xff] %v12067
  %12902 = vst [vmem:[%s11 + $0x168] sm:$0xff] %v12070
  %12903 = vst [vmem:[%s11 + $0x170] sm:$0xff] %v12075
  %12904 = vst [vmem:[%s11 + $0x178] sm:$0xff] %v12078
  %12905 = vst [vmem:[%s11 + $0x180] sm:$0xff] %v12083
  %12906 = vst [vmem:[%s11 + $0x188] sm:$0xff] %v12086
  %12907 = vst [vmem:[%s11 + $0x190] sm:$0xff] %v12091
  %12908 = vst [vmem:[%s11 + $0x198] sm:$0xff] %v12094
  %12909 = vst [vmem:[%s11 + $0x1a0] sm:$0xff] %v12099
  %12910 = vst [vmem:[%s11 + $0x1a8] sm:$0xff] %v12102
  %12911 = vst [vmem:[%s11 + $0x1b0] sm:$0xff] %v12107
  %12912 = vst [vmem:[%s11 + $0x1b8] sm:$0xff] %v12110
  %12913 = vst [vmem:[%s11 + $0x1c0] sm:$0xff] %v12115
  %12914 = vst [vmem:[%s11 + $0x1c8] sm:$0xff] %v12118
  %12915 = vst [vmem:[%s11 + $0x1d0] sm:$0xff] %v12123
  %12916 = vst [vmem:[%s11 + $0x1d8] sm:$0xff] %v12126
  %12917 = vst [vmem:[%s11 + $0x1e0] sm:$0xff] %v12131
  %12918 = vst [vmem:[%s11 + $0x1e8] sm:$0xff] %v12134
  %12919 = vst [vmem:[%s11 + $0x1f0] sm:$0xff] %v12139
  %12920 = vst [vmem:[%s11 + $0x1f8] sm:$0xff] %v12142
  %12921 = vst [vmem:[%s11 + $0x200] sm:$0xff] %v12147
  %12922 = vst [vmem:[%s11 + $0x208] sm:$0xff] %v12150
  %12923 = vst [vmem:[%s11 + $0x210] sm:$0xff] %v12155
  %12924 = vst [vmem:[%s11 + $0x218] sm:$0xff] %v12158
  %12925 = vst [vmem:[%s11 + $0x220] sm:$0xff] %v12163
  %12926 = vst [vmem:[%s11 + $0x228] sm:$0xff] %v12166
  %12927 = vst [vmem:[%s11 + $0x230] sm:$0xff] %v12171
  %12928 = vst [vmem:[%s11 + $0x238] sm:$0xff] %v12174
  %12929 = vst [vmem:[%s11 + $0x240] sm:$0xff] %v12179
  %12930 = vst [vmem:[%s11 + $0x248] sm:$0xff] %v12182
  %12931 = vst [vmem:[%s11 + $0x250] sm:$0xff] %v12187
  %12932 = vst [vmem:[%s11 + $0x258] sm:$0xff] %v12190
  %12933 = vst [vmem:[%s11 + $0x260] sm:$0xff] %v12195
  %12934 = vst [vmem:[%s11 + $0x268] sm:$0xff] %v12198
  %12935 = vst [vmem:[%s11 + $0x270] sm:$0xff] %v12203
  %12936 = vst [vmem:[%s11 + $0x278] sm:$0xff] %v12206
  %12937 = vst [vmem:[%s11 + $0x280] sm:$0xff] %v12211
  %12938 = vst [vmem:[%s12] sm:$0x3] %v12852
  // Predicated region
  $region46: #{_infer_jit.1} parent=0 // pred_check
    _
  $region47: #{_infer_jit.1} parent=0 // pred_check_branch
    %12940 = sbr.rel (0) target = $region49
  $region48: #{_infer_jit.1} parent=0 // pred_region
    _
  $region49: #{_infer_jit.1} parent=0 // pred_fallthru
    _
  // Predicated region
  $region50: #{_infer_jit.1} parent=0 // pred_check
    _
  $region51: #{_infer_jit.1} parent=0 // pred_check_branch
    %12942 = sbr.rel (0) target = $region53
  $region52: #{_infer_jit.1} parent=0 // pred_region
    _
  $region53: #{_infer_jit.1} parent=0 // pred_fallthru
    _
  // Predicated region
  $region54: #{_infer_jit.1} parent=0 // pred_check
    _
  $region55: #{_infer_jit.1} parent=0 // pred_check_branch
    %12944 = sbr.rel (0) target = $region57
  $region56: #{_infer_jit.1} parent=0 // pred_region
    _
  $region57: #{_infer_jit.1} parent=0 // pred_fallthru
    _
  // Predicated region
  $region58: #{_infer_jit.1} parent=0 // pred_check
    _
  $region59: #{_infer_jit.1} parent=0 // pred_check_branch
    %12946 = sbr.rel (0) target = $region61
  $region60: #{_infer_jit.1} parent=0 // pred_region
    _
  $region61: #{_infer_jit.1} parent=0 // pred_fallthru
    _

</llo_original>
